<compile_context>
chip_gen: v7x
topology: tpu7x:2x2x1
jax: 0.10.0
libtpu: 0.0.40
codegen_flags: <defaults>
</compile_context>

<pallas_src>
import math
from functools import partial

import jax
import jax.numpy as jnp
from jax import lax
from jax.experimental import pallas as pl
from jax.experimental.pallas import tpu as pltpu


def _mha_kernel(x_ref, wqkv_ref, bqkv_ref, wo_ref, bo_ref,
                out_ref, attn_ref, *, num_heads):
    # x_ref:    (1, S, D)        bf16
    # wqkv_ref: (D, 3*D)         bf16   (grid-invariant, q|k|v column blocks)
    # bqkv_ref: (1, 3*D)         f32    (scale already folded into the q part)
    # wo_ref:   (D, D)           bf16   (grid-invariant)
    # bo_ref:   (1, D)           f32
    # out_ref:  (1, S, D)        f32
    # attn_ref: (1, H, S, S)     f32
    S, D = x_ref.shape[1], x_ref.shape[2]
    hd = D // num_heads

    x = x_ref[0]                                                     # (S, D) bf16

    # Fused Q/K/V projection: one full-width MXU pass (N = 3*D).
    qkv = (jnp.dot(x, wqkv_ref[...], preferred_element_type=jnp.float32)
           + bqkv_ref[...]).astype(jnp.bfloat16)                     # (S, 3*D)

    ws_parts = []
    for h in range(num_heads):                                       # static loop
        qh = qkv[:, h * hd:(h + 1) * hd]                             # (S, hd)
        kh = qkv[:, D + h * hd:D + (h + 1) * hd]                     # (S, hd)
        vh = qkv[:, 2 * D + h * hd:2 * D + (h + 1) * hd]             # (S, hd)

        # Scores: contract the head dim of BOTH operands -- no explicit K^T.
        scores = lax.dot_general(qh, kh, (((1,), (1,)), ((), ())),
                                 preferred_element_type=jnp.float32)  # (S, S)

        # Numerically-stable softmax in f32; denominator on the EUP.
        scores = scores - jnp.max(scores, axis=-1, keepdims=True)
        p = jnp.exp(scores)
        p = p * pl.reciprocal(jnp.sum(p, axis=-1, keepdims=True), approx=True)
        attn_ref[0, h] = p

        ws_parts.append(
            jnp.dot(p.astype(jnp.bfloat16), vh,
                    preferred_element_type=jnp.float32).astype(jnp.bfloat16))

    # Head-concatenated weighted sum, then a single full-width fc_out matmul.
    ws = jnp.concatenate(ws_parts, axis=-1)                          # (S, D) bf16
    out_ref[0] = (jnp.dot(ws, wo_ref[...], preferred_element_type=jnp.float32)
                  + bo_ref[...])


def multi_head_attention(x, params, num_heads):
    """x: (B, S, D) f32.  params: W of shape (D, D) in PyTorch (out, in)
    convention and b of shape (D,) for query/key/value/fc_out."""
    B, S, D = x.shape
    assert D % num_heads == 0
    hd = D // num_heads
    # TODO(synk): pad S to a multiple of 8 and head_dim to a multiple of 128
    # for non-aligned shapes; the demo uses hardware-aligned sizes directly.
    assert S % 8 == 0 and D % 128 == 0 and hd % 128 == 0
    # Hoisted full-weight layout is valid while 4*D^2 bf16 weights fit VMEM
    # comfortably (D up to ~2048); beyond that, fall back to per-head streaming.
    assert 4 * D * D * 2 <= 16 * 1024 * 1024

    f32, bf16 = jnp.float32, jnp.bfloat16
    scale = 1.0 / math.sqrt(float(D))   # module uses input_dim ** 0.5

    # PyTorch weights are (out, in); transpose to (in, out).  Fold the score
    # scale into the query weight/bias ((s*Q) K^T == s * (Q K^T)).
    wqkv = jnp.concatenate(
        [params["wq"].T * scale, params["wk"].T, params["wv"].T],
        axis=1).astype(bf16)                                        # (D, 3D)
    bqkv = jnp.concatenate(
        [params["bq"] * scale, params["bk"], params["bv"]]
    ).reshape(1, 3 * D).astype(f32)                                 # (1, 3D)
    wo = params["wo"].T.astype(bf16)                                # (D, D)
    bo = params["bo"].reshape(1, D).astype(f32)                     # (1, D)

    x_bf16 = x.astype(bf16)

    kernel = partial(_mha_kernel, num_heads=num_heads)

    out, attn = pl.pallas_call(
        kernel,
        grid=(B,),
        in_specs=[
            pl.BlockSpec((1, S, D), lambda b: (b, 0, 0)),           # x (bf16)
            pl.BlockSpec((D, 3 * D), lambda b: (0, 0)),             # fused QKV W
            pl.BlockSpec((1, 3 * D), lambda b: (0, 0)),             # fused QKV b
            pl.BlockSpec((D, D), lambda b: (0, 0)),                 # fc_out W
            pl.BlockSpec((1, D), lambda b: (0, 0)),                 # fc_out b
        ],
        out_specs=[
            pl.BlockSpec((1, S, D), lambda b: (b, 0, 0)),           # out
            pl.BlockSpec((1, num_heads, S, S), lambda b: (b, 0, 0, 0)),  # attn
        ],
        out_shape=[
            jax.ShapeDtypeStruct((B, S, D), jnp.float32),
            jax.ShapeDtypeStruct((B, num_heads, S, S), jnp.float32),
        ],
        compiler_params=pltpu.CompilerParams(
            dimension_semantics=("parallel",),
            vmem_limit_bytes=32 * 1024 * 1024,  # ~6 MiB actually used at demo shapes
        ),
    )(x_bf16, wqkv, bqkv, wo, bo)
    return out, attn


def _reference(x, params, num_heads):
    """Pure-JAX f32 reference mirroring the PyTorch forward exactly."""
    B, S, D = x.shape
    hd = D // num_heads
    Q = x @ params["wq"].T + params["bq"]
    K = x @ params["wk"].T + params["bk"]
    V = x @ params["wv"].T + params["bv"]
    Q = Q.reshape(B, S, num_heads, hd).transpose(0, 2, 1, 3)
    K = K.reshape(B, S, num_heads, hd).transpose(0, 2, 1, 3)
    V = V.reshape(B, S, num_heads, hd).transpose(0, 2, 1, 3)
    scores = jnp.einsum("bhqd,bhkd->bhqk", Q, K) / (D ** 0.5)
    attn = jax.nn.softmax(scores, axis=-1)
    ws = jnp.einsum("bhqk,bhkd->bhqd", attn, V)
    ws = ws.transpose(0, 2, 1, 3).reshape(B, S, D)
    out = ws @ params["wo"].T + params["bo"]
    return out, attn


if __name__ == "__main__":
    # Hardware-aligned small shapes: head_dim = 128, seq = 128 (lane-dense).
    B, S, D, H = 2, 128, 512, 4

    key = jax.random.PRNGKey(0)
    keys = jax.random.split(key, 9)
    bound = 1.0 / math.sqrt(D)  # nn.Linear default init range

    params = {
        "wq": jax.random.uniform(keys[0], (D, D), jnp.float32, -bound, bound),
        "bq": jax.random.uniform(keys[1], (D,), jnp.float32, -bound, bound),
        "wk": jax.random.uniform(keys[2], (D, D), jnp.float32, -bound, bound),
        "bk": jax.random.uniform(keys[3], (D,), jnp.float32, -bound, bound),
        "wv": jax.random.uniform(keys[4], (D, D), jnp.float32, -bound, bound),
        "bv": jax.random.uniform(keys[5], (D,), jnp.float32, -bound, bound),
        "wo": jax.random.uniform(keys[6], (D, D), jnp.float32, -bound, bound),
        "bo": jax.random.uniform(keys[7], (D,), jnp.float32, -bound, bound),
    }
    x = jax.random.normal(keys[8], (B, S, D), jnp.float32)

    out, attn = multi_head_attention(x, params, H)
    out, attn = jax.block_until_ready((out, attn))

    ref_out, ref_attn = _reference(x, params, H)
    assert out.shape == (B, S, D) and attn.shape == (B, H, S, S)
    # bf16 MXU operands + approx reciprocal -> slightly looser tolerances than f32.
    assert jnp.allclose(out, ref_out, atol=5e-2, rtol=5e-2)
    assert jnp.allclose(attn, ref_attn, atol=5e-3, rtol=5e-2)

    print("KERNEL_OK")
</pallas_src>

<mosaic_0001>
module attributes {stable_mosaic.version = 11 : i64} {
  func.func @_mha_kernel(%arg0: i32, %arg1: memref<1x128x512xbf16, #tpu.memory_space<vmem>>, %arg2: memref<512x1536xbf16, #tpu.memory_space<vmem>>, %arg3: memref<1x1536xf32, #tpu.memory_space<vmem>>, %arg4: memref<512x512xbf16, #tpu.memory_space<vmem>>, %arg5: memref<1x512xf32, #tpu.memory_space<vmem>>, %arg6: memref<1x128x512xf32, #tpu.memory_space<vmem>>, %arg7: memref<1x4x128x128xf32, #tpu.memory_space<vmem>>) attributes {dimension_semantics = [#tpu.dimension_semantics<parallel>], iteration_bounds = array<i64: 2>, scalar_prefetch = 0 : i64, scratch_operands = 0 : i64, tpu.core_type = #tpu.core_type<tc>, window_params = [{transform_indices = @transform_0, window_bounds = array<i64: 1, 128, 512>}, {pipeline_mode = #tpu.pipeline_mode<synchronous>, transform_indices = @transform_1, window_bounds = array<i64: 512, 1536>}, {pipeline_mode = #tpu.pipeline_mode<synchronous>, transform_indices = @transform_2, window_bounds = array<i64: 1, 1536>}, {pipeline_mode = #tpu.pipeline_mode<synchronous>, transform_indices = @transform_3, window_bounds = array<i64: 512, 512>}, {pipeline_mode = #tpu.pipeline_mode<synchronous>, transform_indices = @transform_4, window_bounds = array<i64: 1, 512>}, {transform_indices = @transform_5, window_bounds = array<i64: 1, 128, 512>}, {transform_indices = @transform_6, window_bounds = array<i64: 1, 4, 128, 128>}]} {
    %c0 = arith.constant 0 : index
    %c0_0 = arith.constant 0 : index
    %c0_1 = arith.constant 0 : index
    %0 = vector.load %arg1[%c0, %c0_0, %c0_1] : memref<1x128x512xbf16, #tpu.memory_space<vmem>>, vector<1x128x512xbf16>
    %1 = vector.shape_cast %0 : vector<1x128x512xbf16> to vector<128x512xbf16>
    %c0_2 = arith.constant 0 : index
    %c0_3 = arith.constant 0 : index
    %2 = vector.load %arg2[%c0_2, %c0_3] : memref<512x1536xbf16, #tpu.memory_space<vmem>>, vector<512x1536xbf16>
    %cst = arith.constant dense<0.000000e+00> : vector<128x1536xf32>
    %3 = tpu.matmul %1, %2, %cst {dimension_numbers = #tpu.dot_dimension_numbers<[1], [0], [0], [1], [0, 0, 1, 1], [], []>} : vector<128x512xbf16>, vector<512x1536xbf16>, vector<128x1536xf32> -> vector<128x1536xf32>
    %c0_4 = arith.constant 0 : index
    %c0_5 = arith.constant 0 : index
    %4 = vector.load %arg3[%c0_4, %c0_5] : memref<1x1536xf32, #tpu.memory_space<vmem>>, vector<1x1536xf32>
    %5 = vector.broadcast %4 : vector<1x1536xf32> to vector<128x1536xf32>
    %6 = arith.addf %3, %5 : vector<128x1536xf32>
    %7 = arith.truncf %6 : vector<128x1536xf32> to vector<128x1536xbf16>
    %8 = vector.extract_strided_slice %7 {offsets = [0, 0], sizes = [128, 128], strides = [1, 1]} : vector<128x1536xbf16> to vector<128x128xbf16>
    %9 = vector.extract_strided_slice %7 {offsets = [0, 512], sizes = [128, 128], strides = [1, 1]} : vector<128x1536xbf16> to vector<128x128xbf16>
    %10 = vector.extract_strided_slice %7 {offsets = [0, 1024], sizes = [128, 128], strides = [1, 1]} : vector<128x1536xbf16> to vector<128x128xbf16>
    %cst_6 = arith.constant dense<0.000000e+00> : vector<128x128xf32>
    %11 = tpu.matmul %8, %9, %cst_6 {dimension_numbers = #tpu.dot_dimension_numbers<[1], [1], [0], [0], [0, 0, 1, 0], [], []>} : vector<128x128xbf16>, vector<128x128xbf16>, vector<128x128xf32> -> vector<128x128xf32>
    %cst_7 = arith.constant dense<0xFF800000> : vector<128xf32>
    %12 = vector.multi_reduction <maximumf>, %11, %cst_7 [1] : vector<128x128xf32> to vector<128xf32>
    %13 = vector.shape_cast %12 : vector<128xf32> to vector<128x1xf32>
    %14 = vector.broadcast %13 : vector<128x1xf32> to vector<128x128xf32>
    %15 = arith.subf %11, %14 : vector<128x128xf32>
    %16 = math.exp %15 : vector<128x128xf32>
    %cst_8 = arith.constant dense<0.000000e+00> : vector<128xf32>
    %17 = vector.multi_reduction <add>, %16, %cst_8 [1] : vector<128x128xf32> to vector<128xf32>
    %18 = vector.shape_cast %17 : vector<128xf32> to vector<128x1xf32>
    %19 = tpu.reciprocal %18 {approx = true} : vector<128x1xf32> -> vector<128x1xf32>
    %20 = vector.broadcast %19 : vector<128x1xf32> to vector<128x128xf32>
    %21 = arith.mulf %16, %20 : vector<128x128xf32>
    %c0_9 = arith.constant 0 : index
    %c0_10 = arith.constant 0 : index
    %c0_11 = arith.constant 0 : index
    %c0_12 = arith.constant 0 : index
    %22 = vector.load %arg7[%c0_9, %c0_10, %c0_11, %c0_12] : memref<1x4x128x128xf32, #tpu.memory_space<vmem>>, vector<1x1x128x128xf32>
    %23 = vector.shape_cast %22 : vector<1x1x128x128xf32> to vector<128x128xf32>
    %24 = vector.shape_cast %21 : vector<128x128xf32> to vector<1x1x128x128xf32>
    tpu.vector_store %arg7[%c0_9, %c0_10, %c0_11, %c0_12], %24 {strides = array<i32>} : memref<1x4x128x128xf32, #tpu.memory_space<vmem>>, vector<1x1x128x128xf32>,
    %25 = arith.truncf %21 : vector<128x128xf32> to vector<128x128xbf16>
    %cst_13 = arith.constant dense<0.000000e+00> : vector<128x128xf32>
    %26 = tpu.matmul %25, %10, %cst_13 {dimension_numbers = #tpu.dot_dimension_numbers<[1], [0], [0], [1], [0, 0, 1, 1], [], []>} : vector<128x128xbf16>, vector<128x128xbf16>, vector<128x128xf32> -> vector<128x128xf32>
    %27 = arith.truncf %26 : vector<128x128xf32> to vector<128x128xbf16>
    %28 = vector.extract_strided_slice %7 {offsets = [0, 128], sizes = [128, 128], strides = [1, 1]} : vector<128x1536xbf16> to vector<128x128xbf16>
    %29 = vector.extract_strided_slice %7 {offsets = [0, 640], sizes = [128, 128], strides = [1, 1]} : vector<128x1536xbf16> to vector<128x128xbf16>
    %30 = vector.extract_strided_slice %7 {offsets = [0, 1152], sizes = [128, 128], strides = [1, 1]} : vector<128x1536xbf16> to vector<128x128xbf16>
    %cst_14 = arith.constant dense<0.000000e+00> : vector<128x128xf32>
    %31 = tpu.matmul %28, %29, %cst_14 {dimension_numbers = #tpu.dot_dimension_numbers<[1], [1], [0], [0], [0, 0, 1, 0], [], []>} : vector<128x128xbf16>, vector<128x128xbf16>, vector<128x128xf32> -> vector<128x128xf32>
    %cst_15 = arith.constant dense<0xFF800000> : vector<128xf32>
    %32 = vector.multi_reduction <maximumf>, %31, %cst_15 [1] : vector<128x128xf32> to vector<128xf32>
    %33 = vector.shape_cast %32 : vector<128xf32> to vector<128x1xf32>
    %34 = vector.broadcast %33 : vector<128x1xf32> to vector<128x128xf32>
    %35 = arith.subf %31, %34 : vector<128x128xf32>
    %36 = math.exp %35 : vector<128x128xf32>
    %cst_16 = arith.constant dense<0.000000e+00> : vector<128xf32>
    %37 = vector.multi_reduction <add>, %36, %cst_16 [1] : vector<128x128xf32> to vector<128xf32>
    %38 = vector.shape_cast %37 : vector<128xf32> to vector<128x1xf32>
    %39 = tpu.reciprocal %38 {approx = true} : vector<128x1xf32> -> vector<128x1xf32>
    %40 = vector.broadcast %39 : vector<128x1xf32> to vector<128x128xf32>
    %41 = arith.mulf %36, %40 : vector<128x128xf32>
    %c0_17 = arith.constant 0 : index
    %c1 = arith.constant 1 : index
    %c0_18 = arith.constant 0 : index
    %c0_19 = arith.constant 0 : index
    %42 = vector.load %arg7[%c0_17, %c1, %c0_18, %c0_19] : memref<1x4x128x128xf32, #tpu.memory_space<vmem>>, vector<1x1x128x128xf32>
    %43 = vector.shape_cast %42 : vector<1x1x128x128xf32> to vector<128x128xf32>
    %44 = vector.shape_cast %41 : vector<128x128xf32> to vector<1x1x128x128xf32>
    tpu.vector_store %arg7[%c0_17, %c1, %c0_18, %c0_19], %44 {strides = array<i32>} : memref<1x4x128x128xf32, #tpu.memory_space<vmem>>, vector<1x1x128x128xf32>,
    %45 = arith.truncf %41 : vector<128x128xf32> to vector<128x128xbf16>
    %cst_20 = arith.constant dense<0.000000e+00> : vector<128x128xf32>
    %46 = tpu.matmul %45, %30, %cst_20 {dimension_numbers = #tpu.dot_dimension_numbers<[1], [0], [0], [1], [0, 0, 1, 1], [], []>} : vector<128x128xbf16>, vector<128x128xbf16>, vector<128x128xf32> -> vector<128x128xf32>
    %47 = arith.truncf %46 : vector<128x128xf32> to vector<128x128xbf16>
    %48 = vector.extract_strided_slice %7 {offsets = [0, 256], sizes = [128, 128], strides = [1, 1]} : vector<128x1536xbf16> to vector<128x128xbf16>
    %49 = vector.extract_strided_slice %7 {offsets = [0, 768], sizes = [128, 128], strides = [1, 1]} : vector<128x1536xbf16> to vector<128x128xbf16>
    %50 = vector.extract_strided_slice %7 {offsets = [0, 1280], sizes = [128, 128], strides = [1, 1]} : vector<128x1536xbf16> to vector<128x128xbf16>
    %cst_21 = arith.constant dense<0.000000e+00> : vector<128x128xf32>
    %51 = tpu.matmul %48, %49, %cst_21 {dimension_numbers = #tpu.dot_dimension_numbers<[1], [1], [0], [0], [0, 0, 1, 0], [], []>} : vector<128x128xbf16>, vector<128x128xbf16>, vector<128x128xf32> -> vector<128x128xf32>
    %cst_22 = arith.constant dense<0xFF800000> : vector<128xf32>
    %52 = vector.multi_reduction <maximumf>, %51, %cst_22 [1] : vector<128x128xf32> to vector<128xf32>
    %53 = vector.shape_cast %52 : vector<128xf32> to vector<128x1xf32>
    %54 = vector.broadcast %53 : vector<128x1xf32> to vector<128x128xf32>
    %55 = arith.subf %51, %54 : vector<128x128xf32>
    %56 = math.exp %55 : vector<128x128xf32>
    %cst_23 = arith.constant dense<0.000000e+00> : vector<128xf32>
    %57 = vector.multi_reduction <add>, %56, %cst_23 [1] : vector<128x128xf32> to vector<128xf32>
    %58 = vector.shape_cast %57 : vector<128xf32> to vector<128x1xf32>
    %59 = tpu.reciprocal %58 {approx = true} : vector<128x1xf32> -> vector<128x1xf32>
    %60 = vector.broadcast %59 : vector<128x1xf32> to vector<128x128xf32>
    %61 = arith.mulf %56, %60 : vector<128x128xf32>
    %c0_24 = arith.constant 0 : index
    %c2 = arith.constant 2 : index
    %c0_25 = arith.constant 0 : index
    %c0_26 = arith.constant 0 : index
    %62 = vector.load %arg7[%c0_24, %c2, %c0_25, %c0_26] : memref<1x4x128x128xf32, #tpu.memory_space<vmem>>, vector<1x1x128x128xf32>
    %63 = vector.shape_cast %62 : vector<1x1x128x128xf32> to vector<128x128xf32>
    %64 = vector.shape_cast %61 : vector<128x128xf32> to vector<1x1x128x128xf32>
    tpu.vector_store %arg7[%c0_24, %c2, %c0_25, %c0_26], %64 {strides = array<i32>} : memref<1x4x128x128xf32, #tpu.memory_space<vmem>>, vector<1x1x128x128xf32>,
    %65 = arith.truncf %61 : vector<128x128xf32> to vector<128x128xbf16>
    %cst_27 = arith.constant dense<0.000000e+00> : vector<128x128xf32>
    %66 = tpu.matmul %65, %50, %cst_27 {dimension_numbers = #tpu.dot_dimension_numbers<[1], [0], [0], [1], [0, 0, 1, 1], [], []>} : vector<128x128xbf16>, vector<128x128xbf16>, vector<128x128xf32> -> vector<128x128xf32>
    %67 = arith.truncf %66 : vector<128x128xf32> to vector<128x128xbf16>
    %68 = vector.extract_strided_slice %7 {offsets = [0, 384], sizes = [128, 128], strides = [1, 1]} : vector<128x1536xbf16> to vector<128x128xbf16>
    %69 = vector.extract_strided_slice %7 {offsets = [0, 896], sizes = [128, 128], strides = [1, 1]} : vector<128x1536xbf16> to vector<128x128xbf16>
    %70 = vector.extract_strided_slice %7 {offsets = [0, 1408], sizes = [128, 128], strides = [1, 1]} : vector<128x1536xbf16> to vector<128x128xbf16>
    %cst_28 = arith.constant dense<0.000000e+00> : vector<128x128xf32>
    %71 = tpu.matmul %68, %69, %cst_28 {dimension_numbers = #tpu.dot_dimension_numbers<[1], [1], [0], [0], [0, 0, 1, 0], [], []>} : vector<128x128xbf16>, vector<128x128xbf16>, vector<128x128xf32> -> vector<128x128xf32>
    %cst_29 = arith.constant dense<0xFF800000> : vector<128xf32>
    %72 = vector.multi_reduction <maximumf>, %71, %cst_29 [1] : vector<128x128xf32> to vector<128xf32>
    %73 = vector.shape_cast %72 : vector<128xf32> to vector<128x1xf32>
    %74 = vector.broadcast %73 : vector<128x1xf32> to vector<128x128xf32>
    %75 = arith.subf %71, %74 : vector<128x128xf32>
    %76 = math.exp %75 : vector<128x128xf32>
    %cst_30 = arith.constant dense<0.000000e+00> : vector<128xf32>
    %77 = vector.multi_reduction <add>, %76, %cst_30 [1] : vector<128x128xf32> to vector<128xf32>
    %78 = vector.shape_cast %77 : vector<128xf32> to vector<128x1xf32>
    %79 = tpu.reciprocal %78 {approx = true} : vector<128x1xf32> -> vector<128x1xf32>
    %80 = vector.broadcast %79 : vector<128x1xf32> to vector<128x128xf32>
    %81 = arith.mulf %76, %80 : vector<128x128xf32>
    %c0_31 = arith.constant 0 : index
    %c3 = arith.constant 3 : index
    %c0_32 = arith.constant 0 : index
    %c0_33 = arith.constant 0 : index
    %82 = vector.load %arg7[%c0_31, %c3, %c0_32, %c0_33] : memref<1x4x128x128xf32, #tpu.memory_space<vmem>>, vector<1x1x128x128xf32>
    %83 = vector.shape_cast %82 : vector<1x1x128x128xf32> to vector<128x128xf32>
    %84 = vector.shape_cast %81 : vector<128x128xf32> to vector<1x1x128x128xf32>
    tpu.vector_store %arg7[%c0_31, %c3, %c0_32, %c0_33], %84 {strides = array<i32>} : memref<1x4x128x128xf32, #tpu.memory_space<vmem>>, vector<1x1x128x128xf32>,
    %85 = arith.truncf %81 : vector<128x128xf32> to vector<128x128xbf16>
    %cst_34 = arith.constant dense<0.000000e+00> : vector<128x128xf32>
    %86 = tpu.matmul %85, %70, %cst_34 {dimension_numbers = #tpu.dot_dimension_numbers<[1], [0], [0], [1], [0, 0, 1, 1], [], []>} : vector<128x128xbf16>, vector<128x128xbf16>, vector<128x128xf32> -> vector<128x128xf32>
    %87 = arith.truncf %86 : vector<128x128xf32> to vector<128x128xbf16>
    %88 = tpu.concatenate %27, %47, %67, %87 in 1 : vector<128x128xbf16>, vector<128x128xbf16>, vector<128x128xbf16>, vector<128x128xbf16> -> vector<128x512xbf16>
    %c0_35 = arith.constant 0 : index
    %c0_36 = arith.constant 0 : index
    %89 = vector.load %arg4[%c0_35, %c0_36] : memref<512x512xbf16, #tpu.memory_space<vmem>>, vector<512x512xbf16>
    %cst_37 = arith.constant dense<0.000000e+00> : vector<128x512xf32>
    %90 = tpu.matmul %88, %89, %cst_37 {dimension_numbers = #tpu.dot_dimension_numbers<[1], [0], [0], [1], [0, 0, 1, 1], [], []>} : vector<128x512xbf16>, vector<512x512xbf16>, vector<128x512xf32> -> vector<128x512xf32>
    %c0_38 = arith.constant 0 : index
    %c0_39 = arith.constant 0 : index
    %91 = vector.load %arg5[%c0_38, %c0_39] : memref<1x512xf32, #tpu.memory_space<vmem>>, vector<1x512xf32>
    %92 = vector.broadcast %91 : vector<1x512xf32> to vector<128x512xf32>
    %93 = arith.addf %90, %92 : vector<128x512xf32>
    %c0_40 = arith.constant 0 : index
    %c0_41 = arith.constant 0 : index
    %c0_42 = arith.constant 0 : index
    %94 = vector.load %arg6[%c0_40, %c0_41, %c0_42] : memref<1x128x512xf32, #tpu.memory_space<vmem>>, vector<1x128x512xf32>
    %95 = vector.shape_cast %94 : vector<1x128x512xf32> to vector<128x512xf32>
    %96 = vector.shape_cast %93 : vector<128x512xf32> to vector<1x128x512xf32>
    tpu.vector_store %arg6[%c0_40, %c0_41, %c0_42], %96 {strides = array<i32>} : memref<1x128x512xf32, #tpu.memory_space<vmem>>, vector<1x128x512xf32>,
    return
  }
  func.func @transform_0(%arg0: i32) -> (i32, i32, i32) {
    %c0_i32 = arith.constant 0 : i32
    %c0_i32_0 = arith.constant 0 : i32
    %c0_i32_1 = arith.constant 0 : i32
    return %arg0, %c0_i32, %c0_i32_0 : i32, i32, i32
  }
  func.func @transform_1(%arg0: i32) -> (i32, i32) {
    %c0_i32 = arith.constant 0 : i32
    %c0_i32_0 = arith.constant 0 : i32
    %c0_i32_1 = arith.constant 0 : i32
    return %c0_i32, %c0_i32_0 : i32, i32
  }
  func.func @transform_2(%arg0: i32) -> (i32, i32) {
    %c0_i32 = arith.constant 0 : i32
    %c0_i32_0 = arith.constant 0 : i32
    %c0_i32_1 = arith.constant 0 : i32
    return %c0_i32, %c0_i32_0 : i32, i32
  }
  func.func @transform_3(%arg0: i32) -> (i32, i32) {
    %c0_i32 = arith.constant 0 : i32
    %c0_i32_0 = arith.constant 0 : i32
    %c0_i32_1 = arith.constant 0 : i32
    return %c0_i32, %c0_i32_0 : i32, i32
  }
  func.func @transform_4(%arg0: i32) -> (i32, i32) {
    %c0_i32 = arith.constant 0 : i32
    %c0_i32_0 = arith.constant 0 : i32
    %c0_i32_1 = arith.constant 0 : i32
    return %c0_i32, %c0_i32_0 : i32, i32
  }
  func.func @transform_5(%arg0: i32) -> (i32, i32, i32) {
    %c0_i32 = arith.constant 0 : i32
    %c0_i32_0 = arith.constant 0 : i32
    %c0_i32_1 = arith.constant 0 : i32
    return %arg0, %c0_i32, %c0_i32_0 : i32, i32, i32
  }
  func.func @transform_6(%arg0: i32) -> (i32, i32, i32, i32) {
    %c0_i32 = arith.constant 0 : i32
    %c0_i32_0 = arith.constant 0 : i32
    %c0_i32_1 = arith.constant 0 : i32
    %c0_i32_2 = arith.constant 0 : i32
    return %arg0, %c0_i32, %c0_i32_0, %c0_i32_1 : i32, i32, i32, i32
  }
}

</mosaic_0001>

<llo_original>
// kernel: tpu_custom_call.1
$region0: #{tpu_custom_call.1}
  #allocation0 [shape = 'u32[]', space=smem, size = 0x4, offset = 0x4, fixed_abs, tag = 'smem constant byte address 0x4 - core index']
  #allocation1 [shape = 'u32[144,128]{1,0:T(1,128)}', space=vmem, size = 0x12000, scoped, tag = 'internal scratch']
  %s0 = inlined_call_operand.hbm [shape: bf16[2,128,512], index: 0, kind: input, shape index: {}]
  %s1 = inlined_call_operand.hbm [shape: bf16[512,1536], index: 1, kind: input, shape index: {}]
  %s2 = inlined_call_operand.hbm [shape: f32[1,1536], index: 2, kind: input, shape index: {}]
  %s3 = inlined_call_operand.hbm [shape: bf16[512,512], index: 3, kind: input, shape index: {}]
  %s4 = inlined_call_operand.hbm [shape: f32[1,512], index: 4, kind: input, shape index: {}]
  %s5 = inlined_call_operand.hbm [shape: f32[2,128,512], index: 5, kind: output, shape index: {0}]
  %s6 = inlined_call_operand.hbm [shape: f32[2,4,128,128], index: 6, kind: output, shape index: {1}]
  %7 = xla_tuple %s5, %s6
  %s8 = sld [smem:[#allocation0]]
  $region81: #{tpu_custom_call.1} parent=0
    _
  %s10 = ssub.s32 1, %s8
  %s11 = scalar_select 0, %s10, %s8
  $region1: #{tpu_custom_call.1} parent=0
    #allocation2 [shape = 'u8[262144]{0}', space=vmem, size = 0x40000, scoped, tag = 'input window, operand 0']
    #allocation3 [shape = 's32[2]{0}', space=sflag, size = 0x8, scoped, tag = 'scoped memory for tpu_custom_call.1']
    #allocation4 [shape = 's32[2]{0}', space=sflag, size = 0x8, scoped, tag = 'scoped memory for tpu_custom_call.1']
    #allocation5 [shape = 'u8[1572864]{0}', space=vmem, size = 0x180000, scoped, tag = 'input window, operand 1, single buffered']
    #allocation6 [shape = 's32[1]{0}', space=sflag, size = 0x4, scoped, tag = 'scoped memory for tpu_custom_call.1']
    #allocation7 [shape = 'u8[6144]{0}', space=vmem, size = 0x1800, scoped, tag = 'input window, operand 2, single buffered']
    #allocation8 [shape = 'u8[524288]{0}', space=vmem, size = 0x80000, scoped, tag = 'input window, operand 3, single buffered']
    #allocation9 [shape = 's32[1]{0}', space=sflag, size = 0x4, scoped, tag = 'scoped memory for tpu_custom_call.1']
    #allocation10 [shape = 'u8[2048]{0}', space=vmem, size = 0x800, scoped, tag = 'input window, operand 4, single buffered']
    #allocation11 [shape = 'u8[524288]{0}', space=vmem, size = 0x80000, scoped, tag = 'output window, operand 0']
    #allocation12 [shape = 'u8[524288]{0}', space=vmem, size = 0x80000, scoped, tag = 'output window, operand 1']
    #allocation13 [shape = 's32[2]{0}', space=sflag, size = 0x8, scoped, tag = 'scoped memory for tpu_custom_call.1']
    %12 = vsyncpa [#allocation3], 0
    %s13 = scalar_lea.sflag [#allocation3], 1
    %14 = vsyncpa %s13, 0
    %15 = vsyncpa [#allocation6], 0
    %16 = vsyncpa [#allocation9], 0
    %17 = vsyncpa [#allocation4], 0
    %s18 = scalar_lea.sflag [#allocation4], 1
    %19 = vsyncpa %s18, 0
    %20 = vsyncpa [#allocation13], 0
    %s21 = scalar_lea.sflag [#allocation13], 1
    %22 = vsyncpa %s21, 0
    loop: start=0, step=1, limit=4
    $region2: #{tpu_custom_call.1} parent=1 // loop_pre_header
      _
    $region3: #{tpu_custom_call.1} parent=1 // loop_header
      %s24 = sphi 0, %s28
      %p25 = scmp.ge.s32.totalorder %s24, 4
      %s34 = sphi 0, %s36
      %s37 = sphi 0, %s34
      %s38 = sphi 0, %s37
      %s54 = sphi 0, %s38
      %s58 = sphi 0, %s58
      %s60 = sphi 0, %s58
      %s61 = sphi 0, %s60
      %s75 = sphi 0, %s61
      %s79 = sphi 0, %s79
      %s81 = sphi 0, %s79
      %s82 = sphi 0, %s81
      %s96 = sphi 0, %s82
      %s100 = sphi 0, %s100
      %s102 = sphi 0, %s100
      %s103 = sphi 0, %s102
      %s117 = sphi 0, %s103
      %s121 = sphi 0, %s121
      %s123 = sphi 0, %s121
      %s124 = sphi 0, %s123
      %s138 = sphi 0, %s124
      %s144 = sphi 0, %s146
      %s147 = sphi 0, %s144
      %s148 = sphi 0, %s147
      %s164 = sphi 0, %s148
      %s170 = sphi 0, %s172
      %s173 = sphi 0, %s170
      %s174 = sphi 0, %s173
      %s190 = sphi 0, %s174
    $region4: #{tpu_custom_call.1} parent=1 // loop_header_branch
      %27 = sbr.rel (%p25) target = $region8
    $region5: #{tpu_custom_call.1} parent=1 // loop_body
      %s29 = ssub.s32 %s24, 1
      %s30 = ssub.s32 %s24, 2
      %s31 = sadd.s32 %s24, 1
      %s32 = ssub.s32 %s24, %s31
      %p33 = scmp.eq.s32.totalorder %s32, 0
      %s35 = sadd.s32 %s34, 1
      %s36 = scalar_select %p33, %s34, %s35
      %p39 = pneg %p33
      %p40 = scmp.eq.s32.totalorder %s24, 1
      %p41 = por %p39, %p40
      %p42 = scmp.ne.s32.totalorder %s34, %s37
      %p43 = scmp.eq.s32.totalorder %s24, 0
      %p44 = por %p42, %p43
      %p45 = scmp.ne.s32.totalorder %s34, %s37
      %p46 = scmp.eq.s32.totalorder %s29, 1
      %p47 = por %p45, %p46
      %p48 = scmp.ne.s32.totalorder %s37, %s38
      %p49 = scmp.eq.s32.totalorder %s29, 0
      %p50 = por %p48, %p49
      %p51 = scmp.ne.s32.totalorder %s37, %s38
      %p52 = scmp.eq.s32.totalorder %s30, 1
      %p53 = por %p51, %p52
      %p55 = scmp.ne.s32.totalorder %s38, %s54
      %p56 = scmp.eq.s32.totalorder %s30, 0
      %p57 = por %p55, %p56
      %s59 = sadd.s32 %s58, 1
      %p62 = scmp.eq.s32.totalorder %s24, 1
      %p63 = scmp.ne.s32.totalorder %s58, %s60
      %p64 = scmp.eq.s32.totalorder %s24, 0
      %p65 = por %p63, %p64
      %p66 = scmp.ne.s32.totalorder %s58, %s60
      %p67 = scmp.eq.s32.totalorder %s29, 1
      %p68 = por %p66, %p67
      %p69 = scmp.ne.s32.totalorder %s60, %s61
      %p70 = scmp.eq.s32.totalorder %s29, 0
      %p71 = por %p69, %p70
      %p72 = scmp.ne.s32.totalorder %s60, %s61
      %p73 = scmp.eq.s32.totalorder %s30, 1
      %p74 = por %p72, %p73
      %p76 = scmp.ne.s32.totalorder %s61, %s75
      %p77 = scmp.eq.s32.totalorder %s30, 0
      %p78 = por %p76, %p77
      %s80 = sadd.s32 %s79, 1
      %p83 = scmp.eq.s32.totalorder %s24, 1
      %p84 = scmp.ne.s32.totalorder %s79, %s81
      %p85 = scmp.eq.s32.totalorder %s24, 0
      %p86 = por %p84, %p85
      %p87 = scmp.ne.s32.totalorder %s79, %s81
      %p88 = scmp.eq.s32.totalorder %s29, 1
      %p89 = por %p87, %p88
      %p90 = scmp.ne.s32.totalorder %s81, %s82
      %p91 = scmp.eq.s32.totalorder %s29, 0
      %p92 = por %p90, %p91
      %p93 = scmp.ne.s32.totalorder %s81, %s82
      %p94 = scmp.eq.s32.totalorder %s30, 1
      %p95 = por %p93, %p94
      %p97 = scmp.ne.s32.totalorder %s82, %s96
      %p98 = scmp.eq.s32.totalorder %s30, 0
      %p99 = por %p97, %p98
      %s101 = sadd.s32 %s100, 1
      %p104 = scmp.eq.s32.totalorder %s24, 1
      %p105 = scmp.ne.s32.totalorder %s100, %s102
      %p106 = scmp.eq.s32.totalorder %s24, 0
      %p107 = por %p105, %p106
      %p108 = scmp.ne.s32.totalorder %s100, %s102
      %p109 = scmp.eq.s32.totalorder %s29, 1
      %p110 = por %p108, %p109
      %p111 = scmp.ne.s32.totalorder %s102, %s103
      %p112 = scmp.eq.s32.totalorder %s29, 0
      %p113 = por %p111, %p112
      %p114 = scmp.ne.s32.totalorder %s102, %s103
      %p115 = scmp.eq.s32.totalorder %s30, 1
      %p116 = por %p114, %p115
      %p118 = scmp.ne.s32.totalorder %s103, %s117
      %p119 = scmp.eq.s32.totalorder %s30, 0
      %p120 = por %p118, %p119
      %s122 = sadd.s32 %s121, 1
      %p125 = scmp.eq.s32.totalorder %s24, 1
      %p126 = scmp.ne.s32.totalorder %s121, %s123
      %p127 = scmp.eq.s32.totalorder %s24, 0
      %p128 = por %p126, %p127
      %p129 = scmp.ne.s32.totalorder %s121, %s123
      %p130 = scmp.eq.s32.totalorder %s29, 1
      %p131 = por %p129, %p130
      %p132 = scmp.ne.s32.totalorder %s123, %s124
      %p133 = scmp.eq.s32.totalorder %s29, 0
      %p134 = por %p132, %p133
      %p135 = scmp.ne.s32.totalorder %s123, %s124
      %p136 = scmp.eq.s32.totalorder %s30, 1
      %p137 = por %p135, %p136
      %p139 = scmp.ne.s32.totalorder %s124, %s138
      %p140 = scmp.eq.s32.totalorder %s30, 0
      %p141 = por %p139, %p140
      %s142 = ssub.s32 %s24, %s31
      %p143 = scmp.eq.s32.totalorder %s142, 0
      %s145 = sadd.s32 %s144, 1
      %s146 = scalar_select %p143, %s144, %s145
      %p149 = pneg %p143
      %p150 = scmp.eq.s32.totalorder %s24, 1
      %p151 = por %p149, %p150
      %p152 = scmp.ne.s32.totalorder %s144, %s147
      %p153 = scmp.eq.s32.totalorder %s24, 0
      %p154 = por %p152, %p153
      %p155 = scmp.ne.s32.totalorder %s144, %s147
      %p156 = scmp.eq.s32.totalorder %s29, 1
      %p157 = por %p155, %p156
      %p158 = scmp.ne.s32.totalorder %s147, %s148
      %p159 = scmp.eq.s32.totalorder %s29, 0
      %p160 = por %p158, %p159
      %p161 = scmp.ne.s32.totalorder %s147, %s148
      %p162 = scmp.eq.s32.totalorder %s30, 1
      %p163 = por %p161, %p162
      %p165 = scmp.ne.s32.totalorder %s148, %s164
      %p166 = scmp.eq.s32.totalorder %s30, 0
      %p167 = por %p165, %p166
      %s168 = ssub.s32 %s24, %s31
      %p169 = scmp.eq.s32.totalorder %s168, 0
      %s171 = sadd.s32 %s170, 1
      %s172 = scalar_select %p169, %s170, %s171
      %p175 = pneg %p169
      %p176 = scmp.eq.s32.totalorder %s24, 1
      %p177 = por %p175, %p176
      %p178 = scmp.ne.s32.totalorder %s170, %s173
      %p179 = scmp.eq.s32.totalorder %s24, 0
      %p180 = por %p178, %p179
      %p181 = scmp.ne.s32.totalorder %s170, %s173
      %p182 = scmp.eq.s32.totalorder %s29, 1
      %p183 = por %p181, %p182
      %p184 = scmp.ne.s32.totalorder %s173, %s174
      %p185 = scmp.eq.s32.totalorder %s29, 0
      %p186 = por %p184, %p185
      %p187 = scmp.ne.s32.totalorder %s173, %s174
      %p188 = scmp.eq.s32.totalorder %s30, 1
      %p189 = por %p187, %p188
      %p191 = scmp.ne.s32.totalorder %s174, %s190
      %p192 = scmp.eq.s32.totalorder %s30, 0
      %p193 = por %p191, %p192
      %p194 = scmp.le.s32.totalorder 1, %s24
      %p195 = scmp.lt.s32.totalorder %s24, 3
      %p196 = pnand %p194, %p195
      %p197 = pneg %p196
      // Predicated region
      $region9: #{tpu_custom_call.1} parent=5 // pred_check
        _
      $region10: #{tpu_custom_call.1} parent=5 // pred_check_branch
        %199 = sbr.rel (%p196) target = $region12
      $region11: #{tpu_custom_call.1} parent=5 // pred_region
        %s200 = ssub.s32 %s24, 1
        // Predicated region
        $region13: #{tpu_custom_call.1} parent=11 // pred_check
          %p201 = pneg %p71
        $region14: #{tpu_custom_call.1} parent=11 // pred_check_branch
          %203 = sbr.rel (%p201) target = $region16
        $region15: #{tpu_custom_call.1} parent=11 // pred_region
          %s205 = ssub.s32 49152, 49152
          %206 = vsyncadd [#allocation6], %s205
          %s207 = sshll.u32 [#allocation5], 4
          %s208 = int_to_ptr.vmem [resolvable:$true] %s207
          %213 = dma.hbm_to_vmem [thread:$0]  %s1, 49152, %s208, [#allocation6], 768, 768, 48
        $region16: #{tpu_custom_call.1} parent=11 // pred_fallthru
          _
        // Predicated region
        $region17: #{tpu_custom_call.1} parent=11 // pred_check
          %p214 = pneg %p92
        $region18: #{tpu_custom_call.1} parent=11 // pred_check_branch
          %216 = sbr.rel (%p214) target = $region20
        $region19: #{tpu_custom_call.1} parent=11 // pred_region
          %s218 = ssub.s32 192, 192
          %219 = vsyncadd [#allocation6], %s218
          %s221 = sshll.u32 [#allocation7], 4
          %s222 = int_to_ptr.vmem [resolvable:$true] %s221
          %224 = dma.hbm_to_vmem [thread:$0]  %s2, 192, %s222, [#allocation6]
        $region20: #{tpu_custom_call.1} parent=11 // pred_fallthru
          _
        // Predicated region
        $region21: #{tpu_custom_call.1} parent=11 // pred_check
          %p225 = pneg %p113
        $region22: #{tpu_custom_call.1} parent=11 // pred_check_branch
          %227 = sbr.rel (%p225) target = $region24
        $region23: #{tpu_custom_call.1} parent=11 // pred_region
          %s229 = ssub.s32 16384, 16384
          %230 = vsyncadd [#allocation9], %s229
          %s231 = sshll.u32 [#allocation8], 4
          %s232 = int_to_ptr.vmem [resolvable:$true] %s231
          %237 = dma.hbm_to_vmem [thread:$0]  %s3, 16384, %s232, [#allocation9], 256, 256, 16
        $region24: #{tpu_custom_call.1} parent=11 // pred_fallthru
          _
        // Predicated region
        $region25: #{tpu_custom_call.1} parent=11 // pred_check
          %p238 = pneg %p134
        $region26: #{tpu_custom_call.1} parent=11 // pred_check_branch
          %240 = sbr.rel (%p238) target = $region28
        $region27: #{tpu_custom_call.1} parent=11 // pred_region
          %s242 = ssub.s32 64, 64
          %243 = vsyncadd [#allocation9], %s242
          %s245 = sshll.u32 [#allocation10], 4
          %s246 = int_to_ptr.vmem [resolvable:$true] %s245
          %248 = dma.hbm_to_vmem [thread:$0]  %s4, 64, %s246, [#allocation9]
        $region28: #{tpu_custom_call.1} parent=11 // pred_fallthru
          _
      $region12: #{tpu_custom_call.1} parent=5 // pred_fallthru
        _
      %p249 = scmp.lt.s32.totalorder %s24, 2
      // Predicated region
      $region29: #{tpu_custom_call.1} parent=5 // pred_check
        %p250 = pneg %p249
      $region30: #{tpu_custom_call.1} parent=5 // pred_check_branch
        %252 = sbr.rel (%p250) target = $region32
      $region31: #{tpu_custom_call.1} parent=5 // pred_region
        // Predicated region
        $region33: #{tpu_custom_call.1} parent=31 // pred_check
          %p253 = pneg %p44
        $region34: #{tpu_custom_call.1} parent=31 // pred_check_branch
          %255 = sbr.rel (%p253) target = $region36
        $region35: #{tpu_custom_call.1} parent=31 // pred_region
          %s256 = sand.u32 %s34, 1
          %s257 = scalar_lea.sflag [#allocation3], %s256
          %s258 = sand.u32 %s34, 1
          %s259 = smul.addr %s258, 256
          %s260 = scalar_lea.vmem [#allocation2], %s259
          %s262 = ssub.s32 4096, 4096
          %263 = vsyncadd %s257, %s262
          %s264 = smul.addr %s24, 64
          %s265 = smul.addr %s264, 64
          %s266 = scalar_lea.hbm %s0, %s265
          %s267 = sshll.u32 %s260, 4
          %s268 = int_to_ptr.vmem [resolvable:$true] %s267
          %273 = dma.hbm_to_vmem [thread:$0]  %s266, 4096, %s268, %s257, 256, 256, 16
        $region36: #{tpu_custom_call.1} parent=31 // pred_fallthru
          _
      $region32: #{tpu_custom_call.1} parent=5 // pred_fallthru
        _
      %p274 = scmp.le.s32.totalorder 1, %s24
      %p275 = scmp.lt.s32.totalorder %s24, 3
      %p276 = pnand %p274, %p275
      %p277 = pneg %p276
      // Predicated region
      $region37: #{tpu_custom_call.1} parent=5 // pred_check
        _
      $region38: #{tpu_custom_call.1} parent=5 // pred_check_branch
        %279 = sbr.rel (%p276) target = $region40
      $region39: #{tpu_custom_call.1} parent=5 // pred_region
        %s280 = ssub.s32 %s24, 1
        %s281 = sand.u32 %s37, 1
        %s282 = scalar_lea.sflag [#allocation3], %s281
        %s283 = sand.u32 %s37, 1
        %s284 = smul.addr %s283, 256
        %s285 = scalar_lea.vmem [#allocation2], %s284
        // Predicated region
        $region41: #{tpu_custom_call.1} parent=39 // pred_check
          %p286 = pneg %p50
        $region42: #{tpu_custom_call.1} parent=39 // pred_check_branch
          %288 = sbr.rel (%p286) target = $region44
        $region43: #{tpu_custom_call.1} parent=39 // pred_region
          %289 = dma.done %s282, 4096
        $region44: #{tpu_custom_call.1} parent=39 // pred_fallthru
          _
        // Predicated region
        $region45: #{tpu_custom_call.1} parent=39 // pred_check
          %p290 = pneg %p71
        $region46: #{tpu_custom_call.1} parent=39 // pred_check_branch
          %292 = sbr.rel (%p290) target = $region48
        $region47: #{tpu_custom_call.1} parent=39 // pred_region
          %293 = dma.done [#allocation6], 49152
        $region48: #{tpu_custom_call.1} parent=39 // pred_fallthru
          _
        // Predicated region
        $region49: #{tpu_custom_call.1} parent=39 // pred_check
          %p294 = pneg %p92
        $region50: #{tpu_custom_call.1} parent=39 // pred_check_branch
          %296 = sbr.rel (%p294) target = $region52
        $region51: #{tpu_custom_call.1} parent=39 // pred_region
          %297 = dma.done [#allocation6], 192
        $region52: #{tpu_custom_call.1} parent=39 // pred_fallthru
          _
        // Predicated region
        $region53: #{tpu_custom_call.1} parent=39 // pred_check
          %p298 = pneg %p113
        $region54: #{tpu_custom_call.1} parent=39 // pred_check_branch
          %300 = sbr.rel (%p298) target = $region56
        $region55: #{tpu_custom_call.1} parent=39 // pred_region
          %301 = dma.done [#allocation9], 16384
        $region56: #{tpu_custom_call.1} parent=39 // pred_fallthru
          _
        // Predicated region
        $region57: #{tpu_custom_call.1} parent=39 // pred_check
          %p302 = pneg %p134
        $region58: #{tpu_custom_call.1} parent=39 // pred_check_branch
          %304 = sbr.rel (%p302) target = $region60
        $region59: #{tpu_custom_call.1} parent=39 // pred_region
          %305 = dma.done [#allocation9], 64
        $region60: #{tpu_custom_call.1} parent=39 // pred_fallthru
          _
        %s306 = sand.u32 %s37, 1
        %s307 = scalar_lea.sflag [#allocation3], %s306
        %s308 = sand.u32 %s37, 1
        %s309 = smul.addr %s308, 256
        %s310 = scalar_lea.vmem [#allocation2], %s309
        %p311 = pneg %p50
        %p312 = pneg %p47
        %p313 = pneg %p71
        %p314 = pneg %p68
        %p315 = pneg %p92
        %p316 = pneg %p89
        %p317 = pneg %p113
        %p318 = pneg %p110
        %p319 = pneg %p134
        %p320 = pneg %p131
        %p321 = pneg %p160
        %p322 = pneg %p157
        %s323 = sand.u32 %s147, 1
        %s324 = scalar_lea.sflag [#allocation4], %s323
        %s325 = sand.u32 %s147, 1
        %s326 = smul.addr %s325, 512
        %s327 = scalar_lea.vmem [#allocation11], %s326
        %p328 = pneg %p186
        %p329 = pneg %p183
        %s330 = sand.u32 %s173, 1
        %s331 = scalar_lea.sflag [#allocation13], %s330
        %s332 = sand.u32 %s173, 1
        %s333 = smul.addr %s332, 512
        %s334 = scalar_lea.vmem [#allocation12], %s333
        %v336 = vld [vmem:[%s285] sm:$0xff]
        %v337 = vld [vmem:[%s285 + $0x8] sm:$0xff]
        %v338 = vld [vmem:[%s285 + $0x10] sm:$0xff]
        %v339 = vld [vmem:[%s285 + $0x18] sm:$0xff]
        %v340 = vld [vmem:[%s285 + $0x20] sm:$0xff]
        %v341 = vld [vmem:[%s285 + $0x28] sm:$0xff]
        %v342 = vld [vmem:[%s285 + $0x30] sm:$0xff]
        %v343 = vld [vmem:[%s285 + $0x38] sm:$0xff]
        %v344 = vld [vmem:[%s285 + $0x40] sm:$0xff]
        %v345 = vld [vmem:[%s285 + $0x48] sm:$0xff]
        %v346 = vld [vmem:[%s285 + $0x50] sm:$0xff]
        %v347 = vld [vmem:[%s285 + $0x58] sm:$0xff]
        %v348 = vld [vmem:[%s285 + $0x60] sm:$0xff]
        %v349 = vld [vmem:[%s285 + $0x68] sm:$0xff]
        %v350 = vld [vmem:[%s285 + $0x70] sm:$0xff]
        %v351 = vld [vmem:[%s285 + $0x78] sm:$0xff]
        %v352 = vld [vmem:[%s285 + $0x80] sm:$0xff]
        %v353 = vld [vmem:[%s285 + $0x88] sm:$0xff]
        %v354 = vld [vmem:[%s285 + $0x90] sm:$0xff]
        %v355 = vld [vmem:[%s285 + $0x98] sm:$0xff]
        %v356 = vld [vmem:[%s285 + $0xa0] sm:$0xff]
        %v357 = vld [vmem:[%s285 + $0xa8] sm:$0xff]
        %v358 = vld [vmem:[%s285 + $0xb0] sm:$0xff]
        %v359 = vld [vmem:[%s285 + $0xb8] sm:$0xff]
        %v360 = vld [vmem:[%s285 + $0xc0] sm:$0xff]
        %v361 = vld [vmem:[%s285 + $0xc8] sm:$0xff]
        %v362 = vld [vmem:[%s285 + $0xd0] sm:$0xff]
        %v363 = vld [vmem:[%s285 + $0xd8] sm:$0xff]
        %v364 = vld [vmem:[%s285 + $0xe0] sm:$0xff]
        %v365 = vld [vmem:[%s285 + $0xe8] sm:$0xff]
        %v366 = vld [vmem:[%s285 + $0xf0] sm:$0xff]
        %v367 = vld [vmem:[%s285 + $0xf8] sm:$0xff]
        %v368 = vld [vmem:[#allocation5] sm:$0xff]
        %v369 = vld [vmem:[#allocation5 + $0x8] sm:$0xff]
        %v370 = vld [vmem:[#allocation5 + $0x10] sm:$0xff]
        %v371 = vld [vmem:[#allocation5 + $0x18] sm:$0xff]
        %v372 = vld [vmem:[#allocation5 + $0x20] sm:$0xff]
        %v373 = vld [vmem:[#allocation5 + $0x28] sm:$0xff]
        %v374 = vld [vmem:[#allocation5 + $0x30] sm:$0xff]
        %v375 = vld [vmem:[#allocation5 + $0x38] sm:$0xff]
        %v376 = vld [vmem:[#allocation5 + $0x40] sm:$0xff]
        %v377 = vld [vmem:[#allocation5 + $0x48] sm:$0xff]
        %v378 = vld [vmem:[#allocation5 + $0x50] sm:$0xff]
        %v379 = vld [vmem:[#allocation5 + $0x58] sm:$0xff]
        %v380 = vld [vmem:[#allocation5 + $0x60] sm:$0xff]
        %v381 = vld [vmem:[#allocation5 + $0x68] sm:$0xff]
        %v382 = vld [vmem:[#allocation5 + $0x70] sm:$0xff]
        %v383 = vld [vmem:[#allocation5 + $0x78] sm:$0xff]
        %v384 = vld [vmem:[#allocation5 + $0x80] sm:$0xff]
        %v385 = vld [vmem:[#allocation5 + $0x88] sm:$0xff]
        %v386 = vld [vmem:[#allocation5 + $0x90] sm:$0xff]
        %v387 = vld [vmem:[#allocation5 + $0x98] sm:$0xff]
        %v388 = vld [vmem:[#allocation5 + $0xa0] sm:$0xff]
        %v389 = vld [vmem:[#allocation5 + $0xa8] sm:$0xff]
        %v390 = vld [vmem:[#allocation5 + $0xb0] sm:$0xff]
        %v391 = vld [vmem:[#allocation5 + $0xb8] sm:$0xff]
        %v392 = vld [vmem:[#allocation5 + $0xc0] sm:$0xff]
        %v393 = vld [vmem:[#allocation5 + $0xc8] sm:$0xff]
        %v394 = vld [vmem:[#allocation5 + $0xd0] sm:$0xff]
        %v395 = vld [vmem:[#allocation5 + $0xd8] sm:$0xff]
        %v396 = vld [vmem:[#allocation5 + $0xe0] sm:$0xff]
        %v397 = vld [vmem:[#allocation5 + $0xe8] sm:$0xff]
        %v398 = vld [vmem:[#allocation5 + $0xf0] sm:$0xff]
        %v399 = vld [vmem:[#allocation5 + $0xf8] sm:$0xff]
        %v400 = vld [vmem:[#allocation5 + $0x100] sm:$0xff]
        %v401 = vld [vmem:[#allocation5 + $0x108] sm:$0xff]
        %v402 = vld [vmem:[#allocation5 + $0x110] sm:$0xff]
        %v403 = vld [vmem:[#allocation5 + $0x118] sm:$0xff]
        %v404 = vld [vmem:[#allocation5 + $0x120] sm:$0xff]
        %v405 = vld [vmem:[#allocation5 + $0x128] sm:$0xff]
        %v406 = vld [vmem:[#allocation5 + $0x130] sm:$0xff]
        %v407 = vld [vmem:[#allocation5 + $0x138] sm:$0xff]
        %v408 = vld [vmem:[#allocation5 + $0x140] sm:$0xff]
        %v409 = vld [vmem:[#allocation5 + $0x148] sm:$0xff]
        %v410 = vld [vmem:[#allocation5 + $0x150] sm:$0xff]
        %v411 = vld [vmem:[#allocation5 + $0x158] sm:$0xff]
        %v412 = vld [vmem:[#allocation5 + $0x160] sm:$0xff]
        %v413 = vld [vmem:[#allocation5 + $0x168] sm:$0xff]
        %v414 = vld [vmem:[#allocation5 + $0x170] sm:$0xff]
        %v415 = vld [vmem:[#allocation5 + $0x178] sm:$0xff]
        %v416 = vld [vmem:[#allocation5 + $0x180] sm:$0xff]
        %v417 = vld [vmem:[#allocation5 + $0x188] sm:$0xff]
        %v418 = vld [vmem:[#allocation5 + $0x190] sm:$0xff]
        %v419 = vld [vmem:[#allocation5 + $0x198] sm:$0xff]
        %v420 = vld [vmem:[#allocation5 + $0x1a0] sm:$0xff]
        %v421 = vld [vmem:[#allocation5 + $0x1a8] sm:$0xff]
        %v422 = vld [vmem:[#allocation5 + $0x1b0] sm:$0xff]
        %v423 = vld [vmem:[#allocation5 + $0x1b8] sm:$0xff]
        %v424 = vld [vmem:[#allocation5 + $0x1c0] sm:$0xff]
        %v425 = vld [vmem:[#allocation5 + $0x1c8] sm:$0xff]
        %v426 = vld [vmem:[#allocation5 + $0x1d0] sm:$0xff]
        %v427 = vld [vmem:[#allocation5 + $0x1d8] sm:$0xff]
        %v428 = vld [vmem:[#allocation5 + $0x1e0] sm:$0xff]
        %v429 = vld [vmem:[#allocation5 + $0x1e8] sm:$0xff]
        %v430 = vld [vmem:[#allocation5 + $0x1f0] sm:$0xff]
        %v431 = vld [vmem:[#allocation5 + $0x1f8] sm:$0xff]
        %v432 = vld [vmem:[#allocation5 + $0x200] sm:$0xff]
        %v433 = vld [vmem:[#allocation5 + $0x208] sm:$0xff]
        %v434 = vld [vmem:[#allocation5 + $0x210] sm:$0xff]
        %v435 = vld [vmem:[#allocation5 + $0x218] sm:$0xff]
        %v436 = vld [vmem:[#allocation5 + $0x220] sm:$0xff]
        %v437 = vld [vmem:[#allocation5 + $0x228] sm:$0xff]
        %v438 = vld [vmem:[#allocation5 + $0x230] sm:$0xff]
        %v439 = vld [vmem:[#allocation5 + $0x238] sm:$0xff]
        %v440 = vld [vmem:[#allocation5 + $0x240] sm:$0xff]
        %v441 = vld [vmem:[#allocation5 + $0x248] sm:$0xff]
        %v442 = vld [vmem:[#allocation5 + $0x250] sm:$0xff]
        %v443 = vld [vmem:[#allocation5 + $0x258] sm:$0xff]
        %v444 = vld [vmem:[#allocation5 + $0x260] sm:$0xff]
        %v445 = vld [vmem:[#allocation5 + $0x268] sm:$0xff]
        %v446 = vld [vmem:[#allocation5 + $0x270] sm:$0xff]
        %v447 = vld [vmem:[#allocation5 + $0x278] sm:$0xff]
        %v448 = vld [vmem:[#allocation5 + $0x280] sm:$0xff]
        %v449 = vld [vmem:[#allocation5 + $0x288] sm:$0xff]
        %v450 = vld [vmem:[#allocation5 + $0x290] sm:$0xff]
        %v451 = vld [vmem:[#allocation5 + $0x298] sm:$0xff]
        %v452 = vld [vmem:[#allocation5 + $0x2a0] sm:$0xff]
        %v453 = vld [vmem:[#allocation5 + $0x2a8] sm:$0xff]
        %v454 = vld [vmem:[#allocation5 + $0x2b0] sm:$0xff]
        %v455 = vld [vmem:[#allocation5 + $0x2b8] sm:$0xff]
        %v456 = vld [vmem:[#allocation5 + $0x2c0] sm:$0xff]
        %v457 = vld [vmem:[#allocation5 + $0x2c8] sm:$0xff]
        %v458 = vld [vmem:[#allocation5 + $0x2d0] sm:$0xff]
        %v459 = vld [vmem:[#allocation5 + $0x2d8] sm:$0xff]
        %v460 = vld [vmem:[#allocation5 + $0x2e0] sm:$0xff]
        %v461 = vld [vmem:[#allocation5 + $0x2e8] sm:$0xff]
        %v462 = vld [vmem:[#allocation5 + $0x2f0] sm:$0xff]
        %v463 = vld [vmem:[#allocation5 + $0x2f8] sm:$0xff]
        %v464 = vld [vmem:[#allocation5 + $0x300] sm:$0xff]
        %v465 = vld [vmem:[#allocation5 + $0x308] sm:$0xff]
        %v466 = vld [vmem:[#allocation5 + $0x310] sm:$0xff]
        %v467 = vld [vmem:[#allocation5 + $0x318] sm:$0xff]
        %v468 = vld [vmem:[#allocation5 + $0x320] sm:$0xff]
        %v469 = vld [vmem:[#allocation5 + $0x328] sm:$0xff]
        %v470 = vld [vmem:[#allocation5 + $0x330] sm:$0xff]
        %v471 = vld [vmem:[#allocation5 + $0x338] sm:$0xff]
        %v472 = vld [vmem:[#allocation5 + $0x340] sm:$0xff]
        %v473 = vld [vmem:[#allocation5 + $0x348] sm:$0xff]
        %v474 = vld [vmem:[#allocation5 + $0x350] sm:$0xff]
        %v475 = vld [vmem:[#allocation5 + $0x358] sm:$0xff]
        %v476 = vld [vmem:[#allocation5 + $0x360] sm:$0xff]
        %v477 = vld [vmem:[#allocation5 + $0x368] sm:$0xff]
        %v478 = vld [vmem:[#allocation5 + $0x370] sm:$0xff]
        %v479 = vld [vmem:[#allocation5 + $0x378] sm:$0xff]
        %v480 = vld [vmem:[#allocation5 + $0x380] sm:$0xff]
        %v481 = vld [vmem:[#allocation5 + $0x388] sm:$0xff]
        %v482 = vld [vmem:[#allocation5 + $0x390] sm:$0xff]
        %v483 = vld [vmem:[#allocation5 + $0x398] sm:$0xff]
        %v484 = vld [vmem:[#allocation5 + $0x3a0] sm:$0xff]
        %v485 = vld [vmem:[#allocation5 + $0x3a8] sm:$0xff]
        %v486 = vld [vmem:[#allocation5 + $0x3b0] sm:$0xff]
        %v487 = vld [vmem:[#allocation5 + $0x3b8] sm:$0xff]
        %v488 = vld [vmem:[#allocation5 + $0x3c0] sm:$0xff]
        %v489 = vld [vmem:[#allocation5 + $0x3c8] sm:$0xff]
        %v490 = vld [vmem:[#allocation5 + $0x3d0] sm:$0xff]
        %v491 = vld [vmem:[#allocation5 + $0x3d8] sm:$0xff]
        %v492 = vld [vmem:[#allocation5 + $0x3e0] sm:$0xff]
        %v493 = vld [vmem:[#allocation5 + $0x3e8] sm:$0xff]
        %v494 = vld [vmem:[#allocation5 + $0x3f0] sm:$0xff]
        %v495 = vld [vmem:[#allocation5 + $0x3f8] sm:$0xff]
        %v496 = vld [vmem:[#allocation5 + $0x400] sm:$0xff]
        %v497 = vld [vmem:[#allocation5 + $0x408] sm:$0xff]
        %v498 = vld [vmem:[#allocation5 + $0x410] sm:$0xff]
        %v499 = vld [vmem:[#allocation5 + $0x418] sm:$0xff]
        %v500 = vld [vmem:[#allocation5 + $0x420] sm:$0xff]
        %v501 = vld [vmem:[#allocation5 + $0x428] sm:$0xff]
        %v502 = vld [vmem:[#allocation5 + $0x430] sm:$0xff]
        %v503 = vld [vmem:[#allocation5 + $0x438] sm:$0xff]
        %v504 = vld [vmem:[#allocation5 + $0x440] sm:$0xff]
        %v505 = vld [vmem:[#allocation5 + $0x448] sm:$0xff]
        %v506 = vld [vmem:[#allocation5 + $0x450] sm:$0xff]
        %v507 = vld [vmem:[#allocation5 + $0x458] sm:$0xff]
        %v508 = vld [vmem:[#allocation5 + $0x460] sm:$0xff]
        %v509 = vld [vmem:[#allocation5 + $0x468] sm:$0xff]
        %v510 = vld [vmem:[#allocation5 + $0x470] sm:$0xff]
        %v511 = vld [vmem:[#allocation5 + $0x478] sm:$0xff]
        %v512 = vld [vmem:[#allocation5 + $0x480] sm:$0xff]
        %v513 = vld [vmem:[#allocation5 + $0x488] sm:$0xff]
        %v514 = vld [vmem:[#allocation5 + $0x490] sm:$0xff]
        %v515 = vld [vmem:[#allocation5 + $0x498] sm:$0xff]
        %v516 = vld [vmem:[#allocation5 + $0x4a0] sm:$0xff]
        %v517 = vld [vmem:[#allocation5 + $0x4a8] sm:$0xff]
        %v518 = vld [vmem:[#allocation5 + $0x4b0] sm:$0xff]
        %v519 = vld [vmem:[#allocation5 + $0x4b8] sm:$0xff]
        %v520 = vld [vmem:[#allocation5 + $0x4c0] sm:$0xff]
        %v521 = vld [vmem:[#allocation5 + $0x4c8] sm:$0xff]
        %v522 = vld [vmem:[#allocation5 + $0x4d0] sm:$0xff]
        %v523 = vld [vmem:[#allocation5 + $0x4d8] sm:$0xff]
        %v524 = vld [vmem:[#allocation5 + $0x4e0] sm:$0xff]
        %v525 = vld [vmem:[#allocation5 + $0x4e8] sm:$0xff]
        %v526 = vld [vmem:[#allocation5 + $0x4f0] sm:$0xff]
        %v527 = vld [vmem:[#allocation5 + $0x4f8] sm:$0xff]
        %v528 = vld [vmem:[#allocation5 + $0x500] sm:$0xff]
        %v529 = vld [vmem:[#allocation5 + $0x508] sm:$0xff]
        %v530 = vld [vmem:[#allocation5 + $0x510] sm:$0xff]
        %v531 = vld [vmem:[#allocation5 + $0x518] sm:$0xff]
        %v532 = vld [vmem:[#allocation5 + $0x520] sm:$0xff]
        %v533 = vld [vmem:[#allocation5 + $0x528] sm:$0xff]
        %v534 = vld [vmem:[#allocation5 + $0x530] sm:$0xff]
        %v535 = vld [vmem:[#allocation5 + $0x538] sm:$0xff]
        %v536 = vld [vmem:[#allocation5 + $0x540] sm:$0xff]
        %v537 = vld [vmem:[#allocation5 + $0x548] sm:$0xff]
        %v538 = vld [vmem:[#allocation5 + $0x550] sm:$0xff]
        %v539 = vld [vmem:[#allocation5 + $0x558] sm:$0xff]
        %v540 = vld [vmem:[#allocation5 + $0x560] sm:$0xff]
        %v541 = vld [vmem:[#allocation5 + $0x568] sm:$0xff]
        %v542 = vld [vmem:[#allocation5 + $0x570] sm:$0xff]
        %v543 = vld [vmem:[#allocation5 + $0x578] sm:$0xff]
        %v544 = vld [vmem:[#allocation5 + $0x580] sm:$0xff]
        %v545 = vld [vmem:[#allocation5 + $0x588] sm:$0xff]
        %v546 = vld [vmem:[#allocation5 + $0x590] sm:$0xff]
        %v547 = vld [vmem:[#allocation5 + $0x598] sm:$0xff]
        %v548 = vld [vmem:[#allocation5 + $0x5a0] sm:$0xff]
        %v549 = vld [vmem:[#allocation5 + $0x5a8] sm:$0xff]
        %v550 = vld [vmem:[#allocation5 + $0x5b0] sm:$0xff]
        %v551 = vld [vmem:[#allocation5 + $0x5b8] sm:$0xff]
        %v552 = vld [vmem:[#allocation5 + $0x5c0] sm:$0xff]
        %v553 = vld [vmem:[#allocation5 + $0x5c8] sm:$0xff]
        %v554 = vld [vmem:[#allocation5 + $0x5d0] sm:$0xff]
        %v555 = vld [vmem:[#allocation5 + $0x5d8] sm:$0xff]
        %v556 = vld [vmem:[#allocation5 + $0x5e0] sm:$0xff]
        %v557 = vld [vmem:[#allocation5 + $0x5e8] sm:$0xff]
        %v558 = vld [vmem:[#allocation5 + $0x5f0] sm:$0xff]
        %v559 = vld [vmem:[#allocation5 + $0x5f8] sm:$0xff]
        %v560 = vld [vmem:[#allocation5 + $0x600] sm:$0xff]
        %v561 = vld [vmem:[#allocation5 + $0x608] sm:$0xff]
        %v562 = vld [vmem:[#allocation5 + $0x610] sm:$0xff]
        %v563 = vld [vmem:[#allocation5 + $0x618] sm:$0xff]
        %v564 = vld [vmem:[#allocation5 + $0x620] sm:$0xff]
        %v565 = vld [vmem:[#allocation5 + $0x628] sm:$0xff]
        %v566 = vld [vmem:[#allocation5 + $0x630] sm:$0xff]
        %v567 = vld [vmem:[#allocation5 + $0x638] sm:$0xff]
        %v568 = vld [vmem:[#allocation5 + $0x640] sm:$0xff]
        %v569 = vld [vmem:[#allocation5 + $0x648] sm:$0xff]
        %v570 = vld [vmem:[#allocation5 + $0x650] sm:$0xff]
        %v571 = vld [vmem:[#allocation5 + $0x658] sm:$0xff]
        %v572 = vld [vmem:[#allocation5 + $0x660] sm:$0xff]
        %v573 = vld [vmem:[#allocation5 + $0x668] sm:$0xff]
        %v574 = vld [vmem:[#allocation5 + $0x670] sm:$0xff]
        %v575 = vld [vmem:[#allocation5 + $0x678] sm:$0xff]
        %v576 = vld [vmem:[#allocation5 + $0x680] sm:$0xff]
        %v577 = vld [vmem:[#allocation5 + $0x688] sm:$0xff]
        %v578 = vld [vmem:[#allocation5 + $0x690] sm:$0xff]
        %v579 = vld [vmem:[#allocation5 + $0x698] sm:$0xff]
        %v580 = vld [vmem:[#allocation5 + $0x6a0] sm:$0xff]
        %v581 = vld [vmem:[#allocation5 + $0x6a8] sm:$0xff]
        %v582 = vld [vmem:[#allocation5 + $0x6b0] sm:$0xff]
        %v583 = vld [vmem:[#allocation5 + $0x6b8] sm:$0xff]
        %v584 = vld [vmem:[#allocation5 + $0x6c0] sm:$0xff]
        %v585 = vld [vmem:[#allocation5 + $0x6c8] sm:$0xff]
        %v586 = vld [vmem:[#allocation5 + $0x6d0] sm:$0xff]
        %v587 = vld [vmem:[#allocation5 + $0x6d8] sm:$0xff]
        %v588 = vld [vmem:[#allocation5 + $0x6e0] sm:$0xff]
        %v589 = vld [vmem:[#allocation5 + $0x6e8] sm:$0xff]
        %v590 = vld [vmem:[#allocation5 + $0x6f0] sm:$0xff]
        %v591 = vld [vmem:[#allocation5 + $0x6f8] sm:$0xff]
        %v592 = vld [vmem:[#allocation5 + $0x700] sm:$0xff]
        %v593 = vld [vmem:[#allocation5 + $0x708] sm:$0xff]
        %v594 = vld [vmem:[#allocation5 + $0x710] sm:$0xff]
        %v595 = vld [vmem:[#allocation5 + $0x718] sm:$0xff]
        %v596 = vld [vmem:[#allocation5 + $0x720] sm:$0xff]
        %v597 = vld [vmem:[#allocation5 + $0x728] sm:$0xff]
        %v598 = vld [vmem:[#allocation5 + $0x730] sm:$0xff]
        %v599 = vld [vmem:[#allocation5 + $0x738] sm:$0xff]
        %v600 = vld [vmem:[#allocation5 + $0x740] sm:$0xff]
        %v601 = vld [vmem:[#allocation5 + $0x748] sm:$0xff]
        %v602 = vld [vmem:[#allocation5 + $0x750] sm:$0xff]
        %v603 = vld [vmem:[#allocation5 + $0x758] sm:$0xff]
        %v604 = vld [vmem:[#allocation5 + $0x760] sm:$0xff]
        %v605 = vld [vmem:[#allocation5 + $0x768] sm:$0xff]
        %v606 = vld [vmem:[#allocation5 + $0x770] sm:$0xff]
        %v607 = vld [vmem:[#allocation5 + $0x778] sm:$0xff]
        %v608 = vld [vmem:[#allocation5 + $0x780] sm:$0xff]
        %v609 = vld [vmem:[#allocation5 + $0x788] sm:$0xff]
        %v610 = vld [vmem:[#allocation5 + $0x790] sm:$0xff]
        %v611 = vld [vmem:[#allocation5 + $0x798] sm:$0xff]
        %v612 = vld [vmem:[#allocation5 + $0x7a0] sm:$0xff]
        %v613 = vld [vmem:[#allocation5 + $0x7a8] sm:$0xff]
        %v614 = vld [vmem:[#allocation5 + $0x7b0] sm:$0xff]
        %v615 = vld [vmem:[#allocation5 + $0x7b8] sm:$0xff]
        %v616 = vld [vmem:[#allocation5 + $0x7c0] sm:$0xff]
        %v617 = vld [vmem:[#allocation5 + $0x7c8] sm:$0xff]
        %v618 = vld [vmem:[#allocation5 + $0x7d0] sm:$0xff]
        %v619 = vld [vmem:[#allocation5 + $0x7d8] sm:$0xff]
        %v620 = vld [vmem:[#allocation5 + $0x7e0] sm:$0xff]
        %v621 = vld [vmem:[#allocation5 + $0x7e8] sm:$0xff]
        %v622 = vld [vmem:[#allocation5 + $0x7f0] sm:$0xff]
        %v623 = vld [vmem:[#allocation5 + $0x7f8] sm:$0xff]
        %v624 = vld [vmem:[#allocation5 + $0x800] sm:$0xff]
        %v625 = vld [vmem:[#allocation5 + $0x808] sm:$0xff]
        %v626 = vld [vmem:[#allocation5 + $0x810] sm:$0xff]
        %v627 = vld [vmem:[#allocation5 + $0x818] sm:$0xff]
        %v628 = vld [vmem:[#allocation5 + $0x820] sm:$0xff]
        %v629 = vld [vmem:[#allocation5 + $0x828] sm:$0xff]
        %v630 = vld [vmem:[#allocation5 + $0x830] sm:$0xff]
        %v631 = vld [vmem:[#allocation5 + $0x838] sm:$0xff]
        %v632 = vld [vmem:[#allocation5 + $0x840] sm:$0xff]
        %v633 = vld [vmem:[#allocation5 + $0x848] sm:$0xff]
        %v634 = vld [vmem:[#allocation5 + $0x850] sm:$0xff]
        %v635 = vld [vmem:[#allocation5 + $0x858] sm:$0xff]
        %v636 = vld [vmem:[#allocation5 + $0x860] sm:$0xff]
        %v637 = vld [vmem:[#allocation5 + $0x868] sm:$0xff]
        %v638 = vld [vmem:[#allocation5 + $0x870] sm:$0xff]
        %v639 = vld [vmem:[#allocation5 + $0x878] sm:$0xff]
        %v640 = vld [vmem:[#allocation5 + $0x880] sm:$0xff]
        %v641 = vld [vmem:[#allocation5 + $0x888] sm:$0xff]
        %v642 = vld [vmem:[#allocation5 + $0x890] sm:$0xff]
        %v643 = vld [vmem:[#allocation5 + $0x898] sm:$0xff]
        %v644 = vld [vmem:[#allocation5 + $0x8a0] sm:$0xff]
        %v645 = vld [vmem:[#allocation5 + $0x8a8] sm:$0xff]
        %v646 = vld [vmem:[#allocation5 + $0x8b0] sm:$0xff]
        %v647 = vld [vmem:[#allocation5 + $0x8b8] sm:$0xff]
        %v648 = vld [vmem:[#allocation5 + $0x8c0] sm:$0xff]
        %v649 = vld [vmem:[#allocation5 + $0x8c8] sm:$0xff]
        %v650 = vld [vmem:[#allocation5 + $0x8d0] sm:$0xff]
        %v651 = vld [vmem:[#allocation5 + $0x8d8] sm:$0xff]
        %v652 = vld [vmem:[#allocation5 + $0x8e0] sm:$0xff]
        %v653 = vld [vmem:[#allocation5 + $0x8e8] sm:$0xff]
        %v654 = vld [vmem:[#allocation5 + $0x8f0] sm:$0xff]
        %v655 = vld [vmem:[#allocation5 + $0x8f8] sm:$0xff]
        %v656 = vld [vmem:[#allocation5 + $0x900] sm:$0xff]
        %v657 = vld [vmem:[#allocation5 + $0x908] sm:$0xff]
        %v658 = vld [vmem:[#allocation5 + $0x910] sm:$0xff]
        %v659 = vld [vmem:[#allocation5 + $0x918] sm:$0xff]
        %v660 = vld [vmem:[#allocation5 + $0x920] sm:$0xff]
        %v661 = vld [vmem:[#allocation5 + $0x928] sm:$0xff]
        %v662 = vld [vmem:[#allocation5 + $0x930] sm:$0xff]
        %v663 = vld [vmem:[#allocation5 + $0x938] sm:$0xff]
        %v664 = vld [vmem:[#allocation5 + $0x940] sm:$0xff]
        %v665 = vld [vmem:[#allocation5 + $0x948] sm:$0xff]
        %v666 = vld [vmem:[#allocation5 + $0x950] sm:$0xff]
        %v667 = vld [vmem:[#allocation5 + $0x958] sm:$0xff]
        %v668 = vld [vmem:[#allocation5 + $0x960] sm:$0xff]
        %v669 = vld [vmem:[#allocation5 + $0x968] sm:$0xff]
        %v670 = vld [vmem:[#allocation5 + $0x970] sm:$0xff]
        %v671 = vld [vmem:[#allocation5 + $0x978] sm:$0xff]
        %v672 = vld [vmem:[#allocation5 + $0x980] sm:$0xff]
        %v673 = vld [vmem:[#allocation5 + $0x988] sm:$0xff]
        %v674 = vld [vmem:[#allocation5 + $0x990] sm:$0xff]
        %v675 = vld [vmem:[#allocation5 + $0x998] sm:$0xff]
        %v676 = vld [vmem:[#allocation5 + $0x9a0] sm:$0xff]
        %v677 = vld [vmem:[#allocation5 + $0x9a8] sm:$0xff]
        %v678 = vld [vmem:[#allocation5 + $0x9b0] sm:$0xff]
        %v679 = vld [vmem:[#allocation5 + $0x9b8] sm:$0xff]
        %v680 = vld [vmem:[#allocation5 + $0x9c0] sm:$0xff]
        %v681 = vld [vmem:[#allocation5 + $0x9c8] sm:$0xff]
        %v682 = vld [vmem:[#allocation5 + $0x9d0] sm:$0xff]
        %v683 = vld [vmem:[#allocation5 + $0x9d8] sm:$0xff]
        %v684 = vld [vmem:[#allocation5 + $0x9e0] sm:$0xff]
        %v685 = vld [vmem:[#allocation5 + $0x9e8] sm:$0xff]
        %v686 = vld [vmem:[#allocation5 + $0x9f0] sm:$0xff]
        %v687 = vld [vmem:[#allocation5 + $0x9f8] sm:$0xff]
        %v688 = vld [vmem:[#allocation5 + $0xa00] sm:$0xff]
        %v689 = vld [vmem:[#allocation5 + $0xa08] sm:$0xff]
        %v690 = vld [vmem:[#allocation5 + $0xa10] sm:$0xff]
        %v691 = vld [vmem:[#allocation5 + $0xa18] sm:$0xff]
        %v692 = vld [vmem:[#allocation5 + $0xa20] sm:$0xff]
        %v693 = vld [vmem:[#allocation5 + $0xa28] sm:$0xff]
        %v694 = vld [vmem:[#allocation5 + $0xa30] sm:$0xff]
        %v695 = vld [vmem:[#allocation5 + $0xa38] sm:$0xff]
        %v696 = vld [vmem:[#allocation5 + $0xa40] sm:$0xff]
        %v697 = vld [vmem:[#allocation5 + $0xa48] sm:$0xff]
        %v698 = vld [vmem:[#allocation5 + $0xa50] sm:$0xff]
        %v699 = vld [vmem:[#allocation5 + $0xa58] sm:$0xff]
        %v700 = vld [vmem:[#allocation5 + $0xa60] sm:$0xff]
        %v701 = vld [vmem:[#allocation5 + $0xa68] sm:$0xff]
        %v702 = vld [vmem:[#allocation5 + $0xa70] sm:$0xff]
        %v703 = vld [vmem:[#allocation5 + $0xa78] sm:$0xff]
        %v704 = vld [vmem:[#allocation5 + $0xa80] sm:$0xff]
        %v705 = vld [vmem:[#allocation5 + $0xa88] sm:$0xff]
        %v706 = vld [vmem:[#allocation5 + $0xa90] sm:$0xff]
        %v707 = vld [vmem:[#allocation5 + $0xa98] sm:$0xff]
        %v708 = vld [vmem:[#allocation5 + $0xaa0] sm:$0xff]
        %v709 = vld [vmem:[#allocation5 + $0xaa8] sm:$0xff]
        %v710 = vld [vmem:[#allocation5 + $0xab0] sm:$0xff]
        %v711 = vld [vmem:[#allocation5 + $0xab8] sm:$0xff]
        %v712 = vld [vmem:[#allocation5 + $0xac0] sm:$0xff]
        %v713 = vld [vmem:[#allocation5 + $0xac8] sm:$0xff]
        %v714 = vld [vmem:[#allocation5 + $0xad0] sm:$0xff]
        %v715 = vld [vmem:[#allocation5 + $0xad8] sm:$0xff]
        %v716 = vld [vmem:[#allocation5 + $0xae0] sm:$0xff]
        %v717 = vld [vmem:[#allocation5 + $0xae8] sm:$0xff]
        %v718 = vld [vmem:[#allocation5 + $0xaf0] sm:$0xff]
        %v719 = vld [vmem:[#allocation5 + $0xaf8] sm:$0xff]
        %v720 = vld [vmem:[#allocation5 + $0xb00] sm:$0xff]
        %v721 = vld [vmem:[#allocation5 + $0xb08] sm:$0xff]
        %v722 = vld [vmem:[#allocation5 + $0xb10] sm:$0xff]
        %v723 = vld [vmem:[#allocation5 + $0xb18] sm:$0xff]
        %v724 = vld [vmem:[#allocation5 + $0xb20] sm:$0xff]
        %v725 = vld [vmem:[#allocation5 + $0xb28] sm:$0xff]
        %v726 = vld [vmem:[#allocation5 + $0xb30] sm:$0xff]
        %v727 = vld [vmem:[#allocation5 + $0xb38] sm:$0xff]
        %v728 = vld [vmem:[#allocation5 + $0xb40] sm:$0xff]
        %v729 = vld [vmem:[#allocation5 + $0xb48] sm:$0xff]
        %v730 = vld [vmem:[#allocation5 + $0xb50] sm:$0xff]
        %v731 = vld [vmem:[#allocation5 + $0xb58] sm:$0xff]
        %v732 = vld [vmem:[#allocation5 + $0xb60] sm:$0xff]
        %v733 = vld [vmem:[#allocation5 + $0xb68] sm:$0xff]
        %v734 = vld [vmem:[#allocation5 + $0xb70] sm:$0xff]
        %v735 = vld [vmem:[#allocation5 + $0xb78] sm:$0xff]
        %v736 = vld [vmem:[#allocation5 + $0xb80] sm:$0xff]
        %v737 = vld [vmem:[#allocation5 + $0xb88] sm:$0xff]
        %v738 = vld [vmem:[#allocation5 + $0xb90] sm:$0xff]
        %v739 = vld [vmem:[#allocation5 + $0xb98] sm:$0xff]
        %v740 = vld [vmem:[#allocation5 + $0xba0] sm:$0xff]
        %v741 = vld [vmem:[#allocation5 + $0xba8] sm:$0xff]
        %v742 = vld [vmem:[#allocation5 + $0xbb0] sm:$0xff]
        %v743 = vld [vmem:[#allocation5 + $0xbb8] sm:$0xff]
        %v744 = vld [vmem:[#allocation5 + $0xbc0] sm:$0xff]
        %v745 = vld [vmem:[#allocation5 + $0xbc8] sm:$0xff]
        %v746 = vld [vmem:[#allocation5 + $0xbd0] sm:$0xff]
        %v747 = vld [vmem:[#allocation5 + $0xbd8] sm:$0xff]
        %v748 = vld [vmem:[#allocation5 + $0xbe0] sm:$0xff]
        %v749 = vld [vmem:[#allocation5 + $0xbe8] sm:$0xff]
        %v750 = vld [vmem:[#allocation5 + $0xbf0] sm:$0xff]
        %v751 = vld [vmem:[#allocation5 + $0xbf8] sm:$0xff]
        %v752 = vld [vmem:[#allocation7] sm:$0xff]
        %v753 = vld [vmem:[#allocation7 + $0x8] sm:$0xf]
        %v756 = vlaneseq
        %v757 = vshrl.u32 %v756, 7
        %v758 = vsub.s32 0, %v757
        %v759 = vrot.slane %v752, %v758
        %v760 = vlaneseq
        %v761 = vshrl.u32 %v760, 7
        %v762 = vsub.s32 1, %v761
        %v763 = vrot.slane %v752, %v762
        %v764 = vlaneseq
        %v765 = vshrl.u32 %v764, 7
        %v766 = vsub.s32 2, %v765
        %v767 = vrot.slane %v752, %v766
        %v768 = vlaneseq
        %v769 = vshrl.u32 %v768, 7
        %v770 = vsub.s32 3, %v769
        %v771 = vrot.slane %v752, %v770
        %v772 = vlaneseq
        %v773 = vshrl.u32 %v772, 7
        %v774 = vsub.s32 4, %v773
        %v775 = vrot.slane %v752, %v774
        %v776 = vlaneseq
        %v777 = vshrl.u32 %v776, 7
        %v778 = vsub.s32 5, %v777
        %v779 = vrot.slane %v752, %v778
        %v780 = vlaneseq
        %v781 = vshrl.u32 %v780, 7
        %v782 = vsub.s32 6, %v781
        %v783 = vrot.slane %v752, %v782
        %v784 = vlaneseq
        %v785 = vshrl.u32 %v784, 7
        %v786 = vsub.s32 7, %v785
        %v787 = vrot.slane %v752, %v786
        %v788 = vlaneseq
        %v789 = vshrl.u32 %v788, 7
        %v790 = vsub.s32 0, %v789
        %v791 = vrot.slane %v753, %v790
        %v792 = vlaneseq
        %v793 = vshrl.u32 %v792, 7
        %v794 = vsub.s32 1, %v793
        %v795 = vrot.slane %v753, %v794
        %v796 = vlaneseq
        %v797 = vshrl.u32 %v796, 7
        %v798 = vsub.s32 2, %v797
        %v799 = vrot.slane %v753, %v798
        %v800 = vlaneseq
        %v801 = vshrl.u32 %v800, 7
        %v802 = vsub.s32 3, %v801
        %v803 = vrot.slane %v753, %v802
        %v848 = vunpack.c.l.b16 %v336
        %v849 = vunpack.c.h.b16 %v336
        %v850 = vunpack.c.l.b16 %v337
        %v851 = vunpack.c.h.b16 %v337
        %v852 = vunpack.c.l.b16 %v338
        %v853 = vunpack.c.h.b16 %v338
        %v854 = vunpack.c.l.b16 %v339
        %v855 = vunpack.c.h.b16 %v339
        %v856 = vunpack.c.l.b16 %v340
        %v857 = vunpack.c.h.b16 %v340
        %v858 = vunpack.c.l.b16 %v341
        %v859 = vunpack.c.h.b16 %v341
        %v860 = vunpack.c.l.b16 %v342
        %v861 = vunpack.c.h.b16 %v342
        %v862 = vunpack.c.l.b16 %v343
        %v863 = vunpack.c.h.b16 %v343
        %v864 = vunpack.c.l.b16 %v344
        %v865 = vunpack.c.h.b16 %v344
        %v866 = vunpack.c.l.b16 %v345
        %v867 = vunpack.c.h.b16 %v345
        %v868 = vunpack.c.l.b16 %v346
        %v869 = vunpack.c.h.b16 %v346
        %v870 = vunpack.c.l.b16 %v347
        %v871 = vunpack.c.h.b16 %v347
        %v872 = vunpack.c.l.b16 %v348
        %v873 = vunpack.c.h.b16 %v348
        %v874 = vunpack.c.l.b16 %v349
        %v875 = vunpack.c.h.b16 %v349
        %v876 = vunpack.c.l.b16 %v350
        %v877 = vunpack.c.h.b16 %v350
        %v878 = vunpack.c.l.b16 %v351
        %v879 = vunpack.c.h.b16 %v351
        %v880 = vunpack.c.l.b16 %v352
        %v881 = vunpack.c.h.b16 %v352
        %v882 = vunpack.c.l.b16 %v353
        %v883 = vunpack.c.h.b16 %v353
        %v884 = vunpack.c.l.b16 %v354
        %v885 = vunpack.c.h.b16 %v354
        %v886 = vunpack.c.l.b16 %v355
        %v887 = vunpack.c.h.b16 %v355
        %v888 = vunpack.c.l.b16 %v356
        %v889 = vunpack.c.h.b16 %v356
        %v890 = vunpack.c.l.b16 %v357
        %v891 = vunpack.c.h.b16 %v357
        %v892 = vunpack.c.l.b16 %v358
        %v893 = vunpack.c.h.b16 %v358
        %v894 = vunpack.c.l.b16 %v359
        %v895 = vunpack.c.h.b16 %v359
        %v896 = vunpack.c.l.b16 %v360
        %v897 = vunpack.c.h.b16 %v360
        %v898 = vunpack.c.l.b16 %v361
        %v899 = vunpack.c.h.b16 %v361
        %v900 = vunpack.c.l.b16 %v362
        %v901 = vunpack.c.h.b16 %v362
        %v902 = vunpack.c.l.b16 %v363
        %v903 = vunpack.c.h.b16 %v363
        %v904 = vunpack.c.l.b16 %v364
        %v905 = vunpack.c.h.b16 %v364
        %v906 = vunpack.c.l.b16 %v365
        %v907 = vunpack.c.h.b16 %v365
        %v908 = vunpack.c.l.b16 %v366
        %v909 = vunpack.c.h.b16 %v366
        %v910 = vunpack.c.l.b16 %v367
        %v911 = vunpack.c.h.b16 %v367
        %v912 = vpack.c.b16 %v852, %v848
        %v913 = vpack.c.b16 %v853, %v849
        %v914 = vpack.c.b16 %v854, %v850
        %v915 = vpack.c.b16 %v855, %v851
        %v916 = vpack.c.b16 %v860, %v856
        %v917 = vpack.c.b16 %v861, %v857
        %v918 = vpack.c.b16 %v862, %v858
        %v919 = vpack.c.b16 %v863, %v859
        %v920 = vpack.c.b16 %v868, %v864
        %v921 = vpack.c.b16 %v869, %v865
        %v922 = vpack.c.b16 %v870, %v866
        %v923 = vpack.c.b16 %v871, %v867
        %v924 = vpack.c.b16 %v876, %v872
        %v925 = vpack.c.b16 %v877, %v873
        %v926 = vpack.c.b16 %v878, %v874
        %v927 = vpack.c.b16 %v879, %v875
        %v928 = vpack.c.b16 %v884, %v880
        %v929 = vpack.c.b16 %v885, %v881
        %v930 = vpack.c.b16 %v886, %v882
        %v931 = vpack.c.b16 %v887, %v883
        %v932 = vpack.c.b16 %v892, %v888
        %v933 = vpack.c.b16 %v893, %v889
        %v934 = vpack.c.b16 %v894, %v890
        %v935 = vpack.c.b16 %v895, %v891
        %v936 = vpack.c.b16 %v900, %v896
        %v937 = vpack.c.b16 %v901, %v897
        %v938 = vpack.c.b16 %v902, %v898
        %v939 = vpack.c.b16 %v903, %v899
        %v940 = vpack.c.b16 %v908, %v904
        %v941 = vpack.c.b16 %v909, %v905
        %v942 = vpack.c.b16 %v910, %v906
        %v943 = vpack.c.b16 %v911, %v907
        %v1360 = vunpack.c.l.b16 %v368
        %v1361 = vunpack.c.h.b16 %v368
        %v1362 = vunpack.c.l.b16 %v369
        %v1363 = vunpack.c.h.b16 %v369
        %v1364 = vunpack.c.l.b16 %v370
        %v1365 = vunpack.c.h.b16 %v370
        %v1366 = vunpack.c.l.b16 %v371
        %v1367 = vunpack.c.h.b16 %v371
        %v1368 = vunpack.c.l.b16 %v372
        %v1369 = vunpack.c.h.b16 %v372
        %v1370 = vunpack.c.l.b16 %v373
        %v1371 = vunpack.c.h.b16 %v373
        %v1372 = vunpack.c.l.b16 %v374
        %v1373 = vunpack.c.h.b16 %v374
        %v1374 = vunpack.c.l.b16 %v375
        %v1375 = vunpack.c.h.b16 %v375
        %v1376 = vunpack.c.l.b16 %v376
        %v1377 = vunpack.c.h.b16 %v376
        %v1378 = vunpack.c.l.b16 %v377
        %v1379 = vunpack.c.h.b16 %v377
        %v1380 = vunpack.c.l.b16 %v378
        %v1381 = vunpack.c.h.b16 %v378
        %v1382 = vunpack.c.l.b16 %v379
        %v1383 = vunpack.c.h.b16 %v379
        %v1384 = vunpack.c.l.b16 %v380
        %v1385 = vunpack.c.h.b16 %v380
        %v1386 = vunpack.c.l.b16 %v381
        %v1387 = vunpack.c.h.b16 %v381
        %v1388 = vunpack.c.l.b16 %v382
        %v1389 = vunpack.c.h.b16 %v382
        %v1390 = vunpack.c.l.b16 %v383
        %v1391 = vunpack.c.h.b16 %v383
        %v1392 = vunpack.c.l.b16 %v384
        %v1393 = vunpack.c.h.b16 %v384
        %v1394 = vunpack.c.l.b16 %v385
        %v1395 = vunpack.c.h.b16 %v385
        %v1396 = vunpack.c.l.b16 %v386
        %v1397 = vunpack.c.h.b16 %v386
        %v1398 = vunpack.c.l.b16 %v387
        %v1399 = vunpack.c.h.b16 %v387
        %v1400 = vunpack.c.l.b16 %v388
        %v1401 = vunpack.c.h.b16 %v388
        %v1402 = vunpack.c.l.b16 %v389
        %v1403 = vunpack.c.h.b16 %v389
        %v1404 = vunpack.c.l.b16 %v390
        %v1405 = vunpack.c.h.b16 %v390
        %v1406 = vunpack.c.l.b16 %v391
        %v1407 = vunpack.c.h.b16 %v391
        %v1408 = vunpack.c.l.b16 %v392
        %v1409 = vunpack.c.h.b16 %v392
        %v1410 = vunpack.c.l.b16 %v393
        %v1411 = vunpack.c.h.b16 %v393
        %v1412 = vunpack.c.l.b16 %v394
        %v1413 = vunpack.c.h.b16 %v394
        %v1414 = vunpack.c.l.b16 %v395
        %v1415 = vunpack.c.h.b16 %v395
        %v1416 = vunpack.c.l.b16 %v396
        %v1417 = vunpack.c.h.b16 %v396
        %v1418 = vunpack.c.l.b16 %v397
        %v1419 = vunpack.c.h.b16 %v397
        %v1420 = vunpack.c.l.b16 %v398
        %v1421 = vunpack.c.h.b16 %v398
        %v1422 = vunpack.c.l.b16 %v399
        %v1423 = vunpack.c.h.b16 %v399
        %v1424 = vunpack.c.l.b16 %v400
        %v1425 = vunpack.c.h.b16 %v400
        %v1426 = vunpack.c.l.b16 %v401
        %v1427 = vunpack.c.h.b16 %v401
        %v1428 = vunpack.c.l.b16 %v402
        %v1429 = vunpack.c.h.b16 %v402
        %v1430 = vunpack.c.l.b16 %v403
        %v1431 = vunpack.c.h.b16 %v403
        %v1432 = vunpack.c.l.b16 %v404
        %v1433 = vunpack.c.h.b16 %v404
        %v1434 = vunpack.c.l.b16 %v405
        %v1435 = vunpack.c.h.b16 %v405
        %v1436 = vunpack.c.l.b16 %v406
        %v1437 = vunpack.c.h.b16 %v406
        %v1438 = vunpack.c.l.b16 %v407
        %v1439 = vunpack.c.h.b16 %v407
        %v1440 = vunpack.c.l.b16 %v408
        %v1441 = vunpack.c.h.b16 %v408
        %v1442 = vunpack.c.l.b16 %v409
        %v1443 = vunpack.c.h.b16 %v409
        %v1444 = vunpack.c.l.b16 %v410
        %v1445 = vunpack.c.h.b16 %v410
        %v1446 = vunpack.c.l.b16 %v411
        %v1447 = vunpack.c.h.b16 %v411
        %v1448 = vunpack.c.l.b16 %v412
        %v1449 = vunpack.c.h.b16 %v412
        %v1450 = vunpack.c.l.b16 %v413
        %v1451 = vunpack.c.h.b16 %v413
        %v1452 = vunpack.c.l.b16 %v414
        %v1453 = vunpack.c.h.b16 %v414
        %v1454 = vunpack.c.l.b16 %v415
        %v1455 = vunpack.c.h.b16 %v415
        %v1456 = vunpack.c.l.b16 %v416
        %v1457 = vunpack.c.h.b16 %v416
        %v1458 = vunpack.c.l.b16 %v417
        %v1459 = vunpack.c.h.b16 %v417
        %v1460 = vunpack.c.l.b16 %v418
        %v1461 = vunpack.c.h.b16 %v418
        %v1462 = vunpack.c.l.b16 %v419
        %v1463 = vunpack.c.h.b16 %v419
        %v1464 = vunpack.c.l.b16 %v420
        %v1465 = vunpack.c.h.b16 %v420
        %v1466 = vunpack.c.l.b16 %v421
        %v1467 = vunpack.c.h.b16 %v421
        %v1468 = vunpack.c.l.b16 %v422
        %v1469 = vunpack.c.h.b16 %v422
        %v1470 = vunpack.c.l.b16 %v423
        %v1471 = vunpack.c.h.b16 %v423
        %v1472 = vunpack.c.l.b16 %v424
        %v1473 = vunpack.c.h.b16 %v424
        %v1474 = vunpack.c.l.b16 %v425
        %v1475 = vunpack.c.h.b16 %v425
        %v1476 = vunpack.c.l.b16 %v426
        %v1477 = vunpack.c.h.b16 %v426
        %v1478 = vunpack.c.l.b16 %v427
        %v1479 = vunpack.c.h.b16 %v427
        %v1480 = vunpack.c.l.b16 %v428
        %v1481 = vunpack.c.h.b16 %v428
        %v1482 = vunpack.c.l.b16 %v429
        %v1483 = vunpack.c.h.b16 %v429
        %v1484 = vunpack.c.l.b16 %v430
        %v1485 = vunpack.c.h.b16 %v430
        %v1486 = vunpack.c.l.b16 %v431
        %v1487 = vunpack.c.h.b16 %v431
        %v1488 = vunpack.c.l.b16 %v432
        %v1489 = vunpack.c.h.b16 %v432
        %v1490 = vunpack.c.l.b16 %v433
        %v1491 = vunpack.c.h.b16 %v433
        %v1492 = vunpack.c.l.b16 %v434
        %v1493 = vunpack.c.h.b16 %v434
        %v1494 = vunpack.c.l.b16 %v435
        %v1495 = vunpack.c.h.b16 %v435
        %v1496 = vunpack.c.l.b16 %v436
        %v1497 = vunpack.c.h.b16 %v436
        %v1498 = vunpack.c.l.b16 %v437
        %v1499 = vunpack.c.h.b16 %v437
        %v1500 = vunpack.c.l.b16 %v438
        %v1501 = vunpack.c.h.b16 %v438
        %v1502 = vunpack.c.l.b16 %v439
        %v1503 = vunpack.c.h.b16 %v439
        %v1504 = vunpack.c.l.b16 %v440
        %v1505 = vunpack.c.h.b16 %v440
        %v1506 = vunpack.c.l.b16 %v441
        %v1507 = vunpack.c.h.b16 %v441
        %v1508 = vunpack.c.l.b16 %v442
        %v1509 = vunpack.c.h.b16 %v442
        %v1510 = vunpack.c.l.b16 %v443
        %v1511 = vunpack.c.h.b16 %v443
        %v1512 = vunpack.c.l.b16 %v444
        %v1513 = vunpack.c.h.b16 %v444
        %v1514 = vunpack.c.l.b16 %v445
        %v1515 = vunpack.c.h.b16 %v445
        %v1516 = vunpack.c.l.b16 %v446
        %v1517 = vunpack.c.h.b16 %v446
        %v1518 = vunpack.c.l.b16 %v447
        %v1519 = vunpack.c.h.b16 %v447
        %v1520 = vunpack.c.l.b16 %v448
        %v1521 = vunpack.c.h.b16 %v448
        %v1522 = vunpack.c.l.b16 %v449
        %v1523 = vunpack.c.h.b16 %v449
        %v1524 = vunpack.c.l.b16 %v450
        %v1525 = vunpack.c.h.b16 %v450
        %v1526 = vunpack.c.l.b16 %v451
        %v1527 = vunpack.c.h.b16 %v451
        %v1528 = vunpack.c.l.b16 %v452
        %v1529 = vunpack.c.h.b16 %v452
        %v1530 = vunpack.c.l.b16 %v453
        %v1531 = vunpack.c.h.b16 %v453
        %v1532 = vunpack.c.l.b16 %v454
        %v1533 = vunpack.c.h.b16 %v454
        %v1534 = vunpack.c.l.b16 %v455
        %v1535 = vunpack.c.h.b16 %v455
        %v1536 = vunpack.c.l.b16 %v456
        %v1537 = vunpack.c.h.b16 %v456
        %v1538 = vunpack.c.l.b16 %v457
        %v1539 = vunpack.c.h.b16 %v457
        %v1540 = vunpack.c.l.b16 %v458
        %v1541 = vunpack.c.h.b16 %v458
        %v1542 = vunpack.c.l.b16 %v459
        %v1543 = vunpack.c.h.b16 %v459
        %v1544 = vunpack.c.l.b16 %v460
        %v1545 = vunpack.c.h.b16 %v460
        %v1546 = vunpack.c.l.b16 %v461
        %v1547 = vunpack.c.h.b16 %v461
        %v1548 = vunpack.c.l.b16 %v462
        %v1549 = vunpack.c.h.b16 %v462
        %v1550 = vunpack.c.l.b16 %v463
        %v1551 = vunpack.c.h.b16 %v463
        %v1552 = vunpack.c.l.b16 %v464
        %v1553 = vunpack.c.h.b16 %v464
        %v1554 = vunpack.c.l.b16 %v465
        %v1555 = vunpack.c.h.b16 %v465
        %v1556 = vunpack.c.l.b16 %v466
        %v1557 = vunpack.c.h.b16 %v466
        %v1558 = vunpack.c.l.b16 %v467
        %v1559 = vunpack.c.h.b16 %v467
        %v1560 = vunpack.c.l.b16 %v468
        %v1561 = vunpack.c.h.b16 %v468
        %v1562 = vunpack.c.l.b16 %v469
        %v1563 = vunpack.c.h.b16 %v469
        %v1564 = vunpack.c.l.b16 %v470
        %v1565 = vunpack.c.h.b16 %v470
        %v1566 = vunpack.c.l.b16 %v471
        %v1567 = vunpack.c.h.b16 %v471
        %v1568 = vunpack.c.l.b16 %v472
        %v1569 = vunpack.c.h.b16 %v472
        %v1570 = vunpack.c.l.b16 %v473
        %v1571 = vunpack.c.h.b16 %v473
        %v1572 = vunpack.c.l.b16 %v474
        %v1573 = vunpack.c.h.b16 %v474
        %v1574 = vunpack.c.l.b16 %v475
        %v1575 = vunpack.c.h.b16 %v475
        %v1576 = vunpack.c.l.b16 %v476
        %v1577 = vunpack.c.h.b16 %v476
        %v1578 = vunpack.c.l.b16 %v477
        %v1579 = vunpack.c.h.b16 %v477
        %v1580 = vunpack.c.l.b16 %v478
        %v1581 = vunpack.c.h.b16 %v478
        %v1582 = vunpack.c.l.b16 %v479
        %v1583 = vunpack.c.h.b16 %v479
        %v1584 = vunpack.c.l.b16 %v480
        %v1585 = vunpack.c.h.b16 %v480
        %v1586 = vunpack.c.l.b16 %v481
        %v1587 = vunpack.c.h.b16 %v481
        %v1588 = vunpack.c.l.b16 %v482
        %v1589 = vunpack.c.h.b16 %v482
        %v1590 = vunpack.c.l.b16 %v483
        %v1591 = vunpack.c.h.b16 %v483
        %v1592 = vunpack.c.l.b16 %v484
        %v1593 = vunpack.c.h.b16 %v484
        %v1594 = vunpack.c.l.b16 %v485
        %v1595 = vunpack.c.h.b16 %v485
        %v1596 = vunpack.c.l.b16 %v486
        %v1597 = vunpack.c.h.b16 %v486
        %v1598 = vunpack.c.l.b16 %v487
        %v1599 = vunpack.c.h.b16 %v487
        %v1600 = vunpack.c.l.b16 %v488
        %v1601 = vunpack.c.h.b16 %v488
        %v1602 = vunpack.c.l.b16 %v489
        %v1603 = vunpack.c.h.b16 %v489
        %v1604 = vunpack.c.l.b16 %v490
        %v1605 = vunpack.c.h.b16 %v490
        %v1606 = vunpack.c.l.b16 %v491
        %v1607 = vunpack.c.h.b16 %v491
        %v1608 = vunpack.c.l.b16 %v492
        %v1609 = vunpack.c.h.b16 %v492
        %v1610 = vunpack.c.l.b16 %v493
        %v1611 = vunpack.c.h.b16 %v493
        %v1612 = vunpack.c.l.b16 %v494
        %v1613 = vunpack.c.h.b16 %v494
        %v1614 = vunpack.c.l.b16 %v495
        %v1615 = vunpack.c.h.b16 %v495
        %v1616 = vunpack.c.l.b16 %v496
        %v1617 = vunpack.c.h.b16 %v496
        %v1618 = vunpack.c.l.b16 %v497
        %v1619 = vunpack.c.h.b16 %v497
        %v1620 = vunpack.c.l.b16 %v498
        %v1621 = vunpack.c.h.b16 %v498
        %v1622 = vunpack.c.l.b16 %v499
        %v1623 = vunpack.c.h.b16 %v499
        %v1624 = vunpack.c.l.b16 %v500
        %v1625 = vunpack.c.h.b16 %v500
        %v1626 = vunpack.c.l.b16 %v501
        %v1627 = vunpack.c.h.b16 %v501
        %v1628 = vunpack.c.l.b16 %v502
        %v1629 = vunpack.c.h.b16 %v502
        %v1630 = vunpack.c.l.b16 %v503
        %v1631 = vunpack.c.h.b16 %v503
        %v1632 = vunpack.c.l.b16 %v504
        %v1633 = vunpack.c.h.b16 %v504
        %v1634 = vunpack.c.l.b16 %v505
        %v1635 = vunpack.c.h.b16 %v505
        %v1636 = vunpack.c.l.b16 %v506
        %v1637 = vunpack.c.h.b16 %v506
        %v1638 = vunpack.c.l.b16 %v507
        %v1639 = vunpack.c.h.b16 %v507
        %v1640 = vunpack.c.l.b16 %v508
        %v1641 = vunpack.c.h.b16 %v508
        %v1642 = vunpack.c.l.b16 %v509
        %v1643 = vunpack.c.h.b16 %v509
        %v1644 = vunpack.c.l.b16 %v510
        %v1645 = vunpack.c.h.b16 %v510
        %v1646 = vunpack.c.l.b16 %v511
        %v1647 = vunpack.c.h.b16 %v511
        %v1648 = vunpack.c.l.b16 %v512
        %v1649 = vunpack.c.h.b16 %v512
        %v1650 = vunpack.c.l.b16 %v513
        %v1651 = vunpack.c.h.b16 %v513
        %v1652 = vunpack.c.l.b16 %v514
        %v1653 = vunpack.c.h.b16 %v514
        %v1654 = vunpack.c.l.b16 %v515
        %v1655 = vunpack.c.h.b16 %v515
        %v1656 = vunpack.c.l.b16 %v516
        %v1657 = vunpack.c.h.b16 %v516
        %v1658 = vunpack.c.l.b16 %v517
        %v1659 = vunpack.c.h.b16 %v517
        %v1660 = vunpack.c.l.b16 %v518
        %v1661 = vunpack.c.h.b16 %v518
        %v1662 = vunpack.c.l.b16 %v519
        %v1663 = vunpack.c.h.b16 %v519
        %v1664 = vunpack.c.l.b16 %v520
        %v1665 = vunpack.c.h.b16 %v520
        %v1666 = vunpack.c.l.b16 %v521
        %v1667 = vunpack.c.h.b16 %v521
        %v1668 = vunpack.c.l.b16 %v522
        %v1669 = vunpack.c.h.b16 %v522
        %v1670 = vunpack.c.l.b16 %v523
        %v1671 = vunpack.c.h.b16 %v523
        %v1672 = vunpack.c.l.b16 %v524
        %v1673 = vunpack.c.h.b16 %v524
        %v1674 = vunpack.c.l.b16 %v525
        %v1675 = vunpack.c.h.b16 %v525
        %v1676 = vunpack.c.l.b16 %v526
        %v1677 = vunpack.c.h.b16 %v526
        %v1678 = vunpack.c.l.b16 %v527
        %v1679 = vunpack.c.h.b16 %v527
        %v1680 = vunpack.c.l.b16 %v528
        %v1681 = vunpack.c.h.b16 %v528
        %v1682 = vunpack.c.l.b16 %v529
        %v1683 = vunpack.c.h.b16 %v529
        %v1684 = vunpack.c.l.b16 %v530
        %v1685 = vunpack.c.h.b16 %v530
        %v1686 = vunpack.c.l.b16 %v531
        %v1687 = vunpack.c.h.b16 %v531
        %v1688 = vunpack.c.l.b16 %v532
        %v1689 = vunpack.c.h.b16 %v532
        %v1690 = vunpack.c.l.b16 %v533
        %v1691 = vunpack.c.h.b16 %v533
        %v1692 = vunpack.c.l.b16 %v534
        %v1693 = vunpack.c.h.b16 %v534
        %v1694 = vunpack.c.l.b16 %v535
        %v1695 = vunpack.c.h.b16 %v535
        %v1696 = vunpack.c.l.b16 %v536
        %v1697 = vunpack.c.h.b16 %v536
        %v1698 = vunpack.c.l.b16 %v537
        %v1699 = vunpack.c.h.b16 %v537
        %v1700 = vunpack.c.l.b16 %v538
        %v1701 = vunpack.c.h.b16 %v538
        %v1702 = vunpack.c.l.b16 %v539
        %v1703 = vunpack.c.h.b16 %v539
        %v1704 = vunpack.c.l.b16 %v540
        %v1705 = vunpack.c.h.b16 %v540
        %v1706 = vunpack.c.l.b16 %v541
        %v1707 = vunpack.c.h.b16 %v541
        %v1708 = vunpack.c.l.b16 %v542
        %v1709 = vunpack.c.h.b16 %v542
        %v1710 = vunpack.c.l.b16 %v543
        %v1711 = vunpack.c.h.b16 %v543
        %v1712 = vunpack.c.l.b16 %v544
        %v1713 = vunpack.c.h.b16 %v544
        %v1714 = vunpack.c.l.b16 %v545
        %v1715 = vunpack.c.h.b16 %v545
        %v1716 = vunpack.c.l.b16 %v546
        %v1717 = vunpack.c.h.b16 %v546
        %v1718 = vunpack.c.l.b16 %v547
        %v1719 = vunpack.c.h.b16 %v547
        %v1720 = vunpack.c.l.b16 %v548
        %v1721 = vunpack.c.h.b16 %v548
        %v1722 = vunpack.c.l.b16 %v549
        %v1723 = vunpack.c.h.b16 %v549
        %v1724 = vunpack.c.l.b16 %v550
        %v1725 = vunpack.c.h.b16 %v550
        %v1726 = vunpack.c.l.b16 %v551
        %v1727 = vunpack.c.h.b16 %v551
        %v1728 = vunpack.c.l.b16 %v552
        %v1729 = vunpack.c.h.b16 %v552
        %v1730 = vunpack.c.l.b16 %v553
        %v1731 = vunpack.c.h.b16 %v553
        %v1732 = vunpack.c.l.b16 %v554
        %v1733 = vunpack.c.h.b16 %v554
        %v1734 = vunpack.c.l.b16 %v555
        %v1735 = vunpack.c.h.b16 %v555
        %v1736 = vunpack.c.l.b16 %v556
        %v1737 = vunpack.c.h.b16 %v556
        %v1738 = vunpack.c.l.b16 %v557
        %v1739 = vunpack.c.h.b16 %v557
        %v1740 = vunpack.c.l.b16 %v558
        %v1741 = vunpack.c.h.b16 %v558
        %v1742 = vunpack.c.l.b16 %v559
        %v1743 = vunpack.c.h.b16 %v559
        %v1744 = vunpack.c.l.b16 %v560
        %v1745 = vunpack.c.h.b16 %v560
        %v1746 = vunpack.c.l.b16 %v561
        %v1747 = vunpack.c.h.b16 %v561
        %v1748 = vunpack.c.l.b16 %v562
        %v1749 = vunpack.c.h.b16 %v562
        %v1750 = vunpack.c.l.b16 %v563
        %v1751 = vunpack.c.h.b16 %v563
        %v1752 = vunpack.c.l.b16 %v564
        %v1753 = vunpack.c.h.b16 %v564
        %v1754 = vunpack.c.l.b16 %v565
        %v1755 = vunpack.c.h.b16 %v565
        %v1756 = vunpack.c.l.b16 %v566
        %v1757 = vunpack.c.h.b16 %v566
        %v1758 = vunpack.c.l.b16 %v567
        %v1759 = vunpack.c.h.b16 %v567
        %v1760 = vunpack.c.l.b16 %v568
        %v1761 = vunpack.c.h.b16 %v568
        %v1762 = vunpack.c.l.b16 %v569
        %v1763 = vunpack.c.h.b16 %v569
        %v1764 = vunpack.c.l.b16 %v570
        %v1765 = vunpack.c.h.b16 %v570
        %v1766 = vunpack.c.l.b16 %v571
        %v1767 = vunpack.c.h.b16 %v571
        %v1768 = vunpack.c.l.b16 %v572
        %v1769 = vunpack.c.h.b16 %v572
        %v1770 = vunpack.c.l.b16 %v573
        %v1771 = vunpack.c.h.b16 %v573
        %v1772 = vunpack.c.l.b16 %v574
        %v1773 = vunpack.c.h.b16 %v574
        %v1774 = vunpack.c.l.b16 %v575
        %v1775 = vunpack.c.h.b16 %v575
        %v1776 = vunpack.c.l.b16 %v576
        %v1777 = vunpack.c.h.b16 %v576
        %v1778 = vunpack.c.l.b16 %v577
        %v1779 = vunpack.c.h.b16 %v577
        %v1780 = vunpack.c.l.b16 %v578
        %v1781 = vunpack.c.h.b16 %v578
        %v1782 = vunpack.c.l.b16 %v579
        %v1783 = vunpack.c.h.b16 %v579
        %v1784 = vunpack.c.l.b16 %v580
        %v1785 = vunpack.c.h.b16 %v580
        %v1786 = vunpack.c.l.b16 %v581
        %v1787 = vunpack.c.h.b16 %v581
        %v1788 = vunpack.c.l.b16 %v582
        %v1789 = vunpack.c.h.b16 %v582
        %v1790 = vunpack.c.l.b16 %v583
        %v1791 = vunpack.c.h.b16 %v583
        %v1792 = vunpack.c.l.b16 %v584
        %v1793 = vunpack.c.h.b16 %v584
        %v1794 = vunpack.c.l.b16 %v585
        %v1795 = vunpack.c.h.b16 %v585
        %v1796 = vunpack.c.l.b16 %v586
        %v1797 = vunpack.c.h.b16 %v586
        %v1798 = vunpack.c.l.b16 %v587
        %v1799 = vunpack.c.h.b16 %v587
        %v1800 = vunpack.c.l.b16 %v588
        %v1801 = vunpack.c.h.b16 %v588
        %v1802 = vunpack.c.l.b16 %v589
        %v1803 = vunpack.c.h.b16 %v589
        %v1804 = vunpack.c.l.b16 %v590
        %v1805 = vunpack.c.h.b16 %v590
        %v1806 = vunpack.c.l.b16 %v591
        %v1807 = vunpack.c.h.b16 %v591
        %v1808 = vunpack.c.l.b16 %v592
        %v1809 = vunpack.c.h.b16 %v592
        %v1810 = vunpack.c.l.b16 %v593
        %v1811 = vunpack.c.h.b16 %v593
        %v1812 = vunpack.c.l.b16 %v594
        %v1813 = vunpack.c.h.b16 %v594
        %v1814 = vunpack.c.l.b16 %v595
        %v1815 = vunpack.c.h.b16 %v595
        %v1816 = vunpack.c.l.b16 %v596
        %v1817 = vunpack.c.h.b16 %v596
        %v1818 = vunpack.c.l.b16 %v597
        %v1819 = vunpack.c.h.b16 %v597
        %v1820 = vunpack.c.l.b16 %v598
        %v1821 = vunpack.c.h.b16 %v598
        %v1822 = vunpack.c.l.b16 %v599
        %v1823 = vunpack.c.h.b16 %v599
        %v1824 = vunpack.c.l.b16 %v600
        %v1825 = vunpack.c.h.b16 %v600
        %v1826 = vunpack.c.l.b16 %v601
        %v1827 = vunpack.c.h.b16 %v601
        %v1828 = vunpack.c.l.b16 %v602
        %v1829 = vunpack.c.h.b16 %v602
        %v1830 = vunpack.c.l.b16 %v603
        %v1831 = vunpack.c.h.b16 %v603
        %v1832 = vunpack.c.l.b16 %v604
        %v1833 = vunpack.c.h.b16 %v604
        %v1834 = vunpack.c.l.b16 %v605
        %v1835 = vunpack.c.h.b16 %v605
        %v1836 = vunpack.c.l.b16 %v606
        %v1837 = vunpack.c.h.b16 %v606
        %v1838 = vunpack.c.l.b16 %v607
        %v1839 = vunpack.c.h.b16 %v607
        %v1840 = vunpack.c.l.b16 %v608
        %v1841 = vunpack.c.h.b16 %v608
        %v1842 = vunpack.c.l.b16 %v609
        %v1843 = vunpack.c.h.b16 %v609
        %v1844 = vunpack.c.l.b16 %v610
        %v1845 = vunpack.c.h.b16 %v610
        %v1846 = vunpack.c.l.b16 %v611
        %v1847 = vunpack.c.h.b16 %v611
        %v1848 = vunpack.c.l.b16 %v612
        %v1849 = vunpack.c.h.b16 %v612
        %v1850 = vunpack.c.l.b16 %v613
        %v1851 = vunpack.c.h.b16 %v613
        %v1852 = vunpack.c.l.b16 %v614
        %v1853 = vunpack.c.h.b16 %v614
        %v1854 = vunpack.c.l.b16 %v615
        %v1855 = vunpack.c.h.b16 %v615
        %v1856 = vunpack.c.l.b16 %v616
        %v1857 = vunpack.c.h.b16 %v616
        %v1858 = vunpack.c.l.b16 %v617
        %v1859 = vunpack.c.h.b16 %v617
        %v1860 = vunpack.c.l.b16 %v618
        %v1861 = vunpack.c.h.b16 %v618
        %v1862 = vunpack.c.l.b16 %v619
        %v1863 = vunpack.c.h.b16 %v619
        %v1864 = vunpack.c.l.b16 %v620
        %v1865 = vunpack.c.h.b16 %v620
        %v1866 = vunpack.c.l.b16 %v621
        %v1867 = vunpack.c.h.b16 %v621
        %v1868 = vunpack.c.l.b16 %v622
        %v1869 = vunpack.c.h.b16 %v622
        %v1870 = vunpack.c.l.b16 %v623
        %v1871 = vunpack.c.h.b16 %v623
        %v1872 = vunpack.c.l.b16 %v624
        %v1873 = vunpack.c.h.b16 %v624
        %v1874 = vunpack.c.l.b16 %v625
        %v1875 = vunpack.c.h.b16 %v625
        %v1876 = vunpack.c.l.b16 %v626
        %v1877 = vunpack.c.h.b16 %v626
        %v1878 = vunpack.c.l.b16 %v627
        %v1879 = vunpack.c.h.b16 %v627
        %v1880 = vunpack.c.l.b16 %v628
        %v1881 = vunpack.c.h.b16 %v628
        %v1882 = vunpack.c.l.b16 %v629
        %v1883 = vunpack.c.h.b16 %v629
        %v1884 = vunpack.c.l.b16 %v630
        %v1885 = vunpack.c.h.b16 %v630
        %v1886 = vunpack.c.l.b16 %v631
        %v1887 = vunpack.c.h.b16 %v631
        %v1888 = vunpack.c.l.b16 %v632
        %v1889 = vunpack.c.h.b16 %v632
        %v1890 = vunpack.c.l.b16 %v633
        %v1891 = vunpack.c.h.b16 %v633
        %v1892 = vunpack.c.l.b16 %v634
        %v1893 = vunpack.c.h.b16 %v634
        %v1894 = vunpack.c.l.b16 %v635
        %v1895 = vunpack.c.h.b16 %v635
        %v1896 = vunpack.c.l.b16 %v636
        %v1897 = vunpack.c.h.b16 %v636
        %v1898 = vunpack.c.l.b16 %v637
        %v1899 = vunpack.c.h.b16 %v637
        %v1900 = vunpack.c.l.b16 %v638
        %v1901 = vunpack.c.h.b16 %v638
        %v1902 = vunpack.c.l.b16 %v639
        %v1903 = vunpack.c.h.b16 %v639
        %v1904 = vunpack.c.l.b16 %v640
        %v1905 = vunpack.c.h.b16 %v640
        %v1906 = vunpack.c.l.b16 %v641
        %v1907 = vunpack.c.h.b16 %v641
        %v1908 = vunpack.c.l.b16 %v642
        %v1909 = vunpack.c.h.b16 %v642
        %v1910 = vunpack.c.l.b16 %v643
        %v1911 = vunpack.c.h.b16 %v643
        %v1912 = vunpack.c.l.b16 %v644
        %v1913 = vunpack.c.h.b16 %v644
        %v1914 = vunpack.c.l.b16 %v645
        %v1915 = vunpack.c.h.b16 %v645
        %v1916 = vunpack.c.l.b16 %v646
        %v1917 = vunpack.c.h.b16 %v646
        %v1918 = vunpack.c.l.b16 %v647
        %v1919 = vunpack.c.h.b16 %v647
        %v1920 = vunpack.c.l.b16 %v648
        %v1921 = vunpack.c.h.b16 %v648
        %v1922 = vunpack.c.l.b16 %v649
        %v1923 = vunpack.c.h.b16 %v649
        %v1924 = vunpack.c.l.b16 %v650
        %v1925 = vunpack.c.h.b16 %v650
        %v1926 = vunpack.c.l.b16 %v651
        %v1927 = vunpack.c.h.b16 %v651
        %v1928 = vunpack.c.l.b16 %v652
        %v1929 = vunpack.c.h.b16 %v652
        %v1930 = vunpack.c.l.b16 %v653
        %v1931 = vunpack.c.h.b16 %v653
        %v1932 = vunpack.c.l.b16 %v654
        %v1933 = vunpack.c.h.b16 %v654
        %v1934 = vunpack.c.l.b16 %v655
        %v1935 = vunpack.c.h.b16 %v655
        %v1936 = vunpack.c.l.b16 %v656
        %v1937 = vunpack.c.h.b16 %v656
        %v1938 = vunpack.c.l.b16 %v657
        %v1939 = vunpack.c.h.b16 %v657
        %v1940 = vunpack.c.l.b16 %v658
        %v1941 = vunpack.c.h.b16 %v658
        %v1942 = vunpack.c.l.b16 %v659
        %v1943 = vunpack.c.h.b16 %v659
        %v1944 = vunpack.c.l.b16 %v660
        %v1945 = vunpack.c.h.b16 %v660
        %v1946 = vunpack.c.l.b16 %v661
        %v1947 = vunpack.c.h.b16 %v661
        %v1948 = vunpack.c.l.b16 %v662
        %v1949 = vunpack.c.h.b16 %v662
        %v1950 = vunpack.c.l.b16 %v663
        %v1951 = vunpack.c.h.b16 %v663
        %v1952 = vunpack.c.l.b16 %v664
        %v1953 = vunpack.c.h.b16 %v664
        %v1954 = vunpack.c.l.b16 %v665
        %v1955 = vunpack.c.h.b16 %v665
        %v1956 = vunpack.c.l.b16 %v666
        %v1957 = vunpack.c.h.b16 %v666
        %v1958 = vunpack.c.l.b16 %v667
        %v1959 = vunpack.c.h.b16 %v667
        %v1960 = vunpack.c.l.b16 %v668
        %v1961 = vunpack.c.h.b16 %v668
        %v1962 = vunpack.c.l.b16 %v669
        %v1963 = vunpack.c.h.b16 %v669
        %v1964 = vunpack.c.l.b16 %v670
        %v1965 = vunpack.c.h.b16 %v670
        %v1966 = vunpack.c.l.b16 %v671
        %v1967 = vunpack.c.h.b16 %v671
        %v1968 = vunpack.c.l.b16 %v672
        %v1969 = vunpack.c.h.b16 %v672
        %v1970 = vunpack.c.l.b16 %v673
        %v1971 = vunpack.c.h.b16 %v673
        %v1972 = vunpack.c.l.b16 %v674
        %v1973 = vunpack.c.h.b16 %v674
        %v1974 = vunpack.c.l.b16 %v675
        %v1975 = vunpack.c.h.b16 %v675
        %v1976 = vunpack.c.l.b16 %v676
        %v1977 = vunpack.c.h.b16 %v676
        %v1978 = vunpack.c.l.b16 %v677
        %v1979 = vunpack.c.h.b16 %v677
        %v1980 = vunpack.c.l.b16 %v678
        %v1981 = vunpack.c.h.b16 %v678
        %v1982 = vunpack.c.l.b16 %v679
        %v1983 = vunpack.c.h.b16 %v679
        %v1984 = vunpack.c.l.b16 %v680
        %v1985 = vunpack.c.h.b16 %v680
        %v1986 = vunpack.c.l.b16 %v681
        %v1987 = vunpack.c.h.b16 %v681
        %v1988 = vunpack.c.l.b16 %v682
        %v1989 = vunpack.c.h.b16 %v682
        %v1990 = vunpack.c.l.b16 %v683
        %v1991 = vunpack.c.h.b16 %v683
        %v1992 = vunpack.c.l.b16 %v684
        %v1993 = vunpack.c.h.b16 %v684
        %v1994 = vunpack.c.l.b16 %v685
        %v1995 = vunpack.c.h.b16 %v685
        %v1996 = vunpack.c.l.b16 %v686
        %v1997 = vunpack.c.h.b16 %v686
        %v1998 = vunpack.c.l.b16 %v687
        %v1999 = vunpack.c.h.b16 %v687
        %v2000 = vunpack.c.l.b16 %v688
        %v2001 = vunpack.c.h.b16 %v688
        %v2002 = vunpack.c.l.b16 %v689
        %v2003 = vunpack.c.h.b16 %v689
        %v2004 = vunpack.c.l.b16 %v690
        %v2005 = vunpack.c.h.b16 %v690
        %v2006 = vunpack.c.l.b16 %v691
        %v2007 = vunpack.c.h.b16 %v691
        %v2008 = vunpack.c.l.b16 %v692
        %v2009 = vunpack.c.h.b16 %v692
        %v2010 = vunpack.c.l.b16 %v693
        %v2011 = vunpack.c.h.b16 %v693
        %v2012 = vunpack.c.l.b16 %v694
        %v2013 = vunpack.c.h.b16 %v694
        %v2014 = vunpack.c.l.b16 %v695
        %v2015 = vunpack.c.h.b16 %v695
        %v2016 = vunpack.c.l.b16 %v696
        %v2017 = vunpack.c.h.b16 %v696
        %v2018 = vunpack.c.l.b16 %v697
        %v2019 = vunpack.c.h.b16 %v697
        %v2020 = vunpack.c.l.b16 %v698
        %v2021 = vunpack.c.h.b16 %v698
        %v2022 = vunpack.c.l.b16 %v699
        %v2023 = vunpack.c.h.b16 %v699
        %v2024 = vunpack.c.l.b16 %v700
        %v2025 = vunpack.c.h.b16 %v700
        %v2026 = vunpack.c.l.b16 %v701
        %v2027 = vunpack.c.h.b16 %v701
        %v2028 = vunpack.c.l.b16 %v702
        %v2029 = vunpack.c.h.b16 %v702
        %v2030 = vunpack.c.l.b16 %v703
        %v2031 = vunpack.c.h.b16 %v703
        %v2032 = vunpack.c.l.b16 %v704
        %v2033 = vunpack.c.h.b16 %v704
        %v2034 = vunpack.c.l.b16 %v705
        %v2035 = vunpack.c.h.b16 %v705
        %v2036 = vunpack.c.l.b16 %v706
        %v2037 = vunpack.c.h.b16 %v706
        %v2038 = vunpack.c.l.b16 %v707
        %v2039 = vunpack.c.h.b16 %v707
        %v2040 = vunpack.c.l.b16 %v708
        %v2041 = vunpack.c.h.b16 %v708
        %v2042 = vunpack.c.l.b16 %v709
        %v2043 = vunpack.c.h.b16 %v709
        %v2044 = vunpack.c.l.b16 %v710
        %v2045 = vunpack.c.h.b16 %v710
        %v2046 = vunpack.c.l.b16 %v711
        %v2047 = vunpack.c.h.b16 %v711
        %v2048 = vunpack.c.l.b16 %v712
        %v2049 = vunpack.c.h.b16 %v712
        %v2050 = vunpack.c.l.b16 %v713
        %v2051 = vunpack.c.h.b16 %v713
        %v2052 = vunpack.c.l.b16 %v714
        %v2053 = vunpack.c.h.b16 %v714
        %v2054 = vunpack.c.l.b16 %v715
        %v2055 = vunpack.c.h.b16 %v715
        %v2056 = vunpack.c.l.b16 %v716
        %v2057 = vunpack.c.h.b16 %v716
        %v2058 = vunpack.c.l.b16 %v717
        %v2059 = vunpack.c.h.b16 %v717
        %v2060 = vunpack.c.l.b16 %v718
        %v2061 = vunpack.c.h.b16 %v718
        %v2062 = vunpack.c.l.b16 %v719
        %v2063 = vunpack.c.h.b16 %v719
        %v2064 = vunpack.c.l.b16 %v720
        %v2065 = vunpack.c.h.b16 %v720
        %v2066 = vunpack.c.l.b16 %v721
        %v2067 = vunpack.c.h.b16 %v721
        %v2068 = vunpack.c.l.b16 %v722
        %v2069 = vunpack.c.h.b16 %v722
        %v2070 = vunpack.c.l.b16 %v723
        %v2071 = vunpack.c.h.b16 %v723
        %v2072 = vunpack.c.l.b16 %v724
        %v2073 = vunpack.c.h.b16 %v724
        %v2074 = vunpack.c.l.b16 %v725
        %v2075 = vunpack.c.h.b16 %v725
        %v2076 = vunpack.c.l.b16 %v726
        %v2077 = vunpack.c.h.b16 %v726
        %v2078 = vunpack.c.l.b16 %v727
        %v2079 = vunpack.c.h.b16 %v727
        %v2080 = vunpack.c.l.b16 %v728
        %v2081 = vunpack.c.h.b16 %v728
        %v2082 = vunpack.c.l.b16 %v729
        %v2083 = vunpack.c.h.b16 %v729
        %v2084 = vunpack.c.l.b16 %v730
        %v2085 = vunpack.c.h.b16 %v730
        %v2086 = vunpack.c.l.b16 %v731
        %v2087 = vunpack.c.h.b16 %v731
        %v2088 = vunpack.c.l.b16 %v732
        %v2089 = vunpack.c.h.b16 %v732
        %v2090 = vunpack.c.l.b16 %v733
        %v2091 = vunpack.c.h.b16 %v733
        %v2092 = vunpack.c.l.b16 %v734
        %v2093 = vunpack.c.h.b16 %v734
        %v2094 = vunpack.c.l.b16 %v735
        %v2095 = vunpack.c.h.b16 %v735
        %v2096 = vunpack.c.l.b16 %v736
        %v2097 = vunpack.c.h.b16 %v736
        %v2098 = vunpack.c.l.b16 %v737
        %v2099 = vunpack.c.h.b16 %v737
        %v2100 = vunpack.c.l.b16 %v738
        %v2101 = vunpack.c.h.b16 %v738
        %v2102 = vunpack.c.l.b16 %v739
        %v2103 = vunpack.c.h.b16 %v739
        %v2104 = vunpack.c.l.b16 %v740
        %v2105 = vunpack.c.h.b16 %v740
        %v2106 = vunpack.c.l.b16 %v741
        %v2107 = vunpack.c.h.b16 %v741
        %v2108 = vunpack.c.l.b16 %v742
        %v2109 = vunpack.c.h.b16 %v742
        %v2110 = vunpack.c.l.b16 %v743
        %v2111 = vunpack.c.h.b16 %v743
        %v2112 = vunpack.c.l.b16 %v744
        %v2113 = vunpack.c.h.b16 %v744
        %v2114 = vunpack.c.l.b16 %v745
        %v2115 = vunpack.c.h.b16 %v745
        %v2116 = vunpack.c.l.b16 %v746
        %v2117 = vunpack.c.h.b16 %v746
        %v2118 = vunpack.c.l.b16 %v747
        %v2119 = vunpack.c.h.b16 %v747
        %v2120 = vunpack.c.l.b16 %v748
        %v2121 = vunpack.c.h.b16 %v748
        %v2122 = vunpack.c.l.b16 %v749
        %v2123 = vunpack.c.h.b16 %v749
        %v2124 = vunpack.c.l.b16 %v750
        %v2125 = vunpack.c.h.b16 %v750
        %v2126 = vunpack.c.l.b16 %v751
        %v2127 = vunpack.c.h.b16 %v751
        %v2128 = vpack.c.b16 %v1372, %v1360
        %v2129 = vpack.c.b16 %v1373, %v1361
        %v2130 = vpack.c.b16 %v1374, %v1362
        %v2131 = vpack.c.b16 %v1375, %v1363
        %v2132 = vpack.c.b16 %v1376, %v1364
        %v2133 = vpack.c.b16 %v1377, %v1365
        %v2134 = vpack.c.b16 %v1378, %v1366
        %v2135 = vpack.c.b16 %v1379, %v1367
        %v2136 = vpack.c.b16 %v1380, %v1368
        %v2137 = vpack.c.b16 %v1381, %v1369
        %v2138 = vpack.c.b16 %v1382, %v1370
        %v2139 = vpack.c.b16 %v1383, %v1371
        %v2140 = vpack.c.b16 %v1396, %v1384
        %v2141 = vpack.c.b16 %v1397, %v1385
        %v2142 = vpack.c.b16 %v1398, %v1386
        %v2143 = vpack.c.b16 %v1399, %v1387
        %v2144 = vpack.c.b16 %v1400, %v1388
        %v2145 = vpack.c.b16 %v1401, %v1389
        %v2146 = vpack.c.b16 %v1402, %v1390
        %v2147 = vpack.c.b16 %v1403, %v1391
        %v2148 = vpack.c.b16 %v1404, %v1392
        %v2149 = vpack.c.b16 %v1405, %v1393
        %v2150 = vpack.c.b16 %v1406, %v1394
        %v2151 = vpack.c.b16 %v1407, %v1395
        %v2152 = vpack.c.b16 %v1420, %v1408
        %v2153 = vpack.c.b16 %v1421, %v1409
        %v2154 = vpack.c.b16 %v1422, %v1410
        %v2155 = vpack.c.b16 %v1423, %v1411
        %v2156 = vpack.c.b16 %v1424, %v1412
        %v2157 = vpack.c.b16 %v1425, %v1413
        %v2158 = vpack.c.b16 %v1426, %v1414
        %v2159 = vpack.c.b16 %v1427, %v1415
        %v2160 = vpack.c.b16 %v1428, %v1416
        %v2161 = vpack.c.b16 %v1429, %v1417
        %v2162 = vpack.c.b16 %v1430, %v1418
        %v2163 = vpack.c.b16 %v1431, %v1419
        %v2164 = vpack.c.b16 %v1444, %v1432
        %v2165 = vpack.c.b16 %v1445, %v1433
        %v2166 = vpack.c.b16 %v1446, %v1434
        %v2167 = vpack.c.b16 %v1447, %v1435
        %v2168 = vpack.c.b16 %v1448, %v1436
        %v2169 = vpack.c.b16 %v1449, %v1437
        %v2170 = vpack.c.b16 %v1450, %v1438
        %v2171 = vpack.c.b16 %v1451, %v1439
        %v2172 = vpack.c.b16 %v1452, %v1440
        %v2173 = vpack.c.b16 %v1453, %v1441
        %v2174 = vpack.c.b16 %v1454, %v1442
        %v2175 = vpack.c.b16 %v1455, %v1443
        %v2176 = vpack.c.b16 %v1468, %v1456
        %v2177 = vpack.c.b16 %v1469, %v1457
        %v2178 = vpack.c.b16 %v1470, %v1458
        %v2179 = vpack.c.b16 %v1471, %v1459
        %v2180 = vpack.c.b16 %v1472, %v1460
        %v2181 = vpack.c.b16 %v1473, %v1461
        %v2182 = vpack.c.b16 %v1474, %v1462
        %v2183 = vpack.c.b16 %v1475, %v1463
        %v2184 = vpack.c.b16 %v1476, %v1464
        %v2185 = vpack.c.b16 %v1477, %v1465
        %v2186 = vpack.c.b16 %v1478, %v1466
        %v2187 = vpack.c.b16 %v1479, %v1467
        %v2188 = vpack.c.b16 %v1492, %v1480
        %v2189 = vpack.c.b16 %v1493, %v1481
        %v2190 = vpack.c.b16 %v1494, %v1482
        %v2191 = vpack.c.b16 %v1495, %v1483
        %v2192 = vpack.c.b16 %v1496, %v1484
        %v2193 = vpack.c.b16 %v1497, %v1485
        %v2194 = vpack.c.b16 %v1498, %v1486
        %v2195 = vpack.c.b16 %v1499, %v1487
        %v2196 = vpack.c.b16 %v1500, %v1488
        %v2197 = vpack.c.b16 %v1501, %v1489
        %v2198 = vpack.c.b16 %v1502, %v1490
        %v2199 = vpack.c.b16 %v1503, %v1491
        %v2200 = vpack.c.b16 %v1516, %v1504
        %v2201 = vpack.c.b16 %v1517, %v1505
        %v2202 = vpack.c.b16 %v1518, %v1506
        %v2203 = vpack.c.b16 %v1519, %v1507
        %v2204 = vpack.c.b16 %v1520, %v1508
        %v2205 = vpack.c.b16 %v1521, %v1509
        %v2206 = vpack.c.b16 %v1522, %v1510
        %v2207 = vpack.c.b16 %v1523, %v1511
        %v2208 = vpack.c.b16 %v1524, %v1512
        %v2209 = vpack.c.b16 %v1525, %v1513
        %v2210 = vpack.c.b16 %v1526, %v1514
        %v2211 = vpack.c.b16 %v1527, %v1515
        %v2212 = vpack.c.b16 %v1540, %v1528
        %v2213 = vpack.c.b16 %v1541, %v1529
        %v2214 = vpack.c.b16 %v1542, %v1530
        %v2215 = vpack.c.b16 %v1543, %v1531
        %v2216 = vpack.c.b16 %v1544, %v1532
        %v2217 = vpack.c.b16 %v1545, %v1533
        %v2218 = vpack.c.b16 %v1546, %v1534
        %v2219 = vpack.c.b16 %v1547, %v1535
        %v2220 = vpack.c.b16 %v1548, %v1536
        %v2221 = vpack.c.b16 %v1549, %v1537
        %v2222 = vpack.c.b16 %v1550, %v1538
        %v2223 = vpack.c.b16 %v1551, %v1539
        %v2224 = vpack.c.b16 %v1564, %v1552
        %v2225 = vpack.c.b16 %v1565, %v1553
        %v2226 = vpack.c.b16 %v1566, %v1554
        %v2227 = vpack.c.b16 %v1567, %v1555
        %v2228 = vpack.c.b16 %v1568, %v1556
        %v2229 = vpack.c.b16 %v1569, %v1557
        %v2230 = vpack.c.b16 %v1570, %v1558
        %v2231 = vpack.c.b16 %v1571, %v1559
        %v2232 = vpack.c.b16 %v1572, %v1560
        %v2233 = vpack.c.b16 %v1573, %v1561
        %v2234 = vpack.c.b16 %v1574, %v1562
        %v2235 = vpack.c.b16 %v1575, %v1563
        %v2236 = vpack.c.b16 %v1588, %v1576
        %v2237 = vpack.c.b16 %v1589, %v1577
        %v2238 = vpack.c.b16 %v1590, %v1578
        %v2239 = vpack.c.b16 %v1591, %v1579
        %v2240 = vpack.c.b16 %v1592, %v1580
        %v2241 = vpack.c.b16 %v1593, %v1581
        %v2242 = vpack.c.b16 %v1594, %v1582
        %v2243 = vpack.c.b16 %v1595, %v1583
        %v2244 = vpack.c.b16 %v1596, %v1584
        %v2245 = vpack.c.b16 %v1597, %v1585
        %v2246 = vpack.c.b16 %v1598, %v1586
        %v2247 = vpack.c.b16 %v1599, %v1587
        %v2248 = vpack.c.b16 %v1612, %v1600
        %v2249 = vpack.c.b16 %v1613, %v1601
        %v2250 = vpack.c.b16 %v1614, %v1602
        %v2251 = vpack.c.b16 %v1615, %v1603
        %v2252 = vpack.c.b16 %v1616, %v1604
        %v2253 = vpack.c.b16 %v1617, %v1605
        %v2254 = vpack.c.b16 %v1618, %v1606
        %v2255 = vpack.c.b16 %v1619, %v1607
        %v2256 = vpack.c.b16 %v1620, %v1608
        %v2257 = vpack.c.b16 %v1621, %v1609
        %v2258 = vpack.c.b16 %v1622, %v1610
        %v2259 = vpack.c.b16 %v1623, %v1611
        %v2260 = vpack.c.b16 %v1636, %v1624
        %v2261 = vpack.c.b16 %v1637, %v1625
        %v2262 = vpack.c.b16 %v1638, %v1626
        %v2263 = vpack.c.b16 %v1639, %v1627
        %v2264 = vpack.c.b16 %v1640, %v1628
        %v2265 = vpack.c.b16 %v1641, %v1629
        %v2266 = vpack.c.b16 %v1642, %v1630
        %v2267 = vpack.c.b16 %v1643, %v1631
        %v2268 = vpack.c.b16 %v1644, %v1632
        %v2269 = vpack.c.b16 %v1645, %v1633
        %v2270 = vpack.c.b16 %v1646, %v1634
        %v2271 = vpack.c.b16 %v1647, %v1635
        %v2272 = vpack.c.b16 %v1660, %v1648
        %v2273 = vpack.c.b16 %v1661, %v1649
        %v2274 = vpack.c.b16 %v1662, %v1650
        %v2275 = vpack.c.b16 %v1663, %v1651
        %v2276 = vpack.c.b16 %v1664, %v1652
        %v2277 = vpack.c.b16 %v1665, %v1653
        %v2278 = vpack.c.b16 %v1666, %v1654
        %v2279 = vpack.c.b16 %v1667, %v1655
        %v2280 = vpack.c.b16 %v1668, %v1656
        %v2281 = vpack.c.b16 %v1669, %v1657
        %v2282 = vpack.c.b16 %v1670, %v1658
        %v2283 = vpack.c.b16 %v1671, %v1659
        %v2284 = vpack.c.b16 %v1684, %v1672
        %v2285 = vpack.c.b16 %v1685, %v1673
        %v2286 = vpack.c.b16 %v1686, %v1674
        %v2287 = vpack.c.b16 %v1687, %v1675
        %v2288 = vpack.c.b16 %v1688, %v1676
        %v2289 = vpack.c.b16 %v1689, %v1677
        %v2290 = vpack.c.b16 %v1690, %v1678
        %v2291 = vpack.c.b16 %v1691, %v1679
        %v2292 = vpack.c.b16 %v1692, %v1680
        %v2293 = vpack.c.b16 %v1693, %v1681
        %v2294 = vpack.c.b16 %v1694, %v1682
        %v2295 = vpack.c.b16 %v1695, %v1683
        %v2296 = vpack.c.b16 %v1708, %v1696
        %v2297 = vpack.c.b16 %v1709, %v1697
        %v2298 = vpack.c.b16 %v1710, %v1698
        %v2299 = vpack.c.b16 %v1711, %v1699
        %v2300 = vpack.c.b16 %v1712, %v1700
        %v2301 = vpack.c.b16 %v1713, %v1701
        %v2302 = vpack.c.b16 %v1714, %v1702
        %v2303 = vpack.c.b16 %v1715, %v1703
        %v2304 = vpack.c.b16 %v1716, %v1704
        %v2305 = vpack.c.b16 %v1717, %v1705
        %v2306 = vpack.c.b16 %v1718, %v1706
        %v2307 = vpack.c.b16 %v1719, %v1707
        %v2308 = vpack.c.b16 %v1732, %v1720
        %v2309 = vpack.c.b16 %v1733, %v1721
        %v2310 = vpack.c.b16 %v1734, %v1722
        %v2311 = vpack.c.b16 %v1735, %v1723
        %v2312 = vpack.c.b16 %v1736, %v1724
        %v2313 = vpack.c.b16 %v1737, %v1725
        %v2314 = vpack.c.b16 %v1738, %v1726
        %v2315 = vpack.c.b16 %v1739, %v1727
        %v2316 = vpack.c.b16 %v1740, %v1728
        %v2317 = vpack.c.b16 %v1741, %v1729
        %v2318 = vpack.c.b16 %v1742, %v1730
        %v2319 = vpack.c.b16 %v1743, %v1731
        %v2320 = vpack.c.b16 %v1756, %v1744
        %v2321 = vpack.c.b16 %v1757, %v1745
        %v2322 = vpack.c.b16 %v1758, %v1746
        %v2323 = vpack.c.b16 %v1759, %v1747
        %v2324 = vpack.c.b16 %v1760, %v1748
        %v2325 = vpack.c.b16 %v1761, %v1749
        %v2326 = vpack.c.b16 %v1762, %v1750
        %v2327 = vpack.c.b16 %v1763, %v1751
        %v2328 = vpack.c.b16 %v1764, %v1752
        %v2329 = vpack.c.b16 %v1765, %v1753
        %v2330 = vpack.c.b16 %v1766, %v1754
        %v2331 = vpack.c.b16 %v1767, %v1755
        %v2332 = vpack.c.b16 %v1780, %v1768
        %v2333 = vpack.c.b16 %v1781, %v1769
        %v2334 = vpack.c.b16 %v1782, %v1770
        %v2335 = vpack.c.b16 %v1783, %v1771
        %v2336 = vpack.c.b16 %v1784, %v1772
        %v2337 = vpack.c.b16 %v1785, %v1773
        %v2338 = vpack.c.b16 %v1786, %v1774
        %v2339 = vpack.c.b16 %v1787, %v1775
        %v2340 = vpack.c.b16 %v1788, %v1776
        %v2341 = vpack.c.b16 %v1789, %v1777
        %v2342 = vpack.c.b16 %v1790, %v1778
        %v2343 = vpack.c.b16 %v1791, %v1779
        %v2344 = vpack.c.b16 %v1804, %v1792
        %v2345 = vpack.c.b16 %v1805, %v1793
        %v2346 = vpack.c.b16 %v1806, %v1794
        %v2347 = vpack.c.b16 %v1807, %v1795
        %v2348 = vpack.c.b16 %v1808, %v1796
        %v2349 = vpack.c.b16 %v1809, %v1797
        %v2350 = vpack.c.b16 %v1810, %v1798
        %v2351 = vpack.c.b16 %v1811, %v1799
        %v2352 = vpack.c.b16 %v1812, %v1800
        %v2353 = vpack.c.b16 %v1813, %v1801
        %v2354 = vpack.c.b16 %v1814, %v1802
        %v2355 = vpack.c.b16 %v1815, %v1803
        %v2356 = vpack.c.b16 %v1828, %v1816
        %v2357 = vpack.c.b16 %v1829, %v1817
        %v2358 = vpack.c.b16 %v1830, %v1818
        %v2359 = vpack.c.b16 %v1831, %v1819
        %v2360 = vpack.c.b16 %v1832, %v1820
        %v2361 = vpack.c.b16 %v1833, %v1821
        %v2362 = vpack.c.b16 %v1834, %v1822
        %v2363 = vpack.c.b16 %v1835, %v1823
        %v2364 = vpack.c.b16 %v1836, %v1824
        %v2365 = vpack.c.b16 %v1837, %v1825
        %v2366 = vpack.c.b16 %v1838, %v1826
        %v2367 = vpack.c.b16 %v1839, %v1827
        %v2368 = vpack.c.b16 %v1852, %v1840
        %v2369 = vpack.c.b16 %v1853, %v1841
        %v2370 = vpack.c.b16 %v1854, %v1842
        %v2371 = vpack.c.b16 %v1855, %v1843
        %v2372 = vpack.c.b16 %v1856, %v1844
        %v2373 = vpack.c.b16 %v1857, %v1845
        %v2374 = vpack.c.b16 %v1858, %v1846
        %v2375 = vpack.c.b16 %v1859, %v1847
        %v2376 = vpack.c.b16 %v1860, %v1848
        %v2377 = vpack.c.b16 %v1861, %v1849
        %v2378 = vpack.c.b16 %v1862, %v1850
        %v2379 = vpack.c.b16 %v1863, %v1851
        %v2380 = vpack.c.b16 %v1876, %v1864
        %v2381 = vpack.c.b16 %v1877, %v1865
        %v2382 = vpack.c.b16 %v1878, %v1866
        %v2383 = vpack.c.b16 %v1879, %v1867
        %v2384 = vpack.c.b16 %v1880, %v1868
        %v2385 = vpack.c.b16 %v1881, %v1869
        %v2386 = vpack.c.b16 %v1882, %v1870
        %v2387 = vpack.c.b16 %v1883, %v1871
        %v2388 = vpack.c.b16 %v1884, %v1872
        %v2389 = vpack.c.b16 %v1885, %v1873
        %v2390 = vpack.c.b16 %v1886, %v1874
        %v2391 = vpack.c.b16 %v1887, %v1875
        %v2392 = vpack.c.b16 %v1900, %v1888
        %v2393 = vpack.c.b16 %v1901, %v1889
        %v2394 = vpack.c.b16 %v1902, %v1890
        %v2395 = vpack.c.b16 %v1903, %v1891
        %v2396 = vpack.c.b16 %v1904, %v1892
        %v2397 = vpack.c.b16 %v1905, %v1893
        %v2398 = vpack.c.b16 %v1906, %v1894
        %v2399 = vpack.c.b16 %v1907, %v1895
        %v2400 = vpack.c.b16 %v1908, %v1896
        %v2401 = vpack.c.b16 %v1909, %v1897
        %v2402 = vpack.c.b16 %v1910, %v1898
        %v2403 = vpack.c.b16 %v1911, %v1899
        %v2404 = vpack.c.b16 %v1924, %v1912
        %v2405 = vpack.c.b16 %v1925, %v1913
        %v2406 = vpack.c.b16 %v1926, %v1914
        %v2407 = vpack.c.b16 %v1927, %v1915
        %v2408 = vpack.c.b16 %v1928, %v1916
        %v2409 = vpack.c.b16 %v1929, %v1917
        %v2410 = vpack.c.b16 %v1930, %v1918
        %v2411 = vpack.c.b16 %v1931, %v1919
        %v2412 = vpack.c.b16 %v1932, %v1920
        %v2413 = vpack.c.b16 %v1933, %v1921
        %v2414 = vpack.c.b16 %v1934, %v1922
        %v2415 = vpack.c.b16 %v1935, %v1923
        %v2416 = vpack.c.b16 %v1948, %v1936
        %v2417 = vpack.c.b16 %v1949, %v1937
        %v2418 = vpack.c.b16 %v1950, %v1938
        %v2419 = vpack.c.b16 %v1951, %v1939
        %v2420 = vpack.c.b16 %v1952, %v1940
        %v2421 = vpack.c.b16 %v1953, %v1941
        %v2422 = vpack.c.b16 %v1954, %v1942
        %v2423 = vpack.c.b16 %v1955, %v1943
        %v2424 = vpack.c.b16 %v1956, %v1944
        %v2425 = vpack.c.b16 %v1957, %v1945
        %v2426 = vpack.c.b16 %v1958, %v1946
        %v2427 = vpack.c.b16 %v1959, %v1947
        %v2428 = vpack.c.b16 %v1972, %v1960
        %v2429 = vpack.c.b16 %v1973, %v1961
        %v2430 = vpack.c.b16 %v1974, %v1962
        %v2431 = vpack.c.b16 %v1975, %v1963
        %v2432 = vpack.c.b16 %v1976, %v1964
        %v2433 = vpack.c.b16 %v1977, %v1965
        %v2434 = vpack.c.b16 %v1978, %v1966
        %v2435 = vpack.c.b16 %v1979, %v1967
        %v2436 = vpack.c.b16 %v1980, %v1968
        %v2437 = vpack.c.b16 %v1981, %v1969
        %v2438 = vpack.c.b16 %v1982, %v1970
        %v2439 = vpack.c.b16 %v1983, %v1971
        %v2440 = vpack.c.b16 %v1996, %v1984
        %v2441 = vpack.c.b16 %v1997, %v1985
        %v2442 = vpack.c.b16 %v1998, %v1986
        %v2443 = vpack.c.b16 %v1999, %v1987
        %v2444 = vpack.c.b16 %v2000, %v1988
        %v2445 = vpack.c.b16 %v2001, %v1989
        %v2446 = vpack.c.b16 %v2002, %v1990
        %v2447 = vpack.c.b16 %v2003, %v1991
        %v2448 = vpack.c.b16 %v2004, %v1992
        %v2449 = vpack.c.b16 %v2005, %v1993
        %v2450 = vpack.c.b16 %v2006, %v1994
        %v2451 = vpack.c.b16 %v2007, %v1995
        %v2452 = vpack.c.b16 %v2020, %v2008
        %v2453 = vpack.c.b16 %v2021, %v2009
        %v2454 = vpack.c.b16 %v2022, %v2010
        %v2455 = vpack.c.b16 %v2023, %v2011
        %v2456 = vpack.c.b16 %v2024, %v2012
        %v2457 = vpack.c.b16 %v2025, %v2013
        %v2458 = vpack.c.b16 %v2026, %v2014
        %v2459 = vpack.c.b16 %v2027, %v2015
        %v2460 = vpack.c.b16 %v2028, %v2016
        %v2461 = vpack.c.b16 %v2029, %v2017
        %v2462 = vpack.c.b16 %v2030, %v2018
        %v2463 = vpack.c.b16 %v2031, %v2019
        %v2464 = vpack.c.b16 %v2044, %v2032
        %v2465 = vpack.c.b16 %v2045, %v2033
        %v2466 = vpack.c.b16 %v2046, %v2034
        %v2467 = vpack.c.b16 %v2047, %v2035
        %v2468 = vpack.c.b16 %v2048, %v2036
        %v2469 = vpack.c.b16 %v2049, %v2037
        %v2470 = vpack.c.b16 %v2050, %v2038
        %v2471 = vpack.c.b16 %v2051, %v2039
        %v2472 = vpack.c.b16 %v2052, %v2040
        %v2473 = vpack.c.b16 %v2053, %v2041
        %v2474 = vpack.c.b16 %v2054, %v2042
        %v2475 = vpack.c.b16 %v2055, %v2043
        %v2476 = vpack.c.b16 %v2068, %v2056
        %v2477 = vpack.c.b16 %v2069, %v2057
        %v2478 = vpack.c.b16 %v2070, %v2058
        %v2479 = vpack.c.b16 %v2071, %v2059
        %v2480 = vpack.c.b16 %v2072, %v2060
        %v2481 = vpack.c.b16 %v2073, %v2061
        %v2482 = vpack.c.b16 %v2074, %v2062
        %v2483 = vpack.c.b16 %v2075, %v2063
        %v2484 = vpack.c.b16 %v2076, %v2064
        %v2485 = vpack.c.b16 %v2077, %v2065
        %v2486 = vpack.c.b16 %v2078, %v2066
        %v2487 = vpack.c.b16 %v2079, %v2067
        %v2488 = vpack.c.b16 %v2092, %v2080
        %v2489 = vpack.c.b16 %v2093, %v2081
        %v2490 = vpack.c.b16 %v2094, %v2082
        %v2491 = vpack.c.b16 %v2095, %v2083
        %v2492 = vpack.c.b16 %v2096, %v2084
        %v2493 = vpack.c.b16 %v2097, %v2085
        %v2494 = vpack.c.b16 %v2098, %v2086
        %v2495 = vpack.c.b16 %v2099, %v2087
        %v2496 = vpack.c.b16 %v2100, %v2088
        %v2497 = vpack.c.b16 %v2101, %v2089
        %v2498 = vpack.c.b16 %v2102, %v2090
        %v2499 = vpack.c.b16 %v2103, %v2091
        %v2500 = vpack.c.b16 %v2116, %v2104
        %v2501 = vpack.c.b16 %v2117, %v2105
        %v2502 = vpack.c.b16 %v2118, %v2106
        %v2503 = vpack.c.b16 %v2119, %v2107
        %v2504 = vpack.c.b16 %v2120, %v2108
        %v2505 = vpack.c.b16 %v2121, %v2109
        %v2506 = vpack.c.b16 %v2122, %v2110
        %v2507 = vpack.c.b16 %v2123, %v2111
        %v2508 = vpack.c.b16 %v2124, %v2112
        %v2509 = vpack.c.b16 %v2125, %v2113
        %v2510 = vpack.c.b16 %v2126, %v2114
        %v2511 = vpack.c.b16 %v2127, %v2115
        %2896 = vmatprep.subr.bf16.mxu0 %v2129
        %2897 = vmatpush1.bf16.msra.mxu0 %v2128
        %2898 = vmatprep.subr.bf16.mxu0 %v2141
        %2899 = vmatpush1.bf16.msra.mxu0 %v2140
        %2900 = vmatprep.subr.bf16.mxu0 %v2153
        %2901 = vmatpush1.bf16.msra.mxu0 %v2152
        %2902 = vmatprep.subr.bf16.mxu0 %v2165
        %2903 = vmatpush1.bf16.msra.mxu0 %v2164
        %2904 = vmatprep.subr.bf16.mxu0 %v2177
        %2905 = vmatpush1.bf16.msra.mxu0 %v2176
        %2906 = vmatprep.subr.bf16.mxu0 %v2189
        %2907 = vmatpush1.bf16.msra.mxu0 %v2188
        %2908 = vmatprep.subr.bf16.mxu0 %v2201
        %2909 = vmatpush1.bf16.msra.mxu0 %v2200
        %2910 = vmatprep.subr.bf16.mxu0 %v2213
        %2911 = vmatpush1.bf16.msra.mxu0 %v2212
        %2912 = vmatprep.subr.bf16.mxu0 %v2225
        %2913 = vmatpush1.bf16.msra.mxu0 %v2224
        %2914 = vmatprep.subr.bf16.mxu0 %v2237
        %2915 = vmatpush1.bf16.msra.mxu0 %v2236
        %2916 = vmatprep.subr.bf16.mxu0 %v2249
        %2917 = vmatpush1.bf16.msra.mxu0 %v2248
        %2918 = vmatprep.subr.bf16.mxu0 %v2261
        %2919 = vmatpush1.bf16.msra.mxu0 %v2260
        %2920 = vmatprep.subr.bf16.mxu0 %v2273
        %2921 = vmatpush1.bf16.msra.mxu0 %v2272
        %2922 = vmatprep.subr.bf16.mxu0 %v2285
        %2923 = vmatpush1.bf16.msra.mxu0 %v2284
        %2924 = vmatprep.subr.bf16.mxu0 %v2297
        %2925 = vmatpush1.bf16.msra.mxu0 %v2296
        %2926 = vmatprep.subr.bf16.mxu0 %v2309
        %2927 = vmatpush1.bf16.msra.mxu0 %v2308
        %2928 = vmatprep.mubr.bf16.mxu0 %v913
        %2929 = vmatmul.mubr.bf16.gmra.mrb[0].mxu0 %v912
        %v2930 = vpop.f32.mrb[0].mxu0
        %v2931 = vadd.f32 %v759, %v2930
        %v2932 = vpop.f32.mrb[0].mxu0
        %v2933 = vadd.f32 %v763, %v2932
        %v2934 = vpop.f32.mrb[0].mxu0
        %v2935 = vadd.f32 %v759, %v2934
        %v2936 = vpop.f32.mrb[0].mxu0
        %v2937 = vadd.f32 %v763, %v2936
        %2938 = vmatprep.mubr.bf16.mxu0 %v917
        %2939 = vmatmul.mubr.bf16.gmra.mrb[0].mxu0 %v916
        %v2940 = vpop.f32.mrb[0].mxu0
        %v2941 = vadd.f32 %v759, %v2940
        %v2942 = vpop.f32.mrb[0].mxu0
        %v2943 = vadd.f32 %v763, %v2942
        %v2944 = vpop.f32.mrb[0].mxu0
        %v2945 = vadd.f32 %v759, %v2944
        %v2946 = vpop.f32.mrb[0].mxu0
        %v2947 = vadd.f32 %v763, %v2946
        %2948 = vmatprep.mubr.bf16.mxu0 %v921
        %2949 = vmatmul.mubr.bf16.gmra.mrb[0].mxu0 %v920
        %v2950 = vpop.f32.mrb[0].mxu0
        %v2951 = vadd.f32 %v759, %v2950
        %v2952 = vpop.f32.mrb[0].mxu0
        %v2953 = vadd.f32 %v763, %v2952
        %v2954 = vpop.f32.mrb[0].mxu0
        %v2955 = vadd.f32 %v759, %v2954
        %v2956 = vpop.f32.mrb[0].mxu0
        %v2957 = vadd.f32 %v763, %v2956
        %2958 = vmatprep.mubr.bf16.mxu0 %v925
        %2959 = vmatmul.mubr.bf16.gmra.mrb[0].mxu0 %v924
        %v2960 = vpop.f32.mrb[0].mxu0
        %v2961 = vadd.f32 %v759, %v2960
        %v2962 = vpop.f32.mrb[0].mxu0
        %v2963 = vadd.f32 %v763, %v2962
        %v2964 = vpop.f32.mrb[0].mxu0
        %v2965 = vadd.f32 %v759, %v2964
        %v2966 = vpop.f32.mrb[0].mxu0
        %v2967 = vadd.f32 %v763, %v2966
        %2968 = vmatprep.mubr.bf16.mxu0 %v929
        %2969 = vmatmul.mubr.bf16.gmra.mrb[0].mxu0 %v928
        %v2970 = vpop.f32.mrb[0].mxu0
        %v2971 = vadd.f32 %v759, %v2970
        %v2972 = vpop.f32.mrb[0].mxu0
        %v2973 = vadd.f32 %v763, %v2972
        %v2974 = vpop.f32.mrb[0].mxu0
        %v2975 = vadd.f32 %v759, %v2974
        %v2976 = vpop.f32.mrb[0].mxu0
        %v2977 = vadd.f32 %v763, %v2976
        %2978 = vmatprep.mubr.bf16.mxu0 %v933
        %2979 = vmatmul.mubr.bf16.gmra.mrb[0].mxu0 %v932
        %v2980 = vpop.f32.mrb[0].mxu0
        %v2981 = vadd.f32 %v759, %v2980
        %v2982 = vpop.f32.mrb[0].mxu0
        %v2983 = vadd.f32 %v763, %v2982
        %v2984 = vpop.f32.mrb[0].mxu0
        %v2985 = vadd.f32 %v759, %v2984
        %v2986 = vpop.f32.mrb[0].mxu0
        %v2987 = vadd.f32 %v763, %v2986
        %2988 = vmatprep.mubr.bf16.mxu0 %v937
        %2989 = vmatmul.mubr.bf16.gmra.mrb[0].mxu0 %v936
        %v2990 = vpop.f32.mrb[0].mxu0
        %v2991 = vadd.f32 %v759, %v2990
        %v2992 = vpop.f32.mrb[0].mxu0
        %v2993 = vadd.f32 %v763, %v2992
        %v2994 = vpop.f32.mrb[0].mxu0
        %v2995 = vadd.f32 %v759, %v2994
        %v2996 = vpop.f32.mrb[0].mxu0
        %v2997 = vadd.f32 %v763, %v2996
        %2998 = vmatprep.mubr.bf16.mxu0 %v941
        %2999 = vmatmul.mubr.bf16.gmra.mrb[0].mxu0 %v940
        %v3000 = vpop.f32.mrb[0].mxu0
        %v3001 = vadd.f32 %v759, %v3000
        %v3002 = vpop.f32.mrb[0].mxu0
        %v3003 = vadd.f32 %v763, %v3002
        %v3004 = vpop.f32.mrb[0].mxu0
        %v3005 = vadd.f32 %v759, %v3004
        %v3006 = vpop.f32.mrb[0].mxu0
        %v3007 = vadd.f32 %v763, %v3006
        %3008 = vdwg.mxu0
        %3009 = vmatprep.subr.bf16.mxu0 %v2321
        %3010 = vmatpush1.bf16.msra.mxu0 %v2320
        %3011 = vmatprep.subr.bf16.mxu0 %v2333
        %3012 = vmatpush1.bf16.msra.mxu0 %v2332
        %3013 = vmatprep.subr.bf16.mxu0 %v2345
        %3014 = vmatpush1.bf16.msra.mxu0 %v2344
        %3015 = vmatprep.subr.bf16.mxu0 %v2357
        %3016 = vmatpush1.bf16.msra.mxu0 %v2356
        %3017 = vmatprep.subr.bf16.mxu0 %v2369
        %3018 = vmatpush1.bf16.msra.mxu0 %v2368
        %3019 = vmatprep.subr.bf16.mxu0 %v2381
        %3020 = vmatpush1.bf16.msra.mxu0 %v2380
        %3021 = vmatprep.subr.bf16.mxu0 %v2393
        %3022 = vmatpush1.bf16.msra.mxu0 %v2392
        %3023 = vmatprep.subr.bf16.mxu0 %v2405
        %3024 = vmatpush1.bf16.msra.mxu0 %v2404
        %3025 = vmatprep.subr.bf16.mxu0 %v2417
        %3026 = vmatpush1.bf16.msra.mxu0 %v2416
        %3027 = vmatprep.subr.bf16.mxu0 %v2429
        %3028 = vmatpush1.bf16.msra.mxu0 %v2428
        %3029 = vmatprep.subr.bf16.mxu0 %v2441
        %3030 = vmatpush1.bf16.msra.mxu0 %v2440
        %3031 = vmatprep.subr.bf16.mxu0 %v2453
        %3032 = vmatpush1.bf16.msra.mxu0 %v2452
        %3033 = vmatprep.subr.bf16.mxu0 %v2465
        %3034 = vmatpush1.bf16.msra.mxu0 %v2464
        %3035 = vmatprep.subr.bf16.mxu0 %v2477
        %3036 = vmatpush1.bf16.msra.mxu0 %v2476
        %3037 = vmatprep.subr.bf16.mxu0 %v2489
        %3038 = vmatpush1.bf16.msra.mxu0 %v2488
        %3039 = vmatprep.subr.bf16.mxu0 %v2501
        %3040 = vmatpush1.bf16.msra.mxu0 %v2500
        %3041 = vmatprep.mubr.bf16.mxu0 %v915
        %3042 = vmatmul.mubr.bf16.gmra.mrb[0].mxu0 %v914
        %v3043 = vpop.f32.mrb[0].mxu0
        %v3044 = vadd.f32 %v2931, %v3043
        %v3045 = vpop.f32.mrb[0].mxu0
        %v3046 = vadd.f32 %v2933, %v3045
        %v3047 = vpop.f32.mrb[0].mxu0
        %v3048 = vadd.f32 %v2935, %v3047
        %v3049 = vpop.f32.mrb[0].mxu0
        %v3050 = vadd.f32 %v2937, %v3049
        %3051 = vmatprep.mubr.bf16.mxu0 %v919
        %3052 = vmatmul.mubr.bf16.gmra.mrb[0].mxu0 %v918
        %v3053 = vpop.f32.mrb[0].mxu0
        %v3054 = vadd.f32 %v2941, %v3053
        %v3055 = vpop.f32.mrb[0].mxu0
        %v3056 = vadd.f32 %v2943, %v3055
        %v3057 = vpop.f32.mrb[0].mxu0
        %v3058 = vadd.f32 %v2945, %v3057
        %v3059 = vpop.f32.mrb[0].mxu0
        %v3060 = vadd.f32 %v2947, %v3059
        %3061 = vmatprep.mubr.bf16.mxu0 %v923
        %3062 = vmatmul.mubr.bf16.gmra.mrb[0].mxu0 %v922
        %v3063 = vpop.f32.mrb[0].mxu0
        %v3064 = vadd.f32 %v2951, %v3063
        %v3065 = vpop.f32.mrb[0].mxu0
        %v3066 = vadd.f32 %v2953, %v3065
        %v3067 = vpop.f32.mrb[0].mxu0
        %v3068 = vadd.f32 %v2955, %v3067
        %v3069 = vpop.f32.mrb[0].mxu0
        %v3070 = vadd.f32 %v2957, %v3069
        %3071 = vmatprep.mubr.bf16.mxu0 %v927
        %3072 = vmatmul.mubr.bf16.gmra.mrb[0].mxu0 %v926
        %v3073 = vpop.f32.mrb[0].mxu0
        %v3074 = vadd.f32 %v2961, %v3073
        %v3075 = vpop.f32.mrb[0].mxu0
        %v3076 = vadd.f32 %v2963, %v3075
        %v3077 = vpop.f32.mrb[0].mxu0
        %v3078 = vadd.f32 %v2965, %v3077
        %v3079 = vpop.f32.mrb[0].mxu0
        %v3080 = vadd.f32 %v2967, %v3079
        %3081 = vmatprep.mubr.bf16.mxu0 %v931
        %3082 = vmatmul.mubr.bf16.gmra.mrb[0].mxu0 %v930
        %v3083 = vpop.f32.mrb[0].mxu0
        %v3084 = vadd.f32 %v2971, %v3083
        %v3085 = vpop.f32.mrb[0].mxu0
        %v3086 = vadd.f32 %v2973, %v3085
        %v3087 = vpop.f32.mrb[0].mxu0
        %v3088 = vadd.f32 %v2975, %v3087
        %v3089 = vpop.f32.mrb[0].mxu0
        %v3090 = vadd.f32 %v2977, %v3089
        %3091 = vmatprep.mubr.bf16.mxu0 %v935
        %3092 = vmatmul.mubr.bf16.gmra.mrb[0].mxu0 %v934
        %v3093 = vpop.f32.mrb[0].mxu0
        %v3094 = vadd.f32 %v2981, %v3093
        %v3095 = vpop.f32.mrb[0].mxu0
        %v3096 = vadd.f32 %v2983, %v3095
        %v3097 = vpop.f32.mrb[0].mxu0
        %v3098 = vadd.f32 %v2985, %v3097
        %v3099 = vpop.f32.mrb[0].mxu0
        %v3100 = vadd.f32 %v2987, %v3099
        %3101 = vmatprep.mubr.bf16.mxu0 %v939
        %3102 = vmatmul.mubr.bf16.gmra.mrb[0].mxu0 %v938
        %v3103 = vpop.f32.mrb[0].mxu0
        %v3104 = vadd.f32 %v2991, %v3103
        %v3105 = vpop.f32.mrb[0].mxu0
        %v3106 = vadd.f32 %v2993, %v3105
        %v3107 = vpop.f32.mrb[0].mxu0
        %v3108 = vadd.f32 %v2995, %v3107
        %v3109 = vpop.f32.mrb[0].mxu0
        %v3110 = vadd.f32 %v2997, %v3109
        %3111 = vmatprep.mubr.bf16.mxu0 %v943
        %3112 = vmatmul.mubr.bf16.gmra.mrb[0].mxu0 %v942
        %v3113 = vpop.f32.mrb[0].mxu0
        %v3114 = vadd.f32 %v3001, %v3113
        %v3115 = vpop.f32.mrb[0].mxu0
        %v3116 = vadd.f32 %v3003, %v3115
        %v3117 = vpop.f32.mrb[0].mxu0
        %v3118 = vadd.f32 %v3005, %v3117
        %v3119 = vpop.f32.mrb[0].mxu0
        %v3120 = vadd.f32 %v3007, %v3119
        %3121 = vdwg.mxu0
        %3122 = vmatprep.subr.bf16.mxu0 %v2131
        %3123 = vmatpush1.bf16.msra.mxu0 %v2130
        %3124 = vmatprep.subr.bf16.mxu0 %v2143
        %3125 = vmatpush1.bf16.msra.mxu0 %v2142
        %3126 = vmatprep.subr.bf16.mxu0 %v2155
        %3127 = vmatpush1.bf16.msra.mxu0 %v2154
        %3128 = vmatprep.subr.bf16.mxu0 %v2167
        %3129 = vmatpush1.bf16.msra.mxu0 %v2166
        %3130 = vmatprep.subr.bf16.mxu0 %v2179
        %3131 = vmatpush1.bf16.msra.mxu0 %v2178
        %3132 = vmatprep.subr.bf16.mxu0 %v2191
        %3133 = vmatpush1.bf16.msra.mxu0 %v2190
        %3134 = vmatprep.subr.bf16.mxu0 %v2203
        %3135 = vmatpush1.bf16.msra.mxu0 %v2202
        %3136 = vmatprep.subr.bf16.mxu0 %v2215
        %3137 = vmatpush1.bf16.msra.mxu0 %v2214
        %3138 = vmatprep.subr.bf16.mxu0 %v2227
        %3139 = vmatpush1.bf16.msra.mxu0 %v2226
        %3140 = vmatprep.subr.bf16.mxu0 %v2239
        %3141 = vmatpush1.bf16.msra.mxu0 %v2238
        %3142 = vmatprep.subr.bf16.mxu0 %v2251
        %3143 = vmatpush1.bf16.msra.mxu0 %v2250
        %3144 = vmatprep.subr.bf16.mxu0 %v2263
        %3145 = vmatpush1.bf16.msra.mxu0 %v2262
        %3146 = vmatprep.subr.bf16.mxu0 %v2275
        %3147 = vmatpush1.bf16.msra.mxu0 %v2274
        %3148 = vmatprep.subr.bf16.mxu0 %v2287
        %3149 = vmatpush1.bf16.msra.mxu0 %v2286
        %3150 = vmatprep.subr.bf16.mxu0 %v2299
        %3151 = vmatpush1.bf16.msra.mxu0 %v2298
        %3152 = vmatprep.subr.bf16.mxu0 %v2311
        %3153 = vmatpush1.bf16.msra.mxu0 %v2310
        %3154 = vmatprep.mubr.bf16.mxu0 %v913
        %3155 = vmatmul.mubr.bf16.gmra.mrb[0].mxu0 %v912
        %v3156 = vpop.f32.mrb[0].mxu0
        %v3157 = vadd.f32 %v767, %v3156
        %v3158 = vpop.f32.mrb[0].mxu0
        %v3159 = vadd.f32 %v771, %v3158
        %v3160 = vpop.f32.mrb[0].mxu0
        %v3161 = vadd.f32 %v767, %v3160
        %v3162 = vpop.f32.mrb[0].mxu0
        %v3163 = vadd.f32 %v771, %v3162
        %3164 = vmatprep.mubr.bf16.mxu0 %v917
        %3165 = vmatmul.mubr.bf16.gmra.mrb[0].mxu0 %v916
        %v3166 = vpop.f32.mrb[0].mxu0
        %v3167 = vadd.f32 %v767, %v3166
        %v3168 = vpop.f32.mrb[0].mxu0
        %v3169 = vadd.f32 %v771, %v3168
        %v3170 = vpop.f32.mrb[0].mxu0
        %v3171 = vadd.f32 %v767, %v3170
        %v3172 = vpop.f32.mrb[0].mxu0
        %v3173 = vadd.f32 %v771, %v3172
        %3174 = vmatprep.mubr.bf16.mxu0 %v921
        %3175 = vmatmul.mubr.bf16.gmra.mrb[0].mxu0 %v920
        %v3176 = vpop.f32.mrb[0].mxu0
        %v3177 = vadd.f32 %v767, %v3176
        %v3178 = vpop.f32.mrb[0].mxu0
        %v3179 = vadd.f32 %v771, %v3178
        %v3180 = vpop.f32.mrb[0].mxu0
        %v3181 = vadd.f32 %v767, %v3180
        %v3182 = vpop.f32.mrb[0].mxu0
        %v3183 = vadd.f32 %v771, %v3182
        %3184 = vmatprep.mubr.bf16.mxu0 %v925
        %3185 = vmatmul.mubr.bf16.gmra.mrb[0].mxu0 %v924
        %v3186 = vpop.f32.mrb[0].mxu0
        %v3187 = vadd.f32 %v767, %v3186
        %v3188 = vpop.f32.mrb[0].mxu0
        %v3189 = vadd.f32 %v771, %v3188
        %v3190 = vpop.f32.mrb[0].mxu0
        %v3191 = vadd.f32 %v767, %v3190
        %v3192 = vpop.f32.mrb[0].mxu0
        %v3193 = vadd.f32 %v771, %v3192
        %3194 = vmatprep.mubr.bf16.mxu0 %v929
        %3195 = vmatmul.mubr.bf16.gmra.mrb[0].mxu0 %v928
        %v3196 = vpop.f32.mrb[0].mxu0
        %v3197 = vadd.f32 %v767, %v3196
        %v3198 = vpop.f32.mrb[0].mxu0
        %v3199 = vadd.f32 %v771, %v3198
        %v3200 = vpop.f32.mrb[0].mxu0
        %v3201 = vadd.f32 %v767, %v3200
        %v3202 = vpop.f32.mrb[0].mxu0
        %v3203 = vadd.f32 %v771, %v3202
        %3204 = vmatprep.mubr.bf16.mxu0 %v933
        %3205 = vmatmul.mubr.bf16.gmra.mrb[0].mxu0 %v932
        %v3206 = vpop.f32.mrb[0].mxu0
        %v3207 = vadd.f32 %v767, %v3206
        %v3208 = vpop.f32.mrb[0].mxu0
        %v3209 = vadd.f32 %v771, %v3208
        %v3210 = vpop.f32.mrb[0].mxu0
        %v3211 = vadd.f32 %v767, %v3210
        %v3212 = vpop.f32.mrb[0].mxu0
        %v3213 = vadd.f32 %v771, %v3212
        %3214 = vmatprep.mubr.bf16.mxu0 %v937
        %3215 = vmatmul.mubr.bf16.gmra.mrb[0].mxu0 %v936
        %v3216 = vpop.f32.mrb[0].mxu0
        %v3217 = vadd.f32 %v767, %v3216
        %v3218 = vpop.f32.mrb[0].mxu0
        %v3219 = vadd.f32 %v771, %v3218
        %v3220 = vpop.f32.mrb[0].mxu0
        %v3221 = vadd.f32 %v767, %v3220
        %v3222 = vpop.f32.mrb[0].mxu0
        %v3223 = vadd.f32 %v771, %v3222
        %3224 = vmatprep.mubr.bf16.mxu0 %v941
        %3225 = vmatmul.mubr.bf16.gmra.mrb[0].mxu0 %v940
        %v3226 = vpop.f32.mrb[0].mxu0
        %v3227 = vadd.f32 %v767, %v3226
        %v3228 = vpop.f32.mrb[0].mxu0
        %v3229 = vadd.f32 %v771, %v3228
        %v3230 = vpop.f32.mrb[0].mxu0
        %v3231 = vadd.f32 %v767, %v3230
        %v3232 = vpop.f32.mrb[0].mxu0
        %v3233 = vadd.f32 %v771, %v3232
        %3234 = vdwg.mxu0
        %3235 = vmatprep.subr.bf16.mxu0 %v2323
        %3236 = vmatpush1.bf16.msra.mxu0 %v2322
        %3237 = vmatprep.subr.bf16.mxu0 %v2335
        %3238 = vmatpush1.bf16.msra.mxu0 %v2334
        %3239 = vmatprep.subr.bf16.mxu0 %v2347
        %3240 = vmatpush1.bf16.msra.mxu0 %v2346
        %3241 = vmatprep.subr.bf16.mxu0 %v2359
        %3242 = vmatpush1.bf16.msra.mxu0 %v2358
        %3243 = vmatprep.subr.bf16.mxu0 %v2371
        %3244 = vmatpush1.bf16.msra.mxu0 %v2370
        %3245 = vmatprep.subr.bf16.mxu0 %v2383
        %3246 = vmatpush1.bf16.msra.mxu0 %v2382
        %3247 = vmatprep.subr.bf16.mxu0 %v2395
        %3248 = vmatpush1.bf16.msra.mxu0 %v2394
        %3249 = vmatprep.subr.bf16.mxu0 %v2407
        %3250 = vmatpush1.bf16.msra.mxu0 %v2406
        %3251 = vmatprep.subr.bf16.mxu0 %v2419
        %3252 = vmatpush1.bf16.msra.mxu0 %v2418
        %3253 = vmatprep.subr.bf16.mxu0 %v2431
        %3254 = vmatpush1.bf16.msra.mxu0 %v2430
        %3255 = vmatprep.subr.bf16.mxu0 %v2443
        %3256 = vmatpush1.bf16.msra.mxu0 %v2442
        %3257 = vmatprep.subr.bf16.mxu0 %v2455
        %3258 = vmatpush1.bf16.msra.mxu0 %v2454
        %3259 = vmatprep.subr.bf16.mxu0 %v2467
        %3260 = vmatpush1.bf16.msra.mxu0 %v2466
        %3261 = vmatprep.subr.bf16.mxu0 %v2479
        %3262 = vmatpush1.bf16.msra.mxu0 %v2478
        %3263 = vmatprep.subr.bf16.mxu0 %v2491
        %3264 = vmatpush1.bf16.msra.mxu0 %v2490
        %3265 = vmatprep.subr.bf16.mxu0 %v2503
        %3266 = vmatpush1.bf16.msra.mxu0 %v2502
        %3267 = vmatprep.mubr.bf16.mxu0 %v915
        %3268 = vmatmul.mubr.bf16.gmra.mrb[0].mxu0 %v914
        %v3269 = vpop.f32.mrb[0].mxu0
        %v3270 = vadd.f32 %v3157, %v3269
        %v3271 = vpop.f32.mrb[0].mxu0
        %v3272 = vadd.f32 %v3159, %v3271
        %v3273 = vpop.f32.mrb[0].mxu0
        %v3274 = vadd.f32 %v3161, %v3273
        %v3275 = vpop.f32.mrb[0].mxu0
        %v3276 = vadd.f32 %v3163, %v3275
        %3277 = vmatprep.mubr.bf16.mxu0 %v919
        %3278 = vmatmul.mubr.bf16.gmra.mrb[0].mxu0 %v918
        %v3279 = vpop.f32.mrb[0].mxu0
        %v3280 = vadd.f32 %v3167, %v3279
        %v3281 = vpop.f32.mrb[0].mxu0
        %v3282 = vadd.f32 %v3169, %v3281
        %v3283 = vpop.f32.mrb[0].mxu0
        %v3284 = vadd.f32 %v3171, %v3283
        %v3285 = vpop.f32.mrb[0].mxu0
        %v3286 = vadd.f32 %v3173, %v3285
        %3287 = vmatprep.mubr.bf16.mxu0 %v923
        %3288 = vmatmul.mubr.bf16.gmra.mrb[0].mxu0 %v922
        %v3289 = vpop.f32.mrb[0].mxu0
        %v3290 = vadd.f32 %v3177, %v3289
        %v3291 = vpop.f32.mrb[0].mxu0
        %v3292 = vadd.f32 %v3179, %v3291
        %v3293 = vpop.f32.mrb[0].mxu0
        %v3294 = vadd.f32 %v3181, %v3293
        %v3295 = vpop.f32.mrb[0].mxu0
        %v3296 = vadd.f32 %v3183, %v3295
        %3297 = vmatprep.mubr.bf16.mxu0 %v927
        %3298 = vmatmul.mubr.bf16.gmra.mrb[0].mxu0 %v926
        %v3299 = vpop.f32.mrb[0].mxu0
        %v3300 = vadd.f32 %v3187, %v3299
        %v3301 = vpop.f32.mrb[0].mxu0
        %v3302 = vadd.f32 %v3189, %v3301
        %v3303 = vpop.f32.mrb[0].mxu0
        %v3304 = vadd.f32 %v3191, %v3303
        %v3305 = vpop.f32.mrb[0].mxu0
        %v3306 = vadd.f32 %v3193, %v3305
        %3307 = vmatprep.mubr.bf16.mxu0 %v931
        %3308 = vmatmul.mubr.bf16.gmra.mrb[0].mxu0 %v930
        %v3309 = vpop.f32.mrb[0].mxu0
        %v3310 = vadd.f32 %v3197, %v3309
        %v3311 = vpop.f32.mrb[0].mxu0
        %v3312 = vadd.f32 %v3199, %v3311
        %v3313 = vpop.f32.mrb[0].mxu0
        %v3314 = vadd.f32 %v3201, %v3313
        %v3315 = vpop.f32.mrb[0].mxu0
        %v3316 = vadd.f32 %v3203, %v3315
        %3317 = vmatprep.mubr.bf16.mxu0 %v935
        %3318 = vmatmul.mubr.bf16.gmra.mrb[0].mxu0 %v934
        %v3319 = vpop.f32.mrb[0].mxu0
        %v3320 = vadd.f32 %v3207, %v3319
        %v3321 = vpop.f32.mrb[0].mxu0
        %v3322 = vadd.f32 %v3209, %v3321
        %v3323 = vpop.f32.mrb[0].mxu0
        %v3324 = vadd.f32 %v3211, %v3323
        %v3325 = vpop.f32.mrb[0].mxu0
        %v3326 = vadd.f32 %v3213, %v3325
        %3327 = vmatprep.mubr.bf16.mxu0 %v939
        %3328 = vmatmul.mubr.bf16.gmra.mrb[0].mxu0 %v938
        %v3329 = vpop.f32.mrb[0].mxu0
        %v3330 = vadd.f32 %v3217, %v3329
        %v3331 = vpop.f32.mrb[0].mxu0
        %v3332 = vadd.f32 %v3219, %v3331
        %v3333 = vpop.f32.mrb[0].mxu0
        %v3334 = vadd.f32 %v3221, %v3333
        %v3335 = vpop.f32.mrb[0].mxu0
        %v3336 = vadd.f32 %v3223, %v3335
        %3337 = vmatprep.mubr.bf16.mxu0 %v943
        %3338 = vmatmul.mubr.bf16.gmra.mrb[0].mxu0 %v942
        %v3339 = vpop.f32.mrb[0].mxu0
        %v3340 = vadd.f32 %v3227, %v3339
        %v3341 = vpop.f32.mrb[0].mxu0
        %v3342 = vadd.f32 %v3229, %v3341
        %v3343 = vpop.f32.mrb[0].mxu0
        %v3344 = vadd.f32 %v3231, %v3343
        %v3345 = vpop.f32.mrb[0].mxu0
        %v3346 = vadd.f32 %v3233, %v3345
        %3347 = vdwg.mxu0
        %3348 = vmatprep.subr.bf16.mxu0 %v2133
        %3349 = vmatpush1.bf16.msra.mxu0 %v2132
        %3350 = vmatprep.subr.bf16.mxu0 %v2145
        %3351 = vmatpush1.bf16.msra.mxu0 %v2144
        %3352 = vmatprep.subr.bf16.mxu0 %v2157
        %3353 = vmatpush1.bf16.msra.mxu0 %v2156
        %3354 = vmatprep.subr.bf16.mxu0 %v2169
        %3355 = vmatpush1.bf16.msra.mxu0 %v2168
        %3356 = vmatprep.subr.bf16.mxu0 %v2181
        %3357 = vmatpush1.bf16.msra.mxu0 %v2180
        %3358 = vmatprep.subr.bf16.mxu0 %v2193
        %3359 = vmatpush1.bf16.msra.mxu0 %v2192
        %3360 = vmatprep.subr.bf16.mxu0 %v2205
        %3361 = vmatpush1.bf16.msra.mxu0 %v2204
        %3362 = vmatprep.subr.bf16.mxu0 %v2217
        %3363 = vmatpush1.bf16.msra.mxu0 %v2216
        %3364 = vmatprep.subr.bf16.mxu0 %v2229
        %3365 = vmatpush1.bf16.msra.mxu0 %v2228
        %3366 = vmatprep.subr.bf16.mxu0 %v2241
        %3367 = vmatpush1.bf16.msra.mxu0 %v2240
        %3368 = vmatprep.subr.bf16.mxu0 %v2253
        %3369 = vmatpush1.bf16.msra.mxu0 %v2252
        %3370 = vmatprep.subr.bf16.mxu0 %v2265
        %3371 = vmatpush1.bf16.msra.mxu0 %v2264
        %3372 = vmatprep.subr.bf16.mxu0 %v2277
        %3373 = vmatpush1.bf16.msra.mxu0 %v2276
        %3374 = vmatprep.subr.bf16.mxu0 %v2289
        %3375 = vmatpush1.bf16.msra.mxu0 %v2288
        %3376 = vmatprep.subr.bf16.mxu0 %v2301
        %3377 = vmatpush1.bf16.msra.mxu0 %v2300
        %3378 = vmatprep.subr.bf16.mxu0 %v2313
        %3379 = vmatpush1.bf16.msra.mxu0 %v2312
        %3380 = vmatprep.mubr.bf16.mxu0 %v913
        %3381 = vmatmul.mubr.bf16.gmra.mrb[0].mxu0 %v912
        %v3382 = vpop.f32.mrb[0].mxu0
        %v3383 = vadd.f32 %v775, %v3382
        %v3384 = vpop.f32.mrb[0].mxu0
        %v3385 = vadd.f32 %v779, %v3384
        %v3386 = vpop.f32.mrb[0].mxu0
        %v3387 = vadd.f32 %v775, %v3386
        %v3388 = vpop.f32.mrb[0].mxu0
        %v3389 = vadd.f32 %v779, %v3388
        %3390 = vmatprep.mubr.bf16.mxu0 %v917
        %3391 = vmatmul.mubr.bf16.gmra.mrb[0].mxu0 %v916
        %v3392 = vpop.f32.mrb[0].mxu0
        %v3393 = vadd.f32 %v775, %v3392
        %v3394 = vpop.f32.mrb[0].mxu0
        %v3395 = vadd.f32 %v779, %v3394
        %v3396 = vpop.f32.mrb[0].mxu0
        %v3397 = vadd.f32 %v775, %v3396
        %v3398 = vpop.f32.mrb[0].mxu0
        %v3399 = vadd.f32 %v779, %v3398
        %3400 = vmatprep.mubr.bf16.mxu0 %v921
        %3401 = vmatmul.mubr.bf16.gmra.mrb[0].mxu0 %v920
        %v3402 = vpop.f32.mrb[0].mxu0
        %v3403 = vadd.f32 %v775, %v3402
        %v3404 = vpop.f32.mrb[0].mxu0
        %v3405 = vadd.f32 %v779, %v3404
        %v3406 = vpop.f32.mrb[0].mxu0
        %v3407 = vadd.f32 %v775, %v3406
        %v3408 = vpop.f32.mrb[0].mxu0
        %v3409 = vadd.f32 %v779, %v3408
        %3410 = vmatprep.mubr.bf16.mxu0 %v925
        %3411 = vmatmul.mubr.bf16.gmra.mrb[0].mxu0 %v924
        %v3412 = vpop.f32.mrb[0].mxu0
        %v3413 = vadd.f32 %v775, %v3412
        %v3414 = vpop.f32.mrb[0].mxu0
        %v3415 = vadd.f32 %v779, %v3414
        %v3416 = vpop.f32.mrb[0].mxu0
        %v3417 = vadd.f32 %v775, %v3416
        %v3418 = vpop.f32.mrb[0].mxu0
        %v3419 = vadd.f32 %v779, %v3418
        %3420 = vmatprep.mubr.bf16.mxu0 %v929
        %3421 = vmatmul.mubr.bf16.gmra.mrb[0].mxu0 %v928
        %v3422 = vpop.f32.mrb[0].mxu0
        %v3423 = vadd.f32 %v775, %v3422
        %v3424 = vpop.f32.mrb[0].mxu0
        %v3425 = vadd.f32 %v779, %v3424
        %v3426 = vpop.f32.mrb[0].mxu0
        %v3427 = vadd.f32 %v775, %v3426
        %v3428 = vpop.f32.mrb[0].mxu0
        %v3429 = vadd.f32 %v779, %v3428
        %3430 = vmatprep.mubr.bf16.mxu0 %v933
        %3431 = vmatmul.mubr.bf16.gmra.mrb[0].mxu0 %v932
        %v3432 = vpop.f32.mrb[0].mxu0
        %v3433 = vadd.f32 %v775, %v3432
        %v3434 = vpop.f32.mrb[0].mxu0
        %v3435 = vadd.f32 %v779, %v3434
        %v3436 = vpop.f32.mrb[0].mxu0
        %v3437 = vadd.f32 %v775, %v3436
        %v3438 = vpop.f32.mrb[0].mxu0
        %v3439 = vadd.f32 %v779, %v3438
        %3440 = vmatprep.mubr.bf16.mxu0 %v937
        %3441 = vmatmul.mubr.bf16.gmra.mrb[0].mxu0 %v936
        %v3442 = vpop.f32.mrb[0].mxu0
        %v3443 = vadd.f32 %v775, %v3442
        %v3444 = vpop.f32.mrb[0].mxu0
        %v3445 = vadd.f32 %v779, %v3444
        %v3446 = vpop.f32.mrb[0].mxu0
        %v3447 = vadd.f32 %v775, %v3446
        %v3448 = vpop.f32.mrb[0].mxu0
        %v3449 = vadd.f32 %v779, %v3448
        %3450 = vmatprep.mubr.bf16.mxu0 %v941
        %3451 = vmatmul.mubr.bf16.gmra.mrb[0].mxu0 %v940
        %v3452 = vpop.f32.mrb[0].mxu0
        %v3453 = vadd.f32 %v775, %v3452
        %v3454 = vpop.f32.mrb[0].mxu0
        %v3455 = vadd.f32 %v779, %v3454
        %v3456 = vpop.f32.mrb[0].mxu0
        %v3457 = vadd.f32 %v775, %v3456
        %v3458 = vpop.f32.mrb[0].mxu0
        %v3459 = vadd.f32 %v779, %v3458
        %3460 = vdwg.mxu0
        %3461 = vmatprep.subr.bf16.mxu0 %v2325
        %3462 = vmatpush1.bf16.msra.mxu0 %v2324
        %3463 = vmatprep.subr.bf16.mxu0 %v2337
        %3464 = vmatpush1.bf16.msra.mxu0 %v2336
        %3465 = vmatprep.subr.bf16.mxu0 %v2349
        %3466 = vmatpush1.bf16.msra.mxu0 %v2348
        %3467 = vmatprep.subr.bf16.mxu0 %v2361
        %3468 = vmatpush1.bf16.msra.mxu0 %v2360
        %3469 = vmatprep.subr.bf16.mxu0 %v2373
        %3470 = vmatpush1.bf16.msra.mxu0 %v2372
        %3471 = vmatprep.subr.bf16.mxu0 %v2385
        %3472 = vmatpush1.bf16.msra.mxu0 %v2384
        %3473 = vmatprep.subr.bf16.mxu0 %v2397
        %3474 = vmatpush1.bf16.msra.mxu0 %v2396
        %3475 = vmatprep.subr.bf16.mxu0 %v2409
        %3476 = vmatpush1.bf16.msra.mxu0 %v2408
        %3477 = vmatprep.subr.bf16.mxu0 %v2421
        %3478 = vmatpush1.bf16.msra.mxu0 %v2420
        %3479 = vmatprep.subr.bf16.mxu0 %v2433
        %3480 = vmatpush1.bf16.msra.mxu0 %v2432
        %3481 = vmatprep.subr.bf16.mxu0 %v2445
        %3482 = vmatpush1.bf16.msra.mxu0 %v2444
        %3483 = vmatprep.subr.bf16.mxu0 %v2457
        %3484 = vmatpush1.bf16.msra.mxu0 %v2456
        %3485 = vmatprep.subr.bf16.mxu0 %v2469
        %3486 = vmatpush1.bf16.msra.mxu0 %v2468
        %3487 = vmatprep.subr.bf16.mxu0 %v2481
        %3488 = vmatpush1.bf16.msra.mxu0 %v2480
        %3489 = vmatprep.subr.bf16.mxu0 %v2493
        %3490 = vmatpush1.bf16.msra.mxu0 %v2492
        %3491 = vmatprep.subr.bf16.mxu0 %v2505
        %3492 = vmatpush1.bf16.msra.mxu0 %v2504
        %3493 = vmatprep.mubr.bf16.mxu0 %v915
        %3494 = vmatmul.mubr.bf16.gmra.mrb[0].mxu0 %v914
        %v3495 = vpop.f32.mrb[0].mxu0
        %v3496 = vadd.f32 %v3383, %v3495
        %v3497 = vpop.f32.mrb[0].mxu0
        %v3498 = vadd.f32 %v3385, %v3497
        %v3499 = vpop.f32.mrb[0].mxu0
        %v3500 = vadd.f32 %v3387, %v3499
        %v3501 = vpop.f32.mrb[0].mxu0
        %v3502 = vadd.f32 %v3389, %v3501
        %3503 = vmatprep.mubr.bf16.mxu0 %v919
        %3504 = vmatmul.mubr.bf16.gmra.mrb[0].mxu0 %v918
        %v3505 = vpop.f32.mrb[0].mxu0
        %v3506 = vadd.f32 %v3393, %v3505
        %v3507 = vpop.f32.mrb[0].mxu0
        %v3508 = vadd.f32 %v3395, %v3507
        %v3509 = vpop.f32.mrb[0].mxu0
        %v3510 = vadd.f32 %v3397, %v3509
        %v3511 = vpop.f32.mrb[0].mxu0
        %v3512 = vadd.f32 %v3399, %v3511
        %3513 = vmatprep.mubr.bf16.mxu0 %v923
        %3514 = vmatmul.mubr.bf16.gmra.mrb[0].mxu0 %v922
        %v3515 = vpop.f32.mrb[0].mxu0
        %v3516 = vadd.f32 %v3403, %v3515
        %v3517 = vpop.f32.mrb[0].mxu0
        %v3518 = vadd.f32 %v3405, %v3517
        %v3519 = vpop.f32.mrb[0].mxu0
        %v3520 = vadd.f32 %v3407, %v3519
        %v3521 = vpop.f32.mrb[0].mxu0
        %v3522 = vadd.f32 %v3409, %v3521
        %3523 = vmatprep.mubr.bf16.mxu0 %v927
        %3524 = vmatmul.mubr.bf16.gmra.mrb[0].mxu0 %v926
        %v3525 = vpop.f32.mrb[0].mxu0
        %v3526 = vadd.f32 %v3413, %v3525
        %v3527 = vpop.f32.mrb[0].mxu0
        %v3528 = vadd.f32 %v3415, %v3527
        %v3529 = vpop.f32.mrb[0].mxu0
        %v3530 = vadd.f32 %v3417, %v3529
        %v3531 = vpop.f32.mrb[0].mxu0
        %v3532 = vadd.f32 %v3419, %v3531
        %3533 = vmatprep.mubr.bf16.mxu0 %v931
        %3534 = vmatmul.mubr.bf16.gmra.mrb[0].mxu0 %v930
        %v3535 = vpop.f32.mrb[0].mxu0
        %v3536 = vadd.f32 %v3423, %v3535
        %v3537 = vpop.f32.mrb[0].mxu0
        %v3538 = vadd.f32 %v3425, %v3537
        %v3539 = vpop.f32.mrb[0].mxu0
        %v3540 = vadd.f32 %v3427, %v3539
        %v3541 = vpop.f32.mrb[0].mxu0
        %v3542 = vadd.f32 %v3429, %v3541
        %3543 = vmatprep.mubr.bf16.mxu0 %v935
        %3544 = vmatmul.mubr.bf16.gmra.mrb[0].mxu0 %v934
        %v3545 = vpop.f32.mrb[0].mxu0
        %v3546 = vadd.f32 %v3433, %v3545
        %v3547 = vpop.f32.mrb[0].mxu0
        %v3548 = vadd.f32 %v3435, %v3547
        %v3549 = vpop.f32.mrb[0].mxu0
        %v3550 = vadd.f32 %v3437, %v3549
        %v3551 = vpop.f32.mrb[0].mxu0
        %v3552 = vadd.f32 %v3439, %v3551
        %3553 = vmatprep.mubr.bf16.mxu0 %v939
        %3554 = vmatmul.mubr.bf16.gmra.mrb[0].mxu0 %v938
        %v3555 = vpop.f32.mrb[0].mxu0
        %v3556 = vadd.f32 %v3443, %v3555
        %v3557 = vpop.f32.mrb[0].mxu0
        %v3558 = vadd.f32 %v3445, %v3557
        %v3559 = vpop.f32.mrb[0].mxu0
        %v3560 = vadd.f32 %v3447, %v3559
        %v3561 = vpop.f32.mrb[0].mxu0
        %v3562 = vadd.f32 %v3449, %v3561
        %3563 = vmatprep.mubr.bf16.mxu0 %v943
        %3564 = vmatmul.mubr.bf16.gmra.mrb[0].mxu0 %v942
        %v3565 = vpop.f32.mrb[0].mxu0
        %v3566 = vadd.f32 %v3453, %v3565
        %v3567 = vpop.f32.mrb[0].mxu0
        %v3568 = vadd.f32 %v3455, %v3567
        %v3569 = vpop.f32.mrb[0].mxu0
        %v3570 = vadd.f32 %v3457, %v3569
        %v3571 = vpop.f32.mrb[0].mxu0
        %v3572 = vadd.f32 %v3459, %v3571
        %3573 = vdwg.mxu0
        %3574 = vmatprep.subr.bf16.mxu0 %v2135
        %3575 = vmatpush1.bf16.msra.mxu0 %v2134
        %3576 = vmatprep.subr.bf16.mxu0 %v2147
        %3577 = vmatpush1.bf16.msra.mxu0 %v2146
        %3578 = vmatprep.subr.bf16.mxu0 %v2159
        %3579 = vmatpush1.bf16.msra.mxu0 %v2158
        %3580 = vmatprep.subr.bf16.mxu0 %v2171
        %3581 = vmatpush1.bf16.msra.mxu0 %v2170
        %3582 = vmatprep.subr.bf16.mxu0 %v2183
        %3583 = vmatpush1.bf16.msra.mxu0 %v2182
        %3584 = vmatprep.subr.bf16.mxu0 %v2195
        %3585 = vmatpush1.bf16.msra.mxu0 %v2194
        %3586 = vmatprep.subr.bf16.mxu0 %v2207
        %3587 = vmatpush1.bf16.msra.mxu0 %v2206
        %3588 = vmatprep.subr.bf16.mxu0 %v2219
        %3589 = vmatpush1.bf16.msra.mxu0 %v2218
        %3590 = vmatprep.subr.bf16.mxu0 %v2231
        %3591 = vmatpush1.bf16.msra.mxu0 %v2230
        %3592 = vmatprep.subr.bf16.mxu0 %v2243
        %3593 = vmatpush1.bf16.msra.mxu0 %v2242
        %3594 = vmatprep.subr.bf16.mxu0 %v2255
        %3595 = vmatpush1.bf16.msra.mxu0 %v2254
        %3596 = vmatprep.subr.bf16.mxu0 %v2267
        %3597 = vmatpush1.bf16.msra.mxu0 %v2266
        %3598 = vmatprep.subr.bf16.mxu0 %v2279
        %3599 = vmatpush1.bf16.msra.mxu0 %v2278
        %3600 = vmatprep.subr.bf16.mxu0 %v2291
        %3601 = vmatpush1.bf16.msra.mxu0 %v2290
        %3602 = vmatprep.subr.bf16.mxu0 %v2303
        %3603 = vmatpush1.bf16.msra.mxu0 %v2302
        %3604 = vmatprep.subr.bf16.mxu0 %v2315
        %3605 = vmatpush1.bf16.msra.mxu0 %v2314
        %3606 = vmatprep.mubr.bf16.mxu0 %v913
        %3607 = vmatmul.mubr.bf16.gmra.mrb[0].mxu0 %v912
        %v3608 = vpop.f32.mrb[0].mxu0
        %v3609 = vadd.f32 %v783, %v3608
        %v3610 = vpop.f32.mrb[0].mxu0
        %v3611 = vadd.f32 %v787, %v3610
        %v3612 = vpop.f32.mrb[0].mxu0
        %v3613 = vadd.f32 %v783, %v3612
        %v3614 = vpop.f32.mrb[0].mxu0
        %v3615 = vadd.f32 %v787, %v3614
        %3616 = vmatprep.mubr.bf16.mxu0 %v917
        %3617 = vmatmul.mubr.bf16.gmra.mrb[0].mxu0 %v916
        %v3618 = vpop.f32.mrb[0].mxu0
        %v3619 = vadd.f32 %v783, %v3618
        %v3620 = vpop.f32.mrb[0].mxu0
        %v3621 = vadd.f32 %v787, %v3620
        %v3622 = vpop.f32.mrb[0].mxu0
        %v3623 = vadd.f32 %v783, %v3622
        %v3624 = vpop.f32.mrb[0].mxu0
        %v3625 = vadd.f32 %v787, %v3624
        %3626 = vmatprep.mubr.bf16.mxu0 %v921
        %3627 = vmatmul.mubr.bf16.gmra.mrb[0].mxu0 %v920
        %v3628 = vpop.f32.mrb[0].mxu0
        %v3629 = vadd.f32 %v783, %v3628
        %v3630 = vpop.f32.mrb[0].mxu0
        %v3631 = vadd.f32 %v787, %v3630
        %v3632 = vpop.f32.mrb[0].mxu0
        %v3633 = vadd.f32 %v783, %v3632
        %v3634 = vpop.f32.mrb[0].mxu0
        %v3635 = vadd.f32 %v787, %v3634
        %3636 = vmatprep.mubr.bf16.mxu0 %v925
        %3637 = vmatmul.mubr.bf16.gmra.mrb[0].mxu0 %v924
        %v3638 = vpop.f32.mrb[0].mxu0
        %v3639 = vadd.f32 %v783, %v3638
        %v3640 = vpop.f32.mrb[0].mxu0
        %v3641 = vadd.f32 %v787, %v3640
        %v3642 = vpop.f32.mrb[0].mxu0
        %v3643 = vadd.f32 %v783, %v3642
        %v3644 = vpop.f32.mrb[0].mxu0
        %v3645 = vadd.f32 %v787, %v3644
        %3646 = vmatprep.mubr.bf16.mxu0 %v929
        %3647 = vmatmul.mubr.bf16.gmra.mrb[0].mxu0 %v928
        %v3648 = vpop.f32.mrb[0].mxu0
        %v3649 = vadd.f32 %v783, %v3648
        %v3650 = vpop.f32.mrb[0].mxu0
        %v3651 = vadd.f32 %v787, %v3650
        %v3652 = vpop.f32.mrb[0].mxu0
        %v3653 = vadd.f32 %v783, %v3652
        %v3654 = vpop.f32.mrb[0].mxu0
        %v3655 = vadd.f32 %v787, %v3654
        %3656 = vmatprep.mubr.bf16.mxu0 %v933
        %3657 = vmatmul.mubr.bf16.gmra.mrb[0].mxu0 %v932
        %v3658 = vpop.f32.mrb[0].mxu0
        %v3659 = vadd.f32 %v783, %v3658
        %v3660 = vpop.f32.mrb[0].mxu0
        %v3661 = vadd.f32 %v787, %v3660
        %v3662 = vpop.f32.mrb[0].mxu0
        %v3663 = vadd.f32 %v783, %v3662
        %v3664 = vpop.f32.mrb[0].mxu0
        %v3665 = vadd.f32 %v787, %v3664
        %3666 = vmatprep.mubr.bf16.mxu0 %v937
        %3667 = vmatmul.mubr.bf16.gmra.mrb[0].mxu0 %v936
        %v3668 = vpop.f32.mrb[0].mxu0
        %v3669 = vadd.f32 %v783, %v3668
        %v3670 = vpop.f32.mrb[0].mxu0
        %v3671 = vadd.f32 %v787, %v3670
        %v3672 = vpop.f32.mrb[0].mxu0
        %v3673 = vadd.f32 %v783, %v3672
        %v3674 = vpop.f32.mrb[0].mxu0
        %v3675 = vadd.f32 %v787, %v3674
        %3676 = vmatprep.mubr.bf16.mxu0 %v941
        %3677 = vmatmul.mubr.bf16.gmra.mrb[0].mxu0 %v940
        %v3678 = vpop.f32.mrb[0].mxu0
        %v3679 = vadd.f32 %v783, %v3678
        %v3680 = vpop.f32.mrb[0].mxu0
        %v3681 = vadd.f32 %v787, %v3680
        %v3682 = vpop.f32.mrb[0].mxu0
        %v3683 = vadd.f32 %v783, %v3682
        %v3684 = vpop.f32.mrb[0].mxu0
        %v3685 = vadd.f32 %v787, %v3684
        %3686 = vdwg.mxu0
        %3687 = vmatprep.subr.bf16.mxu0 %v2327
        %3688 = vmatpush1.bf16.msra.mxu0 %v2326
        %3689 = vmatprep.subr.bf16.mxu0 %v2339
        %3690 = vmatpush1.bf16.msra.mxu0 %v2338
        %3691 = vmatprep.subr.bf16.mxu0 %v2351
        %3692 = vmatpush1.bf16.msra.mxu0 %v2350
        %3693 = vmatprep.subr.bf16.mxu0 %v2363
        %3694 = vmatpush1.bf16.msra.mxu0 %v2362
        %3695 = vmatprep.subr.bf16.mxu0 %v2375
        %3696 = vmatpush1.bf16.msra.mxu0 %v2374
        %3697 = vmatprep.subr.bf16.mxu0 %v2387
        %3698 = vmatpush1.bf16.msra.mxu0 %v2386
        %3699 = vmatprep.subr.bf16.mxu0 %v2399
        %3700 = vmatpush1.bf16.msra.mxu0 %v2398
        %3701 = vmatprep.subr.bf16.mxu0 %v2411
        %3702 = vmatpush1.bf16.msra.mxu0 %v2410
        %3703 = vmatprep.subr.bf16.mxu0 %v2423
        %3704 = vmatpush1.bf16.msra.mxu0 %v2422
        %3705 = vmatprep.subr.bf16.mxu0 %v2435
        %3706 = vmatpush1.bf16.msra.mxu0 %v2434
        %3707 = vmatprep.subr.bf16.mxu0 %v2447
        %3708 = vmatpush1.bf16.msra.mxu0 %v2446
        %3709 = vmatprep.subr.bf16.mxu0 %v2459
        %3710 = vmatpush1.bf16.msra.mxu0 %v2458
        %3711 = vmatprep.subr.bf16.mxu0 %v2471
        %3712 = vmatpush1.bf16.msra.mxu0 %v2470
        %3713 = vmatprep.subr.bf16.mxu0 %v2483
        %3714 = vmatpush1.bf16.msra.mxu0 %v2482
        %3715 = vmatprep.subr.bf16.mxu0 %v2495
        %3716 = vmatpush1.bf16.msra.mxu0 %v2494
        %3717 = vmatprep.subr.bf16.mxu0 %v2507
        %3718 = vmatpush1.bf16.msra.mxu0 %v2506
        %3719 = vmatprep.mubr.bf16.mxu0 %v915
        %3720 = vmatmul.mubr.bf16.gmra.mrb[0].mxu0 %v914
        %v3721 = vpop.f32.mrb[0].mxu0
        %v3722 = vadd.f32 %v3609, %v3721
        %v3723 = vpop.f32.mrb[0].mxu0
        %v3724 = vadd.f32 %v3611, %v3723
        %v3725 = vpop.f32.mrb[0].mxu0
        %v3726 = vadd.f32 %v3613, %v3725
        %v3727 = vpop.f32.mrb[0].mxu0
        %v3728 = vadd.f32 %v3615, %v3727
        %3729 = vmatprep.mubr.bf16.mxu0 %v919
        %3730 = vmatmul.mubr.bf16.gmra.mrb[0].mxu0 %v918
        %v3731 = vpop.f32.mrb[0].mxu0
        %v3732 = vadd.f32 %v3619, %v3731
        %v3733 = vpop.f32.mrb[0].mxu0
        %v3734 = vadd.f32 %v3621, %v3733
        %v3735 = vpop.f32.mrb[0].mxu0
        %v3736 = vadd.f32 %v3623, %v3735
        %v3737 = vpop.f32.mrb[0].mxu0
        %v3738 = vadd.f32 %v3625, %v3737
        %3739 = vmatprep.mubr.bf16.mxu0 %v923
        %3740 = vmatmul.mubr.bf16.gmra.mrb[0].mxu0 %v922
        %v3741 = vpop.f32.mrb[0].mxu0
        %v3742 = vadd.f32 %v3629, %v3741
        %v3743 = vpop.f32.mrb[0].mxu0
        %v3744 = vadd.f32 %v3631, %v3743
        %v3745 = vpop.f32.mrb[0].mxu0
        %v3746 = vadd.f32 %v3633, %v3745
        %v3747 = vpop.f32.mrb[0].mxu0
        %v3748 = vadd.f32 %v3635, %v3747
        %3749 = vmatprep.mubr.bf16.mxu0 %v927
        %3750 = vmatmul.mubr.bf16.gmra.mrb[0].mxu0 %v926
        %v3751 = vpop.f32.mrb[0].mxu0
        %v3752 = vadd.f32 %v3639, %v3751
        %v3753 = vpop.f32.mrb[0].mxu0
        %v3754 = vadd.f32 %v3641, %v3753
        %v3755 = vpop.f32.mrb[0].mxu0
        %v3756 = vadd.f32 %v3643, %v3755
        %v3757 = vpop.f32.mrb[0].mxu0
        %v3758 = vadd.f32 %v3645, %v3757
        %3759 = vmatprep.mubr.bf16.mxu0 %v931
        %3760 = vmatmul.mubr.bf16.gmra.mrb[0].mxu0 %v930
        %v3761 = vpop.f32.mrb[0].mxu0
        %v3762 = vadd.f32 %v3649, %v3761
        %v3763 = vpop.f32.mrb[0].mxu0
        %v3764 = vadd.f32 %v3651, %v3763
        %v3765 = vpop.f32.mrb[0].mxu0
        %v3766 = vadd.f32 %v3653, %v3765
        %v3767 = vpop.f32.mrb[0].mxu0
        %v3768 = vadd.f32 %v3655, %v3767
        %3769 = vmatprep.mubr.bf16.mxu0 %v935
        %3770 = vmatmul.mubr.bf16.gmra.mrb[0].mxu0 %v934
        %v3771 = vpop.f32.mrb[0].mxu0
        %v3772 = vadd.f32 %v3659, %v3771
        %v3773 = vpop.f32.mrb[0].mxu0
        %v3774 = vadd.f32 %v3661, %v3773
        %v3775 = vpop.f32.mrb[0].mxu0
        %v3776 = vadd.f32 %v3663, %v3775
        %v3777 = vpop.f32.mrb[0].mxu0
        %v3778 = vadd.f32 %v3665, %v3777
        %3779 = vmatprep.mubr.bf16.mxu0 %v939
        %3780 = vmatmul.mubr.bf16.gmra.mrb[0].mxu0 %v938
        %v3781 = vpop.f32.mrb[0].mxu0
        %v3782 = vadd.f32 %v3669, %v3781
        %v3783 = vpop.f32.mrb[0].mxu0
        %v3784 = vadd.f32 %v3671, %v3783
        %v3785 = vpop.f32.mrb[0].mxu0
        %v3786 = vadd.f32 %v3673, %v3785
        %v3787 = vpop.f32.mrb[0].mxu0
        %v3788 = vadd.f32 %v3675, %v3787
        %3789 = vmatprep.mubr.bf16.mxu0 %v943
        %3790 = vmatmul.mubr.bf16.gmra.mrb[0].mxu0 %v942
        %v3791 = vpop.f32.mrb[0].mxu0
        %v3792 = vadd.f32 %v3679, %v3791
        %v3793 = vpop.f32.mrb[0].mxu0
        %v3794 = vadd.f32 %v3681, %v3793
        %v3795 = vpop.f32.mrb[0].mxu0
        %v3796 = vadd.f32 %v3683, %v3795
        %v3797 = vpop.f32.mrb[0].mxu0
        %v3798 = vadd.f32 %v3685, %v3797
        %3799 = vdwg.mxu0
        %3800 = vmatprep.subr.bf16.mxu0 %v2137
        %3801 = vmatpush1.bf16.msra.mxu0 %v2136
        %3802 = vmatprep.subr.bf16.mxu0 %v2149
        %3803 = vmatpush1.bf16.msra.mxu0 %v2148
        %3804 = vmatprep.subr.bf16.mxu0 %v2161
        %3805 = vmatpush1.bf16.msra.mxu0 %v2160
        %3806 = vmatprep.subr.bf16.mxu0 %v2173
        %3807 = vmatpush1.bf16.msra.mxu0 %v2172
        %3808 = vmatprep.subr.bf16.mxu0 %v2185
        %3809 = vmatpush1.bf16.msra.mxu0 %v2184
        %3810 = vmatprep.subr.bf16.mxu0 %v2197
        %3811 = vmatpush1.bf16.msra.mxu0 %v2196
        %3812 = vmatprep.subr.bf16.mxu0 %v2209
        %3813 = vmatpush1.bf16.msra.mxu0 %v2208
        %3814 = vmatprep.subr.bf16.mxu0 %v2221
        %3815 = vmatpush1.bf16.msra.mxu0 %v2220
        %3816 = vmatprep.subr.bf16.mxu0 %v2233
        %3817 = vmatpush1.bf16.msra.mxu0 %v2232
        %3818 = vmatprep.subr.bf16.mxu0 %v2245
        %3819 = vmatpush1.bf16.msra.mxu0 %v2244
        %3820 = vmatprep.subr.bf16.mxu0 %v2257
        %3821 = vmatpush1.bf16.msra.mxu0 %v2256
        %3822 = vmatprep.subr.bf16.mxu0 %v2269
        %3823 = vmatpush1.bf16.msra.mxu0 %v2268
        %3824 = vmatprep.subr.bf16.mxu0 %v2281
        %3825 = vmatpush1.bf16.msra.mxu0 %v2280
        %3826 = vmatprep.subr.bf16.mxu0 %v2293
        %3827 = vmatpush1.bf16.msra.mxu0 %v2292
        %3828 = vmatprep.subr.bf16.mxu0 %v2305
        %3829 = vmatpush1.bf16.msra.mxu0 %v2304
        %3830 = vmatprep.subr.bf16.mxu0 %v2317
        %3831 = vmatpush1.bf16.msra.mxu0 %v2316
        %3832 = vmatprep.mubr.bf16.mxu0 %v913
        %3833 = vmatmul.mubr.bf16.gmra.mrb[0].mxu0 %v912
        %v3834 = vpop.f32.mrb[0].mxu0
        %v3835 = vadd.f32 %v791, %v3834
        %v3836 = vpop.f32.mrb[0].mxu0
        %v3837 = vadd.f32 %v795, %v3836
        %v3838 = vpop.f32.mrb[0].mxu0
        %v3839 = vadd.f32 %v791, %v3838
        %v3840 = vpop.f32.mrb[0].mxu0
        %v3841 = vadd.f32 %v795, %v3840
        %3842 = vmatprep.mubr.bf16.mxu0 %v917
        %3843 = vmatmul.mubr.bf16.gmra.mrb[0].mxu0 %v916
        %v3844 = vpop.f32.mrb[0].mxu0
        %v3845 = vadd.f32 %v791, %v3844
        %v3846 = vpop.f32.mrb[0].mxu0
        %v3847 = vadd.f32 %v795, %v3846
        %v3848 = vpop.f32.mrb[0].mxu0
        %v3849 = vadd.f32 %v791, %v3848
        %v3850 = vpop.f32.mrb[0].mxu0
        %v3851 = vadd.f32 %v795, %v3850
        %3852 = vmatprep.mubr.bf16.mxu0 %v921
        %3853 = vmatmul.mubr.bf16.gmra.mrb[0].mxu0 %v920
        %v3854 = vpop.f32.mrb[0].mxu0
        %v3855 = vadd.f32 %v791, %v3854
        %v3856 = vpop.f32.mrb[0].mxu0
        %v3857 = vadd.f32 %v795, %v3856
        %v3858 = vpop.f32.mrb[0].mxu0
        %v3859 = vadd.f32 %v791, %v3858
        %v3860 = vpop.f32.mrb[0].mxu0
        %v3861 = vadd.f32 %v795, %v3860
        %3862 = vmatprep.mubr.bf16.mxu0 %v925
        %3863 = vmatmul.mubr.bf16.gmra.mrb[0].mxu0 %v924
        %v3864 = vpop.f32.mrb[0].mxu0
        %v3865 = vadd.f32 %v791, %v3864
        %v3866 = vpop.f32.mrb[0].mxu0
        %v3867 = vadd.f32 %v795, %v3866
        %v3868 = vpop.f32.mrb[0].mxu0
        %v3869 = vadd.f32 %v791, %v3868
        %v3870 = vpop.f32.mrb[0].mxu0
        %v3871 = vadd.f32 %v795, %v3870
        %3872 = vmatprep.mubr.bf16.mxu0 %v929
        %3873 = vmatmul.mubr.bf16.gmra.mrb[0].mxu0 %v928
        %v3874 = vpop.f32.mrb[0].mxu0
        %v3875 = vadd.f32 %v791, %v3874
        %v3876 = vpop.f32.mrb[0].mxu0
        %v3877 = vadd.f32 %v795, %v3876
        %v3878 = vpop.f32.mrb[0].mxu0
        %v3879 = vadd.f32 %v791, %v3878
        %v3880 = vpop.f32.mrb[0].mxu0
        %v3881 = vadd.f32 %v795, %v3880
        %3882 = vmatprep.mubr.bf16.mxu0 %v933
        %3883 = vmatmul.mubr.bf16.gmra.mrb[0].mxu0 %v932
        %v3884 = vpop.f32.mrb[0].mxu0
        %v3885 = vadd.f32 %v791, %v3884
        %v3886 = vpop.f32.mrb[0].mxu0
        %v3887 = vadd.f32 %v795, %v3886
        %v3888 = vpop.f32.mrb[0].mxu0
        %v3889 = vadd.f32 %v791, %v3888
        %v3890 = vpop.f32.mrb[0].mxu0
        %v3891 = vadd.f32 %v795, %v3890
        %3892 = vmatprep.mubr.bf16.mxu0 %v937
        %3893 = vmatmul.mubr.bf16.gmra.mrb[0].mxu0 %v936
        %v3894 = vpop.f32.mrb[0].mxu0
        %v3895 = vadd.f32 %v791, %v3894
        %v3896 = vpop.f32.mrb[0].mxu0
        %v3897 = vadd.f32 %v795, %v3896
        %v3898 = vpop.f32.mrb[0].mxu0
        %v3899 = vadd.f32 %v791, %v3898
        %v3900 = vpop.f32.mrb[0].mxu0
        %v3901 = vadd.f32 %v795, %v3900
        %3902 = vmatprep.mubr.bf16.mxu0 %v941
        %3903 = vmatmul.mubr.bf16.gmra.mrb[0].mxu0 %v940
        %v3904 = vpop.f32.mrb[0].mxu0
        %v3905 = vadd.f32 %v791, %v3904
        %v3906 = vpop.f32.mrb[0].mxu0
        %v3907 = vadd.f32 %v795, %v3906
        %v3908 = vpop.f32.mrb[0].mxu0
        %v3909 = vadd.f32 %v791, %v3908
        %v3910 = vpop.f32.mrb[0].mxu0
        %v3911 = vadd.f32 %v795, %v3910
        %3912 = vdwg.mxu0
        %3913 = vmatprep.subr.bf16.mxu0 %v2329
        %3914 = vmatpush1.bf16.msra.mxu0 %v2328
        %3915 = vmatprep.subr.bf16.mxu0 %v2341
        %3916 = vmatpush1.bf16.msra.mxu0 %v2340
        %3917 = vmatprep.subr.bf16.mxu0 %v2353
        %3918 = vmatpush1.bf16.msra.mxu0 %v2352
        %3919 = vmatprep.subr.bf16.mxu0 %v2365
        %3920 = vmatpush1.bf16.msra.mxu0 %v2364
        %3921 = vmatprep.subr.bf16.mxu0 %v2377
        %3922 = vmatpush1.bf16.msra.mxu0 %v2376
        %3923 = vmatprep.subr.bf16.mxu0 %v2389
        %3924 = vmatpush1.bf16.msra.mxu0 %v2388
        %3925 = vmatprep.subr.bf16.mxu0 %v2401
        %3926 = vmatpush1.bf16.msra.mxu0 %v2400
        %3927 = vmatprep.subr.bf16.mxu0 %v2413
        %3928 = vmatpush1.bf16.msra.mxu0 %v2412
        %3929 = vmatprep.subr.bf16.mxu0 %v2425
        %3930 = vmatpush1.bf16.msra.mxu0 %v2424
        %3931 = vmatprep.subr.bf16.mxu0 %v2437
        %3932 = vmatpush1.bf16.msra.mxu0 %v2436
        %3933 = vmatprep.subr.bf16.mxu0 %v2449
        %3934 = vmatpush1.bf16.msra.mxu0 %v2448
        %3935 = vmatprep.subr.bf16.mxu0 %v2461
        %3936 = vmatpush1.bf16.msra.mxu0 %v2460
        %3937 = vmatprep.subr.bf16.mxu0 %v2473
        %3938 = vmatpush1.bf16.msra.mxu0 %v2472
        %3939 = vmatprep.subr.bf16.mxu0 %v2485
        %3940 = vmatpush1.bf16.msra.mxu0 %v2484
        %3941 = vmatprep.subr.bf16.mxu0 %v2497
        %3942 = vmatpush1.bf16.msra.mxu0 %v2496
        %3943 = vmatprep.subr.bf16.mxu0 %v2509
        %3944 = vmatpush1.bf16.msra.mxu0 %v2508
        %3945 = vmatprep.mubr.bf16.mxu0 %v915
        %3946 = vmatmul.mubr.bf16.gmra.mrb[0].mxu0 %v914
        %v3947 = vpop.f32.mrb[0].mxu0
        %v3948 = vadd.f32 %v3835, %v3947
        %v3949 = vpop.f32.mrb[0].mxu0
        %v3950 = vadd.f32 %v3837, %v3949
        %v3951 = vpop.f32.mrb[0].mxu0
        %v3952 = vadd.f32 %v3839, %v3951
        %v3953 = vpop.f32.mrb[0].mxu0
        %v3954 = vadd.f32 %v3841, %v3953
        %3955 = vmatprep.mubr.bf16.mxu0 %v919
        %3956 = vmatmul.mubr.bf16.gmra.mrb[0].mxu0 %v918
        %v3957 = vpop.f32.mrb[0].mxu0
        %v3958 = vadd.f32 %v3845, %v3957
        %v3959 = vpop.f32.mrb[0].mxu0
        %v3960 = vadd.f32 %v3847, %v3959
        %v3961 = vpop.f32.mrb[0].mxu0
        %v3962 = vadd.f32 %v3849, %v3961
        %v3963 = vpop.f32.mrb[0].mxu0
        %v3964 = vadd.f32 %v3851, %v3963
        %3965 = vmatprep.mubr.bf16.mxu0 %v923
        %3966 = vmatmul.mubr.bf16.gmra.mrb[0].mxu0 %v922
        %v3967 = vpop.f32.mrb[0].mxu0
        %v3968 = vadd.f32 %v3855, %v3967
        %v3969 = vpop.f32.mrb[0].mxu0
        %v3970 = vadd.f32 %v3857, %v3969
        %v3971 = vpop.f32.mrb[0].mxu0
        %v3972 = vadd.f32 %v3859, %v3971
        %v3973 = vpop.f32.mrb[0].mxu0
        %v3974 = vadd.f32 %v3861, %v3973
        %3975 = vmatprep.mubr.bf16.mxu0 %v927
        %3976 = vmatmul.mubr.bf16.gmra.mrb[0].mxu0 %v926
        %v3977 = vpop.f32.mrb[0].mxu0
        %v3978 = vadd.f32 %v3865, %v3977
        %v3979 = vpop.f32.mrb[0].mxu0
        %v3980 = vadd.f32 %v3867, %v3979
        %v3981 = vpop.f32.mrb[0].mxu0
        %v3982 = vadd.f32 %v3869, %v3981
        %v3983 = vpop.f32.mrb[0].mxu0
        %v3984 = vadd.f32 %v3871, %v3983
        %3985 = vmatprep.mubr.bf16.mxu0 %v931
        %3986 = vmatmul.mubr.bf16.gmra.mrb[0].mxu0 %v930
        %v3987 = vpop.f32.mrb[0].mxu0
        %v3988 = vadd.f32 %v3875, %v3987
        %v3989 = vpop.f32.mrb[0].mxu0
        %v3990 = vadd.f32 %v3877, %v3989
        %v3991 = vpop.f32.mrb[0].mxu0
        %v3992 = vadd.f32 %v3879, %v3991
        %v3993 = vpop.f32.mrb[0].mxu0
        %v3994 = vadd.f32 %v3881, %v3993
        %3995 = vmatprep.mubr.bf16.mxu0 %v935
        %3996 = vmatmul.mubr.bf16.gmra.mrb[0].mxu0 %v934
        %v3997 = vpop.f32.mrb[0].mxu0
        %v3998 = vadd.f32 %v3885, %v3997
        %v3999 = vpop.f32.mrb[0].mxu0
        %v4000 = vadd.f32 %v3887, %v3999
        %v4001 = vpop.f32.mrb[0].mxu0
        %v4002 = vadd.f32 %v3889, %v4001
        %v4003 = vpop.f32.mrb[0].mxu0
        %v4004 = vadd.f32 %v3891, %v4003
        %4005 = vmatprep.mubr.bf16.mxu0 %v939
        %4006 = vmatmul.mubr.bf16.gmra.mrb[0].mxu0 %v938
        %v4007 = vpop.f32.mrb[0].mxu0
        %v4008 = vadd.f32 %v3895, %v4007
        %v4009 = vpop.f32.mrb[0].mxu0
        %v4010 = vadd.f32 %v3897, %v4009
        %v4011 = vpop.f32.mrb[0].mxu0
        %v4012 = vadd.f32 %v3899, %v4011
        %v4013 = vpop.f32.mrb[0].mxu0
        %v4014 = vadd.f32 %v3901, %v4013
        %4015 = vmatprep.mubr.bf16.mxu0 %v943
        %4016 = vmatmul.mubr.bf16.gmra.mrb[0].mxu0 %v942
        %v4017 = vpop.f32.mrb[0].mxu0
        %v4018 = vadd.f32 %v3905, %v4017
        %v4019 = vpop.f32.mrb[0].mxu0
        %v4020 = vadd.f32 %v3907, %v4019
        %v4021 = vpop.f32.mrb[0].mxu0
        %v4022 = vadd.f32 %v3909, %v4021
        %v4023 = vpop.f32.mrb[0].mxu0
        %v4024 = vadd.f32 %v3911, %v4023
        %4025 = vdwg.mxu0
        %4026 = vmatprep.subr.bf16.mxu0 %v2139
        %4027 = vmatpush1.bf16.msra.mxu0 %v2138
        %4028 = vmatprep.subr.bf16.mxu0 %v2151
        %4029 = vmatpush1.bf16.msra.mxu0 %v2150
        %4030 = vmatprep.subr.bf16.mxu0 %v2163
        %4031 = vmatpush1.bf16.msra.mxu0 %v2162
        %4032 = vmatprep.subr.bf16.mxu0 %v2175
        %4033 = vmatpush1.bf16.msra.mxu0 %v2174
        %4034 = vmatprep.subr.bf16.mxu0 %v2187
        %4035 = vmatpush1.bf16.msra.mxu0 %v2186
        %4036 = vmatprep.subr.bf16.mxu0 %v2199
        %4037 = vmatpush1.bf16.msra.mxu0 %v2198
        %4038 = vmatprep.subr.bf16.mxu0 %v2211
        %4039 = vmatpush1.bf16.msra.mxu0 %v2210
        %4040 = vmatprep.subr.bf16.mxu0 %v2223
        %4041 = vmatpush1.bf16.msra.mxu0 %v2222
        %4042 = vmatprep.subr.bf16.mxu0 %v2235
        %4043 = vmatpush1.bf16.msra.mxu0 %v2234
        %4044 = vmatprep.subr.bf16.mxu0 %v2247
        %4045 = vmatpush1.bf16.msra.mxu0 %v2246
        %4046 = vmatprep.subr.bf16.mxu0 %v2259
        %4047 = vmatpush1.bf16.msra.mxu0 %v2258
        %4048 = vmatprep.subr.bf16.mxu0 %v2271
        %4049 = vmatpush1.bf16.msra.mxu0 %v2270
        %4050 = vmatprep.subr.bf16.mxu0 %v2283
        %4051 = vmatpush1.bf16.msra.mxu0 %v2282
        %4052 = vmatprep.subr.bf16.mxu0 %v2295
        %4053 = vmatpush1.bf16.msra.mxu0 %v2294
        %4054 = vmatprep.subr.bf16.mxu0 %v2307
        %4055 = vmatpush1.bf16.msra.mxu0 %v2306
        %4056 = vmatprep.subr.bf16.mxu0 %v2319
        %4057 = vmatpush1.bf16.msra.mxu0 %v2318
        %4058 = vmatprep.mubr.bf16.mxu0 %v913
        %4059 = vmatmul.mubr.bf16.gmra.mrb[0].mxu0 %v912
        %v4060 = vpop.f32.mrb[0].mxu0
        %v4061 = vadd.f32 %v799, %v4060
        %v4062 = vpop.f32.mrb[0].mxu0
        %v4063 = vadd.f32 %v803, %v4062
        %v4064 = vpop.f32.mrb[0].mxu0
        %v4065 = vadd.f32 %v799, %v4064
        %v4066 = vpop.f32.mrb[0].mxu0
        %v4067 = vadd.f32 %v803, %v4066
        %4068 = vmatprep.mubr.bf16.mxu0 %v917
        %4069 = vmatmul.mubr.bf16.gmra.mrb[0].mxu0 %v916
        %v4070 = vpop.f32.mrb[0].mxu0
        %v4071 = vadd.f32 %v799, %v4070
        %v4072 = vpop.f32.mrb[0].mxu0
        %v4073 = vadd.f32 %v803, %v4072
        %v4074 = vpop.f32.mrb[0].mxu0
        %v4075 = vadd.f32 %v799, %v4074
        %v4076 = vpop.f32.mrb[0].mxu0
        %v4077 = vadd.f32 %v803, %v4076
        %4078 = vmatprep.mubr.bf16.mxu0 %v921
        %4079 = vmatmul.mubr.bf16.gmra.mrb[0].mxu0 %v920
        %v4080 = vpop.f32.mrb[0].mxu0
        %v4081 = vadd.f32 %v799, %v4080
        %v4082 = vpop.f32.mrb[0].mxu0
        %v4083 = vadd.f32 %v803, %v4082
        %v4084 = vpop.f32.mrb[0].mxu0
        %v4085 = vadd.f32 %v799, %v4084
        %v4086 = vpop.f32.mrb[0].mxu0
        %v4087 = vadd.f32 %v803, %v4086
        %4088 = vmatprep.mubr.bf16.mxu0 %v925
        %4089 = vmatmul.mubr.bf16.gmra.mrb[0].mxu0 %v924
        %v4090 = vpop.f32.mrb[0].mxu0
        %v4091 = vadd.f32 %v799, %v4090
        %v4092 = vpop.f32.mrb[0].mxu0
        %v4093 = vadd.f32 %v803, %v4092
        %v4094 = vpop.f32.mrb[0].mxu0
        %v4095 = vadd.f32 %v799, %v4094
        %v4096 = vpop.f32.mrb[0].mxu0
        %v4097 = vadd.f32 %v803, %v4096
        %4098 = vmatprep.mubr.bf16.mxu0 %v929
        %4099 = vmatmul.mubr.bf16.gmra.mrb[0].mxu0 %v928
        %v4100 = vpop.f32.mrb[0].mxu0
        %v4101 = vadd.f32 %v799, %v4100
        %v4102 = vpop.f32.mrb[0].mxu0
        %v4103 = vadd.f32 %v803, %v4102
        %v4104 = vpop.f32.mrb[0].mxu0
        %v4105 = vadd.f32 %v799, %v4104
        %v4106 = vpop.f32.mrb[0].mxu0
        %v4107 = vadd.f32 %v803, %v4106
        %4108 = vmatprep.mubr.bf16.mxu0 %v933
        %4109 = vmatmul.mubr.bf16.gmra.mrb[0].mxu0 %v932
        %v4110 = vpop.f32.mrb[0].mxu0
        %v4111 = vadd.f32 %v799, %v4110
        %v4112 = vpop.f32.mrb[0].mxu0
        %v4113 = vadd.f32 %v803, %v4112
        %v4114 = vpop.f32.mrb[0].mxu0
        %v4115 = vadd.f32 %v799, %v4114
        %v4116 = vpop.f32.mrb[0].mxu0
        %v4117 = vadd.f32 %v803, %v4116
        %4118 = vmatprep.mubr.bf16.mxu0 %v937
        %4119 = vmatmul.mubr.bf16.gmra.mrb[0].mxu0 %v936
        %v4120 = vpop.f32.mrb[0].mxu0
        %v4121 = vadd.f32 %v799, %v4120
        %v4122 = vpop.f32.mrb[0].mxu0
        %v4123 = vadd.f32 %v803, %v4122
        %v4124 = vpop.f32.mrb[0].mxu0
        %v4125 = vadd.f32 %v799, %v4124
        %v4126 = vpop.f32.mrb[0].mxu0
        %v4127 = vadd.f32 %v803, %v4126
        %4128 = vmatprep.mubr.bf16.mxu0 %v941
        %4129 = vmatmul.mubr.bf16.gmra.mrb[0].mxu0 %v940
        %v4130 = vpop.f32.mrb[0].mxu0
        %v4131 = vadd.f32 %v799, %v4130
        %v4132 = vpop.f32.mrb[0].mxu0
        %v4133 = vadd.f32 %v803, %v4132
        %v4134 = vpop.f32.mrb[0].mxu0
        %v4135 = vadd.f32 %v799, %v4134
        %v4136 = vpop.f32.mrb[0].mxu0
        %v4137 = vadd.f32 %v803, %v4136
        %4138 = vdwg.mxu0
        %4139 = vmatprep.subr.bf16.mxu0 %v2331
        %4140 = vmatpush1.bf16.msra.mxu0 %v2330
        %4141 = vmatprep.subr.bf16.mxu0 %v2343
        %4142 = vmatpush1.bf16.msra.mxu0 %v2342
        %4143 = vmatprep.subr.bf16.mxu0 %v2355
        %4144 = vmatpush1.bf16.msra.mxu0 %v2354
        %4145 = vmatprep.subr.bf16.mxu0 %v2367
        %4146 = vmatpush1.bf16.msra.mxu0 %v2366
        %4147 = vmatprep.subr.bf16.mxu0 %v2379
        %4148 = vmatpush1.bf16.msra.mxu0 %v2378
        %4149 = vmatprep.subr.bf16.mxu0 %v2391
        %4150 = vmatpush1.bf16.msra.mxu0 %v2390
        %4151 = vmatprep.subr.bf16.mxu0 %v2403
        %4152 = vmatpush1.bf16.msra.mxu0 %v2402
        %4153 = vmatprep.subr.bf16.mxu0 %v2415
        %4154 = vmatpush1.bf16.msra.mxu0 %v2414
        %4155 = vmatprep.subr.bf16.mxu0 %v2427
        %4156 = vmatpush1.bf16.msra.mxu0 %v2426
        %4157 = vmatprep.subr.bf16.mxu0 %v2439
        %4158 = vmatpush1.bf16.msra.mxu0 %v2438
        %4159 = vmatprep.subr.bf16.mxu0 %v2451
        %4160 = vmatpush1.bf16.msra.mxu0 %v2450
        %4161 = vmatprep.subr.bf16.mxu0 %v2463
        %4162 = vmatpush1.bf16.msra.mxu0 %v2462
        %4163 = vmatprep.subr.bf16.mxu0 %v2475
        %4164 = vmatpush1.bf16.msra.mxu0 %v2474
        %4165 = vmatprep.subr.bf16.mxu0 %v2487
        %4166 = vmatpush1.bf16.msra.mxu0 %v2486
        %4167 = vmatprep.subr.bf16.mxu0 %v2499
        %4168 = vmatpush1.bf16.msra.mxu0 %v2498
        %4169 = vmatprep.subr.bf16.mxu0 %v2511
        %4170 = vmatpush1.bf16.msra.mxu0 %v2510
        %4171 = vmatprep.mubr.bf16.mxu0 %v915
        %4172 = vmatmul.mubr.bf16.gmra.mrb[0].mxu0 %v914
        %v4173 = vpop.f32.mrb[0].mxu0
        %v4174 = vadd.f32 %v4061, %v4173
        %v4175 = vpop.f32.mrb[0].mxu0
        %v4176 = vadd.f32 %v4063, %v4175
        %v4177 = vpop.f32.mrb[0].mxu0
        %v4178 = vadd.f32 %v4065, %v4177
        %v4179 = vpop.f32.mrb[0].mxu0
        %v4180 = vadd.f32 %v4067, %v4179
        %4181 = vmatprep.mubr.bf16.mxu0 %v919
        %4182 = vmatmul.mubr.bf16.gmra.mrb[0].mxu0 %v918
        %v4183 = vpop.f32.mrb[0].mxu0
        %v4184 = vadd.f32 %v4071, %v4183
        %v4185 = vpop.f32.mrb[0].mxu0
        %v4186 = vadd.f32 %v4073, %v4185
        %v4187 = vpop.f32.mrb[0].mxu0
        %v4188 = vadd.f32 %v4075, %v4187
        %v4189 = vpop.f32.mrb[0].mxu0
        %v4190 = vadd.f32 %v4077, %v4189
        %4191 = vmatprep.mubr.bf16.mxu0 %v923
        %4192 = vmatmul.mubr.bf16.gmra.mrb[0].mxu0 %v922
        %v4193 = vpop.f32.mrb[0].mxu0
        %v4194 = vadd.f32 %v4081, %v4193
        %v4195 = vpop.f32.mrb[0].mxu0
        %v4196 = vadd.f32 %v4083, %v4195
        %v4197 = vpop.f32.mrb[0].mxu0
        %v4198 = vadd.f32 %v4085, %v4197
        %v4199 = vpop.f32.mrb[0].mxu0
        %v4200 = vadd.f32 %v4087, %v4199
        %4201 = vmatprep.mubr.bf16.mxu0 %v927
        %4202 = vmatmul.mubr.bf16.gmra.mrb[0].mxu0 %v926
        %v4203 = vpop.f32.mrb[0].mxu0
        %v4204 = vadd.f32 %v4091, %v4203
        %v4205 = vpop.f32.mrb[0].mxu0
        %v4206 = vadd.f32 %v4093, %v4205
        %v4207 = vpop.f32.mrb[0].mxu0
        %v4208 = vadd.f32 %v4095, %v4207
        %v4209 = vpop.f32.mrb[0].mxu0
        %v4210 = vadd.f32 %v4097, %v4209
        %4211 = vmatprep.mubr.bf16.mxu0 %v931
        %4212 = vmatmul.mubr.bf16.gmra.mrb[0].mxu0 %v930
        %v4213 = vpop.f32.mrb[0].mxu0
        %v4214 = vadd.f32 %v4101, %v4213
        %v4215 = vpop.f32.mrb[0].mxu0
        %v4216 = vadd.f32 %v4103, %v4215
        %v4217 = vpop.f32.mrb[0].mxu0
        %v4218 = vadd.f32 %v4105, %v4217
        %v4219 = vpop.f32.mrb[0].mxu0
        %v4220 = vadd.f32 %v4107, %v4219
        %4221 = vmatprep.mubr.bf16.mxu0 %v935
        %4222 = vmatmul.mubr.bf16.gmra.mrb[0].mxu0 %v934
        %v4223 = vpop.f32.mrb[0].mxu0
        %v4224 = vadd.f32 %v4111, %v4223
        %v4225 = vpop.f32.mrb[0].mxu0
        %v4226 = vadd.f32 %v4113, %v4225
        %v4227 = vpop.f32.mrb[0].mxu0
        %v4228 = vadd.f32 %v4115, %v4227
        %v4229 = vpop.f32.mrb[0].mxu0
        %v4230 = vadd.f32 %v4117, %v4229
        %4231 = vmatprep.mubr.bf16.mxu0 %v939
        %4232 = vmatmul.mubr.bf16.gmra.mrb[0].mxu0 %v938
        %v4233 = vpop.f32.mrb[0].mxu0
        %v4234 = vadd.f32 %v4121, %v4233
        %v4235 = vpop.f32.mrb[0].mxu0
        %v4236 = vadd.f32 %v4123, %v4235
        %v4237 = vpop.f32.mrb[0].mxu0
        %v4238 = vadd.f32 %v4125, %v4237
        %v4239 = vpop.f32.mrb[0].mxu0
        %v4240 = vadd.f32 %v4127, %v4239
        %4241 = vmatprep.mubr.bf16.mxu0 %v943
        %4242 = vmatmul.mubr.bf16.gmra.mrb[0].mxu0 %v942
        %v4243 = vpop.f32.mrb[0].mxu0
        %v4244 = vadd.f32 %v4131, %v4243
        %v4245 = vpop.f32.mrb[0].mxu0
        %v4246 = vadd.f32 %v4133, %v4245
        %v4247 = vpop.f32.mrb[0].mxu0
        %v4248 = vadd.f32 %v4135, %v4247
        %v4249 = vpop.f32.mrb[0].mxu0
        %v4250 = vadd.f32 %v4137, %v4249
        %4251 = vdwg.mxu0
        %v4252 = vpack.c.bf16 %v3048, %v3044
        %v4253 = vpack.c.bf16 %v3050, %v3046
        %v4254 = vpack.c.bf16 %v3274, %v3270
        %v4255 = vpack.c.bf16 %v3276, %v3272
        %v4256 = vpack.c.bf16 %v3500, %v3496
        %v4257 = vpack.c.bf16 %v3502, %v3498
        %v4258 = vpack.c.bf16 %v3726, %v3722
        %v4259 = vpack.c.bf16 %v3728, %v3724
        %v4260 = vpack.c.bf16 %v3952, %v3948
        %v4261 = vpack.c.bf16 %v3954, %v3950
        %v4262 = vpack.c.bf16 %v4178, %v4174
        %v4263 = vpack.c.bf16 %v4180, %v4176
        %v4264 = vpack.c.bf16 %v3058, %v3054
        %v4265 = vpack.c.bf16 %v3060, %v3056
        %v4266 = vpack.c.bf16 %v3284, %v3280
        %v4267 = vpack.c.bf16 %v3286, %v3282
        %v4268 = vpack.c.bf16 %v3510, %v3506
        %v4269 = vpack.c.bf16 %v3512, %v3508
        %v4270 = vpack.c.bf16 %v3736, %v3732
        %v4271 = vpack.c.bf16 %v3738, %v3734
        %v4272 = vpack.c.bf16 %v3962, %v3958
        %v4273 = vpack.c.bf16 %v3964, %v3960
        %v4274 = vpack.c.bf16 %v4188, %v4184
        %v4275 = vpack.c.bf16 %v4190, %v4186
        %v4276 = vpack.c.bf16 %v3068, %v3064
        %v4277 = vpack.c.bf16 %v3070, %v3066
        %v4278 = vpack.c.bf16 %v3294, %v3290
        %v4279 = vpack.c.bf16 %v3296, %v3292
        %v4280 = vpack.c.bf16 %v3520, %v3516
        %v4281 = vpack.c.bf16 %v3522, %v3518
        %v4282 = vpack.c.bf16 %v3746, %v3742
        %v4283 = vpack.c.bf16 %v3748, %v3744
        %v4284 = vpack.c.bf16 %v3972, %v3968
        %v4285 = vpack.c.bf16 %v3974, %v3970
        %v4286 = vpack.c.bf16 %v4198, %v4194
        %v4287 = vpack.c.bf16 %v4200, %v4196
        %v4288 = vpack.c.bf16 %v3078, %v3074
        %v4289 = vpack.c.bf16 %v3080, %v3076
        %v4290 = vpack.c.bf16 %v3304, %v3300
        %v4291 = vpack.c.bf16 %v3306, %v3302
        %v4292 = vpack.c.bf16 %v3530, %v3526
        %v4293 = vpack.c.bf16 %v3532, %v3528
        %v4294 = vpack.c.bf16 %v3756, %v3752
        %v4295 = vpack.c.bf16 %v3758, %v3754
        %v4296 = vpack.c.bf16 %v3982, %v3978
        %v4297 = vpack.c.bf16 %v3984, %v3980
        %v4298 = vpack.c.bf16 %v4208, %v4204
        %v4299 = vpack.c.bf16 %v4210, %v4206
        %v4300 = vpack.c.bf16 %v3088, %v3084
        %v4301 = vpack.c.bf16 %v3090, %v3086
        %v4302 = vpack.c.bf16 %v3314, %v3310
        %v4303 = vpack.c.bf16 %v3316, %v3312
        %v4304 = vpack.c.bf16 %v3540, %v3536
        %v4305 = vpack.c.bf16 %v3542, %v3538
        %v4306 = vpack.c.bf16 %v3766, %v3762
        %v4307 = vpack.c.bf16 %v3768, %v3764
        %v4308 = vpack.c.bf16 %v3992, %v3988
        %v4309 = vpack.c.bf16 %v3994, %v3990
        %v4310 = vpack.c.bf16 %v4218, %v4214
        %v4311 = vpack.c.bf16 %v4220, %v4216
        %v4312 = vpack.c.bf16 %v3098, %v3094
        %v4313 = vpack.c.bf16 %v3100, %v3096
        %v4314 = vpack.c.bf16 %v3324, %v3320
        %v4315 = vpack.c.bf16 %v3326, %v3322
        %v4316 = vpack.c.bf16 %v3550, %v3546
        %v4317 = vpack.c.bf16 %v3552, %v3548
        %v4318 = vpack.c.bf16 %v3776, %v3772
        %v4319 = vpack.c.bf16 %v3778, %v3774
        %v4320 = vpack.c.bf16 %v4002, %v3998
        %v4321 = vpack.c.bf16 %v4004, %v4000
        %v4322 = vpack.c.bf16 %v4228, %v4224
        %v4323 = vpack.c.bf16 %v4230, %v4226
        %v4324 = vpack.c.bf16 %v3108, %v3104
        %v4325 = vpack.c.bf16 %v3110, %v3106
        %v4326 = vpack.c.bf16 %v3334, %v3330
        %v4327 = vpack.c.bf16 %v3336, %v3332
        %v4328 = vpack.c.bf16 %v3560, %v3556
        %v4329 = vpack.c.bf16 %v3562, %v3558
        %v4330 = vpack.c.bf16 %v3786, %v3782
        %v4331 = vpack.c.bf16 %v3788, %v3784
        %v4332 = vpack.c.bf16 %v4012, %v4008
        %v4333 = vpack.c.bf16 %v4014, %v4010
        %v4334 = vpack.c.bf16 %v4238, %v4234
        %v4335 = vpack.c.bf16 %v4240, %v4236
        %v4336 = vpack.c.bf16 %v3118, %v3114
        %v4337 = vpack.c.bf16 %v3120, %v3116
        %v4338 = vpack.c.bf16 %v3344, %v3340
        %v4339 = vpack.c.bf16 %v3346, %v3342
        %v4340 = vpack.c.bf16 %v3570, %v3566
        %v4341 = vpack.c.bf16 %v3572, %v3568
        %v4342 = vpack.c.bf16 %v3796, %v3792
        %v4343 = vpack.c.bf16 %v3798, %v3794
        %v4344 = vpack.c.bf16 %v4022, %v4018
        %v4345 = vpack.c.bf16 %v4024, %v4020
        %v4346 = vpack.c.bf16 %v4248, %v4244
        %v4347 = vpack.c.bf16 %v4250, %v4246
        %4348 = vmatprep.subr.bf16.mxu0 0
        %4349 = vmatpush1.bf16.xpose.msra.mxu0 %v4256
        %4350 = vmatprep.subr.bf16.mxu0 0
        %4351 = vmatpush1.bf16.xpose.msra.mxu0 %v4268
        %4352 = vmatprep.subr.bf16.mxu0 0
        %4353 = vmatpush1.bf16.xpose.msra.mxu0 %v4280
        %4354 = vmatprep.subr.bf16.mxu0 0
        %4355 = vmatpush1.bf16.xpose.msra.mxu0 %v4292
        %4356 = vmatprep.subr.bf16.mxu0 0
        %4357 = vmatpush1.bf16.xpose.msra.mxu0 %v4304
        %4358 = vmatprep.subr.bf16.mxu0 0
        %4359 = vmatpush1.bf16.xpose.msra.mxu0 %v4316
        %4360 = vmatprep.subr.bf16.mxu0 0
        %4361 = vmatpush1.bf16.xpose.msra.mxu0 %v4328
        %4362 = vmatprep.subr.bf16.mxu0 0
        %4363 = vmatpush1.bf16.xpose.msra.mxu0 %v4340
        %4364 = vmatprep.subr.bf16.mxu0 0
        %4365 = vmatpush1.bf16.xpose.msra.mxu0 0
        %4366 = vmatprep.subr.bf16.mxu0 0
        %4367 = vmatpush1.bf16.xpose.msra.mxu0 0
        %4368 = vmatprep.subr.bf16.mxu0 0
        %4369 = vmatpush1.bf16.xpose.msra.mxu0 0
        %4370 = vmatprep.subr.bf16.mxu0 0
        %4371 = vmatpush1.bf16.xpose.msra.mxu0 0
        %4372 = vmatprep.subr.bf16.mxu0 0
        %4373 = vmatpush1.bf16.xpose.msra.mxu0 0
        %4374 = vmatprep.subr.bf16.mxu0 0
        %4375 = vmatpush1.bf16.xpose.msra.mxu0 0
        %4376 = vmatprep.subr.bf16.mxu0 0
        %4377 = vmatpush1.bf16.xpose.msra.mxu0 0
        %4378 = vmatprep.subr.bf16.mxu0 0
        %4379 = vmatpush1.bf16.xpose.msra.mxu0 0
        %4380 = vmatprep.mubr.bf16.mxu0 0
        %4381 = vmatmul.mubr.bf16.gmra.mrb[0].mxu0 %v4252
        %v4382 = vpop.f32.mrb[0].mxu0
        %v4383 = vadd.f32 0.0, %v4382
        %v4384 = vpop.f32.mrb[0].mxu0
        %v4385 = vpop.f32.mrb[0].mxu0
        %v4386 = vadd.f32 0.0, %v4385
        %v4387 = vpop.f32.mrb[0].mxu0
        %4388 = vmatprep.mubr.bf16.mxu0 0
        %4389 = vmatmul.mubr.bf16.gmra.mrb[0].mxu0 %v4264
        %v4390 = vpop.f32.mrb[0].mxu0
        %v4391 = vadd.f32 0.0, %v4390
        %v4392 = vpop.f32.mrb[0].mxu0
        %v4393 = vpop.f32.mrb[0].mxu0
        %v4394 = vadd.f32 0.0, %v4393
        %v4395 = vpop.f32.mrb[0].mxu0
        %4396 = vmatprep.mubr.bf16.mxu0 0
        %4397 = vmatmul.mubr.bf16.gmra.mrb[0].mxu0 %v4276
        %v4398 = vpop.f32.mrb[0].mxu0
        %v4399 = vadd.f32 0.0, %v4398
        %v4400 = vpop.f32.mrb[0].mxu0
        %v4401 = vpop.f32.mrb[0].mxu0
        %v4402 = vadd.f32 0.0, %v4401
        %v4403 = vpop.f32.mrb[0].mxu0
        %4404 = vmatprep.mubr.bf16.mxu0 0
        %4405 = vmatmul.mubr.bf16.gmra.mrb[0].mxu0 %v4288
        %v4406 = vpop.f32.mrb[0].mxu0
        %v4407 = vadd.f32 0.0, %v4406
        %v4408 = vpop.f32.mrb[0].mxu0
        %v4409 = vpop.f32.mrb[0].mxu0
        %v4410 = vadd.f32 0.0, %v4409
        %v4411 = vpop.f32.mrb[0].mxu0
        %4412 = vmatprep.mubr.bf16.mxu0 0
        %4413 = vmatmul.mubr.bf16.gmra.mrb[0].mxu0 %v4300
        %v4414 = vpop.f32.mrb[0].mxu0
        %v4415 = vadd.f32 0.0, %v4414
        %v4416 = vpop.f32.mrb[0].mxu0
        %v4417 = vpop.f32.mrb[0].mxu0
        %v4418 = vadd.f32 0.0, %v4417
        %v4419 = vpop.f32.mrb[0].mxu0
        %4420 = vmatprep.mubr.bf16.mxu0 0
        %4421 = vmatmul.mubr.bf16.gmra.mrb[0].mxu0 %v4312
        %v4422 = vpop.f32.mrb[0].mxu0
        %v4423 = vadd.f32 0.0, %v4422
        %v4424 = vpop.f32.mrb[0].mxu0
        %v4425 = vpop.f32.mrb[0].mxu0
        %v4426 = vadd.f32 0.0, %v4425
        %v4427 = vpop.f32.mrb[0].mxu0
        %4428 = vmatprep.mubr.bf16.mxu0 0
        %4429 = vmatmul.mubr.bf16.gmra.mrb[0].mxu0 %v4324
        %v4430 = vpop.f32.mrb[0].mxu0
        %v4431 = vadd.f32 0.0, %v4430
        %v4432 = vpop.f32.mrb[0].mxu0
        %v4433 = vpop.f32.mrb[0].mxu0
        %v4434 = vadd.f32 0.0, %v4433
        %v4435 = vpop.f32.mrb[0].mxu0
        %4436 = vmatprep.mubr.bf16.mxu0 0
        %4437 = vmatmul.mubr.bf16.gmra.mrb[0].mxu0 %v4336
        %v4438 = vpop.f32.mrb[0].mxu0
        %v4439 = vadd.f32 0.0, %v4438
        %v4440 = vpop.f32.mrb[0].mxu0
        %v4441 = vpop.f32.mrb[0].mxu0
        %v4442 = vadd.f32 0.0, %v4441
        %v4443 = vpop.f32.mrb[0].mxu0
        %4444 = vdwg.mxu0
        %4445 = vmax.xlane.f32.xlu0 %v4383
        %v4446 = vpop.xlane.xlu0 %4445
        %4447 = vmax.xlane.f32.xlu0 %v4386
        %v4448 = vpop.xlane.xlu0 %4447
        %4449 = vmax.xlane.f32.xlu0 %v4391
        %v4450 = vpop.xlane.xlu0 %4449
        %4451 = vmax.xlane.f32.xlu0 %v4394
        %v4452 = vpop.xlane.xlu0 %4451
        %4453 = vmax.xlane.f32.xlu0 %v4399
        %v4454 = vpop.xlane.xlu0 %4453
        %4455 = vmax.xlane.f32.xlu0 %v4402
        %v4456 = vpop.xlane.xlu0 %4455
        %4457 = vmax.xlane.f32.xlu0 %v4407
        %v4458 = vpop.xlane.xlu0 %4457
        %4459 = vmax.xlane.f32.xlu0 %v4410
        %v4460 = vpop.xlane.xlu0 %4459
        %4461 = vmax.xlane.f32.xlu0 %v4415
        %v4462 = vpop.xlane.xlu0 %4461
        %4463 = vmax.xlane.f32.xlu0 %v4418
        %v4464 = vpop.xlane.xlu0 %4463
        %4465 = vmax.xlane.f32.xlu0 %v4423
        %v4466 = vpop.xlane.xlu0 %4465
        %4467 = vmax.xlane.f32.xlu0 %v4426
        %v4468 = vpop.xlane.xlu0 %4467
        %4469 = vmax.xlane.f32.xlu0 %v4431
        %v4470 = vpop.xlane.xlu0 %4469
        %4471 = vmax.xlane.f32.xlu0 %v4434
        %v4472 = vpop.xlane.xlu0 %4471
        %4473 = vmax.xlane.f32.xlu0 %v4439
        %v4474 = vpop.xlane.xlu0 %4473
        %4475 = vmax.xlane.f32.xlu0 %v4442
        %v4476 = vpop.xlane.xlu0 %4475
        %v4477 = vsub.f32 %v4383, %v4446
        %v4478 = vsub.f32 %v4386, %v4448
        %v4479 = vsub.f32 %v4391, %v4450
        %v4480 = vsub.f32 %v4394, %v4452
        %v4481 = vsub.f32 %v4399, %v4454
        %v4482 = vsub.f32 %v4402, %v4456
        %v4483 = vsub.f32 %v4407, %v4458
        %v4484 = vsub.f32 %v4410, %v4460
        %v4485 = vsub.f32 %v4415, %v4462
        %v4486 = vsub.f32 %v4418, %v4464
        %v4487 = vsub.f32 %v4423, %v4466
        %v4488 = vsub.f32 %v4426, %v4468
        %v4489 = vsub.f32 %v4431, %v4470
        %v4490 = vsub.f32 %v4434, %v4472
        %v4491 = vsub.f32 %v4439, %v4474
        %v4492 = vsub.f32 %v4442, %v4476
        %v4493 = vmul.f32 %v4477, 1.442695
        %v4494 = vpow.pop %v4493
        %v4495 = vmul.f32 %v4478, 1.442695
        %v4496 = vpow.pop %v4495
        %v4497 = vmul.f32 %v4479, 1.442695
        %v4498 = vpow.pop %v4497
        %v4499 = vmul.f32 %v4480, 1.442695
        %v4500 = vpow.pop %v4499
        %v4501 = vmul.f32 %v4481, 1.442695
        %v4502 = vpow.pop %v4501
        %v4503 = vmul.f32 %v4482, 1.442695
        %v4504 = vpow.pop %v4503
        %v4505 = vmul.f32 %v4483, 1.442695
        %v4506 = vpow.pop %v4505
        %v4507 = vmul.f32 %v4484, 1.442695
        %v4508 = vpow.pop %v4507
        %v4509 = vmul.f32 %v4485, 1.442695
        %v4510 = vpow.pop %v4509
        %v4511 = vmul.f32 %v4486, 1.442695
        %v4512 = vpow.pop %v4511
        %v4513 = vmul.f32 %v4487, 1.442695
        %v4514 = vpow.pop %v4513
        %v4515 = vmul.f32 %v4488, 1.442695
        %v4516 = vpow.pop %v4515
        %v4517 = vmul.f32 %v4489, 1.442695
        %v4518 = vpow.pop %v4517
        %v4519 = vmul.f32 %v4490, 1.442695
        %v4520 = vpow.pop %v4519
        %v4521 = vmul.f32 %v4491, 1.442695
        %v4522 = vpow.pop %v4521
        %v4523 = vmul.f32 %v4492, 1.442695
        %v4524 = vpow.pop %v4523
        %4525 = vadd.xlane.f32.xlu0 %v4494
        %v4526 = vpop.xlane.xlu0 %4525
        %4527 = vadd.xlane.f32.xlu0 %v4496
        %v4528 = vpop.xlane.xlu0 %4527
        %4529 = vadd.xlane.f32.xlu0 %v4498
        %v4530 = vpop.xlane.xlu0 %4529
        %4531 = vadd.xlane.f32.xlu0 %v4500
        %v4532 = vpop.xlane.xlu0 %4531
        %4533 = vadd.xlane.f32.xlu0 %v4502
        %v4534 = vpop.xlane.xlu0 %4533
        %4535 = vadd.xlane.f32.xlu0 %v4504
        %v4536 = vpop.xlane.xlu0 %4535
        %4537 = vadd.xlane.f32.xlu0 %v4506
        %v4538 = vpop.xlane.xlu0 %4537
        %4539 = vadd.xlane.f32.xlu0 %v4508
        %v4540 = vpop.xlane.xlu0 %4539
        %4541 = vadd.xlane.f32.xlu0 %v4510
        %v4542 = vpop.xlane.xlu0 %4541
        %4543 = vadd.xlane.f32.xlu0 %v4512
        %v4544 = vpop.xlane.xlu0 %4543
        %4545 = vadd.xlane.f32.xlu0 %v4514
        %v4546 = vpop.xlane.xlu0 %4545
        %4547 = vadd.xlane.f32.xlu0 %v4516
        %v4548 = vpop.xlane.xlu0 %4547
        %4549 = vadd.xlane.f32.xlu0 %v4518
        %v4550 = vpop.xlane.xlu0 %4549
        %4551 = vadd.xlane.f32.xlu0 %v4520
        %v4552 = vpop.xlane.xlu0 %4551
        %4553 = vadd.xlane.f32.xlu0 %v4522
        %v4554 = vpop.xlane.xlu0 %4553
        %4555 = vadd.xlane.f32.xlu0 %v4524
        %v4556 = vpop.xlane.xlu0 %4555
        %v4557 = vrcp.pop %v4526
        %v4558 = vrcp.pop %v4528
        %v4559 = vrcp.pop %v4530
        %v4560 = vrcp.pop %v4532
        %v4561 = vrcp.pop %v4534
        %v4562 = vrcp.pop %v4536
        %v4563 = vrcp.pop %v4538
        %v4564 = vrcp.pop %v4540
        %v4565 = vrcp.pop %v4542
        %v4566 = vrcp.pop %v4544
        %v4567 = vrcp.pop %v4546
        %v4568 = vrcp.pop %v4548
        %v4569 = vrcp.pop %v4550
        %v4570 = vrcp.pop %v4552
        %v4571 = vrcp.pop %v4554
        %v4572 = vrcp.pop %v4556
        %v4573 = vmul.f32 %v4494, %v4557
        %v4574 = vmul.f32 %v4496, %v4558
        %v4575 = vmul.f32 %v4498, %v4559
        %v4576 = vmul.f32 %v4500, %v4560
        %v4577 = vmul.f32 %v4502, %v4561
        %v4578 = vmul.f32 %v4504, %v4562
        %v4579 = vmul.f32 %v4506, %v4563
        %v4580 = vmul.f32 %v4508, %v4564
        %v4581 = vmul.f32 %v4510, %v4565
        %v4582 = vmul.f32 %v4512, %v4566
        %v4583 = vmul.f32 %v4514, %v4567
        %v4584 = vmul.f32 %v4516, %v4568
        %v4585 = vmul.f32 %v4518, %v4569
        %v4586 = vmul.f32 %v4520, %v4570
        %v4587 = vmul.f32 %v4522, %v4571
        %v4588 = vmul.f32 %v4524, %v4572
        %4589 = vst [vmem:[%s334] sm:$0xff] %v4573
        %4590 = vst [vmem:[%s334 + $0x8] sm:$0xff] %v4574
        %4591 = vst [vmem:[%s334 + $0x10] sm:$0xff] %v4575
        %4592 = vst [vmem:[%s334 + $0x18] sm:$0xff] %v4576
        %4593 = vst [vmem:[%s334 + $0x20] sm:$0xff] %v4577
        %4594 = vst [vmem:[%s334 + $0x28] sm:$0xff] %v4578
        %4595 = vst [vmem:[%s334 + $0x30] sm:$0xff] %v4579
        %4596 = vst [vmem:[%s334 + $0x38] sm:$0xff] %v4580
        %4597 = vst [vmem:[%s334 + $0x40] sm:$0xff] %v4581
        %4598 = vst [vmem:[%s334 + $0x48] sm:$0xff] %v4582
        %4599 = vst [vmem:[%s334 + $0x50] sm:$0xff] %v4583
        %4600 = vst [vmem:[%s334 + $0x58] sm:$0xff] %v4584
        %4601 = vst [vmem:[%s334 + $0x60] sm:$0xff] %v4585
        %4602 = vst [vmem:[%s334 + $0x68] sm:$0xff] %v4586
        %4603 = vst [vmem:[%s334 + $0x70] sm:$0xff] %v4587
        %4604 = vst [vmem:[%s334 + $0x78] sm:$0xff] %v4588
        %v4605 = vpack.c.bf16 %v4574, %v4573
        %v4606 = vpack.c.bf16 %v4576, %v4575
        %v4607 = vpack.c.bf16 %v4578, %v4577
        %v4608 = vpack.c.bf16 %v4580, %v4579
        %v4609 = vpack.c.bf16 %v4582, %v4581
        %v4610 = vpack.c.bf16 %v4584, %v4583
        %v4611 = vpack.c.bf16 %v4586, %v4585
        %v4612 = vpack.c.bf16 %v4588, %v4587
        %4613 = vmatprep.subr.bf16.mxu0 0
        %4614 = vmatpush1.bf16.msra.mxu0 %v4260
        %4615 = vmatprep.subr.bf16.mxu0 0
        %4616 = vmatpush1.bf16.msra.mxu0 %v4272
        %4617 = vmatprep.subr.bf16.mxu0 0
        %4618 = vmatpush1.bf16.msra.mxu0 %v4284
        %4619 = vmatprep.subr.bf16.mxu0 0
        %4620 = vmatpush1.bf16.msra.mxu0 %v4296
        %4621 = vmatprep.subr.bf16.mxu0 0
        %4622 = vmatpush1.bf16.msra.mxu0 %v4308
        %4623 = vmatprep.subr.bf16.mxu0 0
        %4624 = vmatpush1.bf16.msra.mxu0 %v4320
        %4625 = vmatprep.subr.bf16.mxu0 0
        %4626 = vmatpush1.bf16.msra.mxu0 %v4332
        %4627 = vmatprep.subr.bf16.mxu0 0
        %4628 = vmatpush1.bf16.msra.mxu0 %v4344
        %4629 = vmatprep.subr.bf16.mxu0 0
        %4630 = vmatpush1.bf16.msra.mxu0 0
        %4631 = vmatprep.subr.bf16.mxu0 0
        %4632 = vmatpush1.bf16.msra.mxu0 0
        %4633 = vmatprep.subr.bf16.mxu0 0
        %4634 = vmatpush1.bf16.msra.mxu0 0
        %4635 = vmatprep.subr.bf16.mxu0 0
        %4636 = vmatpush1.bf16.msra.mxu0 0
        %4637 = vmatprep.subr.bf16.mxu0 0
        %4638 = vmatpush1.bf16.msra.mxu0 0
        %4639 = vmatprep.subr.bf16.mxu0 0
        %4640 = vmatpush1.bf16.msra.mxu0 0
        %4641 = vmatprep.subr.bf16.mxu0 0
        %4642 = vmatpush1.bf16.msra.mxu0 0
        %4643 = vmatprep.subr.bf16.mxu0 0
        %4644 = vmatpush1.bf16.msra.mxu0 0
        %4645 = vmatprep.mubr.bf16.mxu0 0
        %4646 = vmatmul.mubr.bf16.gmra.mrb[0].mxu0 %v4605
        %v4647 = vpop.f32.mrb[0].mxu0
        %v4648 = vadd.f32 0.0, %v4647
        %v4649 = vpop.f32.mrb[0].mxu0
        %v4650 = vpop.f32.mrb[0].mxu0
        %v4651 = vadd.f32 0.0, %v4650
        %v4652 = vpop.f32.mrb[0].mxu0
        %4653 = vmatprep.mubr.bf16.mxu0 0
        %4654 = vmatmul.mubr.bf16.gmra.mrb[0].mxu0 %v4606
        %v4655 = vpop.f32.mrb[0].mxu0
        %v4656 = vadd.f32 0.0, %v4655
        %v4657 = vpop.f32.mrb[0].mxu0
        %v4658 = vpop.f32.mrb[0].mxu0
        %v4659 = vadd.f32 0.0, %v4658
        %v4660 = vpop.f32.mrb[0].mxu0
        %4661 = vmatprep.mubr.bf16.mxu0 0
        %4662 = vmatmul.mubr.bf16.gmra.mrb[0].mxu0 %v4607
        %v4663 = vpop.f32.mrb[0].mxu0
        %v4664 = vadd.f32 0.0, %v4663
        %v4665 = vpop.f32.mrb[0].mxu0
        %v4666 = vpop.f32.mrb[0].mxu0
        %v4667 = vadd.f32 0.0, %v4666
        %v4668 = vpop.f32.mrb[0].mxu0
        %4669 = vmatprep.mubr.bf16.mxu0 0
        %4670 = vmatmul.mubr.bf16.gmra.mrb[0].mxu0 %v4608
        %v4671 = vpop.f32.mrb[0].mxu0
        %v4672 = vadd.f32 0.0, %v4671
        %v4673 = vpop.f32.mrb[0].mxu0
        %v4674 = vpop.f32.mrb[0].mxu0
        %v4675 = vadd.f32 0.0, %v4674
        %v4676 = vpop.f32.mrb[0].mxu0
        %4677 = vmatprep.mubr.bf16.mxu0 0
        %4678 = vmatmul.mubr.bf16.gmra.mrb[0].mxu0 %v4609
        %v4679 = vpop.f32.mrb[0].mxu0
        %v4680 = vadd.f32 0.0, %v4679
        %v4681 = vpop.f32.mrb[0].mxu0
        %v4682 = vpop.f32.mrb[0].mxu0
        %v4683 = vadd.f32 0.0, %v4682
        %v4684 = vpop.f32.mrb[0].mxu0
        %4685 = vmatprep.mubr.bf16.mxu0 0
        %4686 = vmatmul.mubr.bf16.gmra.mrb[0].mxu0 %v4610
        %v4687 = vpop.f32.mrb[0].mxu0
        %v4688 = vadd.f32 0.0, %v4687
        %v4689 = vpop.f32.mrb[0].mxu0
        %v4690 = vpop.f32.mrb[0].mxu0
        %v4691 = vadd.f32 0.0, %v4690
        %v4692 = vpop.f32.mrb[0].mxu0
        %4693 = vmatprep.mubr.bf16.mxu0 0
        %4694 = vmatmul.mubr.bf16.gmra.mrb[0].mxu0 %v4611
        %v4695 = vpop.f32.mrb[0].mxu0
        %v4696 = vadd.f32 0.0, %v4695
        %v4697 = vpop.f32.mrb[0].mxu0
        %v4698 = vpop.f32.mrb[0].mxu0
        %v4699 = vadd.f32 0.0, %v4698
        %v4700 = vpop.f32.mrb[0].mxu0
        %4701 = vmatprep.mubr.bf16.mxu0 0
        %4702 = vmatmul.mubr.bf16.gmra.mrb[0].mxu0 %v4612
        %v4703 = vpop.f32.mrb[0].mxu0
        %v4704 = vadd.f32 0.0, %v4703
        %v4705 = vpop.f32.mrb[0].mxu0
        %v4706 = vpop.f32.mrb[0].mxu0
        %v4707 = vadd.f32 0.0, %v4706
        %v4708 = vpop.f32.mrb[0].mxu0
        %4709 = vdwg.mxu0
        %v4710 = vpack.c.bf16 %v4651, %v4648
        %v4711 = vpack.c.bf16 %v4659, %v4656
        %v4712 = vpack.c.bf16 %v4667, %v4664
        %v4713 = vpack.c.bf16 %v4675, %v4672
        %v4714 = vpack.c.bf16 %v4683, %v4680
        %v4715 = vpack.c.bf16 %v4691, %v4688
        %v4716 = vpack.c.bf16 %v4699, %v4696
        %v4717 = vpack.c.bf16 %v4707, %v4704
        %4718 = vmatprep.subr.bf16.mxu0 0
        %4719 = vmatpush1.bf16.xpose.msra.mxu0 %v4257
        %4720 = vmatprep.subr.bf16.mxu0 0
        %4721 = vmatpush1.bf16.xpose.msra.mxu0 %v4269
        %4722 = vmatprep.subr.bf16.mxu0 0
        %4723 = vmatpush1.bf16.xpose.msra.mxu0 %v4281
        %4724 = vmatprep.subr.bf16.mxu0 0
        %4725 = vmatpush1.bf16.xpose.msra.mxu0 %v4293
        %4726 = vmatprep.subr.bf16.mxu0 0
        %4727 = vmatpush1.bf16.xpose.msra.mxu0 %v4305
        %4728 = vmatprep.subr.bf16.mxu0 0
        %4729 = vmatpush1.bf16.xpose.msra.mxu0 %v4317
        %4730 = vmatprep.subr.bf16.mxu0 0
        %4731 = vmatpush1.bf16.xpose.msra.mxu0 %v4329
        %4732 = vmatprep.subr.bf16.mxu0 0
        %4733 = vmatpush1.bf16.xpose.msra.mxu0 %v4341
        %4734 = vmatprep.subr.bf16.mxu0 0
        %4735 = vmatpush1.bf16.xpose.msra.mxu0 0
        %4736 = vmatprep.subr.bf16.mxu0 0
        %4737 = vmatpush1.bf16.xpose.msra.mxu0 0
        %4738 = vmatprep.subr.bf16.mxu0 0
        %4739 = vmatpush1.bf16.xpose.msra.mxu0 0
        %4740 = vmatprep.subr.bf16.mxu0 0
        %4741 = vmatpush1.bf16.xpose.msra.mxu0 0
        %4742 = vmatprep.subr.bf16.mxu0 0
        %4743 = vmatpush1.bf16.xpose.msra.mxu0 0
        %4744 = vmatprep.subr.bf16.mxu0 0
        %4745 = vmatpush1.bf16.xpose.msra.mxu0 0
        %4746 = vmatprep.subr.bf16.mxu0 0
        %4747 = vmatpush1.bf16.xpose.msra.mxu0 0
        %4748 = vmatprep.subr.bf16.mxu0 0
        %4749 = vmatpush1.bf16.xpose.msra.mxu0 0
        %4750 = vmatprep.mubr.bf16.mxu0 0
        %4751 = vmatmul.mubr.bf16.gmra.mrb[0].mxu0 %v4253
        %v4752 = vpop.f32.mrb[0].mxu0
        %v4753 = vadd.f32 0.0, %v4752
        %v4754 = vpop.f32.mrb[0].mxu0
        %v4755 = vpop.f32.mrb[0].mxu0
        %v4756 = vadd.f32 0.0, %v4755
        %v4757 = vpop.f32.mrb[0].mxu0
        %4758 = vmatprep.mubr.bf16.mxu0 0
        %4759 = vmatmul.mubr.bf16.gmra.mrb[0].mxu0 %v4265
        %v4760 = vpop.f32.mrb[0].mxu0
        %v4761 = vadd.f32 0.0, %v4760
        %v4762 = vpop.f32.mrb[0].mxu0
        %v4763 = vpop.f32.mrb[0].mxu0
        %v4764 = vadd.f32 0.0, %v4763
        %v4765 = vpop.f32.mrb[0].mxu0
        %4766 = vmatprep.mubr.bf16.mxu0 0
        %4767 = vmatmul.mubr.bf16.gmra.mrb[0].mxu0 %v4277
        %v4768 = vpop.f32.mrb[0].mxu0
        %v4769 = vadd.f32 0.0, %v4768
        %v4770 = vpop.f32.mrb[0].mxu0
        %v4771 = vpop.f32.mrb[0].mxu0
        %v4772 = vadd.f32 0.0, %v4771
        %v4773 = vpop.f32.mrb[0].mxu0
        %4774 = vmatprep.mubr.bf16.mxu0 0
        %4775 = vmatmul.mubr.bf16.gmra.mrb[0].mxu0 %v4289
        %v4776 = vpop.f32.mrb[0].mxu0
        %v4777 = vadd.f32 0.0, %v4776
        %v4778 = vpop.f32.mrb[0].mxu0
        %v4779 = vpop.f32.mrb[0].mxu0
        %v4780 = vadd.f32 0.0, %v4779
        %v4781 = vpop.f32.mrb[0].mxu0
        %4782 = vmatprep.mubr.bf16.mxu0 0
        %4783 = vmatmul.mubr.bf16.gmra.mrb[0].mxu0 %v4301
        %v4784 = vpop.f32.mrb[0].mxu0
        %v4785 = vadd.f32 0.0, %v4784
        %v4786 = vpop.f32.mrb[0].mxu0
        %v4787 = vpop.f32.mrb[0].mxu0
        %v4788 = vadd.f32 0.0, %v4787
        %v4789 = vpop.f32.mrb[0].mxu0
        %4790 = vmatprep.mubr.bf16.mxu0 0
        %4791 = vmatmul.mubr.bf16.gmra.mrb[0].mxu0 %v4313
        %v4792 = vpop.f32.mrb[0].mxu0
        %v4793 = vadd.f32 0.0, %v4792
        %v4794 = vpop.f32.mrb[0].mxu0
        %v4795 = vpop.f32.mrb[0].mxu0
        %v4796 = vadd.f32 0.0, %v4795
        %v4797 = vpop.f32.mrb[0].mxu0
        %4798 = vmatprep.mubr.bf16.mxu0 0
        %4799 = vmatmul.mubr.bf16.gmra.mrb[0].mxu0 %v4325
        %v4800 = vpop.f32.mrb[0].mxu0
        %v4801 = vadd.f32 0.0, %v4800
        %v4802 = vpop.f32.mrb[0].mxu0
        %v4803 = vpop.f32.mrb[0].mxu0
        %v4804 = vadd.f32 0.0, %v4803
        %v4805 = vpop.f32.mrb[0].mxu0
        %4806 = vmatprep.mubr.bf16.mxu0 0
        %4807 = vmatmul.mubr.bf16.gmra.mrb[0].mxu0 %v4337
        %v4808 = vpop.f32.mrb[0].mxu0
        %v4809 = vadd.f32 0.0, %v4808
        %v4810 = vpop.f32.mrb[0].mxu0
        %v4811 = vpop.f32.mrb[0].mxu0
        %v4812 = vadd.f32 0.0, %v4811
        %v4813 = vpop.f32.mrb[0].mxu0
        %4814 = vdwg.mxu0
        %4815 = vmax.xlane.f32.xlu0 %v4753
        %v4816 = vpop.xlane.xlu0 %4815
        %4817 = vmax.xlane.f32.xlu0 %v4756
        %v4818 = vpop.xlane.xlu0 %4817
        %4819 = vmax.xlane.f32.xlu0 %v4761
        %v4820 = vpop.xlane.xlu0 %4819
        %4821 = vmax.xlane.f32.xlu0 %v4764
        %v4822 = vpop.xlane.xlu0 %4821
        %4823 = vmax.xlane.f32.xlu0 %v4769
        %v4824 = vpop.xlane.xlu0 %4823
        %4825 = vmax.xlane.f32.xlu0 %v4772
        %v4826 = vpop.xlane.xlu0 %4825
        %4827 = vmax.xlane.f32.xlu0 %v4777
        %v4828 = vpop.xlane.xlu0 %4827
        %4829 = vmax.xlane.f32.xlu0 %v4780
        %v4830 = vpop.xlane.xlu0 %4829
        %4831 = vmax.xlane.f32.xlu0 %v4785
        %v4832 = vpop.xlane.xlu0 %4831
        %4833 = vmax.xlane.f32.xlu0 %v4788
        %v4834 = vpop.xlane.xlu0 %4833
        %4835 = vmax.xlane.f32.xlu0 %v4793
        %v4836 = vpop.xlane.xlu0 %4835
        %4837 = vmax.xlane.f32.xlu0 %v4796
        %v4838 = vpop.xlane.xlu0 %4837
        %4839 = vmax.xlane.f32.xlu0 %v4801
        %v4840 = vpop.xlane.xlu0 %4839
        %4841 = vmax.xlane.f32.xlu0 %v4804
        %v4842 = vpop.xlane.xlu0 %4841
        %4843 = vmax.xlane.f32.xlu0 %v4809
        %v4844 = vpop.xlane.xlu0 %4843
        %4845 = vmax.xlane.f32.xlu0 %v4812
        %v4846 = vpop.xlane.xlu0 %4845
        %v4847 = vsub.f32 %v4753, %v4816
        %v4848 = vsub.f32 %v4756, %v4818
        %v4849 = vsub.f32 %v4761, %v4820
        %v4850 = vsub.f32 %v4764, %v4822
        %v4851 = vsub.f32 %v4769, %v4824
        %v4852 = vsub.f32 %v4772, %v4826
        %v4853 = vsub.f32 %v4777, %v4828
        %v4854 = vsub.f32 %v4780, %v4830
        %v4855 = vsub.f32 %v4785, %v4832
        %v4856 = vsub.f32 %v4788, %v4834
        %v4857 = vsub.f32 %v4793, %v4836
        %v4858 = vsub.f32 %v4796, %v4838
        %v4859 = vsub.f32 %v4801, %v4840
        %v4860 = vsub.f32 %v4804, %v4842
        %v4861 = vsub.f32 %v4809, %v4844
        %v4862 = vsub.f32 %v4812, %v4846
        %v4863 = vmul.f32 %v4847, 1.442695
        %v4864 = vpow.pop %v4863
        %v4865 = vmul.f32 %v4848, 1.442695
        %v4866 = vpow.pop %v4865
        %v4867 = vmul.f32 %v4849, 1.442695
        %v4868 = vpow.pop %v4867
        %v4869 = vmul.f32 %v4850, 1.442695
        %v4870 = vpow.pop %v4869
        %v4871 = vmul.f32 %v4851, 1.442695
        %v4872 = vpow.pop %v4871
        %v4873 = vmul.f32 %v4852, 1.442695
        %v4874 = vpow.pop %v4873
        %v4875 = vmul.f32 %v4853, 1.442695
        %v4876 = vpow.pop %v4875
        %v4877 = vmul.f32 %v4854, 1.442695
        %v4878 = vpow.pop %v4877
        %v4879 = vmul.f32 %v4855, 1.442695
        %v4880 = vpow.pop %v4879
        %v4881 = vmul.f32 %v4856, 1.442695
        %v4882 = vpow.pop %v4881
        %v4883 = vmul.f32 %v4857, 1.442695
        %v4884 = vpow.pop %v4883
        %v4885 = vmul.f32 %v4858, 1.442695
        %v4886 = vpow.pop %v4885
        %v4887 = vmul.f32 %v4859, 1.442695
        %v4888 = vpow.pop %v4887
        %v4889 = vmul.f32 %v4860, 1.442695
        %v4890 = vpow.pop %v4889
        %v4891 = vmul.f32 %v4861, 1.442695
        %v4892 = vpow.pop %v4891
        %v4893 = vmul.f32 %v4862, 1.442695
        %v4894 = vpow.pop %v4893
        %4895 = vadd.xlane.f32.xlu0 %v4864
        %v4896 = vpop.xlane.xlu0 %4895
        %4897 = vadd.xlane.f32.xlu0 %v4866
        %v4898 = vpop.xlane.xlu0 %4897
        %4899 = vadd.xlane.f32.xlu0 %v4868
        %v4900 = vpop.xlane.xlu0 %4899
        %4901 = vadd.xlane.f32.xlu0 %v4870
        %v4902 = vpop.xlane.xlu0 %4901
        %4903 = vadd.xlane.f32.xlu0 %v4872
        %v4904 = vpop.xlane.xlu0 %4903
        %4905 = vadd.xlane.f32.xlu0 %v4874
        %v4906 = vpop.xlane.xlu0 %4905
        %4907 = vadd.xlane.f32.xlu0 %v4876
        %v4908 = vpop.xlane.xlu0 %4907
        %4909 = vadd.xlane.f32.xlu0 %v4878
        %v4910 = vpop.xlane.xlu0 %4909
        %4911 = vadd.xlane.f32.xlu0 %v4880
        %v4912 = vpop.xlane.xlu0 %4911
        %4913 = vadd.xlane.f32.xlu0 %v4882
        %v4914 = vpop.xlane.xlu0 %4913
        %4915 = vadd.xlane.f32.xlu0 %v4884
        %v4916 = vpop.xlane.xlu0 %4915
        %4917 = vadd.xlane.f32.xlu0 %v4886
        %v4918 = vpop.xlane.xlu0 %4917
        %4919 = vadd.xlane.f32.xlu0 %v4888
        %v4920 = vpop.xlane.xlu0 %4919
        %4921 = vadd.xlane.f32.xlu0 %v4890
        %v4922 = vpop.xlane.xlu0 %4921
        %4923 = vadd.xlane.f32.xlu0 %v4892
        %v4924 = vpop.xlane.xlu0 %4923
        %4925 = vadd.xlane.f32.xlu0 %v4894
        %v4926 = vpop.xlane.xlu0 %4925
        %v4927 = vrcp.pop %v4896
        %v4928 = vrcp.pop %v4898
        %v4929 = vrcp.pop %v4900
        %v4930 = vrcp.pop %v4902
        %v4931 = vrcp.pop %v4904
        %v4932 = vrcp.pop %v4906
        %v4933 = vrcp.pop %v4908
        %v4934 = vrcp.pop %v4910
        %v4935 = vrcp.pop %v4912
        %v4936 = vrcp.pop %v4914
        %v4937 = vrcp.pop %v4916
        %v4938 = vrcp.pop %v4918
        %v4939 = vrcp.pop %v4920
        %v4940 = vrcp.pop %v4922
        %v4941 = vrcp.pop %v4924
        %v4942 = vrcp.pop %v4926
        %v4943 = vmul.f32 %v4864, %v4927
        %v4944 = vmul.f32 %v4866, %v4928
        %v4945 = vmul.f32 %v4868, %v4929
        %v4946 = vmul.f32 %v4870, %v4930
        %v4947 = vmul.f32 %v4872, %v4931
        %v4948 = vmul.f32 %v4874, %v4932
        %v4949 = vmul.f32 %v4876, %v4933
        %v4950 = vmul.f32 %v4878, %v4934
        %v4951 = vmul.f32 %v4880, %v4935
        %v4952 = vmul.f32 %v4882, %v4936
        %v4953 = vmul.f32 %v4884, %v4937
        %v4954 = vmul.f32 %v4886, %v4938
        %v4955 = vmul.f32 %v4888, %v4939
        %v4956 = vmul.f32 %v4890, %v4940
        %v4957 = vmul.f32 %v4892, %v4941
        %v4958 = vmul.f32 %v4894, %v4942
        %s4959 = scalar_lea.vmem %s334, 128 [#allocation12]
        %4960 = vst [vmem:[%s4959] sm:$0xff] %v4943
        %4961 = vst [vmem:[%s4959 + $0x8] sm:$0xff] %v4944
        %4962 = vst [vmem:[%s4959 + $0x10] sm:$0xff] %v4945
        %4963 = vst [vmem:[%s4959 + $0x18] sm:$0xff] %v4946
        %4964 = vst [vmem:[%s4959 + $0x20] sm:$0xff] %v4947
        %4965 = vst [vmem:[%s4959 + $0x28] sm:$0xff] %v4948
        %4966 = vst [vmem:[%s4959 + $0x30] sm:$0xff] %v4949
        %4967 = vst [vmem:[%s4959 + $0x38] sm:$0xff] %v4950
        %4968 = vst [vmem:[%s4959 + $0x40] sm:$0xff] %v4951
        %4969 = vst [vmem:[%s4959 + $0x48] sm:$0xff] %v4952
        %4970 = vst [vmem:[%s4959 + $0x50] sm:$0xff] %v4953
        %4971 = vst [vmem:[%s4959 + $0x58] sm:$0xff] %v4954
        %4972 = vst [vmem:[%s4959 + $0x60] sm:$0xff] %v4955
        %4973 = vst [vmem:[%s4959 + $0x68] sm:$0xff] %v4956
        %4974 = vst [vmem:[%s4959 + $0x70] sm:$0xff] %v4957
        %4975 = vst [vmem:[%s4959 + $0x78] sm:$0xff] %v4958
        %v4976 = vpack.c.bf16 %v4944, %v4943
        %v4977 = vpack.c.bf16 %v4946, %v4945
        %v4978 = vpack.c.bf16 %v4948, %v4947
        %v4979 = vpack.c.bf16 %v4950, %v4949
        %v4980 = vpack.c.bf16 %v4952, %v4951
        %v4981 = vpack.c.bf16 %v4954, %v4953
        %v4982 = vpack.c.bf16 %v4956, %v4955
        %v4983 = vpack.c.bf16 %v4958, %v4957
        %4984 = vmatprep.subr.bf16.mxu0 0
        %4985 = vmatpush1.bf16.msra.mxu0 %v4261
        %4986 = vmatprep.subr.bf16.mxu0 0
        %4987 = vmatpush1.bf16.msra.mxu0 %v4273
        %4988 = vmatprep.subr.bf16.mxu0 0
        %4989 = vmatpush1.bf16.msra.mxu0 %v4285
        %4990 = vmatprep.subr.bf16.mxu0 0
        %4991 = vmatpush1.bf16.msra.mxu0 %v4297
        %4992 = vmatprep.subr.bf16.mxu0 0
        %4993 = vmatpush1.bf16.msra.mxu0 %v4309
        %4994 = vmatprep.subr.bf16.mxu0 0
        %4995 = vmatpush1.bf16.msra.mxu0 %v4321
        %4996 = vmatprep.subr.bf16.mxu0 0
        %4997 = vmatpush1.bf16.msra.mxu0 %v4333
        %4998 = vmatprep.subr.bf16.mxu0 0
        %4999 = vmatpush1.bf16.msra.mxu0 %v4345
        %5000 = vmatprep.subr.bf16.mxu0 0
        %5001 = vmatpush1.bf16.msra.mxu0 0
        %5002 = vmatprep.subr.bf16.mxu0 0
        %5003 = vmatpush1.bf16.msra.mxu0 0
        %5004 = vmatprep.subr.bf16.mxu0 0
        %5005 = vmatpush1.bf16.msra.mxu0 0
        %5006 = vmatprep.subr.bf16.mxu0 0
        %5007 = vmatpush1.bf16.msra.mxu0 0
        %5008 = vmatprep.subr.bf16.mxu0 0
        %5009 = vmatpush1.bf16.msra.mxu0 0
        %5010 = vmatprep.subr.bf16.mxu0 0
        %5011 = vmatpush1.bf16.msra.mxu0 0
        %5012 = vmatprep.subr.bf16.mxu0 0
        %5013 = vmatpush1.bf16.msra.mxu0 0
        %5014 = vmatprep.subr.bf16.mxu0 0
        %5015 = vmatpush1.bf16.msra.mxu0 0
        %5016 = vmatprep.mubr.bf16.mxu0 0
        %5017 = vmatmul.mubr.bf16.gmra.mrb[0].mxu0 %v4976
        %v5018 = vpop.f32.mrb[0].mxu0
        %v5019 = vadd.f32 0.0, %v5018
        %v5020 = vpop.f32.mrb[0].mxu0
        %v5021 = vpop.f32.mrb[0].mxu0
        %v5022 = vadd.f32 0.0, %v5021
        %v5023 = vpop.f32.mrb[0].mxu0
        %5024 = vmatprep.mubr.bf16.mxu0 0
        %5025 = vmatmul.mubr.bf16.gmra.mrb[0].mxu0 %v4977
        %v5026 = vpop.f32.mrb[0].mxu0
        %v5027 = vadd.f32 0.0, %v5026
        %v5028 = vpop.f32.mrb[0].mxu0
        %v5029 = vpop.f32.mrb[0].mxu0
        %v5030 = vadd.f32 0.0, %v5029
        %v5031 = vpop.f32.mrb[0].mxu0
        %5032 = vmatprep.mubr.bf16.mxu0 0
        %5033 = vmatmul.mubr.bf16.gmra.mrb[0].mxu0 %v4978
        %v5034 = vpop.f32.mrb[0].mxu0
        %v5035 = vadd.f32 0.0, %v5034
        %v5036 = vpop.f32.mrb[0].mxu0
        %v5037 = vpop.f32.mrb[0].mxu0
        %v5038 = vadd.f32 0.0, %v5037
        %v5039 = vpop.f32.mrb[0].mxu0
        %5040 = vmatprep.mubr.bf16.mxu0 0
        %5041 = vmatmul.mubr.bf16.gmra.mrb[0].mxu0 %v4979
        %v5042 = vpop.f32.mrb[0].mxu0
        %v5043 = vadd.f32 0.0, %v5042
        %v5044 = vpop.f32.mrb[0].mxu0
        %v5045 = vpop.f32.mrb[0].mxu0
        %v5046 = vadd.f32 0.0, %v5045
        %v5047 = vpop.f32.mrb[0].mxu0
        %5048 = vmatprep.mubr.bf16.mxu0 0
        %5049 = vmatmul.mubr.bf16.gmra.mrb[0].mxu0 %v4980
        %v5050 = vpop.f32.mrb[0].mxu0
        %v5051 = vadd.f32 0.0, %v5050
        %v5052 = vpop.f32.mrb[0].mxu0
        %v5053 = vpop.f32.mrb[0].mxu0
        %v5054 = vadd.f32 0.0, %v5053
        %v5055 = vpop.f32.mrb[0].mxu0
        %5056 = vmatprep.mubr.bf16.mxu0 0
        %5057 = vmatmul.mubr.bf16.gmra.mrb[0].mxu0 %v4981
        %v5058 = vpop.f32.mrb[0].mxu0
        %v5059 = vadd.f32 0.0, %v5058
        %v5060 = vpop.f32.mrb[0].mxu0
        %v5061 = vpop.f32.mrb[0].mxu0
        %v5062 = vadd.f32 0.0, %v5061
        %v5063 = vpop.f32.mrb[0].mxu0
        %5064 = vmatprep.mubr.bf16.mxu0 0
        %5065 = vmatmul.mubr.bf16.gmra.mrb[0].mxu0 %v4982
        %v5066 = vpop.f32.mrb[0].mxu0
        %v5067 = vadd.f32 0.0, %v5066
        %v5068 = vpop.f32.mrb[0].mxu0
        %v5069 = vpop.f32.mrb[0].mxu0
        %v5070 = vadd.f32 0.0, %v5069
        %v5071 = vpop.f32.mrb[0].mxu0
        %5072 = vmatprep.mubr.bf16.mxu0 0
        %5073 = vmatmul.mubr.bf16.gmra.mrb[0].mxu0 %v4983
        %v5074 = vpop.f32.mrb[0].mxu0
        %v5075 = vadd.f32 0.0, %v5074
        %v5076 = vpop.f32.mrb[0].mxu0
        %v5077 = vpop.f32.mrb[0].mxu0
        %v5078 = vadd.f32 0.0, %v5077
        %v5079 = vpop.f32.mrb[0].mxu0
        %5080 = vdwg.mxu0
        %v5081 = vpack.c.bf16 %v5022, %v5019
        %v5082 = vpack.c.bf16 %v5030, %v5027
        %v5083 = vpack.c.bf16 %v5038, %v5035
        %v5084 = vpack.c.bf16 %v5046, %v5043
        %v5085 = vpack.c.bf16 %v5054, %v5051
        %v5086 = vpack.c.bf16 %v5062, %v5059
        %v5087 = vpack.c.bf16 %v5070, %v5067
        %v5088 = vpack.c.bf16 %v5078, %v5075
        %5089 = vmatprep.subr.bf16.mxu0 0
        %5090 = vmatpush1.bf16.xpose.msra.mxu0 %v4258
        %5091 = vmatprep.subr.bf16.mxu0 0
        %5092 = vmatpush1.bf16.xpose.msra.mxu0 %v4270
        %5093 = vmatprep.subr.bf16.mxu0 0
        %5094 = vmatpush1.bf16.xpose.msra.mxu0 %v4282
        %5095 = vmatprep.subr.bf16.mxu0 0
        %5096 = vmatpush1.bf16.xpose.msra.mxu0 %v4294
        %5097 = vmatprep.subr.bf16.mxu0 0
        %5098 = vmatpush1.bf16.xpose.msra.mxu0 %v4306
        %5099 = vmatprep.subr.bf16.mxu0 0
        %5100 = vmatpush1.bf16.xpose.msra.mxu0 %v4318
        %5101 = vmatprep.subr.bf16.mxu0 0
        %5102 = vmatpush1.bf16.xpose.msra.mxu0 %v4330
        %5103 = vmatprep.subr.bf16.mxu0 0
        %5104 = vmatpush1.bf16.xpose.msra.mxu0 %v4342
        %5105 = vmatprep.subr.bf16.mxu0 0
        %5106 = vmatpush1.bf16.xpose.msra.mxu0 0
        %5107 = vmatprep.subr.bf16.mxu0 0
        %5108 = vmatpush1.bf16.xpose.msra.mxu0 0
        %5109 = vmatprep.subr.bf16.mxu0 0
        %5110 = vmatpush1.bf16.xpose.msra.mxu0 0
        %5111 = vmatprep.subr.bf16.mxu0 0
        %5112 = vmatpush1.bf16.xpose.msra.mxu0 0
        %5113 = vmatprep.subr.bf16.mxu0 0
        %5114 = vmatpush1.bf16.xpose.msra.mxu0 0
        %5115 = vmatprep.subr.bf16.mxu0 0
        %5116 = vmatpush1.bf16.xpose.msra.mxu0 0
        %5117 = vmatprep.subr.bf16.mxu0 0
        %5118 = vmatpush1.bf16.xpose.msra.mxu0 0
        %5119 = vmatprep.subr.bf16.mxu0 0
        %5120 = vmatpush1.bf16.xpose.msra.mxu0 0
        %5121 = vmatprep.mubr.bf16.mxu0 0
        %5122 = vmatmul.mubr.bf16.gmra.mrb[0].mxu0 %v4254
        %v5123 = vpop.f32.mrb[0].mxu0
        %v5124 = vadd.f32 0.0, %v5123
        %v5125 = vpop.f32.mrb[0].mxu0
        %v5126 = vpop.f32.mrb[0].mxu0
        %v5127 = vadd.f32 0.0, %v5126
        %v5128 = vpop.f32.mrb[0].mxu0
        %5129 = vmatprep.mubr.bf16.mxu0 0
        %5130 = vmatmul.mubr.bf16.gmra.mrb[0].mxu0 %v4266
        %v5131 = vpop.f32.mrb[0].mxu0
        %v5132 = vadd.f32 0.0, %v5131
        %v5133 = vpop.f32.mrb[0].mxu0
        %v5134 = vpop.f32.mrb[0].mxu0
        %v5135 = vadd.f32 0.0, %v5134
        %v5136 = vpop.f32.mrb[0].mxu0
        %5137 = vmatprep.mubr.bf16.mxu0 0
        %5138 = vmatmul.mubr.bf16.gmra.mrb[0].mxu0 %v4278
        %v5139 = vpop.f32.mrb[0].mxu0
        %v5140 = vadd.f32 0.0, %v5139
        %v5141 = vpop.f32.mrb[0].mxu0
        %v5142 = vpop.f32.mrb[0].mxu0
        %v5143 = vadd.f32 0.0, %v5142
        %v5144 = vpop.f32.mrb[0].mxu0
        %5145 = vmatprep.mubr.bf16.mxu0 0
        %5146 = vmatmul.mubr.bf16.gmra.mrb[0].mxu0 %v4290
        %v5147 = vpop.f32.mrb[0].mxu0
        %v5148 = vadd.f32 0.0, %v5147
        %v5149 = vpop.f32.mrb[0].mxu0
        %v5150 = vpop.f32.mrb[0].mxu0
        %v5151 = vadd.f32 0.0, %v5150
        %v5152 = vpop.f32.mrb[0].mxu0
        %5153 = vmatprep.mubr.bf16.mxu0 0
        %5154 = vmatmul.mubr.bf16.gmra.mrb[0].mxu0 %v4302
        %v5155 = vpop.f32.mrb[0].mxu0
        %v5156 = vadd.f32 0.0, %v5155
        %v5157 = vpop.f32.mrb[0].mxu0
        %v5158 = vpop.f32.mrb[0].mxu0
        %v5159 = vadd.f32 0.0, %v5158
        %v5160 = vpop.f32.mrb[0].mxu0
        %5161 = vmatprep.mubr.bf16.mxu0 0
        %5162 = vmatmul.mubr.bf16.gmra.mrb[0].mxu0 %v4314
        %v5163 = vpop.f32.mrb[0].mxu0
        %v5164 = vadd.f32 0.0, %v5163
        %v5165 = vpop.f32.mrb[0].mxu0
        %v5166 = vpop.f32.mrb[0].mxu0
        %v5167 = vadd.f32 0.0, %v5166
        %v5168 = vpop.f32.mrb[0].mxu0
        %5169 = vmatprep.mubr.bf16.mxu0 0
        %5170 = vmatmul.mubr.bf16.gmra.mrb[0].mxu0 %v4326
        %v5171 = vpop.f32.mrb[0].mxu0
        %v5172 = vadd.f32 0.0, %v5171
        %v5173 = vpop.f32.mrb[0].mxu0
        %v5174 = vpop.f32.mrb[0].mxu0
        %v5175 = vadd.f32 0.0, %v5174
        %v5176 = vpop.f32.mrb[0].mxu0
        %5177 = vmatprep.mubr.bf16.mxu0 0
        %5178 = vmatmul.mubr.bf16.gmra.mrb[0].mxu0 %v4338
        %v5179 = vpop.f32.mrb[0].mxu0
        %v5180 = vadd.f32 0.0, %v5179
        %v5181 = vpop.f32.mrb[0].mxu0
        %v5182 = vpop.f32.mrb[0].mxu0
        %v5183 = vadd.f32 0.0, %v5182
        %v5184 = vpop.f32.mrb[0].mxu0
        %5185 = vdwg.mxu0
        %5186 = vmax.xlane.f32.xlu0 %v5124
        %v5187 = vpop.xlane.xlu0 %5186
        %5188 = vmax.xlane.f32.xlu0 %v5127
        %v5189 = vpop.xlane.xlu0 %5188
        %5190 = vmax.xlane.f32.xlu0 %v5132
        %v5191 = vpop.xlane.xlu0 %5190
        %5192 = vmax.xlane.f32.xlu0 %v5135
        %v5193 = vpop.xlane.xlu0 %5192
        %5194 = vmax.xlane.f32.xlu0 %v5140
        %v5195 = vpop.xlane.xlu0 %5194
        %5196 = vmax.xlane.f32.xlu0 %v5143
        %v5197 = vpop.xlane.xlu0 %5196
        %5198 = vmax.xlane.f32.xlu0 %v5148
        %v5199 = vpop.xlane.xlu0 %5198
        %5200 = vmax.xlane.f32.xlu0 %v5151
        %v5201 = vpop.xlane.xlu0 %5200
        %5202 = vmax.xlane.f32.xlu0 %v5156
        %v5203 = vpop.xlane.xlu0 %5202
        %5204 = vmax.xlane.f32.xlu0 %v5159
        %v5205 = vpop.xlane.xlu0 %5204
        %5206 = vmax.xlane.f32.xlu0 %v5164
        %v5207 = vpop.xlane.xlu0 %5206
        %5208 = vmax.xlane.f32.xlu0 %v5167
        %v5209 = vpop.xlane.xlu0 %5208
        %5210 = vmax.xlane.f32.xlu0 %v5172
        %v5211 = vpop.xlane.xlu0 %5210
        %5212 = vmax.xlane.f32.xlu0 %v5175
        %v5213 = vpop.xlane.xlu0 %5212
        %5214 = vmax.xlane.f32.xlu0 %v5180
        %v5215 = vpop.xlane.xlu0 %5214
        %5216 = vmax.xlane.f32.xlu0 %v5183
        %v5217 = vpop.xlane.xlu0 %5216
        %v5218 = vsub.f32 %v5124, %v5187
        %v5219 = vsub.f32 %v5127, %v5189
        %v5220 = vsub.f32 %v5132, %v5191
        %v5221 = vsub.f32 %v5135, %v5193
        %v5222 = vsub.f32 %v5140, %v5195
        %v5223 = vsub.f32 %v5143, %v5197
        %v5224 = vsub.f32 %v5148, %v5199
        %v5225 = vsub.f32 %v5151, %v5201
        %v5226 = vsub.f32 %v5156, %v5203
        %v5227 = vsub.f32 %v5159, %v5205
        %v5228 = vsub.f32 %v5164, %v5207
        %v5229 = vsub.f32 %v5167, %v5209
        %v5230 = vsub.f32 %v5172, %v5211
        %v5231 = vsub.f32 %v5175, %v5213
        %v5232 = vsub.f32 %v5180, %v5215
        %v5233 = vsub.f32 %v5183, %v5217
        %v5234 = vmul.f32 %v5218, 1.442695
        %v5235 = vpow.pop %v5234
        %v5236 = vmul.f32 %v5219, 1.442695
        %v5237 = vpow.pop %v5236
        %v5238 = vmul.f32 %v5220, 1.442695
        %v5239 = vpow.pop %v5238
        %v5240 = vmul.f32 %v5221, 1.442695
        %v5241 = vpow.pop %v5240
        %v5242 = vmul.f32 %v5222, 1.442695
        %v5243 = vpow.pop %v5242
        %v5244 = vmul.f32 %v5223, 1.442695
        %v5245 = vpow.pop %v5244
        %v5246 = vmul.f32 %v5224, 1.442695
        %v5247 = vpow.pop %v5246
        %v5248 = vmul.f32 %v5225, 1.442695
        %v5249 = vpow.pop %v5248
        %v5250 = vmul.f32 %v5226, 1.442695
        %v5251 = vpow.pop %v5250
        %v5252 = vmul.f32 %v5227, 1.442695
        %v5253 = vpow.pop %v5252
        %v5254 = vmul.f32 %v5228, 1.442695
        %v5255 = vpow.pop %v5254
        %v5256 = vmul.f32 %v5229, 1.442695
        %v5257 = vpow.pop %v5256
        %v5258 = vmul.f32 %v5230, 1.442695
        %v5259 = vpow.pop %v5258
        %v5260 = vmul.f32 %v5231, 1.442695
        %v5261 = vpow.pop %v5260
        %v5262 = vmul.f32 %v5232, 1.442695
        %v5263 = vpow.pop %v5262
        %v5264 = vmul.f32 %v5233, 1.442695
        %v5265 = vpow.pop %v5264
        %5266 = vadd.xlane.f32.xlu0 %v5235
        %v5267 = vpop.xlane.xlu0 %5266
        %5268 = vadd.xlane.f32.xlu0 %v5237
        %v5269 = vpop.xlane.xlu0 %5268
        %5270 = vadd.xlane.f32.xlu0 %v5239
        %v5271 = vpop.xlane.xlu0 %5270
        %5272 = vadd.xlane.f32.xlu0 %v5241
        %v5273 = vpop.xlane.xlu0 %5272
        %5274 = vadd.xlane.f32.xlu0 %v5243
        %v5275 = vpop.xlane.xlu0 %5274
        %5276 = vadd.xlane.f32.xlu0 %v5245
        %v5277 = vpop.xlane.xlu0 %5276
        %5278 = vadd.xlane.f32.xlu0 %v5247
        %v5279 = vpop.xlane.xlu0 %5278
        %5280 = vadd.xlane.f32.xlu0 %v5249
        %v5281 = vpop.xlane.xlu0 %5280
        %5282 = vadd.xlane.f32.xlu0 %v5251
        %v5283 = vpop.xlane.xlu0 %5282
        %5284 = vadd.xlane.f32.xlu0 %v5253
        %v5285 = vpop.xlane.xlu0 %5284
        %5286 = vadd.xlane.f32.xlu0 %v5255
        %v5287 = vpop.xlane.xlu0 %5286
        %5288 = vadd.xlane.f32.xlu0 %v5257
        %v5289 = vpop.xlane.xlu0 %5288
        %5290 = vadd.xlane.f32.xlu0 %v5259
        %v5291 = vpop.xlane.xlu0 %5290
        %5292 = vadd.xlane.f32.xlu0 %v5261
        %v5293 = vpop.xlane.xlu0 %5292
        %5294 = vadd.xlane.f32.xlu0 %v5263
        %v5295 = vpop.xlane.xlu0 %5294
        %5296 = vadd.xlane.f32.xlu0 %v5265
        %v5297 = vpop.xlane.xlu0 %5296
        %v5298 = vrcp.pop %v5267
        %v5299 = vrcp.pop %v5269
        %v5300 = vrcp.pop %v5271
        %v5301 = vrcp.pop %v5273
        %v5302 = vrcp.pop %v5275
        %v5303 = vrcp.pop %v5277
        %v5304 = vrcp.pop %v5279
        %v5305 = vrcp.pop %v5281
        %v5306 = vrcp.pop %v5283
        %v5307 = vrcp.pop %v5285
        %v5308 = vrcp.pop %v5287
        %v5309 = vrcp.pop %v5289
        %v5310 = vrcp.pop %v5291
        %v5311 = vrcp.pop %v5293
        %v5312 = vrcp.pop %v5295
        %v5313 = vrcp.pop %v5297
        %v5314 = vmul.f32 %v5235, %v5298
        %v5315 = vmul.f32 %v5237, %v5299
        %v5316 = vmul.f32 %v5239, %v5300
        %v5317 = vmul.f32 %v5241, %v5301
        %v5318 = vmul.f32 %v5243, %v5302
        %v5319 = vmul.f32 %v5245, %v5303
        %v5320 = vmul.f32 %v5247, %v5304
        %v5321 = vmul.f32 %v5249, %v5305
        %v5322 = vmul.f32 %v5251, %v5306
        %v5323 = vmul.f32 %v5253, %v5307
        %v5324 = vmul.f32 %v5255, %v5308
        %v5325 = vmul.f32 %v5257, %v5309
        %v5326 = vmul.f32 %v5259, %v5310
        %v5327 = vmul.f32 %v5261, %v5311
        %v5328 = vmul.f32 %v5263, %v5312
        %v5329 = vmul.f32 %v5265, %v5313
        %s5330 = scalar_lea.vmem %s334, 256 [#allocation12]
        %5331 = vst [vmem:[%s5330] sm:$0xff] %v5314
        %5332 = vst [vmem:[%s5330 + $0x8] sm:$0xff] %v5315
        %5333 = vst [vmem:[%s5330 + $0x10] sm:$0xff] %v5316
        %5334 = vst [vmem:[%s5330 + $0x18] sm:$0xff] %v5317
        %5335 = vst [vmem:[%s5330 + $0x20] sm:$0xff] %v5318
        %5336 = vst [vmem:[%s5330 + $0x28] sm:$0xff] %v5319
        %5337 = vst [vmem:[%s5330 + $0x30] sm:$0xff] %v5320
        %5338 = vst [vmem:[%s5330 + $0x38] sm:$0xff] %v5321
        %5339 = vst [vmem:[%s5330 + $0x40] sm:$0xff] %v5322
        %5340 = vst [vmem:[%s5330 + $0x48] sm:$0xff] %v5323
        %5341 = vst [vmem:[%s5330 + $0x50] sm:$0xff] %v5324
        %5342 = vst [vmem:[%s5330 + $0x58] sm:$0xff] %v5325
        %5343 = vst [vmem:[%s5330 + $0x60] sm:$0xff] %v5326
        %5344 = vst [vmem:[%s5330 + $0x68] sm:$0xff] %v5327
        %5345 = vst [vmem:[%s5330 + $0x70] sm:$0xff] %v5328
        %5346 = vst [vmem:[%s5330 + $0x78] sm:$0xff] %v5329
        %v5347 = vpack.c.bf16 %v5315, %v5314
        %v5348 = vpack.c.bf16 %v5317, %v5316
        %v5349 = vpack.c.bf16 %v5319, %v5318
        %v5350 = vpack.c.bf16 %v5321, %v5320
        %v5351 = vpack.c.bf16 %v5323, %v5322
        %v5352 = vpack.c.bf16 %v5325, %v5324
        %v5353 = vpack.c.bf16 %v5327, %v5326
        %v5354 = vpack.c.bf16 %v5329, %v5328
        %5355 = vmatprep.subr.bf16.mxu0 0
        %5356 = vmatpush1.bf16.msra.mxu0 %v4262
        %5357 = vmatprep.subr.bf16.mxu0 0
        %5358 = vmatpush1.bf16.msra.mxu0 %v4274
        %5359 = vmatprep.subr.bf16.mxu0 0
        %5360 = vmatpush1.bf16.msra.mxu0 %v4286
        %5361 = vmatprep.subr.bf16.mxu0 0
        %5362 = vmatpush1.bf16.msra.mxu0 %v4298
        %5363 = vmatprep.subr.bf16.mxu0 0
        %5364 = vmatpush1.bf16.msra.mxu0 %v4310
        %5365 = vmatprep.subr.bf16.mxu0 0
        %5366 = vmatpush1.bf16.msra.mxu0 %v4322
        %5367 = vmatprep.subr.bf16.mxu0 0
        %5368 = vmatpush1.bf16.msra.mxu0 %v4334
        %5369 = vmatprep.subr.bf16.mxu0 0
        %5370 = vmatpush1.bf16.msra.mxu0 %v4346
        %5371 = vmatprep.subr.bf16.mxu0 0
        %5372 = vmatpush1.bf16.msra.mxu0 0
        %5373 = vmatprep.subr.bf16.mxu0 0
        %5374 = vmatpush1.bf16.msra.mxu0 0
        %5375 = vmatprep.subr.bf16.mxu0 0
        %5376 = vmatpush1.bf16.msra.mxu0 0
        %5377 = vmatprep.subr.bf16.mxu0 0
        %5378 = vmatpush1.bf16.msra.mxu0 0
        %5379 = vmatprep.subr.bf16.mxu0 0
        %5380 = vmatpush1.bf16.msra.mxu0 0
        %5381 = vmatprep.subr.bf16.mxu0 0
        %5382 = vmatpush1.bf16.msra.mxu0 0
        %5383 = vmatprep.subr.bf16.mxu0 0
        %5384 = vmatpush1.bf16.msra.mxu0 0
        %5385 = vmatprep.subr.bf16.mxu0 0
        %5386 = vmatpush1.bf16.msra.mxu0 0
        %5387 = vmatprep.mubr.bf16.mxu0 0
        %5388 = vmatmul.mubr.bf16.gmra.mrb[0].mxu0 %v5347
        %v5389 = vpop.f32.mrb[0].mxu0
        %v5390 = vadd.f32 0.0, %v5389
        %v5391 = vpop.f32.mrb[0].mxu0
        %v5392 = vpop.f32.mrb[0].mxu0
        %v5393 = vadd.f32 0.0, %v5392
        %v5394 = vpop.f32.mrb[0].mxu0
        %5395 = vmatprep.mubr.bf16.mxu0 0
        %5396 = vmatmul.mubr.bf16.gmra.mrb[0].mxu0 %v5348
        %v5397 = vpop.f32.mrb[0].mxu0
        %v5398 = vadd.f32 0.0, %v5397
        %v5399 = vpop.f32.mrb[0].mxu0
        %v5400 = vpop.f32.mrb[0].mxu0
        %v5401 = vadd.f32 0.0, %v5400
        %v5402 = vpop.f32.mrb[0].mxu0
        %5403 = vmatprep.mubr.bf16.mxu0 0
        %5404 = vmatmul.mubr.bf16.gmra.mrb[0].mxu0 %v5349
        %v5405 = vpop.f32.mrb[0].mxu0
        %v5406 = vadd.f32 0.0, %v5405
        %v5407 = vpop.f32.mrb[0].mxu0
        %v5408 = vpop.f32.mrb[0].mxu0
        %v5409 = vadd.f32 0.0, %v5408
        %v5410 = vpop.f32.mrb[0].mxu0
        %5411 = vmatprep.mubr.bf16.mxu0 0
        %5412 = vmatmul.mubr.bf16.gmra.mrb[0].mxu0 %v5350
        %v5413 = vpop.f32.mrb[0].mxu0
        %v5414 = vadd.f32 0.0, %v5413
        %v5415 = vpop.f32.mrb[0].mxu0
        %v5416 = vpop.f32.mrb[0].mxu0
        %v5417 = vadd.f32 0.0, %v5416
        %v5418 = vpop.f32.mrb[0].mxu0
        %5419 = vmatprep.mubr.bf16.mxu0 0
        %5420 = vmatmul.mubr.bf16.gmra.mrb[0].mxu0 %v5351
        %v5421 = vpop.f32.mrb[0].mxu0
        %v5422 = vadd.f32 0.0, %v5421
        %v5423 = vpop.f32.mrb[0].mxu0
        %v5424 = vpop.f32.mrb[0].mxu0
        %v5425 = vadd.f32 0.0, %v5424
        %v5426 = vpop.f32.mrb[0].mxu0
        %5427 = vmatprep.mubr.bf16.mxu0 0
        %5428 = vmatmul.mubr.bf16.gmra.mrb[0].mxu0 %v5352
        %v5429 = vpop.f32.mrb[0].mxu0
        %v5430 = vadd.f32 0.0, %v5429
        %v5431 = vpop.f32.mrb[0].mxu0
        %v5432 = vpop.f32.mrb[0].mxu0
        %v5433 = vadd.f32 0.0, %v5432
        %v5434 = vpop.f32.mrb[0].mxu0
        %5435 = vmatprep.mubr.bf16.mxu0 0
        %5436 = vmatmul.mubr.bf16.gmra.mrb[0].mxu0 %v5353
        %v5437 = vpop.f32.mrb[0].mxu0
        %v5438 = vadd.f32 0.0, %v5437
        %v5439 = vpop.f32.mrb[0].mxu0
        %v5440 = vpop.f32.mrb[0].mxu0
        %v5441 = vadd.f32 0.0, %v5440
        %v5442 = vpop.f32.mrb[0].mxu0
        %5443 = vmatprep.mubr.bf16.mxu0 0
        %5444 = vmatmul.mubr.bf16.gmra.mrb[0].mxu0 %v5354
        %v5445 = vpop.f32.mrb[0].mxu0
        %v5446 = vadd.f32 0.0, %v5445
        %v5447 = vpop.f32.mrb[0].mxu0
        %v5448 = vpop.f32.mrb[0].mxu0
        %v5449 = vadd.f32 0.0, %v5448
        %v5450 = vpop.f32.mrb[0].mxu0
        %5451 = vdwg.mxu0
        %v5452 = vpack.c.bf16 %v5393, %v5390
        %v5453 = vpack.c.bf16 %v5401, %v5398
        %v5454 = vpack.c.bf16 %v5409, %v5406
        %v5455 = vpack.c.bf16 %v5417, %v5414
        %v5456 = vpack.c.bf16 %v5425, %v5422
        %v5457 = vpack.c.bf16 %v5433, %v5430
        %v5458 = vpack.c.bf16 %v5441, %v5438
        %v5459 = vpack.c.bf16 %v5449, %v5446
        %5460 = vmatprep.subr.bf16.mxu0 0
        %5461 = vmatpush1.bf16.xpose.msra.mxu0 %v4259
        %5462 = vmatprep.subr.bf16.mxu0 0
        %5463 = vmatpush1.bf16.xpose.msra.mxu0 %v4271
        %5464 = vmatprep.subr.bf16.mxu0 0
        %5465 = vmatpush1.bf16.xpose.msra.mxu0 %v4283
        %5466 = vmatprep.subr.bf16.mxu0 0
        %5467 = vmatpush1.bf16.xpose.msra.mxu0 %v4295
        %5468 = vmatprep.subr.bf16.mxu0 0
        %5469 = vmatpush1.bf16.xpose.msra.mxu0 %v4307
        %5470 = vmatprep.subr.bf16.mxu0 0
        %5471 = vmatpush1.bf16.xpose.msra.mxu0 %v4319
        %5472 = vmatprep.subr.bf16.mxu0 0
        %5473 = vmatpush1.bf16.xpose.msra.mxu0 %v4331
        %5474 = vmatprep.subr.bf16.mxu0 0
        %5475 = vmatpush1.bf16.xpose.msra.mxu0 %v4343
        %5476 = vmatprep.subr.bf16.mxu0 0
        %5477 = vmatpush1.bf16.xpose.msra.mxu0 0
        %5478 = vmatprep.subr.bf16.mxu0 0
        %5479 = vmatpush1.bf16.xpose.msra.mxu0 0
        %5480 = vmatprep.subr.bf16.mxu0 0
        %5481 = vmatpush1.bf16.xpose.msra.mxu0 0
        %5482 = vmatprep.subr.bf16.mxu0 0
        %5483 = vmatpush1.bf16.xpose.msra.mxu0 0
        %5484 = vmatprep.subr.bf16.mxu0 0
        %5485 = vmatpush1.bf16.xpose.msra.mxu0 0
        %5486 = vmatprep.subr.bf16.mxu0 0
        %5487 = vmatpush1.bf16.xpose.msra.mxu0 0
        %5488 = vmatprep.subr.bf16.mxu0 0
        %5489 = vmatpush1.bf16.xpose.msra.mxu0 0
        %5490 = vmatprep.subr.bf16.mxu0 0
        %5491 = vmatpush1.bf16.xpose.msra.mxu0 0
        %5492 = vmatprep.mubr.bf16.mxu0 0
        %5493 = vmatmul.mubr.bf16.gmra.mrb[0].mxu0 %v4255
        %v5494 = vpop.f32.mrb[0].mxu0
        %v5495 = vadd.f32 0.0, %v5494
        %v5496 = vpop.f32.mrb[0].mxu0
        %v5497 = vpop.f32.mrb[0].mxu0
        %v5498 = vadd.f32 0.0, %v5497
        %v5499 = vpop.f32.mrb[0].mxu0
        %5500 = vmatprep.mubr.bf16.mxu0 0
        %5501 = vmatmul.mubr.bf16.gmra.mrb[0].mxu0 %v4267
        %v5502 = vpop.f32.mrb[0].mxu0
        %v5503 = vadd.f32 0.0, %v5502
        %v5504 = vpop.f32.mrb[0].mxu0
        %v5505 = vpop.f32.mrb[0].mxu0
        %v5506 = vadd.f32 0.0, %v5505
        %v5507 = vpop.f32.mrb[0].mxu0
        %5508 = vmatprep.mubr.bf16.mxu0 0
        %5509 = vmatmul.mubr.bf16.gmra.mrb[0].mxu0 %v4279
        %v5510 = vpop.f32.mrb[0].mxu0
        %v5511 = vadd.f32 0.0, %v5510
        %v5512 = vpop.f32.mrb[0].mxu0
        %v5513 = vpop.f32.mrb[0].mxu0
        %v5514 = vadd.f32 0.0, %v5513
        %v5515 = vpop.f32.mrb[0].mxu0
        %5516 = vmatprep.mubr.bf16.mxu0 0
        %5517 = vmatmul.mubr.bf16.gmra.mrb[0].mxu0 %v4291
        %v5518 = vpop.f32.mrb[0].mxu0
        %v5519 = vadd.f32 0.0, %v5518
        %v5520 = vpop.f32.mrb[0].mxu0
        %v5521 = vpop.f32.mrb[0].mxu0
        %v5522 = vadd.f32 0.0, %v5521
        %v5523 = vpop.f32.mrb[0].mxu0
        %5524 = vmatprep.mubr.bf16.mxu0 0
        %5525 = vmatmul.mubr.bf16.gmra.mrb[0].mxu0 %v4303
        %v5526 = vpop.f32.mrb[0].mxu0
        %v5527 = vadd.f32 0.0, %v5526
        %v5528 = vpop.f32.mrb[0].mxu0
        %v5529 = vpop.f32.mrb[0].mxu0
        %v5530 = vadd.f32 0.0, %v5529
        %v5531 = vpop.f32.mrb[0].mxu0
        %5532 = vmatprep.mubr.bf16.mxu0 0
        %5533 = vmatmul.mubr.bf16.gmra.mrb[0].mxu0 %v4315
        %v5534 = vpop.f32.mrb[0].mxu0
        %v5535 = vadd.f32 0.0, %v5534
        %v5536 = vpop.f32.mrb[0].mxu0
        %v5537 = vpop.f32.mrb[0].mxu0
        %v5538 = vadd.f32 0.0, %v5537
        %v5539 = vpop.f32.mrb[0].mxu0
        %5540 = vmatprep.mubr.bf16.mxu0 0
        %5541 = vmatmul.mubr.bf16.gmra.mrb[0].mxu0 %v4327
        %v5542 = vpop.f32.mrb[0].mxu0
        %v5543 = vadd.f32 0.0, %v5542
        %v5544 = vpop.f32.mrb[0].mxu0
        %v5545 = vpop.f32.mrb[0].mxu0
        %v5546 = vadd.f32 0.0, %v5545
        %v5547 = vpop.f32.mrb[0].mxu0
        %5548 = vmatprep.mubr.bf16.mxu0 0
        %5549 = vmatmul.mubr.bf16.gmra.mrb[0].mxu0 %v4339
        %v5550 = vpop.f32.mrb[0].mxu0
        %v5551 = vadd.f32 0.0, %v5550
        %v5552 = vpop.f32.mrb[0].mxu0
        %v5553 = vpop.f32.mrb[0].mxu0
        %v5554 = vadd.f32 0.0, %v5553
        %v5555 = vpop.f32.mrb[0].mxu0
        %5556 = vdwg.mxu0
        %5557 = vmax.xlane.f32.xlu0 %v5495
        %v5558 = vpop.xlane.xlu0 %5557
        %5559 = vmax.xlane.f32.xlu0 %v5498
        %v5560 = vpop.xlane.xlu0 %5559
        %5561 = vmax.xlane.f32.xlu0 %v5503
        %v5562 = vpop.xlane.xlu0 %5561
        %5563 = vmax.xlane.f32.xlu0 %v5506
        %v5564 = vpop.xlane.xlu0 %5563
        %5565 = vmax.xlane.f32.xlu0 %v5511
        %v5566 = vpop.xlane.xlu0 %5565
        %5567 = vmax.xlane.f32.xlu0 %v5514
        %v5568 = vpop.xlane.xlu0 %5567
        %5569 = vmax.xlane.f32.xlu0 %v5519
        %v5570 = vpop.xlane.xlu0 %5569
        %5571 = vmax.xlane.f32.xlu0 %v5522
        %v5572 = vpop.xlane.xlu0 %5571
        %5573 = vmax.xlane.f32.xlu0 %v5527
        %v5574 = vpop.xlane.xlu0 %5573
        %5575 = vmax.xlane.f32.xlu0 %v5530
        %v5576 = vpop.xlane.xlu0 %5575
        %5577 = vmax.xlane.f32.xlu0 %v5535
        %v5578 = vpop.xlane.xlu0 %5577
        %5579 = vmax.xlane.f32.xlu0 %v5538
        %v5580 = vpop.xlane.xlu0 %5579
        %5581 = vmax.xlane.f32.xlu0 %v5543
        %v5582 = vpop.xlane.xlu0 %5581
        %5583 = vmax.xlane.f32.xlu0 %v5546
        %v5584 = vpop.xlane.xlu0 %5583
        %5585 = vmax.xlane.f32.xlu0 %v5551
        %v5586 = vpop.xlane.xlu0 %5585
        %5587 = vmax.xlane.f32.xlu0 %v5554
        %v5588 = vpop.xlane.xlu0 %5587
        %v5589 = vsub.f32 %v5495, %v5558
        %v5590 = vsub.f32 %v5498, %v5560
        %v5591 = vsub.f32 %v5503, %v5562
        %v5592 = vsub.f32 %v5506, %v5564
        %v5593 = vsub.f32 %v5511, %v5566
        %v5594 = vsub.f32 %v5514, %v5568
        %v5595 = vsub.f32 %v5519, %v5570
        %v5596 = vsub.f32 %v5522, %v5572
        %v5597 = vsub.f32 %v5527, %v5574
        %v5598 = vsub.f32 %v5530, %v5576
        %v5599 = vsub.f32 %v5535, %v5578
        %v5600 = vsub.f32 %v5538, %v5580
        %v5601 = vsub.f32 %v5543, %v5582
        %v5602 = vsub.f32 %v5546, %v5584
        %v5603 = vsub.f32 %v5551, %v5586
        %v5604 = vsub.f32 %v5554, %v5588
        %v5605 = vmul.f32 %v5589, 1.442695
        %v5606 = vpow.pop %v5605
        %v5607 = vmul.f32 %v5590, 1.442695
        %v5608 = vpow.pop %v5607
        %v5609 = vmul.f32 %v5591, 1.442695
        %v5610 = vpow.pop %v5609
        %v5611 = vmul.f32 %v5592, 1.442695
        %v5612 = vpow.pop %v5611
        %v5613 = vmul.f32 %v5593, 1.442695
        %v5614 = vpow.pop %v5613
        %v5615 = vmul.f32 %v5594, 1.442695
        %v5616 = vpow.pop %v5615
        %v5617 = vmul.f32 %v5595, 1.442695
        %v5618 = vpow.pop %v5617
        %v5619 = vmul.f32 %v5596, 1.442695
        %v5620 = vpow.pop %v5619
        %v5621 = vmul.f32 %v5597, 1.442695
        %v5622 = vpow.pop %v5621
        %v5623 = vmul.f32 %v5598, 1.442695
        %v5624 = vpow.pop %v5623
        %v5625 = vmul.f32 %v5599, 1.442695
        %v5626 = vpow.pop %v5625
        %v5627 = vmul.f32 %v5600, 1.442695
        %v5628 = vpow.pop %v5627
        %v5629 = vmul.f32 %v5601, 1.442695
        %v5630 = vpow.pop %v5629
        %v5631 = vmul.f32 %v5602, 1.442695
        %v5632 = vpow.pop %v5631
        %v5633 = vmul.f32 %v5603, 1.442695
        %v5634 = vpow.pop %v5633
        %v5635 = vmul.f32 %v5604, 1.442695
        %v5636 = vpow.pop %v5635
        %5637 = vadd.xlane.f32.xlu0 %v5606
        %v5638 = vpop.xlane.xlu0 %5637
        %5639 = vadd.xlane.f32.xlu0 %v5608
        %v5640 = vpop.xlane.xlu0 %5639
        %5641 = vadd.xlane.f32.xlu0 %v5610
        %v5642 = vpop.xlane.xlu0 %5641
        %5643 = vadd.xlane.f32.xlu0 %v5612
        %v5644 = vpop.xlane.xlu0 %5643
        %5645 = vadd.xlane.f32.xlu0 %v5614
        %v5646 = vpop.xlane.xlu0 %5645
        %5647 = vadd.xlane.f32.xlu0 %v5616
        %v5648 = vpop.xlane.xlu0 %5647
        %5649 = vadd.xlane.f32.xlu0 %v5618
        %v5650 = vpop.xlane.xlu0 %5649
        %5651 = vadd.xlane.f32.xlu0 %v5620
        %v5652 = vpop.xlane.xlu0 %5651
        %5653 = vadd.xlane.f32.xlu0 %v5622
        %v5654 = vpop.xlane.xlu0 %5653
        %5655 = vadd.xlane.f32.xlu0 %v5624
        %v5656 = vpop.xlane.xlu0 %5655
        %5657 = vadd.xlane.f32.xlu0 %v5626
        %v5658 = vpop.xlane.xlu0 %5657
        %5659 = vadd.xlane.f32.xlu0 %v5628
        %v5660 = vpop.xlane.xlu0 %5659
        %5661 = vadd.xlane.f32.xlu0 %v5630
        %v5662 = vpop.xlane.xlu0 %5661
        %5663 = vadd.xlane.f32.xlu0 %v5632
        %v5664 = vpop.xlane.xlu0 %5663
        %5665 = vadd.xlane.f32.xlu0 %v5634
        %v5666 = vpop.xlane.xlu0 %5665
        %5667 = vadd.xlane.f32.xlu0 %v5636
        %v5668 = vpop.xlane.xlu0 %5667
        %v5669 = vrcp.pop %v5638
        %v5670 = vrcp.pop %v5640
        %v5671 = vrcp.pop %v5642
        %v5672 = vrcp.pop %v5644
        %v5673 = vrcp.pop %v5646
        %v5674 = vrcp.pop %v5648
        %v5675 = vrcp.pop %v5650
        %v5676 = vrcp.pop %v5652
        %v5677 = vrcp.pop %v5654
        %v5678 = vrcp.pop %v5656
        %v5679 = vrcp.pop %v5658
        %v5680 = vrcp.pop %v5660
        %v5681 = vrcp.pop %v5662
        %v5682 = vrcp.pop %v5664
        %v5683 = vrcp.pop %v5666
        %v5684 = vrcp.pop %v5668
        %v5685 = vmul.f32 %v5606, %v5669
        %v5686 = vmul.f32 %v5608, %v5670
        %v5687 = vmul.f32 %v5610, %v5671
        %v5688 = vmul.f32 %v5612, %v5672
        %v5689 = vmul.f32 %v5614, %v5673
        %v5690 = vmul.f32 %v5616, %v5674
        %v5691 = vmul.f32 %v5618, %v5675
        %v5692 = vmul.f32 %v5620, %v5676
        %v5693 = vmul.f32 %v5622, %v5677
        %v5694 = vmul.f32 %v5624, %v5678
        %v5695 = vmul.f32 %v5626, %v5679
        %v5696 = vmul.f32 %v5628, %v5680
        %v5697 = vmul.f32 %v5630, %v5681
        %v5698 = vmul.f32 %v5632, %v5682
        %v5699 = vmul.f32 %v5634, %v5683
        %v5700 = vmul.f32 %v5636, %v5684
        %s5701 = scalar_lea.vmem %s334, 384 [#allocation12]
        %5702 = vst [vmem:[%s5701] sm:$0xff] %v5685
        %5703 = vst [vmem:[%s5701 + $0x8] sm:$0xff] %v5686
        %5704 = vst [vmem:[%s5701 + $0x10] sm:$0xff] %v5687
        %5705 = vst [vmem:[%s5701 + $0x18] sm:$0xff] %v5688
        %5706 = vst [vmem:[%s5701 + $0x20] sm:$0xff] %v5689
        %5707 = vst [vmem:[%s5701 + $0x28] sm:$0xff] %v5690
        %5708 = vst [vmem:[%s5701 + $0x30] sm:$0xff] %v5691
        %5709 = vst [vmem:[%s5701 + $0x38] sm:$0xff] %v5692
        %5710 = vst [vmem:[%s5701 + $0x40] sm:$0xff] %v5693
        %5711 = vst [vmem:[%s5701 + $0x48] sm:$0xff] %v5694
        %5712 = vst [vmem:[%s5701 + $0x50] sm:$0xff] %v5695
        %5713 = vst [vmem:[%s5701 + $0x58] sm:$0xff] %v5696
        %5714 = vst [vmem:[%s5701 + $0x60] sm:$0xff] %v5697
        %5715 = vst [vmem:[%s5701 + $0x68] sm:$0xff] %v5698
        %5716 = vst [vmem:[%s5701 + $0x70] sm:$0xff] %v5699
        %5717 = vst [vmem:[%s5701 + $0x78] sm:$0xff] %v5700
        %v5718 = vpack.c.bf16 %v5686, %v5685
        %v5719 = vpack.c.bf16 %v5688, %v5687
        %v5720 = vpack.c.bf16 %v5690, %v5689
        %v5721 = vpack.c.bf16 %v5692, %v5691
        %v5722 = vpack.c.bf16 %v5694, %v5693
        %v5723 = vpack.c.bf16 %v5696, %v5695
        %v5724 = vpack.c.bf16 %v5698, %v5697
        %v5725 = vpack.c.bf16 %v5700, %v5699
        %5726 = vmatprep.subr.bf16.mxu0 0
        %5727 = vmatpush1.bf16.msra.mxu0 %v4263
        %5728 = vmatprep.subr.bf16.mxu0 0
        %5729 = vmatpush1.bf16.msra.mxu0 %v4275
        %5730 = vmatprep.subr.bf16.mxu0 0
        %5731 = vmatpush1.bf16.msra.mxu0 %v4287
        %5732 = vmatprep.subr.bf16.mxu0 0
        %5733 = vmatpush1.bf16.msra.mxu0 %v4299
        %5734 = vmatprep.subr.bf16.mxu0 0
        %5735 = vmatpush1.bf16.msra.mxu0 %v4311
        %5736 = vmatprep.subr.bf16.mxu0 0
        %5737 = vmatpush1.bf16.msra.mxu0 %v4323
        %5738 = vmatprep.subr.bf16.mxu0 0
        %5739 = vmatpush1.bf16.msra.mxu0 %v4335
        %5740 = vmatprep.subr.bf16.mxu0 0
        %5741 = vmatpush1.bf16.msra.mxu0 %v4347
        %5742 = vmatprep.subr.bf16.mxu0 0
        %5743 = vmatpush1.bf16.msra.mxu0 0
        %5744 = vmatprep.subr.bf16.mxu0 0
        %5745 = vmatpush1.bf16.msra.mxu0 0
        %5746 = vmatprep.subr.bf16.mxu0 0
        %5747 = vmatpush1.bf16.msra.mxu0 0
        %5748 = vmatprep.subr.bf16.mxu0 0
        %5749 = vmatpush1.bf16.msra.mxu0 0
        %5750 = vmatprep.subr.bf16.mxu0 0
        %5751 = vmatpush1.bf16.msra.mxu0 0
        %5752 = vmatprep.subr.bf16.mxu0 0
        %5753 = vmatpush1.bf16.msra.mxu0 0
        %5754 = vmatprep.subr.bf16.mxu0 0
        %5755 = vmatpush1.bf16.msra.mxu0 0
        %5756 = vmatprep.subr.bf16.mxu0 0
        %5757 = vmatpush1.bf16.msra.mxu0 0
        %5758 = vmatprep.mubr.bf16.mxu0 0
        %5759 = vmatmul.mubr.bf16.gmra.mrb[0].mxu0 %v5718
        %v5760 = vpop.f32.mrb[0].mxu0
        %v5761 = vadd.f32 0.0, %v5760
        %v5762 = vpop.f32.mrb[0].mxu0
        %v5763 = vpop.f32.mrb[0].mxu0
        %v5764 = vadd.f32 0.0, %v5763
        %v5765 = vpop.f32.mrb[0].mxu0
        %5766 = vmatprep.mubr.bf16.mxu0 0
        %5767 = vmatmul.mubr.bf16.gmra.mrb[0].mxu0 %v5719
        %v5768 = vpop.f32.mrb[0].mxu0
        %v5769 = vadd.f32 0.0, %v5768
        %v5770 = vpop.f32.mrb[0].mxu0
        %v5771 = vpop.f32.mrb[0].mxu0
        %v5772 = vadd.f32 0.0, %v5771
        %v5773 = vpop.f32.mrb[0].mxu0
        %5774 = vmatprep.mubr.bf16.mxu0 0
        %5775 = vmatmul.mubr.bf16.gmra.mrb[0].mxu0 %v5720
        %v5776 = vpop.f32.mrb[0].mxu0
        %v5777 = vadd.f32 0.0, %v5776
        %v5778 = vpop.f32.mrb[0].mxu0
        %v5779 = vpop.f32.mrb[0].mxu0
        %v5780 = vadd.f32 0.0, %v5779
        %v5781 = vpop.f32.mrb[0].mxu0
        %5782 = vmatprep.mubr.bf16.mxu0 0
        %5783 = vmatmul.mubr.bf16.gmra.mrb[0].mxu0 %v5721
        %v5784 = vpop.f32.mrb[0].mxu0
        %v5785 = vadd.f32 0.0, %v5784
        %v5786 = vpop.f32.mrb[0].mxu0
        %v5787 = vpop.f32.mrb[0].mxu0
        %v5788 = vadd.f32 0.0, %v5787
        %v5789 = vpop.f32.mrb[0].mxu0
        %5790 = vmatprep.mubr.bf16.mxu0 0
        %5791 = vmatmul.mubr.bf16.gmra.mrb[0].mxu0 %v5722
        %v5792 = vpop.f32.mrb[0].mxu0
        %v5793 = vadd.f32 0.0, %v5792
        %v5794 = vpop.f32.mrb[0].mxu0
        %v5795 = vpop.f32.mrb[0].mxu0
        %v5796 = vadd.f32 0.0, %v5795
        %v5797 = vpop.f32.mrb[0].mxu0
        %5798 = vmatprep.mubr.bf16.mxu0 0
        %5799 = vmatmul.mubr.bf16.gmra.mrb[0].mxu0 %v5723
        %v5800 = vpop.f32.mrb[0].mxu0
        %v5801 = vadd.f32 0.0, %v5800
        %v5802 = vpop.f32.mrb[0].mxu0
        %v5803 = vpop.f32.mrb[0].mxu0
        %v5804 = vadd.f32 0.0, %v5803
        %v5805 = vpop.f32.mrb[0].mxu0
        %5806 = vmatprep.mubr.bf16.mxu0 0
        %5807 = vmatmul.mubr.bf16.gmra.mrb[0].mxu0 %v5724
        %v5808 = vpop.f32.mrb[0].mxu0
        %v5809 = vadd.f32 0.0, %v5808
        %v5810 = vpop.f32.mrb[0].mxu0
        %v5811 = vpop.f32.mrb[0].mxu0
        %v5812 = vadd.f32 0.0, %v5811
        %v5813 = vpop.f32.mrb[0].mxu0
        %5814 = vmatprep.mubr.bf16.mxu0 0
        %5815 = vmatmul.mubr.bf16.gmra.mrb[0].mxu0 %v5725
        %v5816 = vpop.f32.mrb[0].mxu0
        %v5817 = vadd.f32 0.0, %v5816
        %v5818 = vpop.f32.mrb[0].mxu0
        %v5819 = vpop.f32.mrb[0].mxu0
        %v5820 = vadd.f32 0.0, %v5819
        %v5821 = vpop.f32.mrb[0].mxu0
        %5822 = vdwg.mxu0
        %v5823 = vpack.c.bf16 %v5764, %v5761
        %v5824 = vpack.c.bf16 %v5772, %v5769
        %v5825 = vpack.c.bf16 %v5780, %v5777
        %v5826 = vpack.c.bf16 %v5788, %v5785
        %v5827 = vpack.c.bf16 %v5796, %v5793
        %v5828 = vpack.c.bf16 %v5804, %v5801
        %v5829 = vpack.c.bf16 %v5812, %v5809
        %v5830 = vpack.c.bf16 %v5820, %v5817
        %v5831 = vld [vmem:[#allocation8] sm:$0xff]
        %v5832 = vld [vmem:[#allocation8 + $0x8] sm:$0xff]
        %v5833 = vld [vmem:[#allocation8 + $0x10] sm:$0xff]
        %v5834 = vld [vmem:[#allocation8 + $0x18] sm:$0xff]
        %v5835 = vld [vmem:[#allocation8 + $0x20] sm:$0xff]
        %v5836 = vld [vmem:[#allocation8 + $0x28] sm:$0xff]
        %v5837 = vld [vmem:[#allocation8 + $0x30] sm:$0xff]
        %v5838 = vld [vmem:[#allocation8 + $0x38] sm:$0xff]
        %v5839 = vld [vmem:[#allocation8 + $0x40] sm:$0xff]
        %v5840 = vld [vmem:[#allocation8 + $0x48] sm:$0xff]
        %v5841 = vld [vmem:[#allocation8 + $0x50] sm:$0xff]
        %v5842 = vld [vmem:[#allocation8 + $0x58] sm:$0xff]
        %v5843 = vld [vmem:[#allocation8 + $0x60] sm:$0xff]
        %v5844 = vld [vmem:[#allocation8 + $0x68] sm:$0xff]
        %v5845 = vld [vmem:[#allocation8 + $0x70] sm:$0xff]
        %v5846 = vld [vmem:[#allocation8 + $0x78] sm:$0xff]
        %v5847 = vld [vmem:[#allocation8 + $0x80] sm:$0xff]
        %v5848 = vld [vmem:[#allocation8 + $0x88] sm:$0xff]
        %v5849 = vld [vmem:[#allocation8 + $0x90] sm:$0xff]
        %v5850 = vld [vmem:[#allocation8 + $0x98] sm:$0xff]
        %v5851 = vld [vmem:[#allocation8 + $0xa0] sm:$0xff]
        %v5852 = vld [vmem:[#allocation8 + $0xa8] sm:$0xff]
        %v5853 = vld [vmem:[#allocation8 + $0xb0] sm:$0xff]
        %v5854 = vld [vmem:[#allocation8 + $0xb8] sm:$0xff]
        %v5855 = vld [vmem:[#allocation8 + $0xc0] sm:$0xff]
        %v5856 = vld [vmem:[#allocation8 + $0xc8] sm:$0xff]
        %v5857 = vld [vmem:[#allocation8 + $0xd0] sm:$0xff]
        %v5858 = vld [vmem:[#allocation8 + $0xd8] sm:$0xff]
        %v5859 = vld [vmem:[#allocation8 + $0xe0] sm:$0xff]
        %v5860 = vld [vmem:[#allocation8 + $0xe8] sm:$0xff]
        %v5861 = vld [vmem:[#allocation8 + $0xf0] sm:$0xff]
        %v5862 = vld [vmem:[#allocation8 + $0xf8] sm:$0xff]
        %v5863 = vld [vmem:[#allocation8 + $0x100] sm:$0xff]
        %v5864 = vld [vmem:[#allocation8 + $0x108] sm:$0xff]
        %v5865 = vld [vmem:[#allocation8 + $0x110] sm:$0xff]
        %v5866 = vld [vmem:[#allocation8 + $0x118] sm:$0xff]
        %v5867 = vld [vmem:[#allocation8 + $0x120] sm:$0xff]
        %v5868 = vld [vmem:[#allocation8 + $0x128] sm:$0xff]
        %v5869 = vld [vmem:[#allocation8 + $0x130] sm:$0xff]
        %v5870 = vld [vmem:[#allocation8 + $0x138] sm:$0xff]
        %v5871 = vld [vmem:[#allocation8 + $0x140] sm:$0xff]
        %v5872 = vld [vmem:[#allocation8 + $0x148] sm:$0xff]
        %v5873 = vld [vmem:[#allocation8 + $0x150] sm:$0xff]
        %v5874 = vld [vmem:[#allocation8 + $0x158] sm:$0xff]
        %v5875 = vld [vmem:[#allocation8 + $0x160] sm:$0xff]
        %v5876 = vld [vmem:[#allocation8 + $0x168] sm:$0xff]
        %v5877 = vld [vmem:[#allocation8 + $0x170] sm:$0xff]
        %v5878 = vld [vmem:[#allocation8 + $0x178] sm:$0xff]
        %v5879 = vld [vmem:[#allocation8 + $0x180] sm:$0xff]
        %v5880 = vld [vmem:[#allocation8 + $0x188] sm:$0xff]
        %v5881 = vld [vmem:[#allocation8 + $0x190] sm:$0xff]
        %v5882 = vld [vmem:[#allocation8 + $0x198] sm:$0xff]
        %v5883 = vld [vmem:[#allocation8 + $0x1a0] sm:$0xff]
        %v5884 = vld [vmem:[#allocation8 + $0x1a8] sm:$0xff]
        %v5885 = vld [vmem:[#allocation8 + $0x1b0] sm:$0xff]
        %v5886 = vld [vmem:[#allocation8 + $0x1b8] sm:$0xff]
        %v5887 = vld [vmem:[#allocation8 + $0x1c0] sm:$0xff]
        %v5888 = vld [vmem:[#allocation8 + $0x1c8] sm:$0xff]
        %v5889 = vld [vmem:[#allocation8 + $0x1d0] sm:$0xff]
        %v5890 = vld [vmem:[#allocation8 + $0x1d8] sm:$0xff]
        %v5891 = vld [vmem:[#allocation8 + $0x1e0] sm:$0xff]
        %v5892 = vld [vmem:[#allocation8 + $0x1e8] sm:$0xff]
        %v5893 = vld [vmem:[#allocation8 + $0x1f0] sm:$0xff]
        %v5894 = vld [vmem:[#allocation8 + $0x1f8] sm:$0xff]
        %v5895 = vld [vmem:[#allocation8 + $0x200] sm:$0xff]
        %v5896 = vld [vmem:[#allocation8 + $0x208] sm:$0xff]
        %v5897 = vld [vmem:[#allocation8 + $0x210] sm:$0xff]
        %v5898 = vld [vmem:[#allocation8 + $0x218] sm:$0xff]
        %v5899 = vld [vmem:[#allocation8 + $0x220] sm:$0xff]
        %v5900 = vld [vmem:[#allocation8 + $0x228] sm:$0xff]
        %v5901 = vld [vmem:[#allocation8 + $0x230] sm:$0xff]
        %v5902 = vld [vmem:[#allocation8 + $0x238] sm:$0xff]
        %v5903 = vld [vmem:[#allocation8 + $0x240] sm:$0xff]
        %v5904 = vld [vmem:[#allocation8 + $0x248] sm:$0xff]
        %v5905 = vld [vmem:[#allocation8 + $0x250] sm:$0xff]
        %v5906 = vld [vmem:[#allocation8 + $0x258] sm:$0xff]
        %v5907 = vld [vmem:[#allocation8 + $0x260] sm:$0xff]
        %v5908 = vld [vmem:[#allocation8 + $0x268] sm:$0xff]
        %v5909 = vld [vmem:[#allocation8 + $0x270] sm:$0xff]
        %v5910 = vld [vmem:[#allocation8 + $0x278] sm:$0xff]
        %v5911 = vld [vmem:[#allocation8 + $0x280] sm:$0xff]
        %v5912 = vld [vmem:[#allocation8 + $0x288] sm:$0xff]
        %v5913 = vld [vmem:[#allocation8 + $0x290] sm:$0xff]
        %v5914 = vld [vmem:[#allocation8 + $0x298] sm:$0xff]
        %v5915 = vld [vmem:[#allocation8 + $0x2a0] sm:$0xff]
        %v5916 = vld [vmem:[#allocation8 + $0x2a8] sm:$0xff]
        %v5917 = vld [vmem:[#allocation8 + $0x2b0] sm:$0xff]
        %v5918 = vld [vmem:[#allocation8 + $0x2b8] sm:$0xff]
        %v5919 = vld [vmem:[#allocation8 + $0x2c0] sm:$0xff]
        %v5920 = vld [vmem:[#allocation8 + $0x2c8] sm:$0xff]
        %v5921 = vld [vmem:[#allocation8 + $0x2d0] sm:$0xff]
        %v5922 = vld [vmem:[#allocation8 + $0x2d8] sm:$0xff]
        %v5923 = vld [vmem:[#allocation8 + $0x2e0] sm:$0xff]
        %v5924 = vld [vmem:[#allocation8 + $0x2e8] sm:$0xff]
        %v5925 = vld [vmem:[#allocation8 + $0x2f0] sm:$0xff]
        %v5926 = vld [vmem:[#allocation8 + $0x2f8] sm:$0xff]
        %v5927 = vld [vmem:[#allocation8 + $0x300] sm:$0xff]
        %v5928 = vld [vmem:[#allocation8 + $0x308] sm:$0xff]
        %v5929 = vld [vmem:[#allocation8 + $0x310] sm:$0xff]
        %v5930 = vld [vmem:[#allocation8 + $0x318] sm:$0xff]
        %v5931 = vld [vmem:[#allocation8 + $0x320] sm:$0xff]
        %v5932 = vld [vmem:[#allocation8 + $0x328] sm:$0xff]
        %v5933 = vld [vmem:[#allocation8 + $0x330] sm:$0xff]
        %v5934 = vld [vmem:[#allocation8 + $0x338] sm:$0xff]
        %v5935 = vld [vmem:[#allocation8 + $0x340] sm:$0xff]
        %v5936 = vld [vmem:[#allocation8 + $0x348] sm:$0xff]
        %v5937 = vld [vmem:[#allocation8 + $0x350] sm:$0xff]
        %v5938 = vld [vmem:[#allocation8 + $0x358] sm:$0xff]
        %v5939 = vld [vmem:[#allocation8 + $0x360] sm:$0xff]
        %v5940 = vld [vmem:[#allocation8 + $0x368] sm:$0xff]
        %v5941 = vld [vmem:[#allocation8 + $0x370] sm:$0xff]
        %v5942 = vld [vmem:[#allocation8 + $0x378] sm:$0xff]
        %v5943 = vld [vmem:[#allocation8 + $0x380] sm:$0xff]
        %v5944 = vld [vmem:[#allocation8 + $0x388] sm:$0xff]
        %v5945 = vld [vmem:[#allocation8 + $0x390] sm:$0xff]
        %v5946 = vld [vmem:[#allocation8 + $0x398] sm:$0xff]
        %v5947 = vld [vmem:[#allocation8 + $0x3a0] sm:$0xff]
        %v5948 = vld [vmem:[#allocation8 + $0x3a8] sm:$0xff]
        %v5949 = vld [vmem:[#allocation8 + $0x3b0] sm:$0xff]
        %v5950 = vld [vmem:[#allocation8 + $0x3b8] sm:$0xff]
        %v5951 = vld [vmem:[#allocation8 + $0x3c0] sm:$0xff]
        %v5952 = vld [vmem:[#allocation8 + $0x3c8] sm:$0xff]
        %v5953 = vld [vmem:[#allocation8 + $0x3d0] sm:$0xff]
        %v5954 = vld [vmem:[#allocation8 + $0x3d8] sm:$0xff]
        %v5955 = vld [vmem:[#allocation8 + $0x3e0] sm:$0xff]
        %v5956 = vld [vmem:[#allocation8 + $0x3e8] sm:$0xff]
        %v5957 = vld [vmem:[#allocation8 + $0x3f0] sm:$0xff]
        %v5958 = vld [vmem:[#allocation8 + $0x3f8] sm:$0xff]
        %v5959 = vld [vmem:[#allocation10] sm:$0xf]
        %v5961 = vlaneseq
        %v5962 = vshrl.u32 %v5961, 7
        %v5963 = vsub.s32 0, %v5962
        %v5964 = vrot.slane %v5959, %v5963
        %v5965 = vlaneseq
        %v5966 = vshrl.u32 %v5965, 7
        %v5967 = vsub.s32 1, %v5966
        %v5968 = vrot.slane %v5959, %v5967
        %v5969 = vlaneseq
        %v5970 = vshrl.u32 %v5969, 7
        %v5971 = vsub.s32 2, %v5970
        %v5972 = vrot.slane %v5959, %v5971
        %v5973 = vlaneseq
        %v5974 = vshrl.u32 %v5973, 7
        %v5975 = vsub.s32 3, %v5974
        %v5976 = vrot.slane %v5959, %v5975
        %v6109 = vunpack.c.l.b16 %v5831
        %v6110 = vunpack.c.h.b16 %v5831
        %v6111 = vunpack.c.l.b16 %v5832
        %v6112 = vunpack.c.h.b16 %v5832
        %v6113 = vunpack.c.l.b16 %v5833
        %v6114 = vunpack.c.h.b16 %v5833
        %v6115 = vunpack.c.l.b16 %v5834
        %v6116 = vunpack.c.h.b16 %v5834
        %v6117 = vunpack.c.l.b16 %v5835
        %v6118 = vunpack.c.h.b16 %v5835
        %v6119 = vunpack.c.l.b16 %v5836
        %v6120 = vunpack.c.h.b16 %v5836
        %v6121 = vunpack.c.l.b16 %v5837
        %v6122 = vunpack.c.h.b16 %v5837
        %v6123 = vunpack.c.l.b16 %v5838
        %v6124 = vunpack.c.h.b16 %v5838
        %v6125 = vunpack.c.l.b16 %v5839
        %v6126 = vunpack.c.h.b16 %v5839
        %v6127 = vunpack.c.l.b16 %v5840
        %v6128 = vunpack.c.h.b16 %v5840
        %v6129 = vunpack.c.l.b16 %v5841
        %v6130 = vunpack.c.h.b16 %v5841
        %v6131 = vunpack.c.l.b16 %v5842
        %v6132 = vunpack.c.h.b16 %v5842
        %v6133 = vunpack.c.l.b16 %v5843
        %v6134 = vunpack.c.h.b16 %v5843
        %v6135 = vunpack.c.l.b16 %v5844
        %v6136 = vunpack.c.h.b16 %v5844
        %v6137 = vunpack.c.l.b16 %v5845
        %v6138 = vunpack.c.h.b16 %v5845
        %v6139 = vunpack.c.l.b16 %v5846
        %v6140 = vunpack.c.h.b16 %v5846
        %v6141 = vunpack.c.l.b16 %v5847
        %v6142 = vunpack.c.h.b16 %v5847
        %v6143 = vunpack.c.l.b16 %v5848
        %v6144 = vunpack.c.h.b16 %v5848
        %v6145 = vunpack.c.l.b16 %v5849
        %v6146 = vunpack.c.h.b16 %v5849
        %v6147 = vunpack.c.l.b16 %v5850
        %v6148 = vunpack.c.h.b16 %v5850
        %v6149 = vunpack.c.l.b16 %v5851
        %v6150 = vunpack.c.h.b16 %v5851
        %v6151 = vunpack.c.l.b16 %v5852
        %v6152 = vunpack.c.h.b16 %v5852
        %v6153 = vunpack.c.l.b16 %v5853
        %v6154 = vunpack.c.h.b16 %v5853
        %v6155 = vunpack.c.l.b16 %v5854
        %v6156 = vunpack.c.h.b16 %v5854
        %v6157 = vunpack.c.l.b16 %v5855
        %v6158 = vunpack.c.h.b16 %v5855
        %v6159 = vunpack.c.l.b16 %v5856
        %v6160 = vunpack.c.h.b16 %v5856
        %v6161 = vunpack.c.l.b16 %v5857
        %v6162 = vunpack.c.h.b16 %v5857
        %v6163 = vunpack.c.l.b16 %v5858
        %v6164 = vunpack.c.h.b16 %v5858
        %v6165 = vunpack.c.l.b16 %v5859
        %v6166 = vunpack.c.h.b16 %v5859
        %v6167 = vunpack.c.l.b16 %v5860
        %v6168 = vunpack.c.h.b16 %v5860
        %v6169 = vunpack.c.l.b16 %v5861
        %v6170 = vunpack.c.h.b16 %v5861
        %v6171 = vunpack.c.l.b16 %v5862
        %v6172 = vunpack.c.h.b16 %v5862
        %v6173 = vunpack.c.l.b16 %v5863
        %v6174 = vunpack.c.h.b16 %v5863
        %v6175 = vunpack.c.l.b16 %v5864
        %v6176 = vunpack.c.h.b16 %v5864
        %v6177 = vunpack.c.l.b16 %v5865
        %v6178 = vunpack.c.h.b16 %v5865
        %v6179 = vunpack.c.l.b16 %v5866
        %v6180 = vunpack.c.h.b16 %v5866
        %v6181 = vunpack.c.l.b16 %v5867
        %v6182 = vunpack.c.h.b16 %v5867
        %v6183 = vunpack.c.l.b16 %v5868
        %v6184 = vunpack.c.h.b16 %v5868
        %v6185 = vunpack.c.l.b16 %v5869
        %v6186 = vunpack.c.h.b16 %v5869
        %v6187 = vunpack.c.l.b16 %v5870
        %v6188 = vunpack.c.h.b16 %v5870
        %v6189 = vunpack.c.l.b16 %v5871
        %v6190 = vunpack.c.h.b16 %v5871
        %v6191 = vunpack.c.l.b16 %v5872
        %v6192 = vunpack.c.h.b16 %v5872
        %v6193 = vunpack.c.l.b16 %v5873
        %v6194 = vunpack.c.h.b16 %v5873
        %v6195 = vunpack.c.l.b16 %v5874
        %v6196 = vunpack.c.h.b16 %v5874
        %v6197 = vunpack.c.l.b16 %v5875
        %v6198 = vunpack.c.h.b16 %v5875
        %v6199 = vunpack.c.l.b16 %v5876
        %v6200 = vunpack.c.h.b16 %v5876
        %v6201 = vunpack.c.l.b16 %v5877
        %v6202 = vunpack.c.h.b16 %v5877
        %v6203 = vunpack.c.l.b16 %v5878
        %v6204 = vunpack.c.h.b16 %v5878
        %v6205 = vunpack.c.l.b16 %v5879
        %v6206 = vunpack.c.h.b16 %v5879
        %v6207 = vunpack.c.l.b16 %v5880
        %v6208 = vunpack.c.h.b16 %v5880
        %v6209 = vunpack.c.l.b16 %v5881
        %v6210 = vunpack.c.h.b16 %v5881
        %v6211 = vunpack.c.l.b16 %v5882
        %v6212 = vunpack.c.h.b16 %v5882
        %v6213 = vunpack.c.l.b16 %v5883
        %v6214 = vunpack.c.h.b16 %v5883
        %v6215 = vunpack.c.l.b16 %v5884
        %v6216 = vunpack.c.h.b16 %v5884
        %v6217 = vunpack.c.l.b16 %v5885
        %v6218 = vunpack.c.h.b16 %v5885
        %v6219 = vunpack.c.l.b16 %v5886
        %v6220 = vunpack.c.h.b16 %v5886
        %v6221 = vunpack.c.l.b16 %v5887
        %v6222 = vunpack.c.h.b16 %v5887
        %v6223 = vunpack.c.l.b16 %v5888
        %v6224 = vunpack.c.h.b16 %v5888
        %v6225 = vunpack.c.l.b16 %v5889
        %v6226 = vunpack.c.h.b16 %v5889
        %v6227 = vunpack.c.l.b16 %v5890
        %v6228 = vunpack.c.h.b16 %v5890
        %v6229 = vunpack.c.l.b16 %v5891
        %v6230 = vunpack.c.h.b16 %v5891
        %v6231 = vunpack.c.l.b16 %v5892
        %v6232 = vunpack.c.h.b16 %v5892
        %v6233 = vunpack.c.l.b16 %v5893
        %v6234 = vunpack.c.h.b16 %v5893
        %v6235 = vunpack.c.l.b16 %v5894
        %v6236 = vunpack.c.h.b16 %v5894
        %v6237 = vunpack.c.l.b16 %v5895
        %v6238 = vunpack.c.h.b16 %v5895
        %v6239 = vunpack.c.l.b16 %v5896
        %v6240 = vunpack.c.h.b16 %v5896
        %v6241 = vunpack.c.l.b16 %v5897
        %v6242 = vunpack.c.h.b16 %v5897
        %v6243 = vunpack.c.l.b16 %v5898
        %v6244 = vunpack.c.h.b16 %v5898
        %v6245 = vunpack.c.l.b16 %v5899
        %v6246 = vunpack.c.h.b16 %v5899
        %v6247 = vunpack.c.l.b16 %v5900
        %v6248 = vunpack.c.h.b16 %v5900
        %v6249 = vunpack.c.l.b16 %v5901
        %v6250 = vunpack.c.h.b16 %v5901
        %v6251 = vunpack.c.l.b16 %v5902
        %v6252 = vunpack.c.h.b16 %v5902
        %v6253 = vunpack.c.l.b16 %v5903
        %v6254 = vunpack.c.h.b16 %v5903
        %v6255 = vunpack.c.l.b16 %v5904
        %v6256 = vunpack.c.h.b16 %v5904
        %v6257 = vunpack.c.l.b16 %v5905
        %v6258 = vunpack.c.h.b16 %v5905
        %v6259 = vunpack.c.l.b16 %v5906
        %v6260 = vunpack.c.h.b16 %v5906
        %v6261 = vunpack.c.l.b16 %v5907
        %v6262 = vunpack.c.h.b16 %v5907
        %v6263 = vunpack.c.l.b16 %v5908
        %v6264 = vunpack.c.h.b16 %v5908
        %v6265 = vunpack.c.l.b16 %v5909
        %v6266 = vunpack.c.h.b16 %v5909
        %v6267 = vunpack.c.l.b16 %v5910
        %v6268 = vunpack.c.h.b16 %v5910
        %v6269 = vunpack.c.l.b16 %v5911
        %v6270 = vunpack.c.h.b16 %v5911
        %v6271 = vunpack.c.l.b16 %v5912
        %v6272 = vunpack.c.h.b16 %v5912
        %v6273 = vunpack.c.l.b16 %v5913
        %v6274 = vunpack.c.h.b16 %v5913
        %v6275 = vunpack.c.l.b16 %v5914
        %v6276 = vunpack.c.h.b16 %v5914
        %v6277 = vunpack.c.l.b16 %v5915
        %v6278 = vunpack.c.h.b16 %v5915
        %v6279 = vunpack.c.l.b16 %v5916
        %v6280 = vunpack.c.h.b16 %v5916
        %v6281 = vunpack.c.l.b16 %v5917
        %v6282 = vunpack.c.h.b16 %v5917
        %v6283 = vunpack.c.l.b16 %v5918
        %v6284 = vunpack.c.h.b16 %v5918
        %v6285 = vunpack.c.l.b16 %v5919
        %v6286 = vunpack.c.h.b16 %v5919
        %v6287 = vunpack.c.l.b16 %v5920
        %v6288 = vunpack.c.h.b16 %v5920
        %v6289 = vunpack.c.l.b16 %v5921
        %v6290 = vunpack.c.h.b16 %v5921
        %v6291 = vunpack.c.l.b16 %v5922
        %v6292 = vunpack.c.h.b16 %v5922
        %v6293 = vunpack.c.l.b16 %v5923
        %v6294 = vunpack.c.h.b16 %v5923
        %v6295 = vunpack.c.l.b16 %v5924
        %v6296 = vunpack.c.h.b16 %v5924
        %v6297 = vunpack.c.l.b16 %v5925
        %v6298 = vunpack.c.h.b16 %v5925
        %v6299 = vunpack.c.l.b16 %v5926
        %v6300 = vunpack.c.h.b16 %v5926
        %v6301 = vunpack.c.l.b16 %v5927
        %v6302 = vunpack.c.h.b16 %v5927
        %v6303 = vunpack.c.l.b16 %v5928
        %v6304 = vunpack.c.h.b16 %v5928
        %v6305 = vunpack.c.l.b16 %v5929
        %v6306 = vunpack.c.h.b16 %v5929
        %v6307 = vunpack.c.l.b16 %v5930
        %v6308 = vunpack.c.h.b16 %v5930
        %v6309 = vunpack.c.l.b16 %v5931
        %v6310 = vunpack.c.h.b16 %v5931
        %v6311 = vunpack.c.l.b16 %v5932
        %v6312 = vunpack.c.h.b16 %v5932
        %v6313 = vunpack.c.l.b16 %v5933
        %v6314 = vunpack.c.h.b16 %v5933
        %v6315 = vunpack.c.l.b16 %v5934
        %v6316 = vunpack.c.h.b16 %v5934
        %v6317 = vunpack.c.l.b16 %v5935
        %v6318 = vunpack.c.h.b16 %v5935
        %v6319 = vunpack.c.l.b16 %v5936
        %v6320 = vunpack.c.h.b16 %v5936
        %v6321 = vunpack.c.l.b16 %v5937
        %v6322 = vunpack.c.h.b16 %v5937
        %v6323 = vunpack.c.l.b16 %v5938
        %v6324 = vunpack.c.h.b16 %v5938
        %v6325 = vunpack.c.l.b16 %v5939
        %v6326 = vunpack.c.h.b16 %v5939
        %v6327 = vunpack.c.l.b16 %v5940
        %v6328 = vunpack.c.h.b16 %v5940
        %v6329 = vunpack.c.l.b16 %v5941
        %v6330 = vunpack.c.h.b16 %v5941
        %v6331 = vunpack.c.l.b16 %v5942
        %v6332 = vunpack.c.h.b16 %v5942
        %v6333 = vunpack.c.l.b16 %v5943
        %v6334 = vunpack.c.h.b16 %v5943
        %v6335 = vunpack.c.l.b16 %v5944
        %v6336 = vunpack.c.h.b16 %v5944
        %v6337 = vunpack.c.l.b16 %v5945
        %v6338 = vunpack.c.h.b16 %v5945
        %v6339 = vunpack.c.l.b16 %v5946
        %v6340 = vunpack.c.h.b16 %v5946
        %v6341 = vunpack.c.l.b16 %v5947
        %v6342 = vunpack.c.h.b16 %v5947
        %v6343 = vunpack.c.l.b16 %v5948
        %v6344 = vunpack.c.h.b16 %v5948
        %v6345 = vunpack.c.l.b16 %v5949
        %v6346 = vunpack.c.h.b16 %v5949
        %v6347 = vunpack.c.l.b16 %v5950
        %v6348 = vunpack.c.h.b16 %v5950
        %v6349 = vunpack.c.l.b16 %v5951
        %v6350 = vunpack.c.h.b16 %v5951
        %v6351 = vunpack.c.l.b16 %v5952
        %v6352 = vunpack.c.h.b16 %v5952
        %v6353 = vunpack.c.l.b16 %v5953
        %v6354 = vunpack.c.h.b16 %v5953
        %v6355 = vunpack.c.l.b16 %v5954
        %v6356 = vunpack.c.h.b16 %v5954
        %v6357 = vunpack.c.l.b16 %v5955
        %v6358 = vunpack.c.h.b16 %v5955
        %v6359 = vunpack.c.l.b16 %v5956
        %v6360 = vunpack.c.h.b16 %v5956
        %v6361 = vunpack.c.l.b16 %v5957
        %v6362 = vunpack.c.h.b16 %v5957
        %v6363 = vunpack.c.l.b16 %v5958
        %v6364 = vunpack.c.h.b16 %v5958
        %v6365 = vpack.c.b16 %v6113, %v6109
        %v6366 = vpack.c.b16 %v6114, %v6110
        %v6367 = vpack.c.b16 %v6115, %v6111
        %v6368 = vpack.c.b16 %v6116, %v6112
        %v6369 = vpack.c.b16 %v6121, %v6117
        %v6370 = vpack.c.b16 %v6122, %v6118
        %v6371 = vpack.c.b16 %v6123, %v6119
        %v6372 = vpack.c.b16 %v6124, %v6120
        %v6373 = vpack.c.b16 %v6129, %v6125
        %v6374 = vpack.c.b16 %v6130, %v6126
        %v6375 = vpack.c.b16 %v6131, %v6127
        %v6376 = vpack.c.b16 %v6132, %v6128
        %v6377 = vpack.c.b16 %v6137, %v6133
        %v6378 = vpack.c.b16 %v6138, %v6134
        %v6379 = vpack.c.b16 %v6139, %v6135
        %v6380 = vpack.c.b16 %v6140, %v6136
        %v6381 = vpack.c.b16 %v6145, %v6141
        %v6382 = vpack.c.b16 %v6146, %v6142
        %v6383 = vpack.c.b16 %v6147, %v6143
        %v6384 = vpack.c.b16 %v6148, %v6144
        %v6385 = vpack.c.b16 %v6153, %v6149
        %v6386 = vpack.c.b16 %v6154, %v6150
        %v6387 = vpack.c.b16 %v6155, %v6151
        %v6388 = vpack.c.b16 %v6156, %v6152
        %v6389 = vpack.c.b16 %v6161, %v6157
        %v6390 = vpack.c.b16 %v6162, %v6158
        %v6391 = vpack.c.b16 %v6163, %v6159
        %v6392 = vpack.c.b16 %v6164, %v6160
        %v6393 = vpack.c.b16 %v6169, %v6165
        %v6394 = vpack.c.b16 %v6170, %v6166
        %v6395 = vpack.c.b16 %v6171, %v6167
        %v6396 = vpack.c.b16 %v6172, %v6168
        %v6397 = vpack.c.b16 %v6177, %v6173
        %v6398 = vpack.c.b16 %v6178, %v6174
        %v6399 = vpack.c.b16 %v6179, %v6175
        %v6400 = vpack.c.b16 %v6180, %v6176
        %v6401 = vpack.c.b16 %v6185, %v6181
        %v6402 = vpack.c.b16 %v6186, %v6182
        %v6403 = vpack.c.b16 %v6187, %v6183
        %v6404 = vpack.c.b16 %v6188, %v6184
        %v6405 = vpack.c.b16 %v6193, %v6189
        %v6406 = vpack.c.b16 %v6194, %v6190
        %v6407 = vpack.c.b16 %v6195, %v6191
        %v6408 = vpack.c.b16 %v6196, %v6192
        %v6409 = vpack.c.b16 %v6201, %v6197
        %v6410 = vpack.c.b16 %v6202, %v6198
        %v6411 = vpack.c.b16 %v6203, %v6199
        %v6412 = vpack.c.b16 %v6204, %v6200
        %v6413 = vpack.c.b16 %v6209, %v6205
        %v6414 = vpack.c.b16 %v6210, %v6206
        %v6415 = vpack.c.b16 %v6211, %v6207
        %v6416 = vpack.c.b16 %v6212, %v6208
        %v6417 = vpack.c.b16 %v6217, %v6213
        %v6418 = vpack.c.b16 %v6218, %v6214
        %v6419 = vpack.c.b16 %v6219, %v6215
        %v6420 = vpack.c.b16 %v6220, %v6216
        %v6421 = vpack.c.b16 %v6225, %v6221
        %v6422 = vpack.c.b16 %v6226, %v6222
        %v6423 = vpack.c.b16 %v6227, %v6223
        %v6424 = vpack.c.b16 %v6228, %v6224
        %v6425 = vpack.c.b16 %v6233, %v6229
        %v6426 = vpack.c.b16 %v6234, %v6230
        %v6427 = vpack.c.b16 %v6235, %v6231
        %v6428 = vpack.c.b16 %v6236, %v6232
        %v6429 = vpack.c.b16 %v6241, %v6237
        %v6430 = vpack.c.b16 %v6242, %v6238
        %v6431 = vpack.c.b16 %v6243, %v6239
        %v6432 = vpack.c.b16 %v6244, %v6240
        %v6433 = vpack.c.b16 %v6249, %v6245
        %v6434 = vpack.c.b16 %v6250, %v6246
        %v6435 = vpack.c.b16 %v6251, %v6247
        %v6436 = vpack.c.b16 %v6252, %v6248
        %v6437 = vpack.c.b16 %v6257, %v6253
        %v6438 = vpack.c.b16 %v6258, %v6254
        %v6439 = vpack.c.b16 %v6259, %v6255
        %v6440 = vpack.c.b16 %v6260, %v6256
        %v6441 = vpack.c.b16 %v6265, %v6261
        %v6442 = vpack.c.b16 %v6266, %v6262
        %v6443 = vpack.c.b16 %v6267, %v6263
        %v6444 = vpack.c.b16 %v6268, %v6264
        %v6445 = vpack.c.b16 %v6273, %v6269
        %v6446 = vpack.c.b16 %v6274, %v6270
        %v6447 = vpack.c.b16 %v6275, %v6271
        %v6448 = vpack.c.b16 %v6276, %v6272
        %v6449 = vpack.c.b16 %v6281, %v6277
        %v6450 = vpack.c.b16 %v6282, %v6278
        %v6451 = vpack.c.b16 %v6283, %v6279
        %v6452 = vpack.c.b16 %v6284, %v6280
        %v6453 = vpack.c.b16 %v6289, %v6285
        %v6454 = vpack.c.b16 %v6290, %v6286
        %v6455 = vpack.c.b16 %v6291, %v6287
        %v6456 = vpack.c.b16 %v6292, %v6288
        %v6457 = vpack.c.b16 %v6297, %v6293
        %v6458 = vpack.c.b16 %v6298, %v6294
        %v6459 = vpack.c.b16 %v6299, %v6295
        %v6460 = vpack.c.b16 %v6300, %v6296
        %v6461 = vpack.c.b16 %v6305, %v6301
        %v6462 = vpack.c.b16 %v6306, %v6302
        %v6463 = vpack.c.b16 %v6307, %v6303
        %v6464 = vpack.c.b16 %v6308, %v6304
        %v6465 = vpack.c.b16 %v6313, %v6309
        %v6466 = vpack.c.b16 %v6314, %v6310
        %v6467 = vpack.c.b16 %v6315, %v6311
        %v6468 = vpack.c.b16 %v6316, %v6312
        %v6469 = vpack.c.b16 %v6321, %v6317
        %v6470 = vpack.c.b16 %v6322, %v6318
        %v6471 = vpack.c.b16 %v6323, %v6319
        %v6472 = vpack.c.b16 %v6324, %v6320
        %v6473 = vpack.c.b16 %v6329, %v6325
        %v6474 = vpack.c.b16 %v6330, %v6326
        %v6475 = vpack.c.b16 %v6331, %v6327
        %v6476 = vpack.c.b16 %v6332, %v6328
        %v6477 = vpack.c.b16 %v6337, %v6333
        %v6478 = vpack.c.b16 %v6338, %v6334
        %v6479 = vpack.c.b16 %v6339, %v6335
        %v6480 = vpack.c.b16 %v6340, %v6336
        %v6481 = vpack.c.b16 %v6345, %v6341
        %v6482 = vpack.c.b16 %v6346, %v6342
        %v6483 = vpack.c.b16 %v6347, %v6343
        %v6484 = vpack.c.b16 %v6348, %v6344
        %v6485 = vpack.c.b16 %v6353, %v6349
        %v6486 = vpack.c.b16 %v6354, %v6350
        %v6487 = vpack.c.b16 %v6355, %v6351
        %v6488 = vpack.c.b16 %v6356, %v6352
        %v6489 = vpack.c.b16 %v6361, %v6357
        %v6490 = vpack.c.b16 %v6362, %v6358
        %v6491 = vpack.c.b16 %v6363, %v6359
        %v6492 = vpack.c.b16 %v6364, %v6360
        %6621 = vmatprep.subr.bf16.mxu0 %v6366
        %6622 = vmatpush1.bf16.msra.mxu0 %v6365
        %6623 = vmatprep.subr.bf16.mxu0 %v6370
        %6624 = vmatpush1.bf16.msra.mxu0 %v6369
        %6625 = vmatprep.subr.bf16.mxu0 %v6374
        %6626 = vmatpush1.bf16.msra.mxu0 %v6373
        %6627 = vmatprep.subr.bf16.mxu0 %v6378
        %6628 = vmatpush1.bf16.msra.mxu0 %v6377
        %6629 = vmatprep.subr.bf16.mxu0 %v6382
        %6630 = vmatpush1.bf16.msra.mxu0 %v6381
        %6631 = vmatprep.subr.bf16.mxu0 %v6386
        %6632 = vmatpush1.bf16.msra.mxu0 %v6385
        %6633 = vmatprep.subr.bf16.mxu0 %v6390
        %6634 = vmatpush1.bf16.msra.mxu0 %v6389
        %6635 = vmatprep.subr.bf16.mxu0 %v6394
        %6636 = vmatpush1.bf16.msra.mxu0 %v6393
        %6637 = vmatprep.subr.bf16.mxu0 %v6398
        %6638 = vmatpush1.bf16.msra.mxu0 %v6397
        %6639 = vmatprep.subr.bf16.mxu0 %v6402
        %6640 = vmatpush1.bf16.msra.mxu0 %v6401
        %6641 = vmatprep.subr.bf16.mxu0 %v6406
        %6642 = vmatpush1.bf16.msra.mxu0 %v6405
        %6643 = vmatprep.subr.bf16.mxu0 %v6410
        %6644 = vmatpush1.bf16.msra.mxu0 %v6409
        %6645 = vmatprep.subr.bf16.mxu0 %v6414
        %6646 = vmatpush1.bf16.msra.mxu0 %v6413
        %6647 = vmatprep.subr.bf16.mxu0 %v6418
        %6648 = vmatpush1.bf16.msra.mxu0 %v6417
        %6649 = vmatprep.subr.bf16.mxu0 %v6422
        %6650 = vmatpush1.bf16.msra.mxu0 %v6421
        %6651 = vmatprep.subr.bf16.mxu0 %v6426
        %6652 = vmatpush1.bf16.msra.mxu0 %v6425
        %6653 = vmatprep.mubr.bf16.mxu0 %v5081
        %6654 = vmatmul.mubr.bf16.gmra.mrb[0].mxu0 %v4710
        %v6655 = vpop.f32.mrb[0].mxu0
        %v6656 = vadd.f32 %v5964, %v6655
        %v6657 = vpop.f32.mrb[0].mxu0
        %v6658 = vadd.f32 %v5968, %v6657
        %v6659 = vpop.f32.mrb[0].mxu0
        %v6660 = vadd.f32 %v5964, %v6659
        %v6661 = vpop.f32.mrb[0].mxu0
        %v6662 = vadd.f32 %v5968, %v6661
        %6663 = vmatprep.mubr.bf16.mxu0 %v5082
        %6664 = vmatmul.mubr.bf16.gmra.mrb[0].mxu0 %v4711
        %v6665 = vpop.f32.mrb[0].mxu0
        %v6666 = vadd.f32 %v5964, %v6665
        %v6667 = vpop.f32.mrb[0].mxu0
        %v6668 = vadd.f32 %v5968, %v6667
        %v6669 = vpop.f32.mrb[0].mxu0
        %v6670 = vadd.f32 %v5964, %v6669
        %v6671 = vpop.f32.mrb[0].mxu0
        %v6672 = vadd.f32 %v5968, %v6671
        %6673 = vmatprep.mubr.bf16.mxu0 %v5083
        %6674 = vmatmul.mubr.bf16.gmra.mrb[0].mxu0 %v4712
        %v6675 = vpop.f32.mrb[0].mxu0
        %v6676 = vadd.f32 %v5964, %v6675
        %v6677 = vpop.f32.mrb[0].mxu0
        %v6678 = vadd.f32 %v5968, %v6677
        %v6679 = vpop.f32.mrb[0].mxu0
        %v6680 = vadd.f32 %v5964, %v6679
        %v6681 = vpop.f32.mrb[0].mxu0
        %v6682 = vadd.f32 %v5968, %v6681
        %6683 = vmatprep.mubr.bf16.mxu0 %v5084
        %6684 = vmatmul.mubr.bf16.gmra.mrb[0].mxu0 %v4713
        %v6685 = vpop.f32.mrb[0].mxu0
        %v6686 = vadd.f32 %v5964, %v6685
        %v6687 = vpop.f32.mrb[0].mxu0
        %v6688 = vadd.f32 %v5968, %v6687
        %v6689 = vpop.f32.mrb[0].mxu0
        %v6690 = vadd.f32 %v5964, %v6689
        %v6691 = vpop.f32.mrb[0].mxu0
        %v6692 = vadd.f32 %v5968, %v6691
        %6693 = vmatprep.mubr.bf16.mxu0 %v5085
        %6694 = vmatmul.mubr.bf16.gmra.mrb[0].mxu0 %v4714
        %v6695 = vpop.f32.mrb[0].mxu0
        %v6696 = vadd.f32 %v5964, %v6695
        %v6697 = vpop.f32.mrb[0].mxu0
        %v6698 = vadd.f32 %v5968, %v6697
        %v6699 = vpop.f32.mrb[0].mxu0
        %v6700 = vadd.f32 %v5964, %v6699
        %v6701 = vpop.f32.mrb[0].mxu0
        %v6702 = vadd.f32 %v5968, %v6701
        %6703 = vmatprep.mubr.bf16.mxu0 %v5086
        %6704 = vmatmul.mubr.bf16.gmra.mrb[0].mxu0 %v4715
        %v6705 = vpop.f32.mrb[0].mxu0
        %v6706 = vadd.f32 %v5964, %v6705
        %v6707 = vpop.f32.mrb[0].mxu0
        %v6708 = vadd.f32 %v5968, %v6707
        %v6709 = vpop.f32.mrb[0].mxu0
        %v6710 = vadd.f32 %v5964, %v6709
        %v6711 = vpop.f32.mrb[0].mxu0
        %v6712 = vadd.f32 %v5968, %v6711
        %6713 = vmatprep.mubr.bf16.mxu0 %v5087
        %6714 = vmatmul.mubr.bf16.gmra.mrb[0].mxu0 %v4716
        %v6715 = vpop.f32.mrb[0].mxu0
        %v6716 = vadd.f32 %v5964, %v6715
        %v6717 = vpop.f32.mrb[0].mxu0
        %v6718 = vadd.f32 %v5968, %v6717
        %v6719 = vpop.f32.mrb[0].mxu0
        %v6720 = vadd.f32 %v5964, %v6719
        %v6721 = vpop.f32.mrb[0].mxu0
        %v6722 = vadd.f32 %v5968, %v6721
        %6723 = vmatprep.mubr.bf16.mxu0 %v5088
        %6724 = vmatmul.mubr.bf16.gmra.mrb[0].mxu0 %v4717
        %v6725 = vpop.f32.mrb[0].mxu0
        %v6726 = vadd.f32 %v5964, %v6725
        %v6727 = vpop.f32.mrb[0].mxu0
        %v6728 = vadd.f32 %v5968, %v6727
        %v6729 = vpop.f32.mrb[0].mxu0
        %v6730 = vadd.f32 %v5964, %v6729
        %v6731 = vpop.f32.mrb[0].mxu0
        %v6732 = vadd.f32 %v5968, %v6731
        %6733 = vdwg.mxu0
        %6734 = vmatprep.subr.bf16.mxu0 %v6430
        %6735 = vmatpush1.bf16.msra.mxu0 %v6429
        %6736 = vmatprep.subr.bf16.mxu0 %v6434
        %6737 = vmatpush1.bf16.msra.mxu0 %v6433
        %6738 = vmatprep.subr.bf16.mxu0 %v6438
        %6739 = vmatpush1.bf16.msra.mxu0 %v6437
        %6740 = vmatprep.subr.bf16.mxu0 %v6442
        %6741 = vmatpush1.bf16.msra.mxu0 %v6441
        %6742 = vmatprep.subr.bf16.mxu0 %v6446
        %6743 = vmatpush1.bf16.msra.mxu0 %v6445
        %6744 = vmatprep.subr.bf16.mxu0 %v6450
        %6745 = vmatpush1.bf16.msra.mxu0 %v6449
        %6746 = vmatprep.subr.bf16.mxu0 %v6454
        %6747 = vmatpush1.bf16.msra.mxu0 %v6453
        %6748 = vmatprep.subr.bf16.mxu0 %v6458
        %6749 = vmatpush1.bf16.msra.mxu0 %v6457
        %6750 = vmatprep.subr.bf16.mxu0 %v6462
        %6751 = vmatpush1.bf16.msra.mxu0 %v6461
        %6752 = vmatprep.subr.bf16.mxu0 %v6466
        %6753 = vmatpush1.bf16.msra.mxu0 %v6465
        %6754 = vmatprep.subr.bf16.mxu0 %v6470
        %6755 = vmatpush1.bf16.msra.mxu0 %v6469
        %6756 = vmatprep.subr.bf16.mxu0 %v6474
        %6757 = vmatpush1.bf16.msra.mxu0 %v6473
        %6758 = vmatprep.subr.bf16.mxu0 %v6478
        %6759 = vmatpush1.bf16.msra.mxu0 %v6477
        %6760 = vmatprep.subr.bf16.mxu0 %v6482
        %6761 = vmatpush1.bf16.msra.mxu0 %v6481
        %6762 = vmatprep.subr.bf16.mxu0 %v6486
        %6763 = vmatpush1.bf16.msra.mxu0 %v6485
        %6764 = vmatprep.subr.bf16.mxu0 %v6490
        %6765 = vmatpush1.bf16.msra.mxu0 %v6489
        %6766 = vmatprep.mubr.bf16.mxu0 %v5823
        %6767 = vmatmul.mubr.bf16.gmra.mrb[0].mxu0 %v5452
        %v6768 = vpop.f32.mrb[0].mxu0
        %v6769 = vadd.f32 %v6656, %v6768
        %v6770 = vpop.f32.mrb[0].mxu0
        %v6771 = vadd.f32 %v6658, %v6770
        %v6772 = vpop.f32.mrb[0].mxu0
        %v6773 = vadd.f32 %v6660, %v6772
        %v6774 = vpop.f32.mrb[0].mxu0
        %v6775 = vadd.f32 %v6662, %v6774
        %6776 = vmatprep.mubr.bf16.mxu0 %v5824
        %6777 = vmatmul.mubr.bf16.gmra.mrb[0].mxu0 %v5453
        %v6778 = vpop.f32.mrb[0].mxu0
        %v6779 = vadd.f32 %v6666, %v6778
        %v6780 = vpop.f32.mrb[0].mxu0
        %v6781 = vadd.f32 %v6668, %v6780
        %v6782 = vpop.f32.mrb[0].mxu0
        %v6783 = vadd.f32 %v6670, %v6782
        %v6784 = vpop.f32.mrb[0].mxu0
        %v6785 = vadd.f32 %v6672, %v6784
        %6786 = vmatprep.mubr.bf16.mxu0 %v5825
        %6787 = vmatmul.mubr.bf16.gmra.mrb[0].mxu0 %v5454
        %v6788 = vpop.f32.mrb[0].mxu0
        %v6789 = vadd.f32 %v6676, %v6788
        %v6790 = vpop.f32.mrb[0].mxu0
        %v6791 = vadd.f32 %v6678, %v6790
        %v6792 = vpop.f32.mrb[0].mxu0
        %v6793 = vadd.f32 %v6680, %v6792
        %v6794 = vpop.f32.mrb[0].mxu0
        %v6795 = vadd.f32 %v6682, %v6794
        %6796 = vmatprep.mubr.bf16.mxu0 %v5826
        %6797 = vmatmul.mubr.bf16.gmra.mrb[0].mxu0 %v5455
        %v6798 = vpop.f32.mrb[0].mxu0
        %v6799 = vadd.f32 %v6686, %v6798
        %v6800 = vpop.f32.mrb[0].mxu0
        %v6801 = vadd.f32 %v6688, %v6800
        %v6802 = vpop.f32.mrb[0].mxu0
        %v6803 = vadd.f32 %v6690, %v6802
        %v6804 = vpop.f32.mrb[0].mxu0
        %v6805 = vadd.f32 %v6692, %v6804
        %6806 = vmatprep.mubr.bf16.mxu0 %v5827
        %6807 = vmatmul.mubr.bf16.gmra.mrb[0].mxu0 %v5456
        %v6808 = vpop.f32.mrb[0].mxu0
        %v6809 = vadd.f32 %v6696, %v6808
        %v6810 = vpop.f32.mrb[0].mxu0
        %v6811 = vadd.f32 %v6698, %v6810
        %v6812 = vpop.f32.mrb[0].mxu0
        %v6813 = vadd.f32 %v6700, %v6812
        %v6814 = vpop.f32.mrb[0].mxu0
        %v6815 = vadd.f32 %v6702, %v6814
        %6816 = vmatprep.mubr.bf16.mxu0 %v5828
        %6817 = vmatmul.mubr.bf16.gmra.mrb[0].mxu0 %v5457
        %v6818 = vpop.f32.mrb[0].mxu0
        %v6819 = vadd.f32 %v6706, %v6818
        %v6820 = vpop.f32.mrb[0].mxu0
        %v6821 = vadd.f32 %v6708, %v6820
        %v6822 = vpop.f32.mrb[0].mxu0
        %v6823 = vadd.f32 %v6710, %v6822
        %v6824 = vpop.f32.mrb[0].mxu0
        %v6825 = vadd.f32 %v6712, %v6824
        %6826 = vmatprep.mubr.bf16.mxu0 %v5829
        %6827 = vmatmul.mubr.bf16.gmra.mrb[0].mxu0 %v5458
        %v6828 = vpop.f32.mrb[0].mxu0
        %v6829 = vadd.f32 %v6716, %v6828
        %v6830 = vpop.f32.mrb[0].mxu0
        %v6831 = vadd.f32 %v6718, %v6830
        %v6832 = vpop.f32.mrb[0].mxu0
        %v6833 = vadd.f32 %v6720, %v6832
        %v6834 = vpop.f32.mrb[0].mxu0
        %v6835 = vadd.f32 %v6722, %v6834
        %6836 = vmatprep.mubr.bf16.mxu0 %v5830
        %6837 = vmatmul.mubr.bf16.gmra.mrb[0].mxu0 %v5459
        %v6838 = vpop.f32.mrb[0].mxu0
        %v6839 = vadd.f32 %v6726, %v6838
        %v6840 = vpop.f32.mrb[0].mxu0
        %v6841 = vadd.f32 %v6728, %v6840
        %v6842 = vpop.f32.mrb[0].mxu0
        %v6843 = vadd.f32 %v6730, %v6842
        %v6844 = vpop.f32.mrb[0].mxu0
        %v6845 = vadd.f32 %v6732, %v6844
        %6846 = vdwg.mxu0
        %6847 = vmatprep.subr.bf16.mxu0 %v6368
        %6848 = vmatpush1.bf16.msra.mxu0 %v6367
        %6849 = vmatprep.subr.bf16.mxu0 %v6372
        %6850 = vmatpush1.bf16.msra.mxu0 %v6371
        %6851 = vmatprep.subr.bf16.mxu0 %v6376
        %6852 = vmatpush1.bf16.msra.mxu0 %v6375
        %6853 = vmatprep.subr.bf16.mxu0 %v6380
        %6854 = vmatpush1.bf16.msra.mxu0 %v6379
        %6855 = vmatprep.subr.bf16.mxu0 %v6384
        %6856 = vmatpush1.bf16.msra.mxu0 %v6383
        %6857 = vmatprep.subr.bf16.mxu0 %v6388
        %6858 = vmatpush1.bf16.msra.mxu0 %v6387
        %6859 = vmatprep.subr.bf16.mxu0 %v6392
        %6860 = vmatpush1.bf16.msra.mxu0 %v6391
        %6861 = vmatprep.subr.bf16.mxu0 %v6396
        %6862 = vmatpush1.bf16.msra.mxu0 %v6395
        %6863 = vmatprep.subr.bf16.mxu0 %v6400
        %6864 = vmatpush1.bf16.msra.mxu0 %v6399
        %6865 = vmatprep.subr.bf16.mxu0 %v6404
        %6866 = vmatpush1.bf16.msra.mxu0 %v6403
        %6867 = vmatprep.subr.bf16.mxu0 %v6408
        %6868 = vmatpush1.bf16.msra.mxu0 %v6407
        %6869 = vmatprep.subr.bf16.mxu0 %v6412
        %6870 = vmatpush1.bf16.msra.mxu0 %v6411
        %6871 = vmatprep.subr.bf16.mxu0 %v6416
        %6872 = vmatpush1.bf16.msra.mxu0 %v6415
        %6873 = vmatprep.subr.bf16.mxu0 %v6420
        %6874 = vmatpush1.bf16.msra.mxu0 %v6419
        %6875 = vmatprep.subr.bf16.mxu0 %v6424
        %6876 = vmatpush1.bf16.msra.mxu0 %v6423
        %6877 = vmatprep.subr.bf16.mxu0 %v6428
        %6878 = vmatpush1.bf16.msra.mxu0 %v6427
        %6879 = vmatprep.mubr.bf16.mxu0 %v5081
        %6880 = vmatmul.mubr.bf16.gmra.mrb[0].mxu0 %v4710
        %v6881 = vpop.f32.mrb[0].mxu0
        %v6882 = vadd.f32 %v5972, %v6881
        %v6883 = vpop.f32.mrb[0].mxu0
        %v6884 = vadd.f32 %v5976, %v6883
        %v6885 = vpop.f32.mrb[0].mxu0
        %v6886 = vadd.f32 %v5972, %v6885
        %v6887 = vpop.f32.mrb[0].mxu0
        %v6888 = vadd.f32 %v5976, %v6887
        %6889 = vmatprep.mubr.bf16.mxu0 %v5082
        %6890 = vmatmul.mubr.bf16.gmra.mrb[0].mxu0 %v4711
        %v6891 = vpop.f32.mrb[0].mxu0
        %v6892 = vadd.f32 %v5972, %v6891
        %v6893 = vpop.f32.mrb[0].mxu0
        %v6894 = vadd.f32 %v5976, %v6893
        %v6895 = vpop.f32.mrb[0].mxu0
        %v6896 = vadd.f32 %v5972, %v6895
        %v6897 = vpop.f32.mrb[0].mxu0
        %v6898 = vadd.f32 %v5976, %v6897
        %6899 = vmatprep.mubr.bf16.mxu0 %v5083
        %6900 = vmatmul.mubr.bf16.gmra.mrb[0].mxu0 %v4712
        %v6901 = vpop.f32.mrb[0].mxu0
        %v6902 = vadd.f32 %v5972, %v6901
        %v6903 = vpop.f32.mrb[0].mxu0
        %v6904 = vadd.f32 %v5976, %v6903
        %v6905 = vpop.f32.mrb[0].mxu0
        %v6906 = vadd.f32 %v5972, %v6905
        %v6907 = vpop.f32.mrb[0].mxu0
        %v6908 = vadd.f32 %v5976, %v6907
        %6909 = vmatprep.mubr.bf16.mxu0 %v5084
        %6910 = vmatmul.mubr.bf16.gmra.mrb[0].mxu0 %v4713
        %v6911 = vpop.f32.mrb[0].mxu0
        %v6912 = vadd.f32 %v5972, %v6911
        %v6913 = vpop.f32.mrb[0].mxu0
        %v6914 = vadd.f32 %v5976, %v6913
        %v6915 = vpop.f32.mrb[0].mxu0
        %v6916 = vadd.f32 %v5972, %v6915
        %v6917 = vpop.f32.mrb[0].mxu0
        %v6918 = vadd.f32 %v5976, %v6917
        %6919 = vmatprep.mubr.bf16.mxu0 %v5085
        %6920 = vmatmul.mubr.bf16.gmra.mrb[0].mxu0 %v4714
        %v6921 = vpop.f32.mrb[0].mxu0
        %v6922 = vadd.f32 %v5972, %v6921
        %v6923 = vpop.f32.mrb[0].mxu0
        %v6924 = vadd.f32 %v5976, %v6923
        %v6925 = vpop.f32.mrb[0].mxu0
        %v6926 = vadd.f32 %v5972, %v6925
        %v6927 = vpop.f32.mrb[0].mxu0
        %v6928 = vadd.f32 %v5976, %v6927
        %6929 = vmatprep.mubr.bf16.mxu0 %v5086
        %6930 = vmatmul.mubr.bf16.gmra.mrb[0].mxu0 %v4715
        %v6931 = vpop.f32.mrb[0].mxu0
        %v6932 = vadd.f32 %v5972, %v6931
        %v6933 = vpop.f32.mrb[0].mxu0
        %v6934 = vadd.f32 %v5976, %v6933
        %v6935 = vpop.f32.mrb[0].mxu0
        %v6936 = vadd.f32 %v5972, %v6935
        %v6937 = vpop.f32.mrb[0].mxu0
        %v6938 = vadd.f32 %v5976, %v6937
        %6939 = vmatprep.mubr.bf16.mxu0 %v5087
        %6940 = vmatmul.mubr.bf16.gmra.mrb[0].mxu0 %v4716
        %v6941 = vpop.f32.mrb[0].mxu0
        %v6942 = vadd.f32 %v5972, %v6941
        %v6943 = vpop.f32.mrb[0].mxu0
        %v6944 = vadd.f32 %v5976, %v6943
        %v6945 = vpop.f32.mrb[0].mxu0
        %v6946 = vadd.f32 %v5972, %v6945
        %v6947 = vpop.f32.mrb[0].mxu0
        %v6948 = vadd.f32 %v5976, %v6947
        %6949 = vmatprep.mubr.bf16.mxu0 %v5088
        %6950 = vmatmul.mubr.bf16.gmra.mrb[0].mxu0 %v4717
        %v6951 = vpop.f32.mrb[0].mxu0
        %v6952 = vadd.f32 %v5972, %v6951
        %v6953 = vpop.f32.mrb[0].mxu0
        %v6954 = vadd.f32 %v5976, %v6953
        %v6955 = vpop.f32.mrb[0].mxu0
        %v6956 = vadd.f32 %v5972, %v6955
        %v6957 = vpop.f32.mrb[0].mxu0
        %v6958 = vadd.f32 %v5976, %v6957
        %6959 = vdwg.mxu0
        %6960 = vmatprep.subr.bf16.mxu0 %v6432
        %6961 = vmatpush1.bf16.msra.mxu0 %v6431
        %6962 = vmatprep.subr.bf16.mxu0 %v6436
        %6963 = vmatpush1.bf16.msra.mxu0 %v6435
        %6964 = vmatprep.subr.bf16.mxu0 %v6440
        %6965 = vmatpush1.bf16.msra.mxu0 %v6439
        %6966 = vmatprep.subr.bf16.mxu0 %v6444
        %6967 = vmatpush1.bf16.msra.mxu0 %v6443
        %6968 = vmatprep.subr.bf16.mxu0 %v6448
        %6969 = vmatpush1.bf16.msra.mxu0 %v6447
        %6970 = vmatprep.subr.bf16.mxu0 %v6452
        %6971 = vmatpush1.bf16.msra.mxu0 %v6451
        %6972 = vmatprep.subr.bf16.mxu0 %v6456
        %6973 = vmatpush1.bf16.msra.mxu0 %v6455
        %6974 = vmatprep.subr.bf16.mxu0 %v6460
        %6975 = vmatpush1.bf16.msra.mxu0 %v6459
        %6976 = vmatprep.subr.bf16.mxu0 %v6464
        %6977 = vmatpush1.bf16.msra.mxu0 %v6463
        %6978 = vmatprep.subr.bf16.mxu0 %v6468
        %6979 = vmatpush1.bf16.msra.mxu0 %v6467
        %6980 = vmatprep.subr.bf16.mxu0 %v6472
        %6981 = vmatpush1.bf16.msra.mxu0 %v6471
        %6982 = vmatprep.subr.bf16.mxu0 %v6476
        %6983 = vmatpush1.bf16.msra.mxu0 %v6475
        %6984 = vmatprep.subr.bf16.mxu0 %v6480
        %6985 = vmatpush1.bf16.msra.mxu0 %v6479
        %6986 = vmatprep.subr.bf16.mxu0 %v6484
        %6987 = vmatpush1.bf16.msra.mxu0 %v6483
        %6988 = vmatprep.subr.bf16.mxu0 %v6488
        %6989 = vmatpush1.bf16.msra.mxu0 %v6487
        %6990 = vmatprep.subr.bf16.mxu0 %v6492
        %6991 = vmatpush1.bf16.msra.mxu0 %v6491
        %6992 = vmatprep.mubr.bf16.mxu0 %v5823
        %6993 = vmatmul.mubr.bf16.gmra.mrb[0].mxu0 %v5452
        %v6994 = vpop.f32.mrb[0].mxu0
        %v6995 = vadd.f32 %v6882, %v6994
        %v6996 = vpop.f32.mrb[0].mxu0
        %v6997 = vadd.f32 %v6884, %v6996
        %v6998 = vpop.f32.mrb[0].mxu0
        %v6999 = vadd.f32 %v6886, %v6998
        %v7000 = vpop.f32.mrb[0].mxu0
        %v7001 = vadd.f32 %v6888, %v7000
        %7002 = vmatprep.mubr.bf16.mxu0 %v5824
        %7003 = vmatmul.mubr.bf16.gmra.mrb[0].mxu0 %v5453
        %v7004 = vpop.f32.mrb[0].mxu0
        %v7005 = vadd.f32 %v6892, %v7004
        %v7006 = vpop.f32.mrb[0].mxu0
        %v7007 = vadd.f32 %v6894, %v7006
        %v7008 = vpop.f32.mrb[0].mxu0
        %v7009 = vadd.f32 %v6896, %v7008
        %v7010 = vpop.f32.mrb[0].mxu0
        %v7011 = vadd.f32 %v6898, %v7010
        %7012 = vmatprep.mubr.bf16.mxu0 %v5825
        %7013 = vmatmul.mubr.bf16.gmra.mrb[0].mxu0 %v5454
        %v7014 = vpop.f32.mrb[0].mxu0
        %v7015 = vadd.f32 %v6902, %v7014
        %v7016 = vpop.f32.mrb[0].mxu0
        %v7017 = vadd.f32 %v6904, %v7016
        %v7018 = vpop.f32.mrb[0].mxu0
        %v7019 = vadd.f32 %v6906, %v7018
        %v7020 = vpop.f32.mrb[0].mxu0
        %v7021 = vadd.f32 %v6908, %v7020
        %7022 = vmatprep.mubr.bf16.mxu0 %v5826
        %7023 = vmatmul.mubr.bf16.gmra.mrb[0].mxu0 %v5455
        %v7024 = vpop.f32.mrb[0].mxu0
        %v7025 = vadd.f32 %v6912, %v7024
        %v7026 = vpop.f32.mrb[0].mxu0
        %v7027 = vadd.f32 %v6914, %v7026
        %v7028 = vpop.f32.mrb[0].mxu0
        %v7029 = vadd.f32 %v6916, %v7028
        %v7030 = vpop.f32.mrb[0].mxu0
        %v7031 = vadd.f32 %v6918, %v7030
        %7032 = vmatprep.mubr.bf16.mxu0 %v5827
        %7033 = vmatmul.mubr.bf16.gmra.mrb[0].mxu0 %v5456
        %v7034 = vpop.f32.mrb[0].mxu0
        %v7035 = vadd.f32 %v6922, %v7034
        %v7036 = vpop.f32.mrb[0].mxu0
        %v7037 = vadd.f32 %v6924, %v7036
        %v7038 = vpop.f32.mrb[0].mxu0
        %v7039 = vadd.f32 %v6926, %v7038
        %v7040 = vpop.f32.mrb[0].mxu0
        %v7041 = vadd.f32 %v6928, %v7040
        %7042 = vmatprep.mubr.bf16.mxu0 %v5828
        %7043 = vmatmul.mubr.bf16.gmra.mrb[0].mxu0 %v5457
        %v7044 = vpop.f32.mrb[0].mxu0
        %v7045 = vadd.f32 %v6932, %v7044
        %v7046 = vpop.f32.mrb[0].mxu0
        %v7047 = vadd.f32 %v6934, %v7046
        %v7048 = vpop.f32.mrb[0].mxu0
        %v7049 = vadd.f32 %v6936, %v7048
        %v7050 = vpop.f32.mrb[0].mxu0
        %v7051 = vadd.f32 %v6938, %v7050
        %7052 = vmatprep.mubr.bf16.mxu0 %v5829
        %7053 = vmatmul.mubr.bf16.gmra.mrb[0].mxu0 %v5458
        %v7054 = vpop.f32.mrb[0].mxu0
        %v7055 = vadd.f32 %v6942, %v7054
        %v7056 = vpop.f32.mrb[0].mxu0
        %v7057 = vadd.f32 %v6944, %v7056
        %v7058 = vpop.f32.mrb[0].mxu0
        %v7059 = vadd.f32 %v6946, %v7058
        %v7060 = vpop.f32.mrb[0].mxu0
        %v7061 = vadd.f32 %v6948, %v7060
        %7062 = vmatprep.mubr.bf16.mxu0 %v5830
        %7063 = vmatmul.mubr.bf16.gmra.mrb[0].mxu0 %v5459
        %v7064 = vpop.f32.mrb[0].mxu0
        %v7065 = vadd.f32 %v6952, %v7064
        %v7066 = vpop.f32.mrb[0].mxu0
        %v7067 = vadd.f32 %v6954, %v7066
        %v7068 = vpop.f32.mrb[0].mxu0
        %v7069 = vadd.f32 %v6956, %v7068
        %v7070 = vpop.f32.mrb[0].mxu0
        %v7071 = vadd.f32 %v6958, %v7070
        %7072 = vdwg.mxu0
        %7073 = vst [vmem:[%s327] sm:$0xff] %v6769
        %7074 = vst [vmem:[%s327 + $0x8] sm:$0xff] %v6771
        %7075 = vst [vmem:[%s327 + $0x10] sm:$0xff] %v6995
        %7076 = vst [vmem:[%s327 + $0x18] sm:$0xff] %v6997
        %7077 = vst [vmem:[%s327 + $0x20] sm:$0xff] %v6773
        %7078 = vst [vmem:[%s327 + $0x28] sm:$0xff] %v6775
        %7079 = vst [vmem:[%s327 + $0x30] sm:$0xff] %v6999
        %7080 = vst [vmem:[%s327 + $0x38] sm:$0xff] %v7001
        %7081 = vst [vmem:[%s327 + $0x40] sm:$0xff] %v6779
        %7082 = vst [vmem:[%s327 + $0x48] sm:$0xff] %v6781
        %7083 = vst [vmem:[%s327 + $0x50] sm:$0xff] %v7005
        %7084 = vst [vmem:[%s327 + $0x58] sm:$0xff] %v7007
        %7085 = vst [vmem:[%s327 + $0x60] sm:$0xff] %v6783
        %7086 = vst [vmem:[%s327 + $0x68] sm:$0xff] %v6785
        %7087 = vst [vmem:[%s327 + $0x70] sm:$0xff] %v7009
        %7088 = vst [vmem:[%s327 + $0x78] sm:$0xff] %v7011
        %7089 = vst [vmem:[%s327 + $0x80] sm:$0xff] %v6789
        %7090 = vst [vmem:[%s327 + $0x88] sm:$0xff] %v6791
        %7091 = vst [vmem:[%s327 + $0x90] sm:$0xff] %v7015
        %7092 = vst [vmem:[%s327 + $0x98] sm:$0xff] %v7017
        %7093 = vst [vmem:[%s327 + $0xa0] sm:$0xff] %v6793
        %7094 = vst [vmem:[%s327 + $0xa8] sm:$0xff] %v6795
        %7095 = vst [vmem:[%s327 + $0xb0] sm:$0xff] %v7019
        %7096 = vst [vmem:[%s327 + $0xb8] sm:$0xff] %v7021
        %7097 = vst [vmem:[%s327 + $0xc0] sm:$0xff] %v6799
        %7098 = vst [vmem:[%s327 + $0xc8] sm:$0xff] %v6801
        %7099 = vst [vmem:[%s327 + $0xd0] sm:$0xff] %v7025
        %7100 = vst [vmem:[%s327 + $0xd8] sm:$0xff] %v7027
        %7101 = vst [vmem:[%s327 + $0xe0] sm:$0xff] %v6803
        %7102 = vst [vmem:[%s327 + $0xe8] sm:$0xff] %v6805
        %7103 = vst [vmem:[%s327 + $0xf0] sm:$0xff] %v7029
        %7104 = vst [vmem:[%s327 + $0xf8] sm:$0xff] %v7031
        %7105 = vst [vmem:[%s327 + $0x100] sm:$0xff] %v6809
        %7106 = vst [vmem:[%s327 + $0x108] sm:$0xff] %v6811
        %7107 = vst [vmem:[%s327 + $0x110] sm:$0xff] %v7035
        %7108 = vst [vmem:[%s327 + $0x118] sm:$0xff] %v7037
        %7109 = vst [vmem:[%s327 + $0x120] sm:$0xff] %v6813
        %7110 = vst [vmem:[%s327 + $0x128] sm:$0xff] %v6815
        %7111 = vst [vmem:[%s327 + $0x130] sm:$0xff] %v7039
        %7112 = vst [vmem:[%s327 + $0x138] sm:$0xff] %v7041
        %7113 = vst [vmem:[%s327 + $0x140] sm:$0xff] %v6819
        %7114 = vst [vmem:[%s327 + $0x148] sm:$0xff] %v6821
        %7115 = vst [vmem:[%s327 + $0x150] sm:$0xff] %v7045
        %7116 = vst [vmem:[%s327 + $0x158] sm:$0xff] %v7047
        %7117 = vst [vmem:[%s327 + $0x160] sm:$0xff] %v6823
        %7118 = vst [vmem:[%s327 + $0x168] sm:$0xff] %v6825
        %7119 = vst [vmem:[%s327 + $0x170] sm:$0xff] %v7049
        %7120 = vst [vmem:[%s327 + $0x178] sm:$0xff] %v7051
        %7121 = vst [vmem:[%s327 + $0x180] sm:$0xff] %v6829
        %7122 = vst [vmem:[%s327 + $0x188] sm:$0xff] %v6831
        %7123 = vst [vmem:[%s327 + $0x190] sm:$0xff] %v7055
        %7124 = vst [vmem:[%s327 + $0x198] sm:$0xff] %v7057
        %7125 = vst [vmem:[%s327 + $0x1a0] sm:$0xff] %v6833
        %7126 = vst [vmem:[%s327 + $0x1a8] sm:$0xff] %v6835
        %7127 = vst [vmem:[%s327 + $0x1b0] sm:$0xff] %v7059
        %7128 = vst [vmem:[%s327 + $0x1b8] sm:$0xff] %v7061
        %7129 = vst [vmem:[%s327 + $0x1c0] sm:$0xff] %v6839
        %7130 = vst [vmem:[%s327 + $0x1c8] sm:$0xff] %v6841
        %7131 = vst [vmem:[%s327 + $0x1d0] sm:$0xff] %v7065
        %7132 = vst [vmem:[%s327 + $0x1d8] sm:$0xff] %v7067
        %7133 = vst [vmem:[%s327 + $0x1e0] sm:$0xff] %v6843
        %7134 = vst [vmem:[%s327 + $0x1e8] sm:$0xff] %v6845
        %7135 = vst [vmem:[%s327 + $0x1f0] sm:$0xff] %v7069
        %7136 = vst [vmem:[%s327 + $0x1f8] sm:$0xff] %v7071
        %s7137 = sand.u32 %s147, 1
        %s7138 = scalar_lea.sflag [#allocation4], %s7137
        %s7139 = sand.u32 %s147, 1
        %s7140 = smul.addr %s7139, 512
        %s7141 = scalar_lea.vmem [#allocation11], %s7140
        %s7142 = sand.u32 %s173, 1
        %s7143 = scalar_lea.sflag [#allocation13], %s7142
        %s7144 = sand.u32 %s173, 1
        %s7145 = smul.addr %s7144, 512
        %s7146 = scalar_lea.vmem [#allocation12], %s7145
        // Predicated region
        $region61: #{tpu_custom_call.1} parent=39 // pred_check
          %p7147 = pneg %p157
        $region62: #{tpu_custom_call.1} parent=39 // pred_check_branch
          %7149 = sbr.rel (%p7147) target = $region64
        $region63: #{tpu_custom_call.1} parent=39 // pred_region
          %s7151 = ssub.s32 8192, 8192
          %7152 = vsyncadd %s7138, %s7151
          %s7153 = smul.addr %s29, 64
          %s7154 = smul.addr %s7153, 128
          %s7155 = scalar_lea.hbm %s5, %s7154
          %s7156 = sshll.u32 %s7141, 4
          %s7157 = int_to_ptr.vmem [resolvable:$true] %s7156
          %7162 = dma.vmem_to_hbm [thread:$0]  %s7157, 8192, %s7155, %s7138, 512, 512, 32
        $region64: #{tpu_custom_call.1} parent=39 // pred_fallthru
          _
        // Predicated region
        $region65: #{tpu_custom_call.1} parent=39 // pred_check
          %p7163 = pneg %p183
        $region66: #{tpu_custom_call.1} parent=39 // pred_check_branch
          %7165 = sbr.rel (%p7163) target = $region68
        $region67: #{tpu_custom_call.1} parent=39 // pred_region
          %s7167 = ssub.s32 8192, 8192
          %7168 = vsyncadd %s7143, %s7167
          %s7169 = smul.addr %s29, 64
          %s7170 = smul.addr %s7169, 128
          %s7171 = scalar_lea.hbm %s6, %s7170
          %s7172 = sshll.u32 %s7146, 4
          %s7173 = int_to_ptr.vmem [resolvable:$true] %s7172
          %7178 = dma.vmem_to_hbm [thread:$0]  %s7173, 8192, %s7171, %s7143, 128, 128, 8
        $region68: #{tpu_custom_call.1} parent=39 // pred_fallthru
          _
      $region40: #{tpu_custom_call.1} parent=5 // pred_fallthru
        _
      %p7179 = scmp.le.s32.totalorder 2, %s24
      // Predicated region
      $region69: #{tpu_custom_call.1} parent=5 // pred_check
        %p7180 = pneg %p7179
      $region70: #{tpu_custom_call.1} parent=5 // pred_check_branch
        %7182 = sbr.rel (%p7180) target = $region72
      $region71: #{tpu_custom_call.1} parent=5 // pred_region
        %s7183 = ssub.s32 %s24, 2
        // Predicated region
        $region73: #{tpu_custom_call.1} parent=71 // pred_check
          %p7184 = pneg %p163
        $region74: #{tpu_custom_call.1} parent=71 // pred_check_branch
          %7186 = sbr.rel (%p7184) target = $region76
        $region75: #{tpu_custom_call.1} parent=71 // pred_region
          %s7187 = sand.u32 %s148, 1
          %s7188 = scalar_lea.sflag [#allocation4], %s7187
          %s7189 = sand.u32 %s148, 1
          %s7190 = smul.addr %s7189, 512
          %s7191 = scalar_lea.vmem [#allocation11], %s7190
          %7192 = dma.done %s7188, 8192
        $region76: #{tpu_custom_call.1} parent=71 // pred_fallthru
          _
        // Predicated region
        $region77: #{tpu_custom_call.1} parent=71 // pred_check
          %p7193 = pneg %p189
        $region78: #{tpu_custom_call.1} parent=71 // pred_check_branch
          %7195 = sbr.rel (%p7193) target = $region80
        $region79: #{tpu_custom_call.1} parent=71 // pred_region
          %s7196 = sand.u32 %s174, 1
          %s7197 = scalar_lea.sflag [#allocation13], %s7196
          %s7198 = sand.u32 %s174, 1
          %s7199 = smul.addr %s7198, 512
          %s7200 = scalar_lea.vmem [#allocation12], %s7199
          %7201 = dma.done %s7197, 8192
        $region80: #{tpu_custom_call.1} parent=71 // pred_fallthru
          _
      $region72: #{tpu_custom_call.1} parent=5 // pred_fallthru
        _
    $region6: #{tpu_custom_call.1} parent=1 // loop_footer
      %s28 = sadd.s32 1, %s24
    $region7: #{tpu_custom_call.1} parent=1 // loop_footer_branch
      %23 = sbr.rel target = $region3
    $region8: #{tpu_custom_call.1} parent=1 // loop_exit
      _
    %7202 = vsyncpa [#allocation3], 1
    %s7203 = scalar_lea.sflag [#allocation3], 1
    %7204 = vsyncpa %s7203, 1
    %7205 = vsyncpa [#allocation6], 1
    %7206 = vsyncpa [#allocation9], 1
    %7207 = vsyncpa [#allocation4], 1
    %s7208 = scalar_lea.sflag [#allocation4], 1
    %7209 = vsyncpa %s7208, 1
    %7210 = vsyncpa [#allocation13], 1
    %s7211 = scalar_lea.sflag [#allocation13], 1
    %7212 = vsyncpa %s7211, 1

</llo_original>
